<compile_context>
chip_gen: v5e
topology: v5e:2x2
jax: 0.10.0
libtpu: 0.0.40
codegen_flags: <defaults>
</compile_context>

<pallas_src>
import functools

import jax
import jax.numpy as jnp
from jax.experimental import pallas as pl
from jax.experimental.pallas import tpu as pltpu

LANE = 128
_W_OFF = 8  # sublane offset of the real data inside the halo scratch (aligned)


def _espcn_kernel(x_ref, w1_ref, b1_ref, w2_ref, b2_ref, w3_ref, b3_ref,
                  w4_ref, b4_ref, o_ref, h1_ref, h2_ref, h3_ref, *, H, W):
    """Fused conv1..conv4 for one batch element.

    x_ref : (H, W, KP)        conv1 im2col taps (25 real, zero-padded to KP)
    w1_ref: (KP, C)           conv1 weights (taps x cout), zero padded
    wX_ref: (9, C, C)         3x3 conv weights, (cin, cout) zero padded
    bX_ref: (1, C)
    o_ref : (H, W, C)         conv4 output (channels >= r*r are exactly zero)
    hX_ref: (H+2, 2*_W_OFF+W, C) f32 halo scratch for the next layer's taps
    """
    C = o_ref.shape[-1]
    HW = H * W

    # Halo borders must read as zeros ("same" padding).  Re-zero every grid
    # step (cheap; also keeps per-core scratch valid under megacore sharding).
    h1_ref[...] = jnp.zeros_like(h1_ref)
    h2_ref[...] = jnp.zeros_like(h2_ref)
    h3_ref[...] = jnp.zeros_like(h3_ref)

    # ---- conv1: 5x5, cin=1, folded into ONE matmul over the tap dim --------
    x2d = x_ref[...].reshape(HW, x_ref.shape[-1])                 # (HW, KP)
    y = jnp.dot(x2d, w1_ref[...], preferred_element_type=jnp.float32)
    y = jnp.maximum(y + b1_ref[...], 0.0)
    h1_ref[1:1 + H, _W_OFF:_W_OFF + W, :] = y.reshape(H, W, C)    # aligned store

    # ---- generic 3x3 "same" conv from a halo scratch ------------------------
    def conv3x3(h_ref, w_ref, b_ref, relu):
        acc = None
        for kh in range(3):                       # statically unrolled taps
            for kw in range(3):
                tap = h_ref[kh:kh + H, _W_OFF - 1 + kw:_W_OFF - 1 + kw + W, :]
                d = jnp.dot(tap.reshape(HW, C), w_ref[kh * 3 + kw],
                            preferred_element_type=jnp.float32)
                acc = d if acc is None else acc + d
        out = acc + b_ref[...]                    # f32 epilogue
        if relu:
            out = jnp.maximum(out, 0.0)
        return out

    y = conv3x3(h1_ref, w2_ref, b2_ref, relu=True)
    h2_ref[1:1 + H, _W_OFF:_W_OFF + W, :] = y.reshape(H, W, C)

    y = conv3x3(h2_ref, w3_ref, b3_ref, relu=True)
    h3_ref[1:1 + H, _W_OFF:_W_OFF + W, :] = y.reshape(H, W, C)

    y = conv3x3(h3_ref, w4_ref, b4_ref, relu=False)
    o_ref[...] = y.reshape(H, W, C).astype(o_ref.dtype)           # lane-dense


def espcn_forward(x_nchw, params_oihw, *, upscale):
    """NCHW boundary (PyTorch convention). params are (weight OIHW, bias)."""
    (w1, b1), (w2, b2), (w3, b3), (w4, b4) = params_oihw
    N, cin, H, W = x_nchw.shape
    assert cin == 1 and H % 8 == 0 and W % 8 == 0
    r = upscale
    C = LANE          # padded channel width (lane-dense everywhere)
    KP = LANE         # padded conv1 contraction dim (25 real taps)

    # ---- conv1 im2col (layout plumbing, stays in XLA) -----------------------
    xp = jnp.pad(x_nchw[:, 0].astype(jnp.float32), ((0, 0), (2, 2), (2, 2)))
    taps = [xp[:, kh:kh + H, kw:kw + W] for kh in range(5) for kw in range(5)]
    x_taps = jnp.stack(taps, axis=-1)                              # (N,H,W,25)
    x_taps = jnp.pad(x_taps, ((0, 0), (0, 0), (0, 0), (0, KP - 25)))

    # ---- weight / bias prep (zero padding => exact results) -----------------
    def prep_w1(w, b):
        o = w.shape[0]
        w2d = jnp.transpose(w, (2, 3, 1, 0)).reshape(25, o).astype(jnp.float32)
        w2d = jnp.pad(w2d, ((0, KP - 25), (0, C - o)))
        bp = jnp.pad(b.astype(jnp.float32), (0, C - o)).reshape(1, C)
        return w2d, bp

    def prep_w3x3(w, b):
        o, i = w.shape[0], w.shape[1]
        wt = jnp.transpose(w, (2, 3, 1, 0)).astype(jnp.float32)    # (3,3,i,o)
        wt = jnp.pad(wt, ((0, 0), (0, 0), (0, C - i), (0, C - o))).reshape(9, C, C)
        bp = jnp.pad(b.astype(jnp.float32), (0, C - o)).reshape(1, C)
        return wt, bp

    w1p, b1p = prep_w1(w1, b1)
    w2p, b2p = prep_w3x3(w2, b2)
    w3p, b3p = prep_w3x3(w3, b3)
    w4p, b4p = prep_w3x3(w4, b4)

    kernel = functools.partial(_espcn_kernel, H=H, W=W)
    const3 = lambda n: (0, 0, 0)
    const2 = lambda n: (0, 0)
    halo = pltpu.VMEM((H + 2, 2 * _W_OFF + W, C), jnp.float32)

    y = pl.pallas_call(
        kernel,
        out_shape=jax.ShapeDtypeStruct((N, H, W, C), jnp.float32),
        grid_spec=pltpu.PrefetchScalarGridSpec(
            num_scalar_prefetch=0,
            grid=(N,),
            in_specs=[
                pl.BlockSpec((None, H, W, KP), lambda n: (n, 0, 0, 0)),
                pl.BlockSpec((KP, C), const2),      # w1 (resident)
                pl.BlockSpec((1, C), const2),       # b1
                pl.BlockSpec((9, C, C), const3),    # w2
                pl.BlockSpec((1, C), const2),       # b2
                pl.BlockSpec((9, C, C), const3),    # w3
                pl.BlockSpec((1, C), const2),       # b3
                pl.BlockSpec((9, C, C), const3),    # w4
                pl.BlockSpec((1, C), const2),       # b4
            ],
            out_specs=pl.BlockSpec((None, H, W, C), lambda n: (n, 0, 0, 0)),
            scratch_shapes=[halo, halo, halo],
        ),
        compiler_params=pltpu.CompilerParams(
            dimension_semantics=("parallel",),
        ),
    )(x_taps, w1p, b1p, w2p, b2p, w3p, b3p, w4p, b4p)

    y = y[..., :r * r]                                  # drop channel padding
    # TODO(synk): PixelShuffle is a pure layout permute; kept as one fused XLA
    # reshape/transpose in the wrapper rather than a Pallas kernel.
    y = y.reshape(N, H, W, r, r).transpose(0, 1, 3, 2, 4)
    return y.reshape(N, 1, H * r, W * r)


# ----------------------------- pure-JAX reference -----------------------------
def reference_forward(x_nchw, params_oihw, upscale):
    def conv(x, w, b, pad):
        out = jax.lax.conv_general_dilated(
            x, w, window_strides=(1, 1),
            padding=((pad, pad), (pad, pad)),
            dimension_numbers=("NCHW", "OIHW", "NCHW"))
        return out + b[None, :, None, None]

    (w1, b1), (w2, b2), (w3, b3), (w4, b4) = params_oihw
    x = jax.nn.relu(conv(x_nchw, w1, b1, 2))
    x = jax.nn.relu(conv(x, w2, b2, 1))
    x = jax.nn.relu(conv(x, w3, b3, 1))
    x = conv(x, w4, b4, 1)
    r = upscale
    N, _, H, W = x.shape
    x = x.reshape(N, 1, r, r, H, W).transpose(0, 1, 4, 2, 5, 3)
    return x.reshape(N, 1, H * r, W * r)


if __name__ == "__main__":
    upscale = 3
    N, H, W = 2, 16, 16

    key = jax.random.PRNGKey(0)
    ks = jax.random.split(key, 9)

    def winit(k, o, i, kh, kw):
        fan_in = i * kh * kw
        return jax.random.normal(k, (o, i, kh, kw), jnp.float32) / jnp.sqrt(
            jnp.float32(fan_in))

    x = jax.random.normal(ks[0], (N, 1, H, W), jnp.float32)
    w1 = winit(ks[1], 64, 1, 5, 5)
    b1 = 0.1 * jax.random.normal(ks[2], (64,), jnp.float32)
    w2 = winit(ks[3], 64, 64, 3, 3)
    b2 = 0.1 * jax.random.normal(ks[4], (64,), jnp.float32)
    w3 = winit(ks[5], 32, 64, 3, 3)
    b3 = 0.1 * jax.random.normal(ks[6], (32,), jnp.float32)
    w4 = winit(ks[7], upscale ** 2, 32, 3, 3)
    b4 = 0.1 * jax.random.normal(ks[8], (upscale ** 2,), jnp.float32)

    params_oihw = ((w1, b1), (w2, b2), (w3, b3), (w4, b4))

    fwd = jax.jit(functools.partial(espcn_forward, upscale=upscale))
    out = fwd(x, params_oihw)
    jax.block_until_ready(out)

    ref = reference_forward(x, params_oihw, upscale)
    assert out.shape == (N, 1, H * upscale, W * upscale), out.shape
    err = float(jnp.max(jnp.abs(out - ref)))
    scale = float(jnp.max(jnp.abs(ref))) + 1e-6
    assert err <= 5e-2 * scale + 1e-3, f"max abs err {err} vs scale {scale}"
    print("KERNEL_OK")
</pallas_src>

<mosaic_0001>
module attributes {stable_mosaic.version = 11 : i64} {
  func.func @_espcn_kernel(%arg0: i32, %arg1: memref<1x16x16x128xf32, #tpu.memory_space<vmem>>, %arg2: memref<128x128xf32, #tpu.memory_space<vmem>>, %arg3: memref<1x128xf32, #tpu.memory_space<vmem>>, %arg4: memref<9x128x128xf32, #tpu.memory_space<vmem>>, %arg5: memref<1x128xf32, #tpu.memory_space<vmem>>, %arg6: memref<9x128x128xf32, #tpu.memory_space<vmem>>, %arg7: memref<1x128xf32, #tpu.memory_space<vmem>>, %arg8: memref<9x128x128xf32, #tpu.memory_space<vmem>>, %arg9: memref<1x128xf32, #tpu.memory_space<vmem>>, %arg10: memref<1x16x16x128xf32, #tpu.memory_space<vmem>>, %arg11: memref<18x32x128xf32, #tpu.memory_space<vmem>>, %arg12: memref<18x32x128xf32, #tpu.memory_space<vmem>>, %arg13: memref<18x32x128xf32, #tpu.memory_space<vmem>>) attributes {dimension_semantics = [#tpu.dimension_semantics<parallel>], iteration_bounds = array<i64: 2>, scalar_prefetch = 0 : i64, scratch_operands = 3 : i64, tpu.core_type = #tpu.core_type<tc>, window_params = [{transform_indices = @transform_0, window_bounds = array<i64: 1, 16, 16, 128>}, {pipeline_mode = #tpu.pipeline_mode<synchronous>, transform_indices = @transform_1, window_bounds = array<i64: 128, 128>}, {pipeline_mode = #tpu.pipeline_mode<synchronous>, transform_indices = @transform_2, window_bounds = array<i64: 1, 128>}, {pipeline_mode = #tpu.pipeline_mode<synchronous>, transform_indices = @transform_3, window_bounds = array<i64: 9, 128, 128>}, {pipeline_mode = #tpu.pipeline_mode<synchronous>, transform_indices = @transform_4, window_bounds = array<i64: 1, 128>}, {pipeline_mode = #tpu.pipeline_mode<synchronous>, transform_indices = @transform_5, window_bounds = array<i64: 9, 128, 128>}, {pipeline_mode = #tpu.pipeline_mode<synchronous>, transform_indices = @transform_6, window_bounds = array<i64: 1, 128>}, {pipeline_mode = #tpu.pipeline_mode<synchronous>, transform_indices = @transform_7, window_bounds = array<i64: 9, 128, 128>}, {pipeline_mode = #tpu.pipeline_mode<synchronous>, transform_indices = @transform_8, window_bounds = array<i64: 1, 128>}, {transform_indices = @transform_9, window_bounds = array<i64: 1, 16, 16, 128>}]} {
    %cst = arith.constant 0.000000e+00 : f32
    %0 = vector.broadcast %cst : f32 to vector<18x32x128xf32>
    %c0 = arith.constant 0 : index
    %c0_0 = arith.constant 0 : index
    %c0_1 = arith.constant 0 : index
    %1 = vector.load %arg11[%c0, %c0_0, %c0_1] : memref<18x32x128xf32, #tpu.memory_space<vmem>>, vector<18x32x128xf32>
    tpu.vector_store %arg11[%c0, %c0_0, %c0_1], %0 {strides = array<i32>} : memref<18x32x128xf32, #tpu.memory_space<vmem>>, vector<18x32x128xf32>,
    %cst_2 = arith.constant 0.000000e+00 : f32
    %2 = vector.broadcast %cst_2 : f32 to vector<18x32x128xf32>
    %c0_3 = arith.constant 0 : index
    %c0_4 = arith.constant 0 : index
    %c0_5 = arith.constant 0 : index
    %3 = vector.load %arg12[%c0_3, %c0_4, %c0_5] : memref<18x32x128xf32, #tpu.memory_space<vmem>>, vector<18x32x128xf32>
    tpu.vector_store %arg12[%c0_3, %c0_4, %c0_5], %2 {strides = array<i32>} : memref<18x32x128xf32, #tpu.memory_space<vmem>>, vector<18x32x128xf32>,
    %cst_6 = arith.constant 0.000000e+00 : f32
    %4 = vector.broadcast %cst_6 : f32 to vector<18x32x128xf32>
    %c0_7 = arith.constant 0 : index
    %c0_8 = arith.constant 0 : index
    %c0_9 = arith.constant 0 : index
    %5 = vector.load %arg13[%c0_7, %c0_8, %c0_9] : memref<18x32x128xf32, #tpu.memory_space<vmem>>, vector<18x32x128xf32>
    tpu.vector_store %arg13[%c0_7, %c0_8, %c0_9], %4 {strides = array<i32>} : memref<18x32x128xf32, #tpu.memory_space<vmem>>, vector<18x32x128xf32>,
    %c0_10 = arith.constant 0 : index
    %c0_11 = arith.constant 0 : index
    %c0_12 = arith.constant 0 : index
    %c0_13 = arith.constant 0 : index
    %6 = vector.load %arg1[%c0_10, %c0_11, %c0_12, %c0_13] : memref<1x16x16x128xf32, #tpu.memory_space<vmem>>, vector<1x16x16x128xf32>
    %7 = vector.shape_cast %6 : vector<1x16x16x128xf32> to vector<16x16x128xf32>
    %8 = vector.shape_cast %7 : vector<16x16x128xf32> to vector<256x128xf32>
    %c0_14 = arith.constant 0 : index
    %c0_15 = arith.constant 0 : index
    %9 = vector.load %arg2[%c0_14, %c0_15] : memref<128x128xf32, #tpu.memory_space<vmem>>, vector<128x128xf32>
    %cst_16 = arith.constant dense<0.000000e+00> : vector<256x128xf32>
    %10 = tpu.matmul %8, %9, %cst_16 {dimension_numbers = #tpu.dot_dimension_numbers<[1], [0], [0], [1], [0, 0, 1, 1], [], []>} : vector<256x128xf32>, vector<128x128xf32>, vector<256x128xf32> -> vector<256x128xf32>
    %c0_17 = arith.constant 0 : index
    %c0_18 = arith.constant 0 : index
    %11 = vector.load %arg3[%c0_17, %c0_18] : memref<1x128xf32, #tpu.memory_space<vmem>>, vector<1x128xf32>
    %12 = vector.broadcast %11 : vector<1x128xf32> to vector<256x128xf32>
    %13 = arith.addf %10, %12 : vector<256x128xf32>
    %cst_19 = arith.constant 0.000000e+00 : f32
    %14 = vector.broadcast %cst_19 : f32 to vector<256x128xf32>
    %15 = arith.maximumf %13, %14 : vector<256x128xf32>
    %16 = vector.shape_cast %15 : vector<256x128xf32> to vector<16x16x128xf32>
    %c1 = arith.constant 1 : index
    %c8 = arith.constant 8 : index
    %c0_20 = arith.constant 0 : index
    %17 = vector.load %arg11[%c1, %c8, %c0_20] : memref<18x32x128xf32, #tpu.memory_space<vmem>>, vector<16x16x128xf32>
    tpu.vector_store %arg11[%c1, %c8, %c0_20], %16 {strides = array<i32>} : memref<18x32x128xf32, #tpu.memory_space<vmem>>, vector<16x16x128xf32>,
    %c0_21 = arith.constant 0 : index
    %c7 = arith.constant 7 : index
    %c0_22 = arith.constant 0 : index
    %18 = vector.load %arg11[%c0_21, %c7, %c0_22] : memref<18x32x128xf32, #tpu.memory_space<vmem>>, vector<16x16x128xf32>
    %19 = vector.shape_cast %18 : vector<16x16x128xf32> to vector<256x128xf32>
    %c0_23 = arith.constant 0 : index
    %c0_24 = arith.constant 0 : index
    %c0_25 = arith.constant 0 : index
    %20 = vector.load %arg4[%c0_23, %c0_24, %c0_25] : memref<9x128x128xf32, #tpu.memory_space<vmem>>, vector<1x128x128xf32>
    %21 = vector.shape_cast %20 : vector<1x128x128xf32> to vector<128x128xf32>
    %cst_26 = arith.constant dense<0.000000e+00> : vector<256x128xf32>
    %22 = tpu.matmul %19, %21, %cst_26 {dimension_numbers = #tpu.dot_dimension_numbers<[1], [0], [0], [1], [0, 0, 1, 1], [], []>} : vector<256x128xf32>, vector<128x128xf32>, vector<256x128xf32> -> vector<256x128xf32>
    %c0_27 = arith.constant 0 : index
    %c8_28 = arith.constant 8 : index
    %c0_29 = arith.constant 0 : index
    %23 = vector.load %arg11[%c0_27, %c8_28, %c0_29] : memref<18x32x128xf32, #tpu.memory_space<vmem>>, vector<16x16x128xf32>
    %24 = vector.shape_cast %23 : vector<16x16x128xf32> to vector<256x128xf32>
    %c1_30 = arith.constant 1 : index
    %c0_31 = arith.constant 0 : index
    %c0_32 = arith.constant 0 : index
    %25 = vector.load %arg4[%c1_30, %c0_31, %c0_32] : memref<9x128x128xf32, #tpu.memory_space<vmem>>, vector<1x128x128xf32>
    %26 = vector.shape_cast %25 : vector<1x128x128xf32> to vector<128x128xf32>
    %cst_33 = arith.constant dense<0.000000e+00> : vector<256x128xf32>
    %27 = tpu.matmul %24, %26, %cst_33 {dimension_numbers = #tpu.dot_dimension_numbers<[1], [0], [0], [1], [0, 0, 1, 1], [], []>} : vector<256x128xf32>, vector<128x128xf32>, vector<256x128xf32> -> vector<256x128xf32>
    %28 = arith.addf %22, %27 : vector<256x128xf32>
    %c0_34 = arith.constant 0 : index
    %c9 = arith.constant 9 : index
    %c0_35 = arith.constant 0 : index
    %29 = vector.load %arg11[%c0_34, %c9, %c0_35] : memref<18x32x128xf32, #tpu.memory_space<vmem>>, vector<16x16x128xf32>
    %30 = vector.shape_cast %29 : vector<16x16x128xf32> to vector<256x128xf32>
    %c2 = arith.constant 2 : index
    %c0_36 = arith.constant 0 : index
    %c0_37 = arith.constant 0 : index
    %31 = vector.load %arg4[%c2, %c0_36, %c0_37] : memref<9x128x128xf32, #tpu.memory_space<vmem>>, vector<1x128x128xf32>
    %32 = vector.shape_cast %31 : vector<1x128x128xf32> to vector<128x128xf32>
    %cst_38 = arith.constant dense<0.000000e+00> : vector<256x128xf32>
    %33 = tpu.matmul %30, %32, %cst_38 {dimension_numbers = #tpu.dot_dimension_numbers<[1], [0], [0], [1], [0, 0, 1, 1], [], []>} : vector<256x128xf32>, vector<128x128xf32>, vector<256x128xf32> -> vector<256x128xf32>
    %34 = arith.addf %28, %33 : vector<256x128xf32>
    %c1_39 = arith.constant 1 : index
    %c7_40 = arith.constant 7 : index
    %c0_41 = arith.constant 0 : index
    %35 = vector.load %arg11[%c1_39, %c7_40, %c0_41] : memref<18x32x128xf32, #tpu.memory_space<vmem>>, vector<16x16x128xf32>
    %36 = vector.shape_cast %35 : vector<16x16x128xf32> to vector<256x128xf32>
    %c3 = arith.constant 3 : index
    %c0_42 = arith.constant 0 : index
    %c0_43 = arith.constant 0 : index
    %37 = vector.load %arg4[%c3, %c0_42, %c0_43] : memref<9x128x128xf32, #tpu.memory_space<vmem>>, vector<1x128x128xf32>
    %38 = vector.shape_cast %37 : vector<1x128x128xf32> to vector<128x128xf32>
    %cst_44 = arith.constant dense<0.000000e+00> : vector<256x128xf32>
    %39 = tpu.matmul %36, %38, %cst_44 {dimension_numbers = #tpu.dot_dimension_numbers<[1], [0], [0], [1], [0, 0, 1, 1], [], []>} : vector<256x128xf32>, vector<128x128xf32>, vector<256x128xf32> -> vector<256x128xf32>
    %40 = arith.addf %34, %39 : vector<256x128xf32>
    %c1_45 = arith.constant 1 : index
    %c8_46 = arith.constant 8 : index
    %c0_47 = arith.constant 0 : index
    %41 = vector.load %arg11[%c1_45, %c8_46, %c0_47] : memref<18x32x128xf32, #tpu.memory_space<vmem>>, vector<16x16x128xf32>
    %42 = vector.shape_cast %41 : vector<16x16x128xf32> to vector<256x128xf32>
    %c4 = arith.constant 4 : index
    %c0_48 = arith.constant 0 : index
    %c0_49 = arith.constant 0 : index
    %43 = vector.load %arg4[%c4, %c0_48, %c0_49] : memref<9x128x128xf32, #tpu.memory_space<vmem>>, vector<1x128x128xf32>
    %44 = vector.shape_cast %43 : vector<1x128x128xf32> to vector<128x128xf32>
    %cst_50 = arith.constant dense<0.000000e+00> : vector<256x128xf32>
    %45 = tpu.matmul %42, %44, %cst_50 {dimension_numbers = #tpu.dot_dimension_numbers<[1], [0], [0], [1], [0, 0, 1, 1], [], []>} : vector<256x128xf32>, vector<128x128xf32>, vector<256x128xf32> -> vector<256x128xf32>
    %46 = arith.addf %40, %45 : vector<256x128xf32>
    %c1_51 = arith.constant 1 : index
    %c9_52 = arith.constant 9 : index
    %c0_53 = arith.constant 0 : index
    %47 = vector.load %arg11[%c1_51, %c9_52, %c0_53] : memref<18x32x128xf32, #tpu.memory_space<vmem>>, vector<16x16x128xf32>
    %48 = vector.shape_cast %47 : vector<16x16x128xf32> to vector<256x128xf32>
    %c5 = arith.constant 5 : index
    %c0_54 = arith.constant 0 : index
    %c0_55 = arith.constant 0 : index
    %49 = vector.load %arg4[%c5, %c0_54, %c0_55] : memref<9x128x128xf32, #tpu.memory_space<vmem>>, vector<1x128x128xf32>
    %50 = vector.shape_cast %49 : vector<1x128x128xf32> to vector<128x128xf32>
    %cst_56 = arith.constant dense<0.000000e+00> : vector<256x128xf32>
    %51 = tpu.matmul %48, %50, %cst_56 {dimension_numbers = #tpu.dot_dimension_numbers<[1], [0], [0], [1], [0, 0, 1, 1], [], []>} : vector<256x128xf32>, vector<128x128xf32>, vector<256x128xf32> -> vector<256x128xf32>
    %52 = arith.addf %46, %51 : vector<256x128xf32>
    %c2_57 = arith.constant 2 : index
    %c7_58 = arith.constant 7 : index
    %c0_59 = arith.constant 0 : index
    %53 = vector.load %arg11[%c2_57, %c7_58, %c0_59] : memref<18x32x128xf32, #tpu.memory_space<vmem>>, vector<16x16x128xf32>
    %54 = vector.shape_cast %53 : vector<16x16x128xf32> to vector<256x128xf32>
    %c6 = arith.constant 6 : index
    %c0_60 = arith.constant 0 : index
    %c0_61 = arith.constant 0 : index
    %55 = vector.load %arg4[%c6, %c0_60, %c0_61] : memref<9x128x128xf32, #tpu.memory_space<vmem>>, vector<1x128x128xf32>
    %56 = vector.shape_cast %55 : vector<1x128x128xf32> to vector<128x128xf32>
    %cst_62 = arith.constant dense<0.000000e+00> : vector<256x128xf32>
    %57 = tpu.matmul %54, %56, %cst_62 {dimension_numbers = #tpu.dot_dimension_numbers<[1], [0], [0], [1], [0, 0, 1, 1], [], []>} : vector<256x128xf32>, vector<128x128xf32>, vector<256x128xf32> -> vector<256x128xf32>
    %58 = arith.addf %52, %57 : vector<256x128xf32>
    %c2_63 = arith.constant 2 : index
    %c8_64 = arith.constant 8 : index
    %c0_65 = arith.constant 0 : index
    %59 = vector.load %arg11[%c2_63, %c8_64, %c0_65] : memref<18x32x128xf32, #tpu.memory_space<vmem>>, vector<16x16x128xf32>
    %60 = vector.shape_cast %59 : vector<16x16x128xf32> to vector<256x128xf32>
    %c7_66 = arith.constant 7 : index
    %c0_67 = arith.constant 0 : index
    %c0_68 = arith.constant 0 : index
    %61 = vector.load %arg4[%c7_66, %c0_67, %c0_68] : memref<9x128x128xf32, #tpu.memory_space<vmem>>, vector<1x128x128xf32>
    %62 = vector.shape_cast %61 : vector<1x128x128xf32> to vector<128x128xf32>
    %cst_69 = arith.constant dense<0.000000e+00> : vector<256x128xf32>
    %63 = tpu.matmul %60, %62, %cst_69 {dimension_numbers = #tpu.dot_dimension_numbers<[1], [0], [0], [1], [0, 0, 1, 1], [], []>} : vector<256x128xf32>, vector<128x128xf32>, vector<256x128xf32> -> vector<256x128xf32>
    %64 = arith.addf %58, %63 : vector<256x128xf32>
    %c2_70 = arith.constant 2 : index
    %c9_71 = arith.constant 9 : index
    %c0_72 = arith.constant 0 : index
    %65 = vector.load %arg11[%c2_70, %c9_71, %c0_72] : memref<18x32x128xf32, #tpu.memory_space<vmem>>, vector<16x16x128xf32>
    %66 = vector.shape_cast %65 : vector<16x16x128xf32> to vector<256x128xf32>
    %c8_73 = arith.constant 8 : index
    %c0_74 = arith.constant 0 : index
    %c0_75 = arith.constant 0 : index
    %67 = vector.load %arg4[%c8_73, %c0_74, %c0_75] : memref<9x128x128xf32, #tpu.memory_space<vmem>>, vector<1x128x128xf32>
    %68 = vector.shape_cast %67 : vector<1x128x128xf32> to vector<128x128xf32>
    %cst_76 = arith.constant dense<0.000000e+00> : vector<256x128xf32>
    %69 = tpu.matmul %66, %68, %cst_76 {dimension_numbers = #tpu.dot_dimension_numbers<[1], [0], [0], [1], [0, 0, 1, 1], [], []>} : vector<256x128xf32>, vector<128x128xf32>, vector<256x128xf32> -> vector<256x128xf32>
    %70 = arith.addf %64, %69 : vector<256x128xf32>
    %c0_77 = arith.constant 0 : index
    %c0_78 = arith.constant 0 : index
    %71 = vector.load %arg5[%c0_77, %c0_78] : memref<1x128xf32, #tpu.memory_space<vmem>>, vector<1x128xf32>
    %72 = vector.broadcast %71 : vector<1x128xf32> to vector<256x128xf32>
    %73 = arith.addf %70, %72 : vector<256x128xf32>
    %cst_79 = arith.constant 0.000000e+00 : f32
    %74 = vector.broadcast %cst_79 : f32 to vector<256x128xf32>
    %75 = arith.maximumf %73, %74 : vector<256x128xf32>
    %76 = vector.shape_cast %75 : vector<256x128xf32> to vector<16x16x128xf32>
    %c1_80 = arith.constant 1 : index
    %c8_81 = arith.constant 8 : index
    %c0_82 = arith.constant 0 : index
    %77 = vector.load %arg12[%c1_80, %c8_81, %c0_82] : memref<18x32x128xf32, #tpu.memory_space<vmem>>, vector<16x16x128xf32>
    tpu.vector_store %arg12[%c1_80, %c8_81, %c0_82], %76 {strides = array<i32>} : memref<18x32x128xf32, #tpu.memory_space<vmem>>, vector<16x16x128xf32>,
    %c0_83 = arith.constant 0 : index
    %c7_84 = arith.constant 7 : index
    %c0_85 = arith.constant 0 : index
    %78 = vector.load %arg12[%c0_83, %c7_84, %c0_85] : memref<18x32x128xf32, #tpu.memory_space<vmem>>, vector<16x16x128xf32>
    %79 = vector.shape_cast %78 : vector<16x16x128xf32> to vector<256x128xf32>
    %c0_86 = arith.constant 0 : index
    %c0_87 = arith.constant 0 : index
    %c0_88 = arith.constant 0 : index
    %80 = vector.load %arg6[%c0_86, %c0_87, %c0_88] : memref<9x128x128xf32, #tpu.memory_space<vmem>>, vector<1x128x128xf32>
    %81 = vector.shape_cast %80 : vector<1x128x128xf32> to vector<128x128xf32>
    %cst_89 = arith.constant dense<0.000000e+00> : vector<256x128xf32>
    %82 = tpu.matmul %79, %81, %cst_89 {dimension_numbers = #tpu.dot_dimension_numbers<[1], [0], [0], [1], [0, 0, 1, 1], [], []>} : vector<256x128xf32>, vector<128x128xf32>, vector<256x128xf32> -> vector<256x128xf32>
    %c0_90 = arith.constant 0 : index
    %c8_91 = arith.constant 8 : index
    %c0_92 = arith.constant 0 : index
    %83 = vector.load %arg12[%c0_90, %c8_91, %c0_92] : memref<18x32x128xf32, #tpu.memory_space<vmem>>, vector<16x16x128xf32>
    %84 = vector.shape_cast %83 : vector<16x16x128xf32> to vector<256x128xf32>
    %c1_93 = arith.constant 1 : index
    %c0_94 = arith.constant 0 : index
    %c0_95 = arith.constant 0 : index
    %85 = vector.load %arg6[%c1_93, %c0_94, %c0_95] : memref<9x128x128xf32, #tpu.memory_space<vmem>>, vector<1x128x128xf32>
    %86 = vector.shape_cast %85 : vector<1x128x128xf32> to vector<128x128xf32>
    %cst_96 = arith.constant dense<0.000000e+00> : vector<256x128xf32>
    %87 = tpu.matmul %84, %86, %cst_96 {dimension_numbers = #tpu.dot_dimension_numbers<[1], [0], [0], [1], [0, 0, 1, 1], [], []>} : vector<256x128xf32>, vector<128x128xf32>, vector<256x128xf32> -> vector<256x128xf32>
    %88 = arith.addf %82, %87 : vector<256x128xf32>
    %c0_97 = arith.constant 0 : index
    %c9_98 = arith.constant 9 : index
    %c0_99 = arith.constant 0 : index
    %89 = vector.load %arg12[%c0_97, %c9_98, %c0_99] : memref<18x32x128xf32, #tpu.memory_space<vmem>>, vector<16x16x128xf32>
    %90 = vector.shape_cast %89 : vector<16x16x128xf32> to vector<256x128xf32>
    %c2_100 = arith.constant 2 : index
    %c0_101 = arith.constant 0 : index
    %c0_102 = arith.constant 0 : index
    %91 = vector.load %arg6[%c2_100, %c0_101, %c0_102] : memref<9x128x128xf32, #tpu.memory_space<vmem>>, vector<1x128x128xf32>
    %92 = vector.shape_cast %91 : vector<1x128x128xf32> to vector<128x128xf32>
    %cst_103 = arith.constant dense<0.000000e+00> : vector<256x128xf32>
    %93 = tpu.matmul %90, %92, %cst_103 {dimension_numbers = #tpu.dot_dimension_numbers<[1], [0], [0], [1], [0, 0, 1, 1], [], []>} : vector<256x128xf32>, vector<128x128xf32>, vector<256x128xf32> -> vector<256x128xf32>
    %94 = arith.addf %88, %93 : vector<256x128xf32>
    %c1_104 = arith.constant 1 : index
    %c7_105 = arith.constant 7 : index
    %c0_106 = arith.constant 0 : index
    %95 = vector.load %arg12[%c1_104, %c7_105, %c0_106] : memref<18x32x128xf32, #tpu.memory_space<vmem>>, vector<16x16x128xf32>
    %96 = vector.shape_cast %95 : vector<16x16x128xf32> to vector<256x128xf32>
    %c3_107 = arith.constant 3 : index
    %c0_108 = arith.constant 0 : index
    %c0_109 = arith.constant 0 : index
    %97 = vector.load %arg6[%c3_107, %c0_108, %c0_109] : memref<9x128x128xf32, #tpu.memory_space<vmem>>, vector<1x128x128xf32>
    %98 = vector.shape_cast %97 : vector<1x128x128xf32> to vector<128x128xf32>
    %cst_110 = arith.constant dense<0.000000e+00> : vector<256x128xf32>
    %99 = tpu.matmul %96, %98, %cst_110 {dimension_numbers = #tpu.dot_dimension_numbers<[1], [0], [0], [1], [0, 0, 1, 1], [], []>} : vector<256x128xf32>, vector<128x128xf32>, vector<256x128xf32> -> vector<256x128xf32>
    %100 = arith.addf %94, %99 : vector<256x128xf32>
    %c1_111 = arith.constant 1 : index
    %c8_112 = arith.constant 8 : index
    %c0_113 = arith.constant 0 : index
    %101 = vector.load %arg12[%c1_111, %c8_112, %c0_113] : memref<18x32x128xf32, #tpu.memory_space<vmem>>, vector<16x16x128xf32>
    %102 = vector.shape_cast %101 : vector<16x16x128xf32> to vector<256x128xf32>
    %c4_114 = arith.constant 4 : index
    %c0_115 = arith.constant 0 : index
    %c0_116 = arith.constant 0 : index
    %103 = vector.load %arg6[%c4_114, %c0_115, %c0_116] : memref<9x128x128xf32, #tpu.memory_space<vmem>>, vector<1x128x128xf32>
    %104 = vector.shape_cast %103 : vector<1x128x128xf32> to vector<128x128xf32>
    %cst_117 = arith.constant dense<0.000000e+00> : vector<256x128xf32>
    %105 = tpu.matmul %102, %104, %cst_117 {dimension_numbers = #tpu.dot_dimension_numbers<[1], [0], [0], [1], [0, 0, 1, 1], [], []>} : vector<256x128xf32>, vector<128x128xf32>, vector<256x128xf32> -> vector<256x128xf32>
    %106 = arith.addf %100, %105 : vector<256x128xf32>
    %c1_118 = arith.constant 1 : index
    %c9_119 = arith.constant 9 : index
    %c0_120 = arith.constant 0 : index
    %107 = vector.load %arg12[%c1_118, %c9_119, %c0_120] : memref<18x32x128xf32, #tpu.memory_space<vmem>>, vector<16x16x128xf32>
    %108 = vector.shape_cast %107 : vector<16x16x128xf32> to vector<256x128xf32>
    %c5_121 = arith.constant 5 : index
    %c0_122 = arith.constant 0 : index
    %c0_123 = arith.constant 0 : index
    %109 = vector.load %arg6[%c5_121, %c0_122, %c0_123] : memref<9x128x128xf32, #tpu.memory_space<vmem>>, vector<1x128x128xf32>
    %110 = vector.shape_cast %109 : vector<1x128x128xf32> to vector<128x128xf32>
    %cst_124 = arith.constant dense<0.000000e+00> : vector<256x128xf32>
    %111 = tpu.matmul %108, %110, %cst_124 {dimension_numbers = #tpu.dot_dimension_numbers<[1], [0], [0], [1], [0, 0, 1, 1], [], []>} : vector<256x128xf32>, vector<128x128xf32>, vector<256x128xf32> -> vector<256x128xf32>
    %112 = arith.addf %106, %111 : vector<256x128xf32>
    %c2_125 = arith.constant 2 : index
    %c7_126 = arith.constant 7 : index
    %c0_127 = arith.constant 0 : index
    %113 = vector.load %arg12[%c2_125, %c7_126, %c0_127] : memref<18x32x128xf32, #tpu.memory_space<vmem>>, vector<16x16x128xf32>
    %114 = vector.shape_cast %113 : vector<16x16x128xf32> to vector<256x128xf32>
    %c6_128 = arith.constant 6 : index
    %c0_129 = arith.constant 0 : index
    %c0_130 = arith.constant 0 : index
    %115 = vector.load %arg6[%c6_128, %c0_129, %c0_130] : memref<9x128x128xf32, #tpu.memory_space<vmem>>, vector<1x128x128xf32>
    %116 = vector.shape_cast %115 : vector<1x128x128xf32> to vector<128x128xf32>
    %cst_131 = arith.constant dense<0.000000e+00> : vector<256x128xf32>
    %117 = tpu.matmul %114, %116, %cst_131 {dimension_numbers = #tpu.dot_dimension_numbers<[1], [0], [0], [1], [0, 0, 1, 1], [], []>} : vector<256x128xf32>, vector<128x128xf32>, vector<256x128xf32> -> vector<256x128xf32>
    %118 = arith.addf %112, %117 : vector<256x128xf32>
    %c2_132 = arith.constant 2 : index
    %c8_133 = arith.constant 8 : index
    %c0_134 = arith.constant 0 : index
    %119 = vector.load %arg12[%c2_132, %c8_133, %c0_134] : memref<18x32x128xf32, #tpu.memory_space<vmem>>, vector<16x16x128xf32>
    %120 = vector.shape_cast %119 : vector<16x16x128xf32> to vector<256x128xf32>
    %c7_135 = arith.constant 7 : index
    %c0_136 = arith.constant 0 : index
    %c0_137 = arith.constant 0 : index
    %121 = vector.load %arg6[%c7_135, %c0_136, %c0_137] : memref<9x128x128xf32, #tpu.memory_space<vmem>>, vector<1x128x128xf32>
    %122 = vector.shape_cast %121 : vector<1x128x128xf32> to vector<128x128xf32>
    %cst_138 = arith.constant dense<0.000000e+00> : vector<256x128xf32>
    %123 = tpu.matmul %120, %122, %cst_138 {dimension_numbers = #tpu.dot_dimension_numbers<[1], [0], [0], [1], [0, 0, 1, 1], [], []>} : vector<256x128xf32>, vector<128x128xf32>, vector<256x128xf32> -> vector<256x128xf32>
    %124 = arith.addf %118, %123 : vector<256x128xf32>
    %c2_139 = arith.constant 2 : index
    %c9_140 = arith.constant 9 : index
    %c0_141 = arith.constant 0 : index
    %125 = vector.load %arg12[%c2_139, %c9_140, %c0_141] : memref<18x32x128xf32, #tpu.memory_space<vmem>>, vector<16x16x128xf32>
    %126 = vector.shape_cast %125 : vector<16x16x128xf32> to vector<256x128xf32>
    %c8_142 = arith.constant 8 : index
    %c0_143 = arith.constant 0 : index
    %c0_144 = arith.constant 0 : index
    %127 = vector.load %arg6[%c8_142, %c0_143, %c0_144] : memref<9x128x128xf32, #tpu.memory_space<vmem>>, vector<1x128x128xf32>
    %128 = vector.shape_cast %127 : vector<1x128x128xf32> to vector<128x128xf32>
    %cst_145 = arith.constant dense<0.000000e+00> : vector<256x128xf32>
    %129 = tpu.matmul %126, %128, %cst_145 {dimension_numbers = #tpu.dot_dimension_numbers<[1], [0], [0], [1], [0, 0, 1, 1], [], []>} : vector<256x128xf32>, vector<128x128xf32>, vector<256x128xf32> -> vector<256x128xf32>
    %130 = arith.addf %124, %129 : vector<256x128xf32>
    %c0_146 = arith.constant 0 : index
    %c0_147 = arith.constant 0 : index
    %131 = vector.load %arg7[%c0_146, %c0_147] : memref<1x128xf32, #tpu.memory_space<vmem>>, vector<1x128xf32>
    %132 = vector.broadcast %131 : vector<1x128xf32> to vector<256x128xf32>
    %133 = arith.addf %130, %132 : vector<256x128xf32>
    %cst_148 = arith.constant 0.000000e+00 : f32
    %134 = vector.broadcast %cst_148 : f32 to vector<256x128xf32>
    %135 = arith.maximumf %133, %134 : vector<256x128xf32>
    %136 = vector.shape_cast %135 : vector<256x128xf32> to vector<16x16x128xf32>
    %c1_149 = arith.constant 1 : index
    %c8_150 = arith.constant 8 : index
    %c0_151 = arith.constant 0 : index
    %137 = vector.load %arg13[%c1_149, %c8_150, %c0_151] : memref<18x32x128xf32, #tpu.memory_space<vmem>>, vector<16x16x128xf32>
    tpu.vector_store %arg13[%c1_149, %c8_150, %c0_151], %136 {strides = array<i32>} : memref<18x32x128xf32, #tpu.memory_space<vmem>>, vector<16x16x128xf32>,
    %c0_152 = arith.constant 0 : index
    %c7_153 = arith.constant 7 : index
    %c0_154 = arith.constant 0 : index
    %138 = vector.load %arg13[%c0_152, %c7_153, %c0_154] : memref<18x32x128xf32, #tpu.memory_space<vmem>>, vector<16x16x128xf32>
    %139 = vector.shape_cast %138 : vector<16x16x128xf32> to vector<256x128xf32>
    %c0_155 = arith.constant 0 : index
    %c0_156 = arith.constant 0 : index
    %c0_157 = arith.constant 0 : index
    %140 = vector.load %arg8[%c0_155, %c0_156, %c0_157] : memref<9x128x128xf32, #tpu.memory_space<vmem>>, vector<1x128x128xf32>
    %141 = vector.shape_cast %140 : vector<1x128x128xf32> to vector<128x128xf32>
    %cst_158 = arith.constant dense<0.000000e+00> : vector<256x128xf32>
    %142 = tpu.matmul %139, %141, %cst_158 {dimension_numbers = #tpu.dot_dimension_numbers<[1], [0], [0], [1], [0, 0, 1, 1], [], []>} : vector<256x128xf32>, vector<128x128xf32>, vector<256x128xf32> -> vector<256x128xf32>
    %c0_159 = arith.constant 0 : index
    %c8_160 = arith.constant 8 : index
    %c0_161 = arith.constant 0 : index
    %143 = vector.load %arg13[%c0_159, %c8_160, %c0_161] : memref<18x32x128xf32, #tpu.memory_space<vmem>>, vector<16x16x128xf32>
    %144 = vector.shape_cast %143 : vector<16x16x128xf32> to vector<256x128xf32>
    %c1_162 = arith.constant 1 : index
    %c0_163 = arith.constant 0 : index
    %c0_164 = arith.constant 0 : index
    %145 = vector.load %arg8[%c1_162, %c0_163, %c0_164] : memref<9x128x128xf32, #tpu.memory_space<vmem>>, vector<1x128x128xf32>
    %146 = vector.shape_cast %145 : vector<1x128x128xf32> to vector<128x128xf32>
    %cst_165 = arith.constant dense<0.000000e+00> : vector<256x128xf32>
    %147 = tpu.matmul %144, %146, %cst_165 {dimension_numbers = #tpu.dot_dimension_numbers<[1], [0], [0], [1], [0, 0, 1, 1], [], []>} : vector<256x128xf32>, vector<128x128xf32>, vector<256x128xf32> -> vector<256x128xf32>
    %148 = arith.addf %142, %147 : vector<256x128xf32>
    %c0_166 = arith.constant 0 : index
    %c9_167 = arith.constant 9 : index
    %c0_168 = arith.constant 0 : index
    %149 = vector.load %arg13[%c0_166, %c9_167, %c0_168] : memref<18x32x128xf32, #tpu.memory_space<vmem>>, vector<16x16x128xf32>
    %150 = vector.shape_cast %149 : vector<16x16x128xf32> to vector<256x128xf32>
    %c2_169 = arith.constant 2 : index
    %c0_170 = arith.constant 0 : index
    %c0_171 = arith.constant 0 : index
    %151 = vector.load %arg8[%c2_169, %c0_170, %c0_171] : memref<9x128x128xf32, #tpu.memory_space<vmem>>, vector<1x128x128xf32>
    %152 = vector.shape_cast %151 : vector<1x128x128xf32> to vector<128x128xf32>
    %cst_172 = arith.constant dense<0.000000e+00> : vector<256x128xf32>
    %153 = tpu.matmul %150, %152, %cst_172 {dimension_numbers = #tpu.dot_dimension_numbers<[1], [0], [0], [1], [0, 0, 1, 1], [], []>} : vector<256x128xf32>, vector<128x128xf32>, vector<256x128xf32> -> vector<256x128xf32>
    %154 = arith.addf %148, %153 : vector<256x128xf32>
    %c1_173 = arith.constant 1 : index
    %c7_174 = arith.constant 7 : index
    %c0_175 = arith.constant 0 : index
    %155 = vector.load %arg13[%c1_173, %c7_174, %c0_175] : memref<18x32x128xf32, #tpu.memory_space<vmem>>, vector<16x16x128xf32>
    %156 = vector.shape_cast %155 : vector<16x16x128xf32> to vector<256x128xf32>
    %c3_176 = arith.constant 3 : index
    %c0_177 = arith.constant 0 : index
    %c0_178 = arith.constant 0 : index
    %157 = vector.load %arg8[%c3_176, %c0_177, %c0_178] : memref<9x128x128xf32, #tpu.memory_space<vmem>>, vector<1x128x128xf32>
    %158 = vector.shape_cast %157 : vector<1x128x128xf32> to vector<128x128xf32>
    %cst_179 = arith.constant dense<0.000000e+00> : vector<256x128xf32>
    %159 = tpu.matmul %156, %158, %cst_179 {dimension_numbers = #tpu.dot_dimension_numbers<[1], [0], [0], [1], [0, 0, 1, 1], [], []>} : vector<256x128xf32>, vector<128x128xf32>, vector<256x128xf32> -> vector<256x128xf32>
    %160 = arith.addf %154, %159 : vector<256x128xf32>
    %c1_180 = arith.constant 1 : index
    %c8_181 = arith.constant 8 : index
    %c0_182 = arith.constant 0 : index
    %161 = vector.load %arg13[%c1_180, %c8_181, %c0_182] : memref<18x32x128xf32, #tpu.memory_space<vmem>>, vector<16x16x128xf32>
    %162 = vector.shape_cast %161 : vector<16x16x128xf32> to vector<256x128xf32>
    %c4_183 = arith.constant 4 : index
    %c0_184 = arith.constant 0 : index
    %c0_185 = arith.constant 0 : index
    %163 = vector.load %arg8[%c4_183, %c0_184, %c0_185] : memref<9x128x128xf32, #tpu.memory_space<vmem>>, vector<1x128x128xf32>
    %164 = vector.shape_cast %163 : vector<1x128x128xf32> to vector<128x128xf32>
    %cst_186 = arith.constant dense<0.000000e+00> : vector<256x128xf32>
    %165 = tpu.matmul %162, %164, %cst_186 {dimension_numbers = #tpu.dot_dimension_numbers<[1], [0], [0], [1], [0, 0, 1, 1], [], []>} : vector<256x128xf32>, vector<128x128xf32>, vector<256x128xf32> -> vector<256x128xf32>
    %166 = arith.addf %160, %165 : vector<256x128xf32>
    %c1_187 = arith.constant 1 : index
    %c9_188 = arith.constant 9 : index
    %c0_189 = arith.constant 0 : index
    %167 = vector.load %arg13[%c1_187, %c9_188, %c0_189] : memref<18x32x128xf32, #tpu.memory_space<vmem>>, vector<16x16x128xf32>
    %168 = vector.shape_cast %167 : vector<16x16x128xf32> to vector<256x128xf32>
    %c5_190 = arith.constant 5 : index
    %c0_191 = arith.constant 0 : index
    %c0_192 = arith.constant 0 : index
    %169 = vector.load %arg8[%c5_190, %c0_191, %c0_192] : memref<9x128x128xf32, #tpu.memory_space<vmem>>, vector<1x128x128xf32>
    %170 = vector.shape_cast %169 : vector<1x128x128xf32> to vector<128x128xf32>
    %cst_193 = arith.constant dense<0.000000e+00> : vector<256x128xf32>
    %171 = tpu.matmul %168, %170, %cst_193 {dimension_numbers = #tpu.dot_dimension_numbers<[1], [0], [0], [1], [0, 0, 1, 1], [], []>} : vector<256x128xf32>, vector<128x128xf32>, vector<256x128xf32> -> vector<256x128xf32>
    %172 = arith.addf %166, %171 : vector<256x128xf32>
    %c2_194 = arith.constant 2 : index
    %c7_195 = arith.constant 7 : index
    %c0_196 = arith.constant 0 : index
    %173 = vector.load %arg13[%c2_194, %c7_195, %c0_196] : memref<18x32x128xf32, #tpu.memory_space<vmem>>, vector<16x16x128xf32>
    %174 = vector.shape_cast %173 : vector<16x16x128xf32> to vector<256x128xf32>
    %c6_197 = arith.constant 6 : index
    %c0_198 = arith.constant 0 : index
    %c0_199 = arith.constant 0 : index
    %175 = vector.load %arg8[%c6_197, %c0_198, %c0_199] : memref<9x128x128xf32, #tpu.memory_space<vmem>>, vector<1x128x128xf32>
    %176 = vector.shape_cast %175 : vector<1x128x128xf32> to vector<128x128xf32>
    %cst_200 = arith.constant dense<0.000000e+00> : vector<256x128xf32>
    %177 = tpu.matmul %174, %176, %cst_200 {dimension_numbers = #tpu.dot_dimension_numbers<[1], [0], [0], [1], [0, 0, 1, 1], [], []>} : vector<256x128xf32>, vector<128x128xf32>, vector<256x128xf32> -> vector<256x128xf32>
    %178 = arith.addf %172, %177 : vector<256x128xf32>
    %c2_201 = arith.constant 2 : index
    %c8_202 = arith.constant 8 : index
    %c0_203 = arith.constant 0 : index
    %179 = vector.load %arg13[%c2_201, %c8_202, %c0_203] : memref<18x32x128xf32, #tpu.memory_space<vmem>>, vector<16x16x128xf32>
    %180 = vector.shape_cast %179 : vector<16x16x128xf32> to vector<256x128xf32>
    %c7_204 = arith.constant 7 : index
    %c0_205 = arith.constant 0 : index
    %c0_206 = arith.constant 0 : index
    %181 = vector.load %arg8[%c7_204, %c0_205, %c0_206] : memref<9x128x128xf32, #tpu.memory_space<vmem>>, vector<1x128x128xf32>
    %182 = vector.shape_cast %181 : vector<1x128x128xf32> to vector<128x128xf32>
    %cst_207 = arith.constant dense<0.000000e+00> : vector<256x128xf32>
    %183 = tpu.matmul %180, %182, %cst_207 {dimension_numbers = #tpu.dot_dimension_numbers<[1], [0], [0], [1], [0, 0, 1, 1], [], []>} : vector<256x128xf32>, vector<128x128xf32>, vector<256x128xf32> -> vector<256x128xf32>
    %184 = arith.addf %178, %183 : vector<256x128xf32>
    %c2_208 = arith.constant 2 : index
    %c9_209 = arith.constant 9 : index
    %c0_210 = arith.constant 0 : index
    %185 = vector.load %arg13[%c2_208, %c9_209, %c0_210] : memref<18x32x128xf32, #tpu.memory_space<vmem>>, vector<16x16x128xf32>
    %186 = vector.shape_cast %185 : vector<16x16x128xf32> to vector<256x128xf32>
    %c8_211 = arith.constant 8 : index
    %c0_212 = arith.constant 0 : index
    %c0_213 = arith.constant 0 : index
    %187 = vector.load %arg8[%c8_211, %c0_212, %c0_213] : memref<9x128x128xf32, #tpu.memory_space<vmem>>, vector<1x128x128xf32>
    %188 = vector.shape_cast %187 : vector<1x128x128xf32> to vector<128x128xf32>
    %cst_214 = arith.constant dense<0.000000e+00> : vector<256x128xf32>
    %189 = tpu.matmul %186, %188, %cst_214 {dimension_numbers = #tpu.dot_dimension_numbers<[1], [0], [0], [1], [0, 0, 1, 1], [], []>} : vector<256x128xf32>, vector<128x128xf32>, vector<256x128xf32> -> vector<256x128xf32>
    %190 = arith.addf %184, %189 : vector<256x128xf32>
    %c0_215 = arith.constant 0 : index
    %c0_216 = arith.constant 0 : index
    %191 = vector.load %arg9[%c0_215, %c0_216] : memref<1x128xf32, #tpu.memory_space<vmem>>, vector<1x128xf32>
    %192 = vector.broadcast %191 : vector<1x128xf32> to vector<256x128xf32>
    %193 = arith.addf %190, %192 : vector<256x128xf32>
    %194 = vector.shape_cast %193 : vector<256x128xf32> to vector<16x16x128xf32>
    %c0_217 = arith.constant 0 : index
    %c0_218 = arith.constant 0 : index
    %c0_219 = arith.constant 0 : index
    %c0_220 = arith.constant 0 : index
    %195 = vector.load %arg10[%c0_217, %c0_218, %c0_219, %c0_220] : memref<1x16x16x128xf32, #tpu.memory_space<vmem>>, vector<1x16x16x128xf32>
    %196 = vector.shape_cast %195 : vector<1x16x16x128xf32> to vector<16x16x128xf32>
    %197 = vector.shape_cast %194 : vector<16x16x128xf32> to vector<1x16x16x128xf32>
    tpu.vector_store %arg10[%c0_217, %c0_218, %c0_219, %c0_220], %197 {strides = array<i32>} : memref<1x16x16x128xf32, #tpu.memory_space<vmem>>, vector<1x16x16x128xf32>,
    return
  }
  func.func @transform_0(%arg0: i32) -> (i32, i32, i32, i32) {
    %c0_i32 = arith.constant 0 : i32
    %c0_i32_0 = arith.constant 0 : i32
    %c0_i32_1 = arith.constant 0 : i32
    %c0_i32_2 = arith.constant 0 : i32
    return %arg0, %c0_i32, %c0_i32_0, %c0_i32_1 : i32, i32, i32, i32
  }
  func.func @transform_1(%arg0: i32) -> (i32, i32) {
    %c0_i32 = arith.constant 0 : i32
    %c0_i32_0 = arith.constant 0 : i32
    %c0_i32_1 = arith.constant 0 : i32
    return %c0_i32, %c0_i32_0 : i32, i32
  }
  func.func @transform_2(%arg0: i32) -> (i32, i32) {
    %c0_i32 = arith.constant 0 : i32
    %c0_i32_0 = arith.constant 0 : i32
    %c0_i32_1 = arith.constant 0 : i32
    return %c0_i32, %c0_i32_0 : i32, i32
  }
  func.func @transform_3(%arg0: i32) -> (i32, i32, i32) {
    %c0_i32 = arith.constant 0 : i32
    %c0_i32_0 = arith.constant 0 : i32
    %c0_i32_1 = arith.constant 0 : i32
    %c0_i32_2 = arith.constant 0 : i32
    return %c0_i32, %c0_i32_0, %c0_i32_1 : i32, i32, i32
  }
  func.func @transform_4(%arg0: i32) -> (i32, i32) {
    %c0_i32 = arith.constant 0 : i32
    %c0_i32_0 = arith.constant 0 : i32
    %c0_i32_1 = arith.constant 0 : i32
    return %c0_i32, %c0_i32_0 : i32, i32
  }
  func.func @transform_5(%arg0: i32) -> (i32, i32, i32) {
    %c0_i32 = arith.constant 0 : i32
    %c0_i32_0 = arith.constant 0 : i32
    %c0_i32_1 = arith.constant 0 : i32
    %c0_i32_2 = arith.constant 0 : i32
    return %c0_i32, %c0_i32_0, %c0_i32_1 : i32, i32, i32
  }
  func.func @transform_6(%arg0: i32) -> (i32, i32) {
    %c0_i32 = arith.constant 0 : i32
    %c0_i32_0 = arith.constant 0 : i32
    %c0_i32_1 = arith.constant 0 : i32
    return %c0_i32, %c0_i32_0 : i32, i32
  }
  func.func @transform_7(%arg0: i32) -> (i32, i32, i32) {
    %c0_i32 = arith.constant 0 : i32
    %c0_i32_0 = arith.constant 0 : i32
    %c0_i32_1 = arith.constant 0 : i32
    %c0_i32_2 = arith.constant 0 : i32
    return %c0_i32, %c0_i32_0, %c0_i32_1 : i32, i32, i32
  }
  func.func @transform_8(%arg0: i32) -> (i32, i32) {
    %c0_i32 = arith.constant 0 : i32
    %c0_i32_0 = arith.constant 0 : i32
    %c0_i32_1 = arith.constant 0 : i32
    return %c0_i32, %c0_i32_0 : i32, i32
  }
  func.func @transform_9(%arg0: i32) -> (i32, i32, i32, i32) {
    %c0_i32 = arith.constant 0 : i32
    %c0_i32_0 = arith.constant 0 : i32
    %c0_i32_1 = arith.constant 0 : i32
    %c0_i32_2 = arith.constant 0 : i32
    return %arg0, %c0_i32, %c0_i32_0, %c0_i32_1 : i32, i32, i32, i32
  }
}

</mosaic_0001>

<llo_original>
// kernel: espcn_forward.1
$region0: #{espcn_forward.1}
  #allocation0 [shape = 'u32[]', space=smem, size = 0x4, offset = 0x4, fixed_abs, tag = 'smem constant byte address 0x4 - core index']
  #allocation1 [shape = 'u32[72,128]{1,0:T(1,128)}', space=vmem, size = 0x9000, scoped, tag = 'internal scratch']
  #allocation2 [shape = 'f32[18,32,128]{2,1,0:T(8,128)}', space=vmem, size = 0x48000, scoped, tag = 'scratch operand']
  #allocation3 [shape = 'f32[18,32,128]{2,1,0:T(8,128)}', space=vmem, size = 0x48000, scoped, tag = 'scratch operand']
  #allocation4 [shape = 'f32[18,32,128]{2,1,0:T(8,128)}', space=vmem, size = 0x48000, scoped, tag = 'scratch operand']
  %s0 = inlined_call_operand.vmem [shape: f32[2,16,16,128], index: 0, kind: input, shape index: {}]
  %s1 = inlined_call_operand.vmem [shape: f32[128,128], index: 1, kind: input, shape index: {}]
  %s2 = inlined_call_operand.vmem [shape: f32[1,128], index: 2, kind: input, shape index: {}]
  %s3 = inlined_call_operand.vmem [shape: f32[9,128,128], index: 3, kind: input, shape index: {}]
  %s4 = inlined_call_operand.vmem [shape: f32[1,128], index: 4, kind: input, shape index: {}]
  %s5 = inlined_call_operand.vmem [shape: f32[9,128,128], index: 5, kind: input, shape index: {}]
  %s6 = inlined_call_operand.vmem [shape: f32[1,128], index: 6, kind: input, shape index: {}]
  %s7 = inlined_call_operand.vmem [shape: f32[9,128,128], index: 7, kind: input, shape index: {}]
  %s8 = inlined_call_operand.vmem [shape: f32[1,128], index: 8, kind: input, shape index: {}]
  %s9 = inlined_call_operand.vmem [shape: f32[2,16,16,128], index: 9, kind: output, shape index: {}]
  %s10 = sld [smem:[#allocation0]]
  $region69: #{espcn_forward.1} parent=0
    _
  %s12 = ssub.s32 1, %s10
  %s13 = scalar_select 0, %s12, %s10
  loop: start=0, step=1, limit=4
  $region2: #{espcn_forward.1} parent=0 // loop_pre_header
    _
  $region3: #{espcn_forward.1} parent=0 // loop_header
    %s15 = sphi 0, %s19
    %p16 = scmp.ge.s32.totalorder %s15, 4
    %s25 = sphi 0, %s27
    %s28 = sphi 0, %s25
    %s29 = sphi 0, %s28
    %s45 = sphi 0, %s29
    %s49 = sphi 0, %s49
    %s51 = sphi 0, %s49
    %s52 = sphi 0, %s51
    %s66 = sphi 0, %s52
    %s70 = sphi 0, %s70
    %s72 = sphi 0, %s70
    %s73 = sphi 0, %s72
    %s87 = sphi 0, %s73
    %s91 = sphi 0, %s91
    %s93 = sphi 0, %s91
    %s94 = sphi 0, %s93
    %s108 = sphi 0, %s94
    %s112 = sphi 0, %s112
    %s114 = sphi 0, %s112
    %s115 = sphi 0, %s114
    %s129 = sphi 0, %s115
    %s133 = sphi 0, %s133
    %s135 = sphi 0, %s133
    %s136 = sphi 0, %s135
    %s150 = sphi 0, %s136
    %s154 = sphi 0, %s154
    %s156 = sphi 0, %s154
    %s157 = sphi 0, %s156
    %s171 = sphi 0, %s157
    %s175 = sphi 0, %s175
    %s177 = sphi 0, %s175
    %s178 = sphi 0, %s177
    %s192 = sphi 0, %s178
    %s196 = sphi 0, %s196
    %s198 = sphi 0, %s196
    %s199 = sphi 0, %s198
    %s213 = sphi 0, %s199
    %s219 = sphi 0, %s221
    %s222 = sphi 0, %s219
    %s223 = sphi 0, %s222
    %s239 = sphi 0, %s223
  $region4: #{espcn_forward.1} parent=0 // loop_header_branch
    %18 = sbr.rel (%p16) target = $region8
  $region5: #{espcn_forward.1} parent=0 // loop_body
    %s20 = ssub.s32 %s15, 1
    %s21 = ssub.s32 %s15, 2
    %s22 = sadd.s32 %s15, 1
    %s23 = ssub.s32 %s15, %s22
    %p24 = scmp.eq.s32.totalorder %s23, 0
    %s26 = sadd.s32 %s25, 1
    %s27 = scalar_select %p24, %s25, %s26
    %p30 = pneg %p24
    %p31 = scmp.eq.s32.totalorder %s15, 1
    %p32 = por %p30, %p31
    %p33 = scmp.ne.s32.totalorder %s25, %s28
    %p34 = scmp.eq.s32.totalorder %s15, 0
    %p35 = por %p33, %p34
    %p36 = scmp.ne.s32.totalorder %s25, %s28
    %p37 = scmp.eq.s32.totalorder %s20, 1
    %p38 = por %p36, %p37
    %p39 = scmp.ne.s32.totalorder %s28, %s29
    %p40 = scmp.eq.s32.totalorder %s20, 0
    %p41 = por %p39, %p40
    %p42 = scmp.ne.s32.totalorder %s28, %s29
    %p43 = scmp.eq.s32.totalorder %s21, 1
    %p44 = por %p42, %p43
    %p46 = scmp.ne.s32.totalorder %s29, %s45
    %p47 = scmp.eq.s32.totalorder %s21, 0
    %p48 = por %p46, %p47
    %s50 = sadd.s32 %s49, 1
    %p53 = scmp.eq.s32.totalorder %s15, 1
    %p54 = scmp.ne.s32.totalorder %s49, %s51
    %p55 = scmp.eq.s32.totalorder %s15, 0
    %p56 = por %p54, %p55
    %p57 = scmp.ne.s32.totalorder %s49, %s51
    %p58 = scmp.eq.s32.totalorder %s20, 1
    %p59 = por %p57, %p58
    %p60 = scmp.ne.s32.totalorder %s51, %s52
    %p61 = scmp.eq.s32.totalorder %s20, 0
    %p62 = por %p60, %p61
    %p63 = scmp.ne.s32.totalorder %s51, %s52
    %p64 = scmp.eq.s32.totalorder %s21, 1
    %p65 = por %p63, %p64
    %p67 = scmp.ne.s32.totalorder %s52, %s66
    %p68 = scmp.eq.s32.totalorder %s21, 0
    %p69 = por %p67, %p68
    %s71 = sadd.s32 %s70, 1
    %p74 = scmp.eq.s32.totalorder %s15, 1
    %p75 = scmp.ne.s32.totalorder %s70, %s72
    %p76 = scmp.eq.s32.totalorder %s15, 0
    %p77 = por %p75, %p76
    %p78 = scmp.ne.s32.totalorder %s70, %s72
    %p79 = scmp.eq.s32.totalorder %s20, 1
    %p80 = por %p78, %p79
    %p81 = scmp.ne.s32.totalorder %s72, %s73
    %p82 = scmp.eq.s32.totalorder %s20, 0
    %p83 = por %p81, %p82
    %p84 = scmp.ne.s32.totalorder %s72, %s73
    %p85 = scmp.eq.s32.totalorder %s21, 1
    %p86 = por %p84, %p85
    %p88 = scmp.ne.s32.totalorder %s73, %s87
    %p89 = scmp.eq.s32.totalorder %s21, 0
    %p90 = por %p88, %p89
    %s92 = sadd.s32 %s91, 1
    %p95 = scmp.eq.s32.totalorder %s15, 1
    %p96 = scmp.ne.s32.totalorder %s91, %s93
    %p97 = scmp.eq.s32.totalorder %s15, 0
    %p98 = por %p96, %p97
    %p99 = scmp.ne.s32.totalorder %s91, %s93
    %p100 = scmp.eq.s32.totalorder %s20, 1
    %p101 = por %p99, %p100
    %p102 = scmp.ne.s32.totalorder %s93, %s94
    %p103 = scmp.eq.s32.totalorder %s20, 0
    %p104 = por %p102, %p103
    %p105 = scmp.ne.s32.totalorder %s93, %s94
    %p106 = scmp.eq.s32.totalorder %s21, 1
    %p107 = por %p105, %p106
    %p109 = scmp.ne.s32.totalorder %s94, %s108
    %p110 = scmp.eq.s32.totalorder %s21, 0
    %p111 = por %p109, %p110
    %s113 = sadd.s32 %s112, 1
    %p116 = scmp.eq.s32.totalorder %s15, 1
    %p117 = scmp.ne.s32.totalorder %s112, %s114
    %p118 = scmp.eq.s32.totalorder %s15, 0
    %p119 = por %p117, %p118
    %p120 = scmp.ne.s32.totalorder %s112, %s114
    %p121 = scmp.eq.s32.totalorder %s20, 1
    %p122 = por %p120, %p121
    %p123 = scmp.ne.s32.totalorder %s114, %s115
    %p124 = scmp.eq.s32.totalorder %s20, 0
    %p125 = por %p123, %p124
    %p126 = scmp.ne.s32.totalorder %s114, %s115
    %p127 = scmp.eq.s32.totalorder %s21, 1
    %p128 = por %p126, %p127
    %p130 = scmp.ne.s32.totalorder %s115, %s129
    %p131 = scmp.eq.s32.totalorder %s21, 0
    %p132 = por %p130, %p131
    %s134 = sadd.s32 %s133, 1
    %p137 = scmp.eq.s32.totalorder %s15, 1
    %p138 = scmp.ne.s32.totalorder %s133, %s135
    %p139 = scmp.eq.s32.totalorder %s15, 0
    %p140 = por %p138, %p139
    %p141 = scmp.ne.s32.totalorder %s133, %s135
    %p142 = scmp.eq.s32.totalorder %s20, 1
    %p143 = por %p141, %p142
    %p144 = scmp.ne.s32.totalorder %s135, %s136
    %p145 = scmp.eq.s32.totalorder %s20, 0
    %p146 = por %p144, %p145
    %p147 = scmp.ne.s32.totalorder %s135, %s136
    %p148 = scmp.eq.s32.totalorder %s21, 1
    %p149 = por %p147, %p148
    %p151 = scmp.ne.s32.totalorder %s136, %s150
    %p152 = scmp.eq.s32.totalorder %s21, 0
    %p153 = por %p151, %p152
    %s155 = sadd.s32 %s154, 1
    %p158 = scmp.eq.s32.totalorder %s15, 1
    %p159 = scmp.ne.s32.totalorder %s154, %s156
    %p160 = scmp.eq.s32.totalorder %s15, 0
    %p161 = por %p159, %p160
    %p162 = scmp.ne.s32.totalorder %s154, %s156
    %p163 = scmp.eq.s32.totalorder %s20, 1
    %p164 = por %p162, %p163
    %p165 = scmp.ne.s32.totalorder %s156, %s157
    %p166 = scmp.eq.s32.totalorder %s20, 0
    %p167 = por %p165, %p166
    %p168 = scmp.ne.s32.totalorder %s156, %s157
    %p169 = scmp.eq.s32.totalorder %s21, 1
    %p170 = por %p168, %p169
    %p172 = scmp.ne.s32.totalorder %s157, %s171
    %p173 = scmp.eq.s32.totalorder %s21, 0
    %p174 = por %p172, %p173
    %s176 = sadd.s32 %s175, 1
    %p179 = scmp.eq.s32.totalorder %s15, 1
    %p180 = scmp.ne.s32.totalorder %s175, %s177
    %p181 = scmp.eq.s32.totalorder %s15, 0
    %p182 = por %p180, %p181
    %p183 = scmp.ne.s32.totalorder %s175, %s177
    %p184 = scmp.eq.s32.totalorder %s20, 1
    %p185 = por %p183, %p184
    %p186 = scmp.ne.s32.totalorder %s177, %s178
    %p187 = scmp.eq.s32.totalorder %s20, 0
    %p188 = por %p186, %p187
    %p189 = scmp.ne.s32.totalorder %s177, %s178
    %p190 = scmp.eq.s32.totalorder %s21, 1
    %p191 = por %p189, %p190
    %p193 = scmp.ne.s32.totalorder %s178, %s192
    %p194 = scmp.eq.s32.totalorder %s21, 0
    %p195 = por %p193, %p194
    %s197 = sadd.s32 %s196, 1
    %p200 = scmp.eq.s32.totalorder %s15, 1
    %p201 = scmp.ne.s32.totalorder %s196, %s198
    %p202 = scmp.eq.s32.totalorder %s15, 0
    %p203 = por %p201, %p202
    %p204 = scmp.ne.s32.totalorder %s196, %s198
    %p205 = scmp.eq.s32.totalorder %s20, 1
    %p206 = por %p204, %p205
    %p207 = scmp.ne.s32.totalorder %s198, %s199
    %p208 = scmp.eq.s32.totalorder %s20, 0
    %p209 = por %p207, %p208
    %p210 = scmp.ne.s32.totalorder %s198, %s199
    %p211 = scmp.eq.s32.totalorder %s21, 1
    %p212 = por %p210, %p211
    %p214 = scmp.ne.s32.totalorder %s199, %s213
    %p215 = scmp.eq.s32.totalorder %s21, 0
    %p216 = por %p214, %p215
    %s217 = ssub.s32 %s15, %s22
    %p218 = scmp.eq.s32.totalorder %s217, 0
    %s220 = sadd.s32 %s219, 1
    %s221 = scalar_select %p218, %s219, %s220
    %p224 = pneg %p218
    %p225 = scmp.eq.s32.totalorder %s15, 1
    %p226 = por %p224, %p225
    %p227 = scmp.ne.s32.totalorder %s219, %s222
    %p228 = scmp.eq.s32.totalorder %s15, 0
    %p229 = por %p227, %p228
    %p230 = scmp.ne.s32.totalorder %s219, %s222
    %p231 = scmp.eq.s32.totalorder %s20, 1
    %p232 = por %p230, %p231
    %p233 = scmp.ne.s32.totalorder %s222, %s223
    %p234 = scmp.eq.s32.totalorder %s20, 0
    %p235 = por %p233, %p234
    %p236 = scmp.ne.s32.totalorder %s222, %s223
    %p237 = scmp.eq.s32.totalorder %s21, 1
    %p238 = por %p236, %p237
    %p240 = scmp.ne.s32.totalorder %s223, %s239
    %p241 = scmp.eq.s32.totalorder %s21, 0
    %p242 = por %p240, %p241
    %p243 = scmp.le.s32.totalorder 1, %s15
    %p244 = scmp.lt.s32.totalorder %s15, 3
    %p245 = pnand %p243, %p244
    %p246 = pneg %p245
    // Predicated region
    $region9: #{espcn_forward.1} parent=5 // pred_check
      _
    $region10: #{espcn_forward.1} parent=5 // pred_check_branch
      %248 = sbr.rel (%p245) target = $region12
    $region11: #{espcn_forward.1} parent=5 // pred_region
      %s249 = ssub.s32 %s15, 1
      // Predicated region
      $region13: #{espcn_forward.1} parent=11 // pred_check
        %p250 = pneg %p62
      $region14: #{espcn_forward.1} parent=11 // pred_check_branch
        %252 = sbr.rel (%p250) target = $region16
      $region15: #{espcn_forward.1} parent=11 // pred_region
        _
      $region16: #{espcn_forward.1} parent=11 // pred_fallthru
        _
      // Predicated region
      $region17: #{espcn_forward.1} parent=11 // pred_check
        %p253 = pneg %p83
      $region18: #{espcn_forward.1} parent=11 // pred_check_branch
        %255 = sbr.rel (%p253) target = $region20
      $region19: #{espcn_forward.1} parent=11 // pred_region
        _
      $region20: #{espcn_forward.1} parent=11 // pred_fallthru
        _
      // Predicated region
      $region21: #{espcn_forward.1} parent=11 // pred_check
        %p256 = pneg %p104
      $region22: #{espcn_forward.1} parent=11 // pred_check_branch
        %258 = sbr.rel (%p256) target = $region24
      $region23: #{espcn_forward.1} parent=11 // pred_region
        _
      $region24: #{espcn_forward.1} parent=11 // pred_fallthru
        _
      // Predicated region
      $region25: #{espcn_forward.1} parent=11 // pred_check
        %p259 = pneg %p125
      $region26: #{espcn_forward.1} parent=11 // pred_check_branch
        %261 = sbr.rel (%p259) target = $region28
      $region27: #{espcn_forward.1} parent=11 // pred_region
        _
      $region28: #{espcn_forward.1} parent=11 // pred_fallthru
        _
      // Predicated region
      $region29: #{espcn_forward.1} parent=11 // pred_check
        %p262 = pneg %p146
      $region30: #{espcn_forward.1} parent=11 // pred_check_branch
        %264 = sbr.rel (%p262) target = $region32
      $region31: #{espcn_forward.1} parent=11 // pred_region
        _
      $region32: #{espcn_forward.1} parent=11 // pred_fallthru
        _
      // Predicated region
      $region33: #{espcn_forward.1} parent=11 // pred_check
        %p265 = pneg %p167
      $region34: #{espcn_forward.1} parent=11 // pred_check_branch
        %267 = sbr.rel (%p265) target = $region36
      $region35: #{espcn_forward.1} parent=11 // pred_region
        _
      $region36: #{espcn_forward.1} parent=11 // pred_fallthru
        _
      // Predicated region
      $region37: #{espcn_forward.1} parent=11 // pred_check
        %p268 = pneg %p188
      $region38: #{espcn_forward.1} parent=11 // pred_check_branch
        %270 = sbr.rel (%p268) target = $region40
      $region39: #{espcn_forward.1} parent=11 // pred_region
        _
      $region40: #{espcn_forward.1} parent=11 // pred_fallthru
        _
      // Predicated region
      $region41: #{espcn_forward.1} parent=11 // pred_check
        %p271 = pneg %p209
      $region42: #{espcn_forward.1} parent=11 // pred_check_branch
        %273 = sbr.rel (%p271) target = $region44
      $region43: #{espcn_forward.1} parent=11 // pred_region
        _
      $region44: #{espcn_forward.1} parent=11 // pred_fallthru
        _
    $region12: #{espcn_forward.1} parent=5 // pred_fallthru
      _
    %p274 = scmp.lt.s32.totalorder %s15, 2
    // Predicated region
    $region45: #{espcn_forward.1} parent=5 // pred_check
      %p275 = pneg %p274
    $region46: #{espcn_forward.1} parent=5 // pred_check_branch
      %277 = sbr.rel (%p275) target = $region48
    $region47: #{espcn_forward.1} parent=5 // pred_region
      // Predicated region
      $region49: #{espcn_forward.1} parent=47 // pred_check
        %p278 = pneg %p35
      $region50: #{espcn_forward.1} parent=47 // pred_check_branch
        %280 = sbr.rel (%p278) target = $region52
      $region51: #{espcn_forward.1} parent=47 // pred_region
        %p281 = scmp.lt.s32.totalorder %s15, 1
        %s282 = scalar_select %p281, %s15, 1
        %s283 = smul.addr %s282, 32
        %s284 = smul.addr %s283, 8
        %s285 = scalar_lea.vmem %s0, %s284
      $region52: #{espcn_forward.1} parent=47 // pred_fallthru
        _
    $region48: #{espcn_forward.1} parent=5 // pred_fallthru
      _
    %p286 = scmp.le.s32.totalorder 1, %s15
    %p287 = scmp.lt.s32.totalorder %s15, 3
    %p288 = pnand %p286, %p287
    %p289 = pneg %p288
    // Predicated region
    $region53: #{espcn_forward.1} parent=5 // pred_check
      _
    $region54: #{espcn_forward.1} parent=5 // pred_check_branch
      %291 = sbr.rel (%p288) target = $region56
    $region55: #{espcn_forward.1} parent=5 // pred_region
      %s292 = ssub.s32 %s15, 1
      %p293 = scmp.lt.s32.totalorder %s20, 1
      %s294 = scalar_select %p293, %s20, 1
      %s295 = smul.addr %s294, 32
      %s296 = smul.addr %s295, 8
      %s297 = scalar_lea.vmem %s0, %s296
      %p298 = pneg %p41
      %p299 = pneg %p38
      %p300 = pneg %p62
      %p301 = pneg %p59
      %p302 = pneg %p83
      %p303 = pneg %p80
      %p304 = pneg %p104
      %p305 = pneg %p101
      %p306 = pneg %p125
      %p307 = pneg %p122
      %p308 = pneg %p146
      %p309 = pneg %p143
      %p310 = pneg %p167
      %p311 = pneg %p164
      %p312 = pneg %p188
      %p313 = pneg %p185
      %p314 = pneg %p209
      %p315 = pneg %p206
      %p316 = pneg %p235
      %p317 = pneg %p232
      %p318 = scmp.lt.s32.totalorder %s20, 1
      %s319 = scalar_select %p318, %s20, 1
      %s320 = smul.addr %s319, 32
      %s321 = smul.addr %s320, 8
      %s322 = scalar_lea.vmem %s9, %s321
      %p323 = scmp.lt.s32.totalorder %s20, 1
      %s324 = scalar_select %p323, %s20, 1
      %s325 = smul.addr %s324, 32
      %s326 = smul.addr %s325, 8
      %s327 = scalar_lea.vmem %s0, %s326
      %p328 = scmp.lt.s32.totalorder %s20, 1
      %s329 = scalar_select %p328, %s20, 1
      %s330 = smul.addr %s329, 32
      %s331 = smul.addr %s330, 8
      %s332 = scalar_lea.vmem %s9, %s331
      %333 = vst [vmem:[#allocation2] sm:$0xff] 0.0
      %334 = vst [vmem:[#allocation2 + $0x8] sm:$0xff] 0.0
      %335 = vst [vmem:[#allocation2 + $0x10] sm:$0xff] 0.0
      %336 = vst [vmem:[#allocation2 + $0x18] sm:$0xff] 0.0
      %337 = vst [vmem:[#allocation2 + $0x20] sm:$0xff] 0.0
      %338 = vst [vmem:[#allocation2 + $0x28] sm:$0xff] 0.0
      %339 = vst [vmem:[#allocation2 + $0x30] sm:$0xff] 0.0
      %340 = vst [vmem:[#allocation2 + $0x38] sm:$0xff] 0.0
      %341 = vst [vmem:[#allocation2 + $0x40] sm:$0xff] 0.0
      %342 = vst [vmem:[#allocation2 + $0x48] sm:$0xff] 0.0
      %343 = vst [vmem:[#allocation2 + $0x50] sm:$0xff] 0.0
      %344 = vst [vmem:[#allocation2 + $0x58] sm:$0xff] 0.0
      %345 = vst [vmem:[#allocation2 + $0x60] sm:$0xff] 0.0
      %346 = vst [vmem:[#allocation2 + $0x68] sm:$0xff] 0.0
      %347 = vst [vmem:[#allocation2 + $0x70] sm:$0xff] 0.0
      %348 = vst [vmem:[#allocation2 + $0x78] sm:$0xff] 0.0
      %349 = vst [vmem:[#allocation2 + $0x80] sm:$0xff] 0.0
      %350 = vst [vmem:[#allocation2 + $0x88] sm:$0xff] 0.0
      %351 = vst [vmem:[#allocation2 + $0x90] sm:$0xff] 0.0
      %352 = vst [vmem:[#allocation2 + $0x98] sm:$0xff] 0.0
      %353 = vst [vmem:[#allocation2 + $0xa0] sm:$0xff] 0.0
      %354 = vst [vmem:[#allocation2 + $0xa8] sm:$0xff] 0.0
      %355 = vst [vmem:[#allocation2 + $0xb0] sm:$0xff] 0.0
      %356 = vst [vmem:[#allocation2 + $0xb8] sm:$0xff] 0.0
      %357 = vst [vmem:[#allocation2 + $0xc0] sm:$0xff] 0.0
      %358 = vst [vmem:[#allocation2 + $0xc8] sm:$0xff] 0.0
      %359 = vst [vmem:[#allocation2 + $0xd0] sm:$0xff] 0.0
      %360 = vst [vmem:[#allocation2 + $0xd8] sm:$0xff] 0.0
      %361 = vst [vmem:[#allocation2 + $0xe0] sm:$0xff] 0.0
      %362 = vst [vmem:[#allocation2 + $0xe8] sm:$0xff] 0.0
      %363 = vst [vmem:[#allocation2 + $0xf0] sm:$0xff] 0.0
      %364 = vst [vmem:[#allocation2 + $0xf8] sm:$0xff] 0.0
      %365 = vst [vmem:[#allocation2 + $0x100] sm:$0xff] 0.0
      %366 = vst [vmem:[#allocation2 + $0x108] sm:$0xff] 0.0
      %367 = vst [vmem:[#allocation2 + $0x110] sm:$0xff] 0.0
      %368 = vst [vmem:[#allocation2 + $0x118] sm:$0xff] 0.0
      %369 = vst [vmem:[#allocation2 + $0x120] sm:$0xff] 0.0
      %370 = vst [vmem:[#allocation2 + $0x128] sm:$0xff] 0.0
      %371 = vst [vmem:[#allocation2 + $0x130] sm:$0xff] 0.0
      %372 = vst [vmem:[#allocation2 + $0x138] sm:$0xff] 0.0
      %373 = vst [vmem:[#allocation2 + $0x140] sm:$0xff] 0.0
      %374 = vst [vmem:[#allocation2 + $0x148] sm:$0xff] 0.0
      %375 = vst [vmem:[#allocation2 + $0x150] sm:$0xff] 0.0
      %376 = vst [vmem:[#allocation2 + $0x158] sm:$0xff] 0.0
      %377 = vst [vmem:[#allocation2 + $0x160] sm:$0xff] 0.0
      %378 = vst [vmem:[#allocation2 + $0x168] sm:$0xff] 0.0
      %379 = vst [vmem:[#allocation2 + $0x170] sm:$0xff] 0.0
      %380 = vst [vmem:[#allocation2 + $0x178] sm:$0xff] 0.0
      %381 = vst [vmem:[#allocation2 + $0x180] sm:$0xff] 0.0
      %382 = vst [vmem:[#allocation2 + $0x188] sm:$0xff] 0.0
      %383 = vst [vmem:[#allocation2 + $0x190] sm:$0xff] 0.0
      %384 = vst [vmem:[#allocation2 + $0x198] sm:$0xff] 0.0
      %385 = vst [vmem:[#allocation2 + $0x1a0] sm:$0xff] 0.0
      %386 = vst [vmem:[#allocation2 + $0x1a8] sm:$0xff] 0.0
      %387 = vst [vmem:[#allocation2 + $0x1b0] sm:$0xff] 0.0
      %388 = vst [vmem:[#allocation2 + $0x1b8] sm:$0xff] 0.0
      %389 = vst [vmem:[#allocation2 + $0x1c0] sm:$0xff] 0.0
      %390 = vst [vmem:[#allocation2 + $0x1c8] sm:$0xff] 0.0
      %391 = vst [vmem:[#allocation2 + $0x1d0] sm:$0xff] 0.0
      %392 = vst [vmem:[#allocation2 + $0x1d8] sm:$0xff] 0.0
      %393 = vst [vmem:[#allocation2 + $0x1e0] sm:$0xff] 0.0
      %394 = vst [vmem:[#allocation2 + $0x1e8] sm:$0xff] 0.0
      %395 = vst [vmem:[#allocation2 + $0x1f0] sm:$0xff] 0.0
      %396 = vst [vmem:[#allocation2 + $0x1f8] sm:$0xff] 0.0
      %397 = vst [vmem:[#allocation2 + $0x200] sm:$0xff] 0.0
      %398 = vst [vmem:[#allocation2 + $0x208] sm:$0xff] 0.0
      %399 = vst [vmem:[#allocation2 + $0x210] sm:$0xff] 0.0
      %400 = vst [vmem:[#allocation2 + $0x218] sm:$0xff] 0.0
      %401 = vst [vmem:[#allocation2 + $0x220] sm:$0xff] 0.0
      %402 = vst [vmem:[#allocation2 + $0x228] sm:$0xff] 0.0
      %403 = vst [vmem:[#allocation2 + $0x230] sm:$0xff] 0.0
      %404 = vst [vmem:[#allocation2 + $0x238] sm:$0xff] 0.0
      %405 = vst [vmem:[#allocation3] sm:$0xff] 0.0
      %406 = vst [vmem:[#allocation3 + $0x8] sm:$0xff] 0.0
      %407 = vst [vmem:[#allocation3 + $0x10] sm:$0xff] 0.0
      %408 = vst [vmem:[#allocation3 + $0x18] sm:$0xff] 0.0
      %409 = vst [vmem:[#allocation3 + $0x20] sm:$0xff] 0.0
      %410 = vst [vmem:[#allocation3 + $0x28] sm:$0xff] 0.0
      %411 = vst [vmem:[#allocation3 + $0x30] sm:$0xff] 0.0
      %412 = vst [vmem:[#allocation3 + $0x38] sm:$0xff] 0.0
      %413 = vst [vmem:[#allocation3 + $0x40] sm:$0xff] 0.0
      %414 = vst [vmem:[#allocation3 + $0x48] sm:$0xff] 0.0
      %415 = vst [vmem:[#allocation3 + $0x50] sm:$0xff] 0.0
      %416 = vst [vmem:[#allocation3 + $0x58] sm:$0xff] 0.0
      %417 = vst [vmem:[#allocation3 + $0x60] sm:$0xff] 0.0
      %418 = vst [vmem:[#allocation3 + $0x68] sm:$0xff] 0.0
      %419 = vst [vmem:[#allocation3 + $0x70] sm:$0xff] 0.0
      %420 = vst [vmem:[#allocation3 + $0x78] sm:$0xff] 0.0
      %421 = vst [vmem:[#allocation3 + $0x80] sm:$0xff] 0.0
      %422 = vst [vmem:[#allocation3 + $0x88] sm:$0xff] 0.0
      %423 = vst [vmem:[#allocation3 + $0x90] sm:$0xff] 0.0
      %424 = vst [vmem:[#allocation3 + $0x98] sm:$0xff] 0.0
      %425 = vst [vmem:[#allocation3 + $0xa0] sm:$0xff] 0.0
      %426 = vst [vmem:[#allocation3 + $0xa8] sm:$0xff] 0.0
      %427 = vst [vmem:[#allocation3 + $0xb0] sm:$0xff] 0.0
      %428 = vst [vmem:[#allocation3 + $0xb8] sm:$0xff] 0.0
      %429 = vst [vmem:[#allocation3 + $0xc0] sm:$0xff] 0.0
      %430 = vst [vmem:[#allocation3 + $0xc8] sm:$0xff] 0.0
      %431 = vst [vmem:[#allocation3 + $0xd0] sm:$0xff] 0.0
      %432 = vst [vmem:[#allocation3 + $0xd8] sm:$0xff] 0.0
      %433 = vst [vmem:[#allocation3 + $0xe0] sm:$0xff] 0.0
      %434 = vst [vmem:[#allocation3 + $0xe8] sm:$0xff] 0.0
      %435 = vst [vmem:[#allocation3 + $0xf0] sm:$0xff] 0.0
      %436 = vst [vmem:[#allocation3 + $0xf8] sm:$0xff] 0.0
      %437 = vst [vmem:[#allocation3 + $0x100] sm:$0xff] 0.0
      %438 = vst [vmem:[#allocation3 + $0x108] sm:$0xff] 0.0
      %439 = vst [vmem:[#allocation3 + $0x110] sm:$0xff] 0.0
      %440 = vst [vmem:[#allocation3 + $0x118] sm:$0xff] 0.0
      %441 = vst [vmem:[#allocation3 + $0x120] sm:$0xff] 0.0
      %442 = vst [vmem:[#allocation3 + $0x128] sm:$0xff] 0.0
      %443 = vst [vmem:[#allocation3 + $0x130] sm:$0xff] 0.0
      %444 = vst [vmem:[#allocation3 + $0x138] sm:$0xff] 0.0
      %445 = vst [vmem:[#allocation3 + $0x140] sm:$0xff] 0.0
      %446 = vst [vmem:[#allocation3 + $0x148] sm:$0xff] 0.0
      %447 = vst [vmem:[#allocation3 + $0x150] sm:$0xff] 0.0
      %448 = vst [vmem:[#allocation3 + $0x158] sm:$0xff] 0.0
      %449 = vst [vmem:[#allocation3 + $0x160] sm:$0xff] 0.0
      %450 = vst [vmem:[#allocation3 + $0x168] sm:$0xff] 0.0
      %451 = vst [vmem:[#allocation3 + $0x170] sm:$0xff] 0.0
      %452 = vst [vmem:[#allocation3 + $0x178] sm:$0xff] 0.0
      %453 = vst [vmem:[#allocation3 + $0x180] sm:$0xff] 0.0
      %454 = vst [vmem:[#allocation3 + $0x188] sm:$0xff] 0.0
      %455 = vst [vmem:[#allocation3 + $0x190] sm:$0xff] 0.0
      %456 = vst [vmem:[#allocation3 + $0x198] sm:$0xff] 0.0
      %457 = vst [vmem:[#allocation3 + $0x1a0] sm:$0xff] 0.0
      %458 = vst [vmem:[#allocation3 + $0x1a8] sm:$0xff] 0.0
      %459 = vst [vmem:[#allocation3 + $0x1b0] sm:$0xff] 0.0
      %460 = vst [vmem:[#allocation3 + $0x1b8] sm:$0xff] 0.0
      %461 = vst [vmem:[#allocation3 + $0x1c0] sm:$0xff] 0.0
      %462 = vst [vmem:[#allocation3 + $0x1c8] sm:$0xff] 0.0
      %463 = vst [vmem:[#allocation3 + $0x1d0] sm:$0xff] 0.0
      %464 = vst [vmem:[#allocation3 + $0x1d8] sm:$0xff] 0.0
      %465 = vst [vmem:[#allocation3 + $0x1e0] sm:$0xff] 0.0
      %466 = vst [vmem:[#allocation3 + $0x1e8] sm:$0xff] 0.0
      %467 = vst [vmem:[#allocation3 + $0x1f0] sm:$0xff] 0.0
      %468 = vst [vmem:[#allocation3 + $0x1f8] sm:$0xff] 0.0
      %469 = vst [vmem:[#allocation3 + $0x200] sm:$0xff] 0.0
      %470 = vst [vmem:[#allocation3 + $0x208] sm:$0xff] 0.0
      %471 = vst [vmem:[#allocation3 + $0x210] sm:$0xff] 0.0
      %472 = vst [vmem:[#allocation3 + $0x218] sm:$0xff] 0.0
      %473 = vst [vmem:[#allocation3 + $0x220] sm:$0xff] 0.0
      %474 = vst [vmem:[#allocation3 + $0x228] sm:$0xff] 0.0
      %475 = vst [vmem:[#allocation3 + $0x230] sm:$0xff] 0.0
      %476 = vst [vmem:[#allocation3 + $0x238] sm:$0xff] 0.0
      %477 = vst [vmem:[#allocation4] sm:$0xff] 0.0
      %478 = vst [vmem:[#allocation4 + $0x8] sm:$0xff] 0.0
      %479 = vst [vmem:[#allocation4 + $0x10] sm:$0xff] 0.0
      %480 = vst [vmem:[#allocation4 + $0x18] sm:$0xff] 0.0
      %481 = vst [vmem:[#allocation4 + $0x20] sm:$0xff] 0.0
      %482 = vst [vmem:[#allocation4 + $0x28] sm:$0xff] 0.0
      %483 = vst [vmem:[#allocation4 + $0x30] sm:$0xff] 0.0
      %484 = vst [vmem:[#allocation4 + $0x38] sm:$0xff] 0.0
      %485 = vst [vmem:[#allocation4 + $0x40] sm:$0xff] 0.0
      %486 = vst [vmem:[#allocation4 + $0x48] sm:$0xff] 0.0
      %487 = vst [vmem:[#allocation4 + $0x50] sm:$0xff] 0.0
      %488 = vst [vmem:[#allocation4 + $0x58] sm:$0xff] 0.0
      %489 = vst [vmem:[#allocation4 + $0x60] sm:$0xff] 0.0
      %490 = vst [vmem:[#allocation4 + $0x68] sm:$0xff] 0.0
      %491 = vst [vmem:[#allocation4 + $0x70] sm:$0xff] 0.0
      %492 = vst [vmem:[#allocation4 + $0x78] sm:$0xff] 0.0
      %493 = vst [vmem:[#allocation4 + $0x80] sm:$0xff] 0.0
      %494 = vst [vmem:[#allocation4 + $0x88] sm:$0xff] 0.0
      %495 = vst [vmem:[#allocation4 + $0x90] sm:$0xff] 0.0
      %496 = vst [vmem:[#allocation4 + $0x98] sm:$0xff] 0.0
      %497 = vst [vmem:[#allocation4 + $0xa0] sm:$0xff] 0.0
      %498 = vst [vmem:[#allocation4 + $0xa8] sm:$0xff] 0.0
      %499 = vst [vmem:[#allocation4 + $0xb0] sm:$0xff] 0.0
      %500 = vst [vmem:[#allocation4 + $0xb8] sm:$0xff] 0.0
      %501 = vst [vmem:[#allocation4 + $0xc0] sm:$0xff] 0.0
      %502 = vst [vmem:[#allocation4 + $0xc8] sm:$0xff] 0.0
      %503 = vst [vmem:[#allocation4 + $0xd0] sm:$0xff] 0.0
      %504 = vst [vmem:[#allocation4 + $0xd8] sm:$0xff] 0.0
      %505 = vst [vmem:[#allocation4 + $0xe0] sm:$0xff] 0.0
      %506 = vst [vmem:[#allocation4 + $0xe8] sm:$0xff] 0.0
      %507 = vst [vmem:[#allocation4 + $0xf0] sm:$0xff] 0.0
      %508 = vst [vmem:[#allocation4 + $0xf8] sm:$0xff] 0.0
      %509 = vst [vmem:[#allocation4 + $0x100] sm:$0xff] 0.0
      %510 = vst [vmem:[#allocation4 + $0x108] sm:$0xff] 0.0
      %511 = vst [vmem:[#allocation4 + $0x110] sm:$0xff] 0.0
      %512 = vst [vmem:[#allocation4 + $0x118] sm:$0xff] 0.0
      %513 = vst [vmem:[#allocation4 + $0x120] sm:$0xff] 0.0
      %514 = vst [vmem:[#allocation4 + $0x128] sm:$0xff] 0.0
      %515 = vst [vmem:[#allocation4 + $0x130] sm:$0xff] 0.0
      %516 = vst [vmem:[#allocation4 + $0x138] sm:$0xff] 0.0
      %517 = vst [vmem:[#allocation4 + $0x140] sm:$0xff] 0.0
      %518 = vst [vmem:[#allocation4 + $0x148] sm:$0xff] 0.0
      %519 = vst [vmem:[#allocation4 + $0x150] sm:$0xff] 0.0
      %520 = vst [vmem:[#allocation4 + $0x158] sm:$0xff] 0.0
      %521 = vst [vmem:[#allocation4 + $0x160] sm:$0xff] 0.0
      %522 = vst [vmem:[#allocation4 + $0x168] sm:$0xff] 0.0
      %523 = vst [vmem:[#allocation4 + $0x170] sm:$0xff] 0.0
      %524 = vst [vmem:[#allocation4 + $0x178] sm:$0xff] 0.0
      %525 = vst [vmem:[#allocation4 + $0x180] sm:$0xff] 0.0
      %526 = vst [vmem:[#allocation4 + $0x188] sm:$0xff] 0.0
      %527 = vst [vmem:[#allocation4 + $0x190] sm:$0xff] 0.0
      %528 = vst [vmem:[#allocation4 + $0x198] sm:$0xff] 0.0
      %529 = vst [vmem:[#allocation4 + $0x1a0] sm:$0xff] 0.0
      %530 = vst [vmem:[#allocation4 + $0x1a8] sm:$0xff] 0.0
      %531 = vst [vmem:[#allocation4 + $0x1b0] sm:$0xff] 0.0
      %532 = vst [vmem:[#allocation4 + $0x1b8] sm:$0xff] 0.0
      %533 = vst [vmem:[#allocation4 + $0x1c0] sm:$0xff] 0.0
      %534 = vst [vmem:[#allocation4 + $0x1c8] sm:$0xff] 0.0
      %535 = vst [vmem:[#allocation4 + $0x1d0] sm:$0xff] 0.0
      %536 = vst [vmem:[#allocation4 + $0x1d8] sm:$0xff] 0.0
      %537 = vst [vmem:[#allocation4 + $0x1e0] sm:$0xff] 0.0
      %538 = vst [vmem:[#allocation4 + $0x1e8] sm:$0xff] 0.0
      %539 = vst [vmem:[#allocation4 + $0x1f0] sm:$0xff] 0.0
      %540 = vst [vmem:[#allocation4 + $0x1f8] sm:$0xff] 0.0
      %541 = vst [vmem:[#allocation4 + $0x200] sm:$0xff] 0.0
      %542 = vst [vmem:[#allocation4 + $0x208] sm:$0xff] 0.0
      %543 = vst [vmem:[#allocation4 + $0x210] sm:$0xff] 0.0
      %544 = vst [vmem:[#allocation4 + $0x218] sm:$0xff] 0.0
      %545 = vst [vmem:[#allocation4 + $0x220] sm:$0xff] 0.0
      %546 = vst [vmem:[#allocation4 + $0x228] sm:$0xff] 0.0
      %547 = vst [vmem:[#allocation4 + $0x230] sm:$0xff] 0.0
      %548 = vst [vmem:[#allocation4 + $0x238] sm:$0xff] 0.0
      %v549 = vld [vmem:[%s327] sm:$0xff]
      %v550 = vld [vmem:[%s327 + $0x8] sm:$0xff]
      %v551 = vld [vmem:[%s327 + $0x10] sm:$0xff]
      %v552 = vld [vmem:[%s327 + $0x18] sm:$0xff]
      %v553 = vld [vmem:[%s327 + $0x20] sm:$0xff]
      %v554 = vld [vmem:[%s327 + $0x28] sm:$0xff]
      %v555 = vld [vmem:[%s327 + $0x30] sm:$0xff]
      %v556 = vld [vmem:[%s327 + $0x38] sm:$0xff]
      %v557 = vld [vmem:[%s327 + $0x40] sm:$0xff]
      %v558 = vld [vmem:[%s327 + $0x48] sm:$0xff]
      %v559 = vld [vmem:[%s327 + $0x50] sm:$0xff]
      %v560 = vld [vmem:[%s327 + $0x58] sm:$0xff]
      %v561 = vld [vmem:[%s327 + $0x60] sm:$0xff]
      %v562 = vld [vmem:[%s327 + $0x68] sm:$0xff]
      %v563 = vld [vmem:[%s327 + $0x70] sm:$0xff]
      %v564 = vld [vmem:[%s327 + $0x78] sm:$0xff]
      %v565 = vld [vmem:[%s327 + $0x80] sm:$0xff]
      %v566 = vld [vmem:[%s327 + $0x88] sm:$0xff]
      %v567 = vld [vmem:[%s327 + $0x90] sm:$0xff]
      %v568 = vld [vmem:[%s327 + $0x98] sm:$0xff]
      %v569 = vld [vmem:[%s327 + $0xa0] sm:$0xff]
      %v570 = vld [vmem:[%s327 + $0xa8] sm:$0xff]
      %v571 = vld [vmem:[%s327 + $0xb0] sm:$0xff]
      %v572 = vld [vmem:[%s327 + $0xb8] sm:$0xff]
      %v573 = vld [vmem:[%s327 + $0xc0] sm:$0xff]
      %v574 = vld [vmem:[%s327 + $0xc8] sm:$0xff]
      %v575 = vld [vmem:[%s327 + $0xd0] sm:$0xff]
      %v576 = vld [vmem:[%s327 + $0xd8] sm:$0xff]
      %v577 = vld [vmem:[%s327 + $0xe0] sm:$0xff]
      %v578 = vld [vmem:[%s327 + $0xe8] sm:$0xff]
      %v579 = vld [vmem:[%s327 + $0xf0] sm:$0xff]
      %v580 = vld [vmem:[%s327 + $0xf8] sm:$0xff]
      %v581 = vld [vmem:[%s1] sm:$0xff]
      %v582 = vld [vmem:[%s1 + $0x8] sm:$0xff]
      %v583 = vld [vmem:[%s1 + $0x10] sm:$0xff]
      %v584 = vld [vmem:[%s1 + $0x18] sm:$0xff]
      %v585 = vld [vmem:[%s1 + $0x20] sm:$0xff]
      %v586 = vld [vmem:[%s1 + $0x28] sm:$0xff]
      %v587 = vld [vmem:[%s1 + $0x30] sm:$0xff]
      %v588 = vld [vmem:[%s1 + $0x38] sm:$0xff]
      %v589 = vld [vmem:[%s1 + $0x40] sm:$0xff]
      %v590 = vld [vmem:[%s1 + $0x48] sm:$0xff]
      %v591 = vld [vmem:[%s1 + $0x50] sm:$0xff]
      %v592 = vld [vmem:[%s1 + $0x58] sm:$0xff]
      %v593 = vld [vmem:[%s1 + $0x60] sm:$0xff]
      %v594 = vld [vmem:[%s1 + $0x68] sm:$0xff]
      %v595 = vld [vmem:[%s1 + $0x70] sm:$0xff]
      %v596 = vld [vmem:[%s1 + $0x78] sm:$0xff]
      %v597 = vld [vmem:[%s2] sm:$0x1]
      %v599 = vperm.slane %v597, 0
      %601 = vmatpush.msra.mxu0 %v596
      %602 = vmatpush.msra.mxu0 %v595
      %603 = vmatpush.msra.mxu0 %v594
      %604 = vmatpush.msra.mxu0 %v593
      %605 = vmatpush.msra.mxu0 %v592
      %606 = vmatpush.msra.mxu0 %v591
      %607 = vmatpush.msra.mxu0 %v590
      %608 = vmatpush.msra.mxu0 %v589
      %609 = vmatpush.msra.mxu0 %v588
      %610 = vmatpush.msra.mxu0 %v587
      %611 = vmatpush.msra.mxu0 %v586
      %612 = vmatpush.msra.mxu0 %v585
      %613 = vmatpush.msra.mxu0 %v584
      %614 = vmatpush.msra.mxu0 %v583
      %615 = vmatpush.msra.mxu0 %v582
      %616 = vmatpush.msra.mxu0 %v581
      %617 = vmatmul.f32.gmra.mxu0 %v549
      %v618 = vpop.f32.mrf.mxu0
      %v619 = vadd.f32 %v599, %v618
      %620 = vmatmul.f32.gmra.mxu0 %v550
      %v621 = vpop.f32.mrf.mxu0
      %v622 = vadd.f32 %v599, %v621
      %623 = vmatmul.f32.gmra.mxu0 %v551
      %v624 = vpop.f32.mrf.mxu0
      %v625 = vadd.f32 %v599, %v624
      %626 = vmatmul.f32.gmra.mxu0 %v552
      %v627 = vpop.f32.mrf.mxu0
      %v628 = vadd.f32 %v599, %v627
      %629 = vmatmul.f32.gmra.mxu0 %v553
      %v630 = vpop.f32.mrf.mxu0
      %v631 = vadd.f32 %v599, %v630
      %632 = vmatmul.f32.gmra.mxu0 %v554
      %v633 = vpop.f32.mrf.mxu0
      %v634 = vadd.f32 %v599, %v633
      %635 = vmatmul.f32.gmra.mxu0 %v555
      %v636 = vpop.f32.mrf.mxu0
      %v637 = vadd.f32 %v599, %v636
      %638 = vmatmul.f32.gmra.mxu0 %v556
      %v639 = vpop.f32.mrf.mxu0
      %v640 = vadd.f32 %v599, %v639
      %641 = vmatmul.f32.gmra.mxu0 %v557
      %v642 = vpop.f32.mrf.mxu0
      %v643 = vadd.f32 %v599, %v642
      %644 = vmatmul.f32.gmra.mxu0 %v558
      %v645 = vpop.f32.mrf.mxu0
      %v646 = vadd.f32 %v599, %v645
      %647 = vmatmul.f32.gmra.mxu0 %v559
      %v648 = vpop.f32.mrf.mxu0
      %v649 = vadd.f32 %v599, %v648
      %650 = vmatmul.f32.gmra.mxu0 %v560
      %v651 = vpop.f32.mrf.mxu0
      %v652 = vadd.f32 %v599, %v651
      %653 = vmatmul.f32.gmra.mxu0 %v561
      %v654 = vpop.f32.mrf.mxu0
      %v655 = vadd.f32 %v599, %v654
      %656 = vmatmul.f32.gmra.mxu0 %v562
      %v657 = vpop.f32.mrf.mxu0
      %v658 = vadd.f32 %v599, %v657
      %659 = vmatmul.f32.gmra.mxu0 %v563
      %v660 = vpop.f32.mrf.mxu0
      %v661 = vadd.f32 %v599, %v660
      %662 = vmatmul.f32.gmra.mxu0 %v564
      %v663 = vpop.f32.mrf.mxu0
      %v664 = vadd.f32 %v599, %v663
      %665 = vmatmul.f32.gmra.mxu0 %v565
      %v666 = vpop.f32.mrf.mxu0
      %v667 = vadd.f32 %v599, %v666
      %668 = vmatmul.f32.gmra.mxu0 %v566
      %v669 = vpop.f32.mrf.mxu0
      %v670 = vadd.f32 %v599, %v669
      %671 = vmatmul.f32.gmra.mxu0 %v567
      %v672 = vpop.f32.mrf.mxu0
      %v673 = vadd.f32 %v599, %v672
      %674 = vmatmul.f32.gmra.mxu0 %v568
      %v675 = vpop.f32.mrf.mxu0
      %v676 = vadd.f32 %v599, %v675
      %677 = vmatmul.f32.gmra.mxu0 %v569
      %v678 = vpop.f32.mrf.mxu0
      %v679 = vadd.f32 %v599, %v678
      %680 = vmatmul.f32.gmra.mxu0 %v570
      %v681 = vpop.f32.mrf.mxu0
      %v682 = vadd.f32 %v599, %v681
      %683 = vmatmul.f32.gmra.mxu0 %v571
      %v684 = vpop.f32.mrf.mxu0
      %v685 = vadd.f32 %v599, %v684
      %686 = vmatmul.f32.gmra.mxu0 %v572
      %v687 = vpop.f32.mrf.mxu0
      %v688 = vadd.f32 %v599, %v687
      %689 = vmatmul.f32.gmra.mxu0 %v573
      %v690 = vpop.f32.mrf.mxu0
      %v691 = vadd.f32 %v599, %v690
      %692 = vmatmul.f32.gmra.mxu0 %v574
      %v693 = vpop.f32.mrf.mxu0
      %v694 = vadd.f32 %v599, %v693
      %695 = vmatmul.f32.gmra.mxu0 %v575
      %v696 = vpop.f32.mrf.mxu0
      %v697 = vadd.f32 %v599, %v696
      %698 = vmatmul.f32.gmra.mxu0 %v576
      %v699 = vpop.f32.mrf.mxu0
      %v700 = vadd.f32 %v599, %v699
      %701 = vmatmul.f32.gmra.mxu0 %v577
      %v702 = vpop.f32.mrf.mxu0
      %v703 = vadd.f32 %v599, %v702
      %704 = vmatmul.f32.gmra.mxu0 %v578
      %v705 = vpop.f32.mrf.mxu0
      %v706 = vadd.f32 %v599, %v705
      %707 = vmatmul.f32.gmra.mxu0 %v579
      %v708 = vpop.f32.mrf.mxu0
      %v709 = vadd.f32 %v599, %v708
      %710 = vmatmul.f32.gmra.mxu0 %v580
      %v711 = vpop.f32.mrf.mxu0
      %v712 = vadd.f32 %v599, %v711
      %713 = vdwg.mxu0
      %v714 = vmax.f32 %v619, 0.0
      %v715 = vmax.f32 %v622, 0.0
      %v716 = vmax.f32 %v625, 0.0
      %v717 = vmax.f32 %v628, 0.0
      %v718 = vmax.f32 %v631, 0.0
      %v719 = vmax.f32 %v634, 0.0
      %v720 = vmax.f32 %v637, 0.0
      %v721 = vmax.f32 %v640, 0.0
      %v722 = vmax.f32 %v643, 0.0
      %v723 = vmax.f32 %v646, 0.0
      %v724 = vmax.f32 %v649, 0.0
      %v725 = vmax.f32 %v652, 0.0
      %v726 = vmax.f32 %v655, 0.0
      %v727 = vmax.f32 %v658, 0.0
      %v728 = vmax.f32 %v661, 0.0
      %v729 = vmax.f32 %v664, 0.0
      %v730 = vmax.f32 %v667, 0.0
      %v731 = vmax.f32 %v670, 0.0
      %v732 = vmax.f32 %v673, 0.0
      %v733 = vmax.f32 %v676, 0.0
      %v734 = vmax.f32 %v679, 0.0
      %v735 = vmax.f32 %v682, 0.0
      %v736 = vmax.f32 %v685, 0.0
      %v737 = vmax.f32 %v688, 0.0
      %v738 = vmax.f32 %v691, 0.0
      %v739 = vmax.f32 %v694, 0.0
      %v740 = vmax.f32 %v697, 0.0
      %v741 = vmax.f32 %v700, 0.0
      %v742 = vmax.f32 %v703, 0.0
      %v743 = vmax.f32 %v706, 0.0
      %v744 = vmax.f32 %v709, 0.0
      %v745 = vmax.f32 %v712, 0.0
      %s746 = scalar_lea.vmem [#allocation2], 32
      %747 = vst [vmem:[%s746 + $0x8] sm:$0xff] %v714
      %748 = vst [vmem:[%s746 + $0x10] sm:$0xff] %v715
      %749 = vst [vmem:[%s746 + $0x28] sm:$0xff] %v716
      %750 = vst [vmem:[%s746 + $0x30] sm:$0xff] %v717
      %751 = vst [vmem:[%s746 + $0x48] sm:$0xff] %v718
      %752 = vst [vmem:[%s746 + $0x50] sm:$0xff] %v719
      %753 = vst [vmem:[%s746 + $0x68] sm:$0xff] %v720
      %754 = vst [vmem:[%s746 + $0x70] sm:$0xff] %v721
      %755 = vst [vmem:[%s746 + $0x88] sm:$0xff] %v722
      %756 = vst [vmem:[%s746 + $0x90] sm:$0xff] %v723
      %757 = vst [vmem:[%s746 + $0xa8] sm:$0xff] %v724
      %758 = vst [vmem:[%s746 + $0xb0] sm:$0xff] %v725
      %759 = vst [vmem:[%s746 + $0xc8] sm:$0xff] %v726
      %760 = vst [vmem:[%s746 + $0xd0] sm:$0xff] %v727
      %761 = vst [vmem:[%s746 + $0xe8] sm:$0xff] %v728
      %762 = vst [vmem:[%s746 + $0xf0] sm:$0xff] %v729
      %763 = vst [vmem:[%s746 + $0x108] sm:$0xff] %v730
      %764 = vst [vmem:[%s746 + $0x110] sm:$0xff] %v731
      %765 = vst [vmem:[%s746 + $0x128] sm:$0xff] %v732
      %766 = vst [vmem:[%s746 + $0x130] sm:$0xff] %v733
      %767 = vst [vmem:[%s746 + $0x148] sm:$0xff] %v734
      %768 = vst [vmem:[%s746 + $0x150] sm:$0xff] %v735
      %769 = vst [vmem:[%s746 + $0x168] sm:$0xff] %v736
      %770 = vst [vmem:[%s746 + $0x170] sm:$0xff] %v737
      %771 = vst [vmem:[%s746 + $0x188] sm:$0xff] %v738
      %772 = vst [vmem:[%s746 + $0x190] sm:$0xff] %v739
      %773 = vst [vmem:[%s746 + $0x1a8] sm:$0xff] %v740
      %774 = vst [vmem:[%s746 + $0x1b0] sm:$0xff] %v741
      %775 = vst [vmem:[%s746 + $0x1c8] sm:$0xff] %v742
      %776 = vst [vmem:[%s746 + $0x1d0] sm:$0xff] %v743
      %777 = vst [vmem:[%s746 + $0x1e8] sm:$0xff] %v744
      %778 = vst [vmem:[%s746 + $0x1f0] sm:$0xff] %v745
      %v779 = vld [vmem:[#allocation2 + $0x7] sm:$0xff]
      %v780 = vld [vmem:[#allocation2 + $0xf] sm:$0xff]
      %v781 = vld [vmem:[#allocation2 + $0x27] sm:$0xff]
      %v782 = vld [vmem:[#allocation2 + $0x2f] sm:$0xff]
      %v783 = vld [vmem:[#allocation2 + $0x47] sm:$0xff]
      %v784 = vld [vmem:[#allocation2 + $0x4f] sm:$0xff]
      %v785 = vld [vmem:[#allocation2 + $0x67] sm:$0xff]
      %v786 = vld [vmem:[#allocation2 + $0x6f] sm:$0xff]
      %v787 = vld [vmem:[#allocation2 + $0x87] sm:$0xff]
      %v788 = vld [vmem:[#allocation2 + $0x8f] sm:$0xff]
      %v789 = vld [vmem:[#allocation2 + $0xa7] sm:$0xff]
      %v790 = vld [vmem:[#allocation2 + $0xaf] sm:$0xff]
      %v791 = vld [vmem:[#allocation2 + $0xc7] sm:$0xff]
      %v792 = vld [vmem:[#allocation2 + $0xcf] sm:$0xff]
      %v793 = vld [vmem:[#allocation2 + $0xe7] sm:$0xff]
      %v794 = vld [vmem:[#allocation2 + $0xef] sm:$0xff]
      %v795 = vld [vmem:[#allocation2 + $0x107] sm:$0xff]
      %v796 = vld [vmem:[#allocation2 + $0x10f] sm:$0xff]
      %v797 = vld [vmem:[#allocation2 + $0x127] sm:$0xff]
      %v798 = vld [vmem:[#allocation2 + $0x12f] sm:$0xff]
      %v799 = vld [vmem:[#allocation2 + $0x147] sm:$0xff]
      %v800 = vld [vmem:[#allocation2 + $0x14f] sm:$0xff]
      %v801 = vld [vmem:[#allocation2 + $0x167] sm:$0xff]
      %v802 = vld [vmem:[#allocation2 + $0x16f] sm:$0xff]
      %v803 = vld [vmem:[#allocation2 + $0x187] sm:$0xff]
      %v804 = vld [vmem:[#allocation2 + $0x18f] sm:$0xff]
      %v805 = vld [vmem:[#allocation2 + $0x1a7] sm:$0xff]
      %v806 = vld [vmem:[#allocation2 + $0x1af] sm:$0xff]
      %v807 = vld [vmem:[#allocation2 + $0x1c7] sm:$0xff]
      %v808 = vld [vmem:[#allocation2 + $0x1cf] sm:$0xff]
      %v809 = vld [vmem:[#allocation2 + $0x1e7] sm:$0xff]
      %v810 = vld [vmem:[#allocation2 + $0x1ef] sm:$0xff]
      %v811 = vld [vmem:[%s3] sm:$0xff]
      %v812 = vld [vmem:[%s3 + $0x8] sm:$0xff]
      %v813 = vld [vmem:[%s3 + $0x10] sm:$0xff]
      %v814 = vld [vmem:[%s3 + $0x18] sm:$0xff]
      %v815 = vld [vmem:[%s3 + $0x20] sm:$0xff]
      %v816 = vld [vmem:[%s3 + $0x28] sm:$0xff]
      %v817 = vld [vmem:[%s3 + $0x30] sm:$0xff]
      %v818 = vld [vmem:[%s3 + $0x38] sm:$0xff]
      %v819 = vld [vmem:[%s3 + $0x40] sm:$0xff]
      %v820 = vld [vmem:[%s3 + $0x48] sm:$0xff]
      %v821 = vld [vmem:[%s3 + $0x50] sm:$0xff]
      %v822 = vld [vmem:[%s3 + $0x58] sm:$0xff]
      %v823 = vld [vmem:[%s3 + $0x60] sm:$0xff]
      %v824 = vld [vmem:[%s3 + $0x68] sm:$0xff]
      %v825 = vld [vmem:[%s3 + $0x70] sm:$0xff]
      %v826 = vld [vmem:[%s3 + $0x78] sm:$0xff]
      %v827 = vld [vmem:[#allocation2 + $0x8] sm:$0xff]
      %v828 = vld [vmem:[#allocation2 + $0x10] sm:$0xff]
      %v829 = vld [vmem:[#allocation2 + $0x28] sm:$0xff]
      %v830 = vld [vmem:[#allocation2 + $0x30] sm:$0xff]
      %v831 = vld [vmem:[#allocation2 + $0x48] sm:$0xff]
      %v832 = vld [vmem:[#allocation2 + $0x50] sm:$0xff]
      %v833 = vld [vmem:[#allocation2 + $0x68] sm:$0xff]
      %v834 = vld [vmem:[#allocation2 + $0x70] sm:$0xff]
      %v835 = vld [vmem:[#allocation2 + $0x88] sm:$0xff]
      %v836 = vld [vmem:[#allocation2 + $0x90] sm:$0xff]
      %v837 = vld [vmem:[#allocation2 + $0xa8] sm:$0xff]
      %v838 = vld [vmem:[#allocation2 + $0xb0] sm:$0xff]
      %v839 = vld [vmem:[#allocation2 + $0xc8] sm:$0xff]
      %v840 = vld [vmem:[#allocation2 + $0xd0] sm:$0xff]
      %v841 = vld [vmem:[#allocation2 + $0xe8] sm:$0xff]
      %v842 = vld [vmem:[#allocation2 + $0xf0] sm:$0xff]
      %v843 = vld [vmem:[#allocation2 + $0x108] sm:$0xff]
      %v844 = vld [vmem:[#allocation2 + $0x110] sm:$0xff]
      %v845 = vld [vmem:[#allocation2 + $0x128] sm:$0xff]
      %v846 = vld [vmem:[#allocation2 + $0x130] sm:$0xff]
      %v847 = vld [vmem:[#allocation2 + $0x148] sm:$0xff]
      %v848 = vld [vmem:[#allocation2 + $0x150] sm:$0xff]
      %v849 = vld [vmem:[#allocation2 + $0x168] sm:$0xff]
      %v850 = vld [vmem:[#allocation2 + $0x170] sm:$0xff]
      %v851 = vld [vmem:[#allocation2 + $0x188] sm:$0xff]
      %v852 = vld [vmem:[#allocation2 + $0x190] sm:$0xff]
      %v853 = vld [vmem:[#allocation2 + $0x1a8] sm:$0xff]
      %v854 = vld [vmem:[#allocation2 + $0x1b0] sm:$0xff]
      %v855 = vld [vmem:[#allocation2 + $0x1c8] sm:$0xff]
      %v856 = vld [vmem:[#allocation2 + $0x1d0] sm:$0xff]
      %v857 = vld [vmem:[#allocation2 + $0x1e8] sm:$0xff]
      %v858 = vld [vmem:[#allocation2 + $0x1f0] sm:$0xff]
      %s859 = scalar_lea.vmem %s3, 128
      %v860 = vld [vmem:[%s859] sm:$0xff]
      %v861 = vld [vmem:[%s859 + $0x8] sm:$0xff]
      %v862 = vld [vmem:[%s859 + $0x10] sm:$0xff]
      %v863 = vld [vmem:[%s859 + $0x18] sm:$0xff]
      %v864 = vld [vmem:[%s859 + $0x20] sm:$0xff]
      %v865 = vld [vmem:[%s859 + $0x28] sm:$0xff]
      %v866 = vld [vmem:[%s859 + $0x30] sm:$0xff]
      %v867 = vld [vmem:[%s859 + $0x38] sm:$0xff]
      %v868 = vld [vmem:[%s859 + $0x40] sm:$0xff]
      %v869 = vld [vmem:[%s859 + $0x48] sm:$0xff]
      %v870 = vld [vmem:[%s859 + $0x50] sm:$0xff]
      %v871 = vld [vmem:[%s859 + $0x58] sm:$0xff]
      %v872 = vld [vmem:[%s859 + $0x60] sm:$0xff]
      %v873 = vld [vmem:[%s859 + $0x68] sm:$0xff]
      %v874 = vld [vmem:[%s859 + $0x70] sm:$0xff]
      %v875 = vld [vmem:[%s859 + $0x78] sm:$0xff]
      %876 = vmatpush.msra.mxu0 %v875
      %877 = vmatpush.msra.mxu0 %v874
      %878 = vmatpush.msra.mxu0 %v873
      %879 = vmatpush.msra.mxu0 %v872
      %880 = vmatpush.msra.mxu0 %v871
      %881 = vmatpush.msra.mxu0 %v870
      %882 = vmatpush.msra.mxu0 %v869
      %883 = vmatpush.msra.mxu0 %v868
      %884 = vmatpush.msra.mxu0 %v867
      %885 = vmatpush.msra.mxu0 %v866
      %886 = vmatpush.msra.mxu0 %v865
      %887 = vmatpush.msra.mxu0 %v864
      %888 = vmatpush.msra.mxu0 %v863
      %889 = vmatpush.msra.mxu0 %v862
      %890 = vmatpush.msra.mxu0 %v861
      %891 = vmatpush.msra.mxu0 %v860
      %892 = vmatmul.f32.gmra.mxu0 %v827
      %v893 = vpop.f32.mrf.mxu0
      %v894 = vadd.f32 0.0, %v893
      %895 = vmatmul.f32.gmra.mxu0 %v828
      %v896 = vpop.f32.mrf.mxu0
      %v897 = vadd.f32 0.0, %v896
      %898 = vmatmul.f32.gmra.mxu0 %v829
      %v899 = vpop.f32.mrf.mxu0
      %v900 = vadd.f32 0.0, %v899
      %901 = vmatmul.f32.gmra.mxu0 %v830
      %v902 = vpop.f32.mrf.mxu0
      %v903 = vadd.f32 0.0, %v902
      %904 = vmatmul.f32.gmra.mxu0 %v831
      %v905 = vpop.f32.mrf.mxu0
      %v906 = vadd.f32 0.0, %v905
      %907 = vmatmul.f32.gmra.mxu0 %v832
      %v908 = vpop.f32.mrf.mxu0
      %v909 = vadd.f32 0.0, %v908
      %910 = vmatmul.f32.gmra.mxu0 %v833
      %v911 = vpop.f32.mrf.mxu0
      %v912 = vadd.f32 0.0, %v911
      %913 = vmatmul.f32.gmra.mxu0 %v834
      %v914 = vpop.f32.mrf.mxu0
      %v915 = vadd.f32 0.0, %v914
      %916 = vmatmul.f32.gmra.mxu0 %v835
      %v917 = vpop.f32.mrf.mxu0
      %v918 = vadd.f32 0.0, %v917
      %919 = vmatmul.f32.gmra.mxu0 %v836
      %v920 = vpop.f32.mrf.mxu0
      %v921 = vadd.f32 0.0, %v920
      %922 = vmatmul.f32.gmra.mxu0 %v837
      %v923 = vpop.f32.mrf.mxu0
      %v924 = vadd.f32 0.0, %v923
      %925 = vmatmul.f32.gmra.mxu0 %v838
      %v926 = vpop.f32.mrf.mxu0
      %v927 = vadd.f32 0.0, %v926
      %928 = vmatmul.f32.gmra.mxu0 %v839
      %v929 = vpop.f32.mrf.mxu0
      %v930 = vadd.f32 0.0, %v929
      %931 = vmatmul.f32.gmra.mxu0 %v840
      %v932 = vpop.f32.mrf.mxu0
      %v933 = vadd.f32 0.0, %v932
      %934 = vmatmul.f32.gmra.mxu0 %v841
      %v935 = vpop.f32.mrf.mxu0
      %v936 = vadd.f32 0.0, %v935
      %937 = vmatmul.f32.gmra.mxu0 %v842
      %v938 = vpop.f32.mrf.mxu0
      %v939 = vadd.f32 0.0, %v938
      %940 = vmatmul.f32.gmra.mxu0 %v843
      %v941 = vpop.f32.mrf.mxu0
      %v942 = vadd.f32 0.0, %v941
      %943 = vmatmul.f32.gmra.mxu0 %v844
      %v944 = vpop.f32.mrf.mxu0
      %v945 = vadd.f32 0.0, %v944
      %946 = vmatmul.f32.gmra.mxu0 %v845
      %v947 = vpop.f32.mrf.mxu0
      %v948 = vadd.f32 0.0, %v947
      %949 = vmatmul.f32.gmra.mxu0 %v846
      %v950 = vpop.f32.mrf.mxu0
      %v951 = vadd.f32 0.0, %v950
      %952 = vmatmul.f32.gmra.mxu0 %v847
      %v953 = vpop.f32.mrf.mxu0
      %v954 = vadd.f32 0.0, %v953
      %955 = vmatmul.f32.gmra.mxu0 %v848
      %v956 = vpop.f32.mrf.mxu0
      %v957 = vadd.f32 0.0, %v956
      %958 = vmatmul.f32.gmra.mxu0 %v849
      %v959 = vpop.f32.mrf.mxu0
      %v960 = vadd.f32 0.0, %v959
      %961 = vmatmul.f32.gmra.mxu0 %v850
      %v962 = vpop.f32.mrf.mxu0
      %v963 = vadd.f32 0.0, %v962
      %964 = vmatmul.f32.gmra.mxu0 %v851
      %v965 = vpop.f32.mrf.mxu0
      %v966 = vadd.f32 0.0, %v965
      %967 = vmatmul.f32.gmra.mxu0 %v852
      %v968 = vpop.f32.mrf.mxu0
      %v969 = vadd.f32 0.0, %v968
      %970 = vmatmul.f32.gmra.mxu0 %v853
      %v971 = vpop.f32.mrf.mxu0
      %v972 = vadd.f32 0.0, %v971
      %973 = vmatmul.f32.gmra.mxu0 %v854
      %v974 = vpop.f32.mrf.mxu0
      %v975 = vadd.f32 0.0, %v974
      %976 = vmatmul.f32.gmra.mxu0 %v855
      %v977 = vpop.f32.mrf.mxu0
      %v978 = vadd.f32 0.0, %v977
      %979 = vmatmul.f32.gmra.mxu0 %v856
      %v980 = vpop.f32.mrf.mxu0
      %v981 = vadd.f32 0.0, %v980
      %982 = vmatmul.f32.gmra.mxu0 %v857
      %v983 = vpop.f32.mrf.mxu0
      %v984 = vadd.f32 0.0, %v983
      %985 = vmatmul.f32.gmra.mxu0 %v858
      %v986 = vpop.f32.mrf.mxu0
      %v987 = vadd.f32 0.0, %v986
      %988 = vdwg.mxu0
      %989 = vmatpush.msra.mxu0 %v826
      %990 = vmatpush.msra.mxu0 %v825
      %991 = vmatpush.msra.mxu0 %v824
      %992 = vmatpush.msra.mxu0 %v823
      %993 = vmatpush.msra.mxu0 %v822
      %994 = vmatpush.msra.mxu0 %v821
      %995 = vmatpush.msra.mxu0 %v820
      %996 = vmatpush.msra.mxu0 %v819
      %997 = vmatpush.msra.mxu0 %v818
      %998 = vmatpush.msra.mxu0 %v817
      %999 = vmatpush.msra.mxu0 %v816
      %1000 = vmatpush.msra.mxu0 %v815
      %1001 = vmatpush.msra.mxu0 %v814
      %1002 = vmatpush.msra.mxu0 %v813
      %1003 = vmatpush.msra.mxu0 %v812
      %1004 = vmatpush.msra.mxu0 %v811
      %1005 = vmatmul.f32.gmra.mxu0 %v779
      %v1006 = vpop.f32.mrf.mxu0
      %v1007 = vadd.f32 %v894, %v1006
      %1008 = vmatmul.f32.gmra.mxu0 %v780
      %v1009 = vpop.f32.mrf.mxu0
      %v1010 = vadd.f32 %v897, %v1009
      %1011 = vmatmul.f32.gmra.mxu0 %v781
      %v1012 = vpop.f32.mrf.mxu0
      %v1013 = vadd.f32 %v900, %v1012
      %1014 = vmatmul.f32.gmra.mxu0 %v782
      %v1015 = vpop.f32.mrf.mxu0
      %v1016 = vadd.f32 %v903, %v1015
      %1017 = vmatmul.f32.gmra.mxu0 %v783
      %v1018 = vpop.f32.mrf.mxu0
      %v1019 = vadd.f32 %v906, %v1018
      %1020 = vmatmul.f32.gmra.mxu0 %v784
      %v1021 = vpop.f32.mrf.mxu0
      %v1022 = vadd.f32 %v909, %v1021
      %1023 = vmatmul.f32.gmra.mxu0 %v785
      %v1024 = vpop.f32.mrf.mxu0
      %v1025 = vadd.f32 %v912, %v1024
      %1026 = vmatmul.f32.gmra.mxu0 %v786
      %v1027 = vpop.f32.mrf.mxu0
      %v1028 = vadd.f32 %v915, %v1027
      %1029 = vmatmul.f32.gmra.mxu0 %v787
      %v1030 = vpop.f32.mrf.mxu0
      %v1031 = vadd.f32 %v918, %v1030
      %1032 = vmatmul.f32.gmra.mxu0 %v788
      %v1033 = vpop.f32.mrf.mxu0
      %v1034 = vadd.f32 %v921, %v1033
      %1035 = vmatmul.f32.gmra.mxu0 %v789
      %v1036 = vpop.f32.mrf.mxu0
      %v1037 = vadd.f32 %v924, %v1036
      %1038 = vmatmul.f32.gmra.mxu0 %v790
      %v1039 = vpop.f32.mrf.mxu0
      %v1040 = vadd.f32 %v927, %v1039
      %1041 = vmatmul.f32.gmra.mxu0 %v791
      %v1042 = vpop.f32.mrf.mxu0
      %v1043 = vadd.f32 %v930, %v1042
      %1044 = vmatmul.f32.gmra.mxu0 %v792
      %v1045 = vpop.f32.mrf.mxu0
      %v1046 = vadd.f32 %v933, %v1045
      %1047 = vmatmul.f32.gmra.mxu0 %v793
      %v1048 = vpop.f32.mrf.mxu0
      %v1049 = vadd.f32 %v936, %v1048
      %1050 = vmatmul.f32.gmra.mxu0 %v794
      %v1051 = vpop.f32.mrf.mxu0
      %v1052 = vadd.f32 %v939, %v1051
      %1053 = vmatmul.f32.gmra.mxu0 %v795
      %v1054 = vpop.f32.mrf.mxu0
      %v1055 = vadd.f32 %v942, %v1054
      %1056 = vmatmul.f32.gmra.mxu0 %v796
      %v1057 = vpop.f32.mrf.mxu0
      %v1058 = vadd.f32 %v945, %v1057
      %1059 = vmatmul.f32.gmra.mxu0 %v797
      %v1060 = vpop.f32.mrf.mxu0
      %v1061 = vadd.f32 %v948, %v1060
      %1062 = vmatmul.f32.gmra.mxu0 %v798
      %v1063 = vpop.f32.mrf.mxu0
      %v1064 = vadd.f32 %v951, %v1063
      %1065 = vmatmul.f32.gmra.mxu0 %v799
      %v1066 = vpop.f32.mrf.mxu0
      %v1067 = vadd.f32 %v954, %v1066
      %1068 = vmatmul.f32.gmra.mxu0 %v800
      %v1069 = vpop.f32.mrf.mxu0
      %v1070 = vadd.f32 %v957, %v1069
      %1071 = vmatmul.f32.gmra.mxu0 %v801
      %v1072 = vpop.f32.mrf.mxu0
      %v1073 = vadd.f32 %v960, %v1072
      %1074 = vmatmul.f32.gmra.mxu0 %v802
      %v1075 = vpop.f32.mrf.mxu0
      %v1076 = vadd.f32 %v963, %v1075
      %1077 = vmatmul.f32.gmra.mxu0 %v803
      %v1078 = vpop.f32.mrf.mxu0
      %v1079 = vadd.f32 %v966, %v1078
      %1080 = vmatmul.f32.gmra.mxu0 %v804
      %v1081 = vpop.f32.mrf.mxu0
      %v1082 = vadd.f32 %v969, %v1081
      %1083 = vmatmul.f32.gmra.mxu0 %v805
      %v1084 = vpop.f32.mrf.mxu0
      %v1085 = vadd.f32 %v972, %v1084
      %1086 = vmatmul.f32.gmra.mxu0 %v806
      %v1087 = vpop.f32.mrf.mxu0
      %v1088 = vadd.f32 %v975, %v1087
      %1089 = vmatmul.f32.gmra.mxu0 %v807
      %v1090 = vpop.f32.mrf.mxu0
      %v1091 = vadd.f32 %v978, %v1090
      %1092 = vmatmul.f32.gmra.mxu0 %v808
      %v1093 = vpop.f32.mrf.mxu0
      %v1094 = vadd.f32 %v981, %v1093
      %1095 = vmatmul.f32.gmra.mxu0 %v809
      %v1096 = vpop.f32.mrf.mxu0
      %v1097 = vadd.f32 %v984, %v1096
      %1098 = vmatmul.f32.gmra.mxu0 %v810
      %v1099 = vpop.f32.mrf.mxu0
      %v1100 = vadd.f32 %v987, %v1099
      %1101 = vdwg.mxu0
      %v1102 = vld [vmem:[#allocation2 + $0x9] sm:$0xff]
      %v1103 = vld [vmem:[#allocation2 + $0x11] sm:$0xff]
      %v1104 = vld [vmem:[#allocation2 + $0x29] sm:$0xff]
      %v1105 = vld [vmem:[#allocation2 + $0x31] sm:$0xff]
      %v1106 = vld [vmem:[#allocation2 + $0x49] sm:$0xff]
      %v1107 = vld [vmem:[#allocation2 + $0x51] sm:$0xff]
      %v1108 = vld [vmem:[#allocation2 + $0x69] sm:$0xff]
      %v1109 = vld [vmem:[#allocation2 + $0x71] sm:$0xff]
      %v1110 = vld [vmem:[#allocation2 + $0x89] sm:$0xff]
      %v1111 = vld [vmem:[#allocation2 + $0x91] sm:$0xff]
      %v1112 = vld [vmem:[#allocation2 + $0xa9] sm:$0xff]
      %v1113 = vld [vmem:[#allocation2 + $0xb1] sm:$0xff]
      %v1114 = vld [vmem:[#allocation2 + $0xc9] sm:$0xff]
      %v1115 = vld [vmem:[#allocation2 + $0xd1] sm:$0xff]
      %v1116 = vld [vmem:[#allocation2 + $0xe9] sm:$0xff]
      %v1117 = vld [vmem:[#allocation2 + $0xf1] sm:$0xff]
      %v1118 = vld [vmem:[#allocation2 + $0x109] sm:$0xff]
      %v1119 = vld [vmem:[#allocation2 + $0x111] sm:$0xff]
      %v1120 = vld [vmem:[#allocation2 + $0x129] sm:$0xff]
      %v1121 = vld [vmem:[#allocation2 + $0x131] sm:$0xff]
      %v1122 = vld [vmem:[#allocation2 + $0x149] sm:$0xff]
      %v1123 = vld [vmem:[#allocation2 + $0x151] sm:$0xff]
      %v1124 = vld [vmem:[#allocation2 + $0x169] sm:$0xff]
      %v1125 = vld [vmem:[#allocation2 + $0x171] sm:$0xff]
      %v1126 = vld [vmem:[#allocation2 + $0x189] sm:$0xff]
      %v1127 = vld [vmem:[#allocation2 + $0x191] sm:$0xff]
      %v1128 = vld [vmem:[#allocation2 + $0x1a9] sm:$0xff]
      %v1129 = vld [vmem:[#allocation2 + $0x1b1] sm:$0xff]
      %v1130 = vld [vmem:[#allocation2 + $0x1c9] sm:$0xff]
      %v1131 = vld [vmem:[#allocation2 + $0x1d1] sm:$0xff]
      %v1132 = vld [vmem:[#allocation2 + $0x1e9] sm:$0xff]
      %v1133 = vld [vmem:[#allocation2 + $0x1f1] sm:$0xff]
      %s1134 = scalar_lea.vmem %s3, 256
      %v1135 = vld [vmem:[%s1134] sm:$0xff]
      %v1136 = vld [vmem:[%s1134 + $0x8] sm:$0xff]
      %v1137 = vld [vmem:[%s1134 + $0x10] sm:$0xff]
      %v1138 = vld [vmem:[%s1134 + $0x18] sm:$0xff]
      %v1139 = vld [vmem:[%s1134 + $0x20] sm:$0xff]
      %v1140 = vld [vmem:[%s1134 + $0x28] sm:$0xff]
      %v1141 = vld [vmem:[%s1134 + $0x30] sm:$0xff]
      %v1142 = vld [vmem:[%s1134 + $0x38] sm:$0xff]
      %v1143 = vld [vmem:[%s1134 + $0x40] sm:$0xff]
      %v1144 = vld [vmem:[%s1134 + $0x48] sm:$0xff]
      %v1145 = vld [vmem:[%s1134 + $0x50] sm:$0xff]
      %v1146 = vld [vmem:[%s1134 + $0x58] sm:$0xff]
      %v1147 = vld [vmem:[%s1134 + $0x60] sm:$0xff]
      %v1148 = vld [vmem:[%s1134 + $0x68] sm:$0xff]
      %v1149 = vld [vmem:[%s1134 + $0x70] sm:$0xff]
      %v1150 = vld [vmem:[%s1134 + $0x78] sm:$0xff]
      %1151 = vmatpush.msra.mxu0 %v1150
      %1152 = vmatpush.msra.mxu0 %v1149
      %1153 = vmatpush.msra.mxu0 %v1148
      %1154 = vmatpush.msra.mxu0 %v1147
      %1155 = vmatpush.msra.mxu0 %v1146
      %1156 = vmatpush.msra.mxu0 %v1145
      %1157 = vmatpush.msra.mxu0 %v1144
      %1158 = vmatpush.msra.mxu0 %v1143
      %1159 = vmatpush.msra.mxu0 %v1142
      %1160 = vmatpush.msra.mxu0 %v1141
      %1161 = vmatpush.msra.mxu0 %v1140
      %1162 = vmatpush.msra.mxu0 %v1139
      %1163 = vmatpush.msra.mxu0 %v1138
      %1164 = vmatpush.msra.mxu0 %v1137
      %1165 = vmatpush.msra.mxu0 %v1136
      %1166 = vmatpush.msra.mxu0 %v1135
      %1167 = vmatmul.f32.gmra.mxu0 %v1102
      %v1168 = vpop.f32.mrf.mxu0
      %v1169 = vadd.f32 0.0, %v1168
      %1170 = vmatmul.f32.gmra.mxu0 %v1103
      %v1171 = vpop.f32.mrf.mxu0
      %v1172 = vadd.f32 0.0, %v1171
      %1173 = vmatmul.f32.gmra.mxu0 %v1104
      %v1174 = vpop.f32.mrf.mxu0
      %v1175 = vadd.f32 0.0, %v1174
      %1176 = vmatmul.f32.gmra.mxu0 %v1105
      %v1177 = vpop.f32.mrf.mxu0
      %v1178 = vadd.f32 0.0, %v1177
      %1179 = vmatmul.f32.gmra.mxu0 %v1106
      %v1180 = vpop.f32.mrf.mxu0
      %v1181 = vadd.f32 0.0, %v1180
      %1182 = vmatmul.f32.gmra.mxu0 %v1107
      %v1183 = vpop.f32.mrf.mxu0
      %v1184 = vadd.f32 0.0, %v1183
      %1185 = vmatmul.f32.gmra.mxu0 %v1108
      %v1186 = vpop.f32.mrf.mxu0
      %v1187 = vadd.f32 0.0, %v1186
      %1188 = vmatmul.f32.gmra.mxu0 %v1109
      %v1189 = vpop.f32.mrf.mxu0
      %v1190 = vadd.f32 0.0, %v1189
      %1191 = vmatmul.f32.gmra.mxu0 %v1110
      %v1192 = vpop.f32.mrf.mxu0
      %v1193 = vadd.f32 0.0, %v1192
      %1194 = vmatmul.f32.gmra.mxu0 %v1111
      %v1195 = vpop.f32.mrf.mxu0
      %v1196 = vadd.f32 0.0, %v1195
      %1197 = vmatmul.f32.gmra.mxu0 %v1112
      %v1198 = vpop.f32.mrf.mxu0
      %v1199 = vadd.f32 0.0, %v1198
      %1200 = vmatmul.f32.gmra.mxu0 %v1113
      %v1201 = vpop.f32.mrf.mxu0
      %v1202 = vadd.f32 0.0, %v1201
      %1203 = vmatmul.f32.gmra.mxu0 %v1114
      %v1204 = vpop.f32.mrf.mxu0
      %v1205 = vadd.f32 0.0, %v1204
      %1206 = vmatmul.f32.gmra.mxu0 %v1115
      %v1207 = vpop.f32.mrf.mxu0
      %v1208 = vadd.f32 0.0, %v1207
      %1209 = vmatmul.f32.gmra.mxu0 %v1116
      %v1210 = vpop.f32.mrf.mxu0
      %v1211 = vadd.f32 0.0, %v1210
      %1212 = vmatmul.f32.gmra.mxu0 %v1117
      %v1213 = vpop.f32.mrf.mxu0
      %v1214 = vadd.f32 0.0, %v1213
      %1215 = vmatmul.f32.gmra.mxu0 %v1118
      %v1216 = vpop.f32.mrf.mxu0
      %v1217 = vadd.f32 0.0, %v1216
      %1218 = vmatmul.f32.gmra.mxu0 %v1119
      %v1219 = vpop.f32.mrf.mxu0
      %v1220 = vadd.f32 0.0, %v1219
      %1221 = vmatmul.f32.gmra.mxu0 %v1120
      %v1222 = vpop.f32.mrf.mxu0
      %v1223 = vadd.f32 0.0, %v1222
      %1224 = vmatmul.f32.gmra.mxu0 %v1121
      %v1225 = vpop.f32.mrf.mxu0
      %v1226 = vadd.f32 0.0, %v1225
      %1227 = vmatmul.f32.gmra.mxu0 %v1122
      %v1228 = vpop.f32.mrf.mxu0
      %v1229 = vadd.f32 0.0, %v1228
      %1230 = vmatmul.f32.gmra.mxu0 %v1123
      %v1231 = vpop.f32.mrf.mxu0
      %v1232 = vadd.f32 0.0, %v1231
      %1233 = vmatmul.f32.gmra.mxu0 %v1124
      %v1234 = vpop.f32.mrf.mxu0
      %v1235 = vadd.f32 0.0, %v1234
      %1236 = vmatmul.f32.gmra.mxu0 %v1125
      %v1237 = vpop.f32.mrf.mxu0
      %v1238 = vadd.f32 0.0, %v1237
      %1239 = vmatmul.f32.gmra.mxu0 %v1126
      %v1240 = vpop.f32.mrf.mxu0
      %v1241 = vadd.f32 0.0, %v1240
      %1242 = vmatmul.f32.gmra.mxu0 %v1127
      %v1243 = vpop.f32.mrf.mxu0
      %v1244 = vadd.f32 0.0, %v1243
      %1245 = vmatmul.f32.gmra.mxu0 %v1128
      %v1246 = vpop.f32.mrf.mxu0
      %v1247 = vadd.f32 0.0, %v1246
      %1248 = vmatmul.f32.gmra.mxu0 %v1129
      %v1249 = vpop.f32.mrf.mxu0
      %v1250 = vadd.f32 0.0, %v1249
      %1251 = vmatmul.f32.gmra.mxu0 %v1130
      %v1252 = vpop.f32.mrf.mxu0
      %v1253 = vadd.f32 0.0, %v1252
      %1254 = vmatmul.f32.gmra.mxu0 %v1131
      %v1255 = vpop.f32.mrf.mxu0
      %v1256 = vadd.f32 0.0, %v1255
      %1257 = vmatmul.f32.gmra.mxu0 %v1132
      %v1258 = vpop.f32.mrf.mxu0
      %v1259 = vadd.f32 0.0, %v1258
      %1260 = vmatmul.f32.gmra.mxu0 %v1133
      %v1261 = vpop.f32.mrf.mxu0
      %v1262 = vadd.f32 0.0, %v1261
      %1263 = vdwg.mxu0
      %v1264 = vadd.f32 %v1007, %v1169
      %v1265 = vadd.f32 %v1010, %v1172
      %v1266 = vadd.f32 %v1013, %v1175
      %v1267 = vadd.f32 %v1016, %v1178
      %v1268 = vadd.f32 %v1019, %v1181
      %v1269 = vadd.f32 %v1022, %v1184
      %v1270 = vadd.f32 %v1025, %v1187
      %v1271 = vadd.f32 %v1028, %v1190
      %v1272 = vadd.f32 %v1031, %v1193
      %v1273 = vadd.f32 %v1034, %v1196
      %v1274 = vadd.f32 %v1037, %v1199
      %v1275 = vadd.f32 %v1040, %v1202
      %v1276 = vadd.f32 %v1043, %v1205
      %v1277 = vadd.f32 %v1046, %v1208
      %v1278 = vadd.f32 %v1049, %v1211
      %v1279 = vadd.f32 %v1052, %v1214
      %v1280 = vadd.f32 %v1055, %v1217
      %v1281 = vadd.f32 %v1058, %v1220
      %v1282 = vadd.f32 %v1061, %v1223
      %v1283 = vadd.f32 %v1064, %v1226
      %v1284 = vadd.f32 %v1067, %v1229
      %v1285 = vadd.f32 %v1070, %v1232
      %v1286 = vadd.f32 %v1073, %v1235
      %v1287 = vadd.f32 %v1076, %v1238
      %v1288 = vadd.f32 %v1079, %v1241
      %v1289 = vadd.f32 %v1082, %v1244
      %v1290 = vadd.f32 %v1085, %v1247
      %v1291 = vadd.f32 %v1088, %v1250
      %v1292 = vadd.f32 %v1091, %v1253
      %v1293 = vadd.f32 %v1094, %v1256
      %v1294 = vadd.f32 %v1097, %v1259
      %v1295 = vadd.f32 %v1100, %v1262
      %v1296 = vld [vmem:[%s746 + $0x7] sm:$0xff]
      %v1297 = vld [vmem:[%s746 + $0xf] sm:$0xff]
      %v1298 = vld [vmem:[%s746 + $0x27] sm:$0xff]
      %v1299 = vld [vmem:[%s746 + $0x2f] sm:$0xff]
      %v1300 = vld [vmem:[%s746 + $0x47] sm:$0xff]
      %v1301 = vld [vmem:[%s746 + $0x4f] sm:$0xff]
      %v1302 = vld [vmem:[%s746 + $0x67] sm:$0xff]
      %v1303 = vld [vmem:[%s746 + $0x6f] sm:$0xff]
      %v1304 = vld [vmem:[%s746 + $0x87] sm:$0xff]
      %v1305 = vld [vmem:[%s746 + $0x8f] sm:$0xff]
      %v1306 = vld [vmem:[%s746 + $0xa7] sm:$0xff]
      %v1307 = vld [vmem:[%s746 + $0xaf] sm:$0xff]
      %v1308 = vld [vmem:[%s746 + $0xc7] sm:$0xff]
      %v1309 = vld [vmem:[%s746 + $0xcf] sm:$0xff]
      %v1310 = vld [vmem:[%s746 + $0xe7] sm:$0xff]
      %v1311 = vld [vmem:[%s746 + $0xef] sm:$0xff]
      %v1312 = vld [vmem:[%s746 + $0x107] sm:$0xff]
      %v1313 = vld [vmem:[%s746 + $0x10f] sm:$0xff]
      %v1314 = vld [vmem:[%s746 + $0x127] sm:$0xff]
      %v1315 = vld [vmem:[%s746 + $0x12f] sm:$0xff]
      %v1316 = vld [vmem:[%s746 + $0x147] sm:$0xff]
      %v1317 = vld [vmem:[%s746 + $0x14f] sm:$0xff]
      %v1318 = vld [vmem:[%s746 + $0x167] sm:$0xff]
      %v1319 = vld [vmem:[%s746 + $0x16f] sm:$0xff]
      %v1320 = vld [vmem:[%s746 + $0x187] sm:$0xff]
      %v1321 = vld [vmem:[%s746 + $0x18f] sm:$0xff]
      %v1322 = vld [vmem:[%s746 + $0x1a7] sm:$0xff]
      %v1323 = vld [vmem:[%s746 + $0x1af] sm:$0xff]
      %v1324 = vld [vmem:[%s746 + $0x1c7] sm:$0xff]
      %v1325 = vld [vmem:[%s746 + $0x1cf] sm:$0xff]
      %v1326 = vld [vmem:[%s746 + $0x1e7] sm:$0xff]
      %v1327 = vld [vmem:[%s746 + $0x1ef] sm:$0xff]
      %s1328 = scalar_lea.vmem %s3, 384
      %v1329 = vld [vmem:[%s1328] sm:$0xff]
      %v1330 = vld [vmem:[%s1328 + $0x8] sm:$0xff]
      %v1331 = vld [vmem:[%s1328 + $0x10] sm:$0xff]
      %v1332 = vld [vmem:[%s1328 + $0x18] sm:$0xff]
      %v1333 = vld [vmem:[%s1328 + $0x20] sm:$0xff]
      %v1334 = vld [vmem:[%s1328 + $0x28] sm:$0xff]
      %v1335 = vld [vmem:[%s1328 + $0x30] sm:$0xff]
      %v1336 = vld [vmem:[%s1328 + $0x38] sm:$0xff]
      %v1337 = vld [vmem:[%s1328 + $0x40] sm:$0xff]
      %v1338 = vld [vmem:[%s1328 + $0x48] sm:$0xff]
      %v1339 = vld [vmem:[%s1328 + $0x50] sm:$0xff]
      %v1340 = vld [vmem:[%s1328 + $0x58] sm:$0xff]
      %v1341 = vld [vmem:[%s1328 + $0x60] sm:$0xff]
      %v1342 = vld [vmem:[%s1328 + $0x68] sm:$0xff]
      %v1343 = vld [vmem:[%s1328 + $0x70] sm:$0xff]
      %v1344 = vld [vmem:[%s1328 + $0x78] sm:$0xff]
      %1345 = vmatpush.msra.mxu0 %v1344
      %1346 = vmatpush.msra.mxu0 %v1343
      %1347 = vmatpush.msra.mxu0 %v1342
      %1348 = vmatpush.msra.mxu0 %v1341
      %1349 = vmatpush.msra.mxu0 %v1340
      %1350 = vmatpush.msra.mxu0 %v1339
      %1351 = vmatpush.msra.mxu0 %v1338
      %1352 = vmatpush.msra.mxu0 %v1337
      %1353 = vmatpush.msra.mxu0 %v1336
      %1354 = vmatpush.msra.mxu0 %v1335
      %1355 = vmatpush.msra.mxu0 %v1334
      %1356 = vmatpush.msra.mxu0 %v1333
      %1357 = vmatpush.msra.mxu0 %v1332
      %1358 = vmatpush.msra.mxu0 %v1331
      %1359 = vmatpush.msra.mxu0 %v1330
      %1360 = vmatpush.msra.mxu0 %v1329
      %1361 = vmatmul.f32.gmra.mxu0 %v1296
      %v1362 = vpop.f32.mrf.mxu0
      %v1363 = vadd.f32 0.0, %v1362
      %1364 = vmatmul.f32.gmra.mxu0 %v1297
      %v1365 = vpop.f32.mrf.mxu0
      %v1366 = vadd.f32 0.0, %v1365
      %1367 = vmatmul.f32.gmra.mxu0 %v1298
      %v1368 = vpop.f32.mrf.mxu0
      %v1369 = vadd.f32 0.0, %v1368
      %1370 = vmatmul.f32.gmra.mxu0 %v1299
      %v1371 = vpop.f32.mrf.mxu0
      %v1372 = vadd.f32 0.0, %v1371
      %1373 = vmatmul.f32.gmra.mxu0 %v1300
      %v1374 = vpop.f32.mrf.mxu0
      %v1375 = vadd.f32 0.0, %v1374
      %1376 = vmatmul.f32.gmra.mxu0 %v1301
      %v1377 = vpop.f32.mrf.mxu0
      %v1378 = vadd.f32 0.0, %v1377
      %1379 = vmatmul.f32.gmra.mxu0 %v1302
      %v1380 = vpop.f32.mrf.mxu0
      %v1381 = vadd.f32 0.0, %v1380
      %1382 = vmatmul.f32.gmra.mxu0 %v1303
      %v1383 = vpop.f32.mrf.mxu0
      %v1384 = vadd.f32 0.0, %v1383
      %1385 = vmatmul.f32.gmra.mxu0 %v1304
      %v1386 = vpop.f32.mrf.mxu0
      %v1387 = vadd.f32 0.0, %v1386
      %1388 = vmatmul.f32.gmra.mxu0 %v1305
      %v1389 = vpop.f32.mrf.mxu0
      %v1390 = vadd.f32 0.0, %v1389
      %1391 = vmatmul.f32.gmra.mxu0 %v1306
      %v1392 = vpop.f32.mrf.mxu0
      %v1393 = vadd.f32 0.0, %v1392
      %1394 = vmatmul.f32.gmra.mxu0 %v1307
      %v1395 = vpop.f32.mrf.mxu0
      %v1396 = vadd.f32 0.0, %v1395
      %1397 = vmatmul.f32.gmra.mxu0 %v1308
      %v1398 = vpop.f32.mrf.mxu0
      %v1399 = vadd.f32 0.0, %v1398
      %1400 = vmatmul.f32.gmra.mxu0 %v1309
      %v1401 = vpop.f32.mrf.mxu0
      %v1402 = vadd.f32 0.0, %v1401
      %1403 = vmatmul.f32.gmra.mxu0 %v1310
      %v1404 = vpop.f32.mrf.mxu0
      %v1405 = vadd.f32 0.0, %v1404
      %1406 = vmatmul.f32.gmra.mxu0 %v1311
      %v1407 = vpop.f32.mrf.mxu0
      %v1408 = vadd.f32 0.0, %v1407
      %1409 = vmatmul.f32.gmra.mxu0 %v1312
      %v1410 = vpop.f32.mrf.mxu0
      %v1411 = vadd.f32 0.0, %v1410
      %1412 = vmatmul.f32.gmra.mxu0 %v1313
      %v1413 = vpop.f32.mrf.mxu0
      %v1414 = vadd.f32 0.0, %v1413
      %1415 = vmatmul.f32.gmra.mxu0 %v1314
      %v1416 = vpop.f32.mrf.mxu0
      %v1417 = vadd.f32 0.0, %v1416
      %1418 = vmatmul.f32.gmra.mxu0 %v1315
      %v1419 = vpop.f32.mrf.mxu0
      %v1420 = vadd.f32 0.0, %v1419
      %1421 = vmatmul.f32.gmra.mxu0 %v1316
      %v1422 = vpop.f32.mrf.mxu0
      %v1423 = vadd.f32 0.0, %v1422
      %1424 = vmatmul.f32.gmra.mxu0 %v1317
      %v1425 = vpop.f32.mrf.mxu0
      %v1426 = vadd.f32 0.0, %v1425
      %1427 = vmatmul.f32.gmra.mxu0 %v1318
      %v1428 = vpop.f32.mrf.mxu0
      %v1429 = vadd.f32 0.0, %v1428
      %1430 = vmatmul.f32.gmra.mxu0 %v1319
      %v1431 = vpop.f32.mrf.mxu0
      %v1432 = vadd.f32 0.0, %v1431
      %1433 = vmatmul.f32.gmra.mxu0 %v1320
      %v1434 = vpop.f32.mrf.mxu0
      %v1435 = vadd.f32 0.0, %v1434
      %1436 = vmatmul.f32.gmra.mxu0 %v1321
      %v1437 = vpop.f32.mrf.mxu0
      %v1438 = vadd.f32 0.0, %v1437
      %1439 = vmatmul.f32.gmra.mxu0 %v1322
      %v1440 = vpop.f32.mrf.mxu0
      %v1441 = vadd.f32 0.0, %v1440
      %1442 = vmatmul.f32.gmra.mxu0 %v1323
      %v1443 = vpop.f32.mrf.mxu0
      %v1444 = vadd.f32 0.0, %v1443
      %1445 = vmatmul.f32.gmra.mxu0 %v1324
      %v1446 = vpop.f32.mrf.mxu0
      %v1447 = vadd.f32 0.0, %v1446
      %1448 = vmatmul.f32.gmra.mxu0 %v1325
      %v1449 = vpop.f32.mrf.mxu0
      %v1450 = vadd.f32 0.0, %v1449
      %1451 = vmatmul.f32.gmra.mxu0 %v1326
      %v1452 = vpop.f32.mrf.mxu0
      %v1453 = vadd.f32 0.0, %v1452
      %1454 = vmatmul.f32.gmra.mxu0 %v1327
      %v1455 = vpop.f32.mrf.mxu0
      %v1456 = vadd.f32 0.0, %v1455
      %1457 = vdwg.mxu0
      %v1458 = vadd.f32 %v1264, %v1363
      %v1459 = vadd.f32 %v1265, %v1366
      %v1460 = vadd.f32 %v1266, %v1369
      %v1461 = vadd.f32 %v1267, %v1372
      %v1462 = vadd.f32 %v1268, %v1375
      %v1463 = vadd.f32 %v1269, %v1378
      %v1464 = vadd.f32 %v1270, %v1381
      %v1465 = vadd.f32 %v1271, %v1384
      %v1466 = vadd.f32 %v1272, %v1387
      %v1467 = vadd.f32 %v1273, %v1390
      %v1468 = vadd.f32 %v1274, %v1393
      %v1469 = vadd.f32 %v1275, %v1396
      %v1470 = vadd.f32 %v1276, %v1399
      %v1471 = vadd.f32 %v1277, %v1402
      %v1472 = vadd.f32 %v1278, %v1405
      %v1473 = vadd.f32 %v1279, %v1408
      %v1474 = vadd.f32 %v1280, %v1411
      %v1475 = vadd.f32 %v1281, %v1414
      %v1476 = vadd.f32 %v1282, %v1417
      %v1477 = vadd.f32 %v1283, %v1420
      %v1478 = vadd.f32 %v1284, %v1423
      %v1479 = vadd.f32 %v1285, %v1426
      %v1480 = vadd.f32 %v1286, %v1429
      %v1481 = vadd.f32 %v1287, %v1432
      %v1482 = vadd.f32 %v1288, %v1435
      %v1483 = vadd.f32 %v1289, %v1438
      %v1484 = vadd.f32 %v1290, %v1441
      %v1485 = vadd.f32 %v1291, %v1444
      %v1486 = vadd.f32 %v1292, %v1447
      %v1487 = vadd.f32 %v1293, %v1450
      %v1488 = vadd.f32 %v1294, %v1453
      %v1489 = vadd.f32 %v1295, %v1456
      %v1490 = vld [vmem:[%s746 + $0x8] sm:$0xff]
      %v1491 = vld [vmem:[%s746 + $0x10] sm:$0xff]
      %v1492 = vld [vmem:[%s746 + $0x28] sm:$0xff]
      %v1493 = vld [vmem:[%s746 + $0x30] sm:$0xff]
      %v1494 = vld [vmem:[%s746 + $0x48] sm:$0xff]
      %v1495 = vld [vmem:[%s746 + $0x50] sm:$0xff]
      %v1496 = vld [vmem:[%s746 + $0x68] sm:$0xff]
      %v1497 = vld [vmem:[%s746 + $0x70] sm:$0xff]
      %v1498 = vld [vmem:[%s746 + $0x88] sm:$0xff]
      %v1499 = vld [vmem:[%s746 + $0x90] sm:$0xff]
      %v1500 = vld [vmem:[%s746 + $0xa8] sm:$0xff]
      %v1501 = vld [vmem:[%s746 + $0xb0] sm:$0xff]
      %v1502 = vld [vmem:[%s746 + $0xc8] sm:$0xff]
      %v1503 = vld [vmem:[%s746 + $0xd0] sm:$0xff]
      %v1504 = vld [vmem:[%s746 + $0xe8] sm:$0xff]
      %v1505 = vld [vmem:[%s746 + $0xf0] sm:$0xff]
      %v1506 = vld [vmem:[%s746 + $0x108] sm:$0xff]
      %v1507 = vld [vmem:[%s746 + $0x110] sm:$0xff]
      %v1508 = vld [vmem:[%s746 + $0x128] sm:$0xff]
      %v1509 = vld [vmem:[%s746 + $0x130] sm:$0xff]
      %v1510 = vld [vmem:[%s746 + $0x148] sm:$0xff]
      %v1511 = vld [vmem:[%s746 + $0x150] sm:$0xff]
      %v1512 = vld [vmem:[%s746 + $0x168] sm:$0xff]
      %v1513 = vld [vmem:[%s746 + $0x170] sm:$0xff]
      %v1514 = vld [vmem:[%s746 + $0x188] sm:$0xff]
      %v1515 = vld [vmem:[%s746 + $0x190] sm:$0xff]
      %v1516 = vld [vmem:[%s746 + $0x1a8] sm:$0xff]
      %v1517 = vld [vmem:[%s746 + $0x1b0] sm:$0xff]
      %v1518 = vld [vmem:[%s746 + $0x1c8] sm:$0xff]
      %v1519 = vld [vmem:[%s746 + $0x1d0] sm:$0xff]
      %v1520 = vld [vmem:[%s746 + $0x1e8] sm:$0xff]
      %v1521 = vld [vmem:[%s746 + $0x1f0] sm:$0xff]
      %s1522 = scalar_lea.vmem %s3, 512
      %v1523 = vld [vmem:[%s1522] sm:$0xff]
      %v1524 = vld [vmem:[%s1522 + $0x8] sm:$0xff]
      %v1525 = vld [vmem:[%s1522 + $0x10] sm:$0xff]
      %v1526 = vld [vmem:[%s1522 + $0x18] sm:$0xff]
      %v1527 = vld [vmem:[%s1522 + $0x20] sm:$0xff]
      %v1528 = vld [vmem:[%s1522 + $0x28] sm:$0xff]
      %v1529 = vld [vmem:[%s1522 + $0x30] sm:$0xff]
      %v1530 = vld [vmem:[%s1522 + $0x38] sm:$0xff]
      %v1531 = vld [vmem:[%s1522 + $0x40] sm:$0xff]
      %v1532 = vld [vmem:[%s1522 + $0x48] sm:$0xff]
      %v1533 = vld [vmem:[%s1522 + $0x50] sm:$0xff]
      %v1534 = vld [vmem:[%s1522 + $0x58] sm:$0xff]
      %v1535 = vld [vmem:[%s1522 + $0x60] sm:$0xff]
      %v1536 = vld [vmem:[%s1522 + $0x68] sm:$0xff]
      %v1537 = vld [vmem:[%s1522 + $0x70] sm:$0xff]
      %v1538 = vld [vmem:[%s1522 + $0x78] sm:$0xff]
      %1539 = vmatpush.msra.mxu0 %v1538
      %1540 = vmatpush.msra.mxu0 %v1537
      %1541 = vmatpush.msra.mxu0 %v1536
      %1542 = vmatpush.msra.mxu0 %v1535
      %1543 = vmatpush.msra.mxu0 %v1534
      %1544 = vmatpush.msra.mxu0 %v1533
      %1545 = vmatpush.msra.mxu0 %v1532
      %1546 = vmatpush.msra.mxu0 %v1531
      %1547 = vmatpush.msra.mxu0 %v1530
      %1548 = vmatpush.msra.mxu0 %v1529
      %1549 = vmatpush.msra.mxu0 %v1528
      %1550 = vmatpush.msra.mxu0 %v1527
      %1551 = vmatpush.msra.mxu0 %v1526
      %1552 = vmatpush.msra.mxu0 %v1525
      %1553 = vmatpush.msra.mxu0 %v1524
      %1554 = vmatpush.msra.mxu0 %v1523
      %1555 = vmatmul.f32.gmra.mxu0 %v1490
      %v1556 = vpop.f32.mrf.mxu0
      %v1557 = vadd.f32 0.0, %v1556
      %1558 = vmatmul.f32.gmra.mxu0 %v1491
      %v1559 = vpop.f32.mrf.mxu0
      %v1560 = vadd.f32 0.0, %v1559
      %1561 = vmatmul.f32.gmra.mxu0 %v1492
      %v1562 = vpop.f32.mrf.mxu0
      %v1563 = vadd.f32 0.0, %v1562
      %1564 = vmatmul.f32.gmra.mxu0 %v1493
      %v1565 = vpop.f32.mrf.mxu0
      %v1566 = vadd.f32 0.0, %v1565
      %1567 = vmatmul.f32.gmra.mxu0 %v1494
      %v1568 = vpop.f32.mrf.mxu0
      %v1569 = vadd.f32 0.0, %v1568
      %1570 = vmatmul.f32.gmra.mxu0 %v1495
      %v1571 = vpop.f32.mrf.mxu0
      %v1572 = vadd.f32 0.0, %v1571
      %1573 = vmatmul.f32.gmra.mxu0 %v1496
      %v1574 = vpop.f32.mrf.mxu0
      %v1575 = vadd.f32 0.0, %v1574
      %1576 = vmatmul.f32.gmra.mxu0 %v1497
      %v1577 = vpop.f32.mrf.mxu0
      %v1578 = vadd.f32 0.0, %v1577
      %1579 = vmatmul.f32.gmra.mxu0 %v1498
      %v1580 = vpop.f32.mrf.mxu0
      %v1581 = vadd.f32 0.0, %v1580
      %1582 = vmatmul.f32.gmra.mxu0 %v1499
      %v1583 = vpop.f32.mrf.mxu0
      %v1584 = vadd.f32 0.0, %v1583
      %1585 = vmatmul.f32.gmra.mxu0 %v1500
      %v1586 = vpop.f32.mrf.mxu0
      %v1587 = vadd.f32 0.0, %v1586
      %1588 = vmatmul.f32.gmra.mxu0 %v1501
      %v1589 = vpop.f32.mrf.mxu0
      %v1590 = vadd.f32 0.0, %v1589
      %1591 = vmatmul.f32.gmra.mxu0 %v1502
      %v1592 = vpop.f32.mrf.mxu0
      %v1593 = vadd.f32 0.0, %v1592
      %1594 = vmatmul.f32.gmra.mxu0 %v1503
      %v1595 = vpop.f32.mrf.mxu0
      %v1596 = vadd.f32 0.0, %v1595
      %1597 = vmatmul.f32.gmra.mxu0 %v1504
      %v1598 = vpop.f32.mrf.mxu0
      %v1599 = vadd.f32 0.0, %v1598
      %1600 = vmatmul.f32.gmra.mxu0 %v1505
      %v1601 = vpop.f32.mrf.mxu0
      %v1602 = vadd.f32 0.0, %v1601
      %1603 = vmatmul.f32.gmra.mxu0 %v1506
      %v1604 = vpop.f32.mrf.mxu0
      %v1605 = vadd.f32 0.0, %v1604
      %1606 = vmatmul.f32.gmra.mxu0 %v1507
      %v1607 = vpop.f32.mrf.mxu0
      %v1608 = vadd.f32 0.0, %v1607
      %1609 = vmatmul.f32.gmra.mxu0 %v1508
      %v1610 = vpop.f32.mrf.mxu0
      %v1611 = vadd.f32 0.0, %v1610
      %1612 = vmatmul.f32.gmra.mxu0 %v1509
      %v1613 = vpop.f32.mrf.mxu0
      %v1614 = vadd.f32 0.0, %v1613
      %1615 = vmatmul.f32.gmra.mxu0 %v1510
      %v1616 = vpop.f32.mrf.mxu0
      %v1617 = vadd.f32 0.0, %v1616
      %1618 = vmatmul.f32.gmra.mxu0 %v1511
      %v1619 = vpop.f32.mrf.mxu0
      %v1620 = vadd.f32 0.0, %v1619
      %1621 = vmatmul.f32.gmra.mxu0 %v1512
      %v1622 = vpop.f32.mrf.mxu0
      %v1623 = vadd.f32 0.0, %v1622
      %1624 = vmatmul.f32.gmra.mxu0 %v1513
      %v1625 = vpop.f32.mrf.mxu0
      %v1626 = vadd.f32 0.0, %v1625
      %1627 = vmatmul.f32.gmra.mxu0 %v1514
      %v1628 = vpop.f32.mrf.mxu0
      %v1629 = vadd.f32 0.0, %v1628
      %1630 = vmatmul.f32.gmra.mxu0 %v1515
      %v1631 = vpop.f32.mrf.mxu0
      %v1632 = vadd.f32 0.0, %v1631
      %1633 = vmatmul.f32.gmra.mxu0 %v1516
      %v1634 = vpop.f32.mrf.mxu0
      %v1635 = vadd.f32 0.0, %v1634
      %1636 = vmatmul.f32.gmra.mxu0 %v1517
      %v1637 = vpop.f32.mrf.mxu0
      %v1638 = vadd.f32 0.0, %v1637
      %1639 = vmatmul.f32.gmra.mxu0 %v1518
      %v1640 = vpop.f32.mrf.mxu0
      %v1641 = vadd.f32 0.0, %v1640
      %1642 = vmatmul.f32.gmra.mxu0 %v1519
      %v1643 = vpop.f32.mrf.mxu0
      %v1644 = vadd.f32 0.0, %v1643
      %1645 = vmatmul.f32.gmra.mxu0 %v1520
      %v1646 = vpop.f32.mrf.mxu0
      %v1647 = vadd.f32 0.0, %v1646
      %1648 = vmatmul.f32.gmra.mxu0 %v1521
      %v1649 = vpop.f32.mrf.mxu0
      %v1650 = vadd.f32 0.0, %v1649
      %1651 = vdwg.mxu0
      %v1652 = vadd.f32 %v1458, %v1557
      %v1653 = vadd.f32 %v1459, %v1560
      %v1654 = vadd.f32 %v1460, %v1563
      %v1655 = vadd.f32 %v1461, %v1566
      %v1656 = vadd.f32 %v1462, %v1569
      %v1657 = vadd.f32 %v1463, %v1572
      %v1658 = vadd.f32 %v1464, %v1575
      %v1659 = vadd.f32 %v1465, %v1578
      %v1660 = vadd.f32 %v1466, %v1581
      %v1661 = vadd.f32 %v1467, %v1584
      %v1662 = vadd.f32 %v1468, %v1587
      %v1663 = vadd.f32 %v1469, %v1590
      %v1664 = vadd.f32 %v1470, %v1593
      %v1665 = vadd.f32 %v1471, %v1596
      %v1666 = vadd.f32 %v1472, %v1599
      %v1667 = vadd.f32 %v1473, %v1602
      %v1668 = vadd.f32 %v1474, %v1605
      %v1669 = vadd.f32 %v1475, %v1608
      %v1670 = vadd.f32 %v1476, %v1611
      %v1671 = vadd.f32 %v1477, %v1614
      %v1672 = vadd.f32 %v1478, %v1617
      %v1673 = vadd.f32 %v1479, %v1620
      %v1674 = vadd.f32 %v1480, %v1623
      %v1675 = vadd.f32 %v1481, %v1626
      %v1676 = vadd.f32 %v1482, %v1629
      %v1677 = vadd.f32 %v1483, %v1632
      %v1678 = vadd.f32 %v1484, %v1635
      %v1679 = vadd.f32 %v1485, %v1638
      %v1680 = vadd.f32 %v1486, %v1641
      %v1681 = vadd.f32 %v1487, %v1644
      %v1682 = vadd.f32 %v1488, %v1647
      %v1683 = vadd.f32 %v1489, %v1650
      %v1684 = vld [vmem:[%s746 + $0x9] sm:$0xff]
      %v1685 = vld [vmem:[%s746 + $0x11] sm:$0xff]
      %v1686 = vld [vmem:[%s746 + $0x29] sm:$0xff]
      %v1687 = vld [vmem:[%s746 + $0x31] sm:$0xff]
      %v1688 = vld [vmem:[%s746 + $0x49] sm:$0xff]
      %v1689 = vld [vmem:[%s746 + $0x51] sm:$0xff]
      %v1690 = vld [vmem:[%s746 + $0x69] sm:$0xff]
      %v1691 = vld [vmem:[%s746 + $0x71] sm:$0xff]
      %v1692 = vld [vmem:[%s746 + $0x89] sm:$0xff]
      %v1693 = vld [vmem:[%s746 + $0x91] sm:$0xff]
      %v1694 = vld [vmem:[%s746 + $0xa9] sm:$0xff]
      %v1695 = vld [vmem:[%s746 + $0xb1] sm:$0xff]
      %v1696 = vld [vmem:[%s746 + $0xc9] sm:$0xff]
      %v1697 = vld [vmem:[%s746 + $0xd1] sm:$0xff]
      %v1698 = vld [vmem:[%s746 + $0xe9] sm:$0xff]
      %v1699 = vld [vmem:[%s746 + $0xf1] sm:$0xff]
      %v1700 = vld [vmem:[%s746 + $0x109] sm:$0xff]
      %v1701 = vld [vmem:[%s746 + $0x111] sm:$0xff]
      %v1702 = vld [vmem:[%s746 + $0x129] sm:$0xff]
      %v1703 = vld [vmem:[%s746 + $0x131] sm:$0xff]
      %v1704 = vld [vmem:[%s746 + $0x149] sm:$0xff]
      %v1705 = vld [vmem:[%s746 + $0x151] sm:$0xff]
      %v1706 = vld [vmem:[%s746 + $0x169] sm:$0xff]
      %v1707 = vld [vmem:[%s746 + $0x171] sm:$0xff]
      %v1708 = vld [vmem:[%s746 + $0x189] sm:$0xff]
      %v1709 = vld [vmem:[%s746 + $0x191] sm:$0xff]
      %v1710 = vld [vmem:[%s746 + $0x1a9] sm:$0xff]
      %v1711 = vld [vmem:[%s746 + $0x1b1] sm:$0xff]
      %v1712 = vld [vmem:[%s746 + $0x1c9] sm:$0xff]
      %v1713 = vld [vmem:[%s746 + $0x1d1] sm:$0xff]
      %v1714 = vld [vmem:[%s746 + $0x1e9] sm:$0xff]
      %v1715 = vld [vmem:[%s746 + $0x1f1] sm:$0xff]
      %s1716 = scalar_lea.vmem %s3, 640
      %v1717 = vld [vmem:[%s1716] sm:$0xff]
      %v1718 = vld [vmem:[%s1716 + $0x8] sm:$0xff]
      %v1719 = vld [vmem:[%s1716 + $0x10] sm:$0xff]
      %v1720 = vld [vmem:[%s1716 + $0x18] sm:$0xff]
      %v1721 = vld [vmem:[%s1716 + $0x20] sm:$0xff]
      %v1722 = vld [vmem:[%s1716 + $0x28] sm:$0xff]
      %v1723 = vld [vmem:[%s1716 + $0x30] sm:$0xff]
      %v1724 = vld [vmem:[%s1716 + $0x38] sm:$0xff]
      %v1725 = vld [vmem:[%s1716 + $0x40] sm:$0xff]
      %v1726 = vld [vmem:[%s1716 + $0x48] sm:$0xff]
      %v1727 = vld [vmem:[%s1716 + $0x50] sm:$0xff]
      %v1728 = vld [vmem:[%s1716 + $0x58] sm:$0xff]
      %v1729 = vld [vmem:[%s1716 + $0x60] sm:$0xff]
      %v1730 = vld [vmem:[%s1716 + $0x68] sm:$0xff]
      %v1731 = vld [vmem:[%s1716 + $0x70] sm:$0xff]
      %v1732 = vld [vmem:[%s1716 + $0x78] sm:$0xff]
      %1733 = vmatpush.msra.mxu0 %v1732
      %1734 = vmatpush.msra.mxu0 %v1731
      %1735 = vmatpush.msra.mxu0 %v1730
      %1736 = vmatpush.msra.mxu0 %v1729
      %1737 = vmatpush.msra.mxu0 %v1728
      %1738 = vmatpush.msra.mxu0 %v1727
      %1739 = vmatpush.msra.mxu0 %v1726
      %1740 = vmatpush.msra.mxu0 %v1725
      %1741 = vmatpush.msra.mxu0 %v1724
      %1742 = vmatpush.msra.mxu0 %v1723
      %1743 = vmatpush.msra.mxu0 %v1722
      %1744 = vmatpush.msra.mxu0 %v1721
      %1745 = vmatpush.msra.mxu0 %v1720
      %1746 = vmatpush.msra.mxu0 %v1719
      %1747 = vmatpush.msra.mxu0 %v1718
      %1748 = vmatpush.msra.mxu0 %v1717
      %1749 = vmatmul.f32.gmra.mxu0 %v1684
      %v1750 = vpop.f32.mrf.mxu0
      %v1751 = vadd.f32 0.0, %v1750
      %1752 = vmatmul.f32.gmra.mxu0 %v1685
      %v1753 = vpop.f32.mrf.mxu0
      %v1754 = vadd.f32 0.0, %v1753
      %1755 = vmatmul.f32.gmra.mxu0 %v1686
      %v1756 = vpop.f32.mrf.mxu0
      %v1757 = vadd.f32 0.0, %v1756
      %1758 = vmatmul.f32.gmra.mxu0 %v1687
      %v1759 = vpop.f32.mrf.mxu0
      %v1760 = vadd.f32 0.0, %v1759
      %1761 = vmatmul.f32.gmra.mxu0 %v1688
      %v1762 = vpop.f32.mrf.mxu0
      %v1763 = vadd.f32 0.0, %v1762
      %1764 = vmatmul.f32.gmra.mxu0 %v1689
      %v1765 = vpop.f32.mrf.mxu0
      %v1766 = vadd.f32 0.0, %v1765
      %1767 = vmatmul.f32.gmra.mxu0 %v1690
      %v1768 = vpop.f32.mrf.mxu0
      %v1769 = vadd.f32 0.0, %v1768
      %1770 = vmatmul.f32.gmra.mxu0 %v1691
      %v1771 = vpop.f32.mrf.mxu0
      %v1772 = vadd.f32 0.0, %v1771
      %1773 = vmatmul.f32.gmra.mxu0 %v1692
      %v1774 = vpop.f32.mrf.mxu0
      %v1775 = vadd.f32 0.0, %v1774
      %1776 = vmatmul.f32.gmra.mxu0 %v1693
      %v1777 = vpop.f32.mrf.mxu0
      %v1778 = vadd.f32 0.0, %v1777
      %1779 = vmatmul.f32.gmra.mxu0 %v1694
      %v1780 = vpop.f32.mrf.mxu0
      %v1781 = vadd.f32 0.0, %v1780
      %1782 = vmatmul.f32.gmra.mxu0 %v1695
      %v1783 = vpop.f32.mrf.mxu0
      %v1784 = vadd.f32 0.0, %v1783
      %1785 = vmatmul.f32.gmra.mxu0 %v1696
      %v1786 = vpop.f32.mrf.mxu0
      %v1787 = vadd.f32 0.0, %v1786
      %1788 = vmatmul.f32.gmra.mxu0 %v1697
      %v1789 = vpop.f32.mrf.mxu0
      %v1790 = vadd.f32 0.0, %v1789
      %1791 = vmatmul.f32.gmra.mxu0 %v1698
      %v1792 = vpop.f32.mrf.mxu0
      %v1793 = vadd.f32 0.0, %v1792
      %1794 = vmatmul.f32.gmra.mxu0 %v1699
      %v1795 = vpop.f32.mrf.mxu0
      %v1796 = vadd.f32 0.0, %v1795
      %1797 = vmatmul.f32.gmra.mxu0 %v1700
      %v1798 = vpop.f32.mrf.mxu0
      %v1799 = vadd.f32 0.0, %v1798
      %1800 = vmatmul.f32.gmra.mxu0 %v1701
      %v1801 = vpop.f32.mrf.mxu0
      %v1802 = vadd.f32 0.0, %v1801
      %1803 = vmatmul.f32.gmra.mxu0 %v1702
      %v1804 = vpop.f32.mrf.mxu0
      %v1805 = vadd.f32 0.0, %v1804
      %1806 = vmatmul.f32.gmra.mxu0 %v1703
      %v1807 = vpop.f32.mrf.mxu0
      %v1808 = vadd.f32 0.0, %v1807
      %1809 = vmatmul.f32.gmra.mxu0 %v1704
      %v1810 = vpop.f32.mrf.mxu0
      %v1811 = vadd.f32 0.0, %v1810
      %1812 = vmatmul.f32.gmra.mxu0 %v1705
      %v1813 = vpop.f32.mrf.mxu0
      %v1814 = vadd.f32 0.0, %v1813
      %1815 = vmatmul.f32.gmra.mxu0 %v1706
      %v1816 = vpop.f32.mrf.mxu0
      %v1817 = vadd.f32 0.0, %v1816
      %1818 = vmatmul.f32.gmra.mxu0 %v1707
      %v1819 = vpop.f32.mrf.mxu0
      %v1820 = vadd.f32 0.0, %v1819
      %1821 = vmatmul.f32.gmra.mxu0 %v1708
      %v1822 = vpop.f32.mrf.mxu0
      %v1823 = vadd.f32 0.0, %v1822
      %1824 = vmatmul.f32.gmra.mxu0 %v1709
      %v1825 = vpop.f32.mrf.mxu0
      %v1826 = vadd.f32 0.0, %v1825
      %1827 = vmatmul.f32.gmra.mxu0 %v1710
      %v1828 = vpop.f32.mrf.mxu0
      %v1829 = vadd.f32 0.0, %v1828
      %1830 = vmatmul.f32.gmra.mxu0 %v1711
      %v1831 = vpop.f32.mrf.mxu0
      %v1832 = vadd.f32 0.0, %v1831
      %1833 = vmatmul.f32.gmra.mxu0 %v1712
      %v1834 = vpop.f32.mrf.mxu0
      %v1835 = vadd.f32 0.0, %v1834
      %1836 = vmatmul.f32.gmra.mxu0 %v1713
      %v1837 = vpop.f32.mrf.mxu0
      %v1838 = vadd.f32 0.0, %v1837
      %1839 = vmatmul.f32.gmra.mxu0 %v1714
      %v1840 = vpop.f32.mrf.mxu0
      %v1841 = vadd.f32 0.0, %v1840
      %1842 = vmatmul.f32.gmra.mxu0 %v1715
      %v1843 = vpop.f32.mrf.mxu0
      %v1844 = vadd.f32 0.0, %v1843
      %1845 = vdwg.mxu0
      %v1846 = vadd.f32 %v1652, %v1751
      %v1847 = vadd.f32 %v1653, %v1754
      %v1848 = vadd.f32 %v1654, %v1757
      %v1849 = vadd.f32 %v1655, %v1760
      %v1850 = vadd.f32 %v1656, %v1763
      %v1851 = vadd.f32 %v1657, %v1766
      %v1852 = vadd.f32 %v1658, %v1769
      %v1853 = vadd.f32 %v1659, %v1772
      %v1854 = vadd.f32 %v1660, %v1775
      %v1855 = vadd.f32 %v1661, %v1778
      %v1856 = vadd.f32 %v1662, %v1781
      %v1857 = vadd.f32 %v1663, %v1784
      %v1858 = vadd.f32 %v1664, %v1787
      %v1859 = vadd.f32 %v1665, %v1790
      %v1860 = vadd.f32 %v1666, %v1793
      %v1861 = vadd.f32 %v1667, %v1796
      %v1862 = vadd.f32 %v1668, %v1799
      %v1863 = vadd.f32 %v1669, %v1802
      %v1864 = vadd.f32 %v1670, %v1805
      %v1865 = vadd.f32 %v1671, %v1808
      %v1866 = vadd.f32 %v1672, %v1811
      %v1867 = vadd.f32 %v1673, %v1814
      %v1868 = vadd.f32 %v1674, %v1817
      %v1869 = vadd.f32 %v1675, %v1820
      %v1870 = vadd.f32 %v1676, %v1823
      %v1871 = vadd.f32 %v1677, %v1826
      %v1872 = vadd.f32 %v1678, %v1829
      %v1873 = vadd.f32 %v1679, %v1832
      %v1874 = vadd.f32 %v1680, %v1835
      %v1875 = vadd.f32 %v1681, %v1838
      %v1876 = vadd.f32 %v1682, %v1841
      %v1877 = vadd.f32 %v1683, %v1844
      %s1878 = scalar_lea.vmem [#allocation2], 64
      %v1879 = vld [vmem:[%s1878 + $0x7] sm:$0xff]
      %v1880 = vld [vmem:[%s1878 + $0xf] sm:$0xff]
      %v1881 = vld [vmem:[%s1878 + $0x27] sm:$0xff]
      %v1882 = vld [vmem:[%s1878 + $0x2f] sm:$0xff]
      %v1883 = vld [vmem:[%s1878 + $0x47] sm:$0xff]
      %v1884 = vld [vmem:[%s1878 + $0x4f] sm:$0xff]
      %v1885 = vld [vmem:[%s1878 + $0x67] sm:$0xff]
      %v1886 = vld [vmem:[%s1878 + $0x6f] sm:$0xff]
      %v1887 = vld [vmem:[%s1878 + $0x87] sm:$0xff]
      %v1888 = vld [vmem:[%s1878 + $0x8f] sm:$0xff]
      %v1889 = vld [vmem:[%s1878 + $0xa7] sm:$0xff]
      %v1890 = vld [vmem:[%s1878 + $0xaf] sm:$0xff]
      %v1891 = vld [vmem:[%s1878 + $0xc7] sm:$0xff]
      %v1892 = vld [vmem:[%s1878 + $0xcf] sm:$0xff]
      %v1893 = vld [vmem:[%s1878 + $0xe7] sm:$0xff]
      %v1894 = vld [vmem:[%s1878 + $0xef] sm:$0xff]
      %v1895 = vld [vmem:[%s1878 + $0x107] sm:$0xff]
      %v1896 = vld [vmem:[%s1878 + $0x10f] sm:$0xff]
      %v1897 = vld [vmem:[%s1878 + $0x127] sm:$0xff]
      %v1898 = vld [vmem:[%s1878 + $0x12f] sm:$0xff]
      %v1899 = vld [vmem:[%s1878 + $0x147] sm:$0xff]
      %v1900 = vld [vmem:[%s1878 + $0x14f] sm:$0xff]
      %v1901 = vld [vmem:[%s1878 + $0x167] sm:$0xff]
      %v1902 = vld [vmem:[%s1878 + $0x16f] sm:$0xff]
      %v1903 = vld [vmem:[%s1878 + $0x187] sm:$0xff]
      %v1904 = vld [vmem:[%s1878 + $0x18f] sm:$0xff]
      %v1905 = vld [vmem:[%s1878 + $0x1a7] sm:$0xff]
      %v1906 = vld [vmem:[%s1878 + $0x1af] sm:$0xff]
      %v1907 = vld [vmem:[%s1878 + $0x1c7] sm:$0xff]
      %v1908 = vld [vmem:[%s1878 + $0x1cf] sm:$0xff]
      %v1909 = vld [vmem:[%s1878 + $0x1e7] sm:$0xff]
      %v1910 = vld [vmem:[%s1878 + $0x1ef] sm:$0xff]
      %s1911 = scalar_lea.vmem %s3, 768
      %v1912 = vld [vmem:[%s1911] sm:$0xff]
      %v1913 = vld [vmem:[%s1911 + $0x8] sm:$0xff]
      %v1914 = vld [vmem:[%s1911 + $0x10] sm:$0xff]
      %v1915 = vld [vmem:[%s1911 + $0x18] sm:$0xff]
      %v1916 = vld [vmem:[%s1911 + $0x20] sm:$0xff]
      %v1917 = vld [vmem:[%s1911 + $0x28] sm:$0xff]
      %v1918 = vld [vmem:[%s1911 + $0x30] sm:$0xff]
      %v1919 = vld [vmem:[%s1911 + $0x38] sm:$0xff]
      %v1920 = vld [vmem:[%s1911 + $0x40] sm:$0xff]
      %v1921 = vld [vmem:[%s1911 + $0x48] sm:$0xff]
      %v1922 = vld [vmem:[%s1911 + $0x50] sm:$0xff]
      %v1923 = vld [vmem:[%s1911 + $0x58] sm:$0xff]
      %v1924 = vld [vmem:[%s1911 + $0x60] sm:$0xff]
      %v1925 = vld [vmem:[%s1911 + $0x68] sm:$0xff]
      %v1926 = vld [vmem:[%s1911 + $0x70] sm:$0xff]
      %v1927 = vld [vmem:[%s1911 + $0x78] sm:$0xff]
      %1928 = vmatpush.msra.mxu0 %v1927
      %1929 = vmatpush.msra.mxu0 %v1926
      %1930 = vmatpush.msra.mxu0 %v1925
      %1931 = vmatpush.msra.mxu0 %v1924
      %1932 = vmatpush.msra.mxu0 %v1923
      %1933 = vmatpush.msra.mxu0 %v1922
      %1934 = vmatpush.msra.mxu0 %v1921
      %1935 = vmatpush.msra.mxu0 %v1920
      %1936 = vmatpush.msra.mxu0 %v1919
      %1937 = vmatpush.msra.mxu0 %v1918
      %1938 = vmatpush.msra.mxu0 %v1917
      %1939 = vmatpush.msra.mxu0 %v1916
      %1940 = vmatpush.msra.mxu0 %v1915
      %1941 = vmatpush.msra.mxu0 %v1914
      %1942 = vmatpush.msra.mxu0 %v1913
      %1943 = vmatpush.msra.mxu0 %v1912
      %1944 = vmatmul.f32.gmra.mxu0 %v1879
      %v1945 = vpop.f32.mrf.mxu0
      %v1946 = vadd.f32 0.0, %v1945
      %1947 = vmatmul.f32.gmra.mxu0 %v1880
      %v1948 = vpop.f32.mrf.mxu0
      %v1949 = vadd.f32 0.0, %v1948
      %1950 = vmatmul.f32.gmra.mxu0 %v1881
      %v1951 = vpop.f32.mrf.mxu0
      %v1952 = vadd.f32 0.0, %v1951
      %1953 = vmatmul.f32.gmra.mxu0 %v1882
      %v1954 = vpop.f32.mrf.mxu0
      %v1955 = vadd.f32 0.0, %v1954
      %1956 = vmatmul.f32.gmra.mxu0 %v1883
      %v1957 = vpop.f32.mrf.mxu0
      %v1958 = vadd.f32 0.0, %v1957
      %1959 = vmatmul.f32.gmra.mxu0 %v1884
      %v1960 = vpop.f32.mrf.mxu0
      %v1961 = vadd.f32 0.0, %v1960
      %1962 = vmatmul.f32.gmra.mxu0 %v1885
      %v1963 = vpop.f32.mrf.mxu0
      %v1964 = vadd.f32 0.0, %v1963
      %1965 = vmatmul.f32.gmra.mxu0 %v1886
      %v1966 = vpop.f32.mrf.mxu0
      %v1967 = vadd.f32 0.0, %v1966
      %1968 = vmatmul.f32.gmra.mxu0 %v1887
      %v1969 = vpop.f32.mrf.mxu0
      %v1970 = vadd.f32 0.0, %v1969
      %1971 = vmatmul.f32.gmra.mxu0 %v1888
      %v1972 = vpop.f32.mrf.mxu0
      %v1973 = vadd.f32 0.0, %v1972
      %1974 = vmatmul.f32.gmra.mxu0 %v1889
      %v1975 = vpop.f32.mrf.mxu0
      %v1976 = vadd.f32 0.0, %v1975
      %1977 = vmatmul.f32.gmra.mxu0 %v1890
      %v1978 = vpop.f32.mrf.mxu0
      %v1979 = vadd.f32 0.0, %v1978
      %1980 = vmatmul.f32.gmra.mxu0 %v1891
      %v1981 = vpop.f32.mrf.mxu0
      %v1982 = vadd.f32 0.0, %v1981
      %1983 = vmatmul.f32.gmra.mxu0 %v1892
      %v1984 = vpop.f32.mrf.mxu0
      %v1985 = vadd.f32 0.0, %v1984
      %1986 = vmatmul.f32.gmra.mxu0 %v1893
      %v1987 = vpop.f32.mrf.mxu0
      %v1988 = vadd.f32 0.0, %v1987
      %1989 = vmatmul.f32.gmra.mxu0 %v1894
      %v1990 = vpop.f32.mrf.mxu0
      %v1991 = vadd.f32 0.0, %v1990
      %1992 = vmatmul.f32.gmra.mxu0 %v1895
      %v1993 = vpop.f32.mrf.mxu0
      %v1994 = vadd.f32 0.0, %v1993
      %1995 = vmatmul.f32.gmra.mxu0 %v1896
      %v1996 = vpop.f32.mrf.mxu0
      %v1997 = vadd.f32 0.0, %v1996
      %1998 = vmatmul.f32.gmra.mxu0 %v1897
      %v1999 = vpop.f32.mrf.mxu0
      %v2000 = vadd.f32 0.0, %v1999
      %2001 = vmatmul.f32.gmra.mxu0 %v1898
      %v2002 = vpop.f32.mrf.mxu0
      %v2003 = vadd.f32 0.0, %v2002
      %2004 = vmatmul.f32.gmra.mxu0 %v1899
      %v2005 = vpop.f32.mrf.mxu0
      %v2006 = vadd.f32 0.0, %v2005
      %2007 = vmatmul.f32.gmra.mxu0 %v1900
      %v2008 = vpop.f32.mrf.mxu0
      %v2009 = vadd.f32 0.0, %v2008
      %2010 = vmatmul.f32.gmra.mxu0 %v1901
      %v2011 = vpop.f32.mrf.mxu0
      %v2012 = vadd.f32 0.0, %v2011
      %2013 = vmatmul.f32.gmra.mxu0 %v1902
      %v2014 = vpop.f32.mrf.mxu0
      %v2015 = vadd.f32 0.0, %v2014
      %2016 = vmatmul.f32.gmra.mxu0 %v1903
      %v2017 = vpop.f32.mrf.mxu0
      %v2018 = vadd.f32 0.0, %v2017
      %2019 = vmatmul.f32.gmra.mxu0 %v1904
      %v2020 = vpop.f32.mrf.mxu0
      %v2021 = vadd.f32 0.0, %v2020
      %2022 = vmatmul.f32.gmra.mxu0 %v1905
      %v2023 = vpop.f32.mrf.mxu0
      %v2024 = vadd.f32 0.0, %v2023
      %2025 = vmatmul.f32.gmra.mxu0 %v1906
      %v2026 = vpop.f32.mrf.mxu0
      %v2027 = vadd.f32 0.0, %v2026
      %2028 = vmatmul.f32.gmra.mxu0 %v1907
      %v2029 = vpop.f32.mrf.mxu0
      %v2030 = vadd.f32 0.0, %v2029
      %2031 = vmatmul.f32.gmra.mxu0 %v1908
      %v2032 = vpop.f32.mrf.mxu0
      %v2033 = vadd.f32 0.0, %v2032
      %2034 = vmatmul.f32.gmra.mxu0 %v1909
      %v2035 = vpop.f32.mrf.mxu0
      %v2036 = vadd.f32 0.0, %v2035
      %2037 = vmatmul.f32.gmra.mxu0 %v1910
      %v2038 = vpop.f32.mrf.mxu0
      %v2039 = vadd.f32 0.0, %v2038
      %2040 = vdwg.mxu0
      %v2041 = vadd.f32 %v1846, %v1946
      %v2042 = vadd.f32 %v1847, %v1949
      %v2043 = vadd.f32 %v1848, %v1952
      %v2044 = vadd.f32 %v1849, %v1955
      %v2045 = vadd.f32 %v1850, %v1958
      %v2046 = vadd.f32 %v1851, %v1961
      %v2047 = vadd.f32 %v1852, %v1964
      %v2048 = vadd.f32 %v1853, %v1967
      %v2049 = vadd.f32 %v1854, %v1970
      %v2050 = vadd.f32 %v1855, %v1973
      %v2051 = vadd.f32 %v1856, %v1976
      %v2052 = vadd.f32 %v1857, %v1979
      %v2053 = vadd.f32 %v1858, %v1982
      %v2054 = vadd.f32 %v1859, %v1985
      %v2055 = vadd.f32 %v1860, %v1988
      %v2056 = vadd.f32 %v1861, %v1991
      %v2057 = vadd.f32 %v1862, %v1994
      %v2058 = vadd.f32 %v1863, %v1997
      %v2059 = vadd.f32 %v1864, %v2000
      %v2060 = vadd.f32 %v1865, %v2003
      %v2061 = vadd.f32 %v1866, %v2006
      %v2062 = vadd.f32 %v1867, %v2009
      %v2063 = vadd.f32 %v1868, %v2012
      %v2064 = vadd.f32 %v1869, %v2015
      %v2065 = vadd.f32 %v1870, %v2018
      %v2066 = vadd.f32 %v1871, %v2021
      %v2067 = vadd.f32 %v1872, %v2024
      %v2068 = vadd.f32 %v1873, %v2027
      %v2069 = vadd.f32 %v1874, %v2030
      %v2070 = vadd.f32 %v1875, %v2033
      %v2071 = vadd.f32 %v1876, %v2036
      %v2072 = vadd.f32 %v1877, %v2039
      %v2073 = vld [vmem:[%s1878 + $0x8] sm:$0xff]
      %v2074 = vld [vmem:[%s1878 + $0x10] sm:$0xff]
      %v2075 = vld [vmem:[%s1878 + $0x28] sm:$0xff]
      %v2076 = vld [vmem:[%s1878 + $0x30] sm:$0xff]
      %v2077 = vld [vmem:[%s1878 + $0x48] sm:$0xff]
      %v2078 = vld [vmem:[%s1878 + $0x50] sm:$0xff]
      %v2079 = vld [vmem:[%s1878 + $0x68] sm:$0xff]
      %v2080 = vld [vmem:[%s1878 + $0x70] sm:$0xff]
      %v2081 = vld [vmem:[%s1878 + $0x88] sm:$0xff]
      %v2082 = vld [vmem:[%s1878 + $0x90] sm:$0xff]
      %v2083 = vld [vmem:[%s1878 + $0xa8] sm:$0xff]
      %v2084 = vld [vmem:[%s1878 + $0xb0] sm:$0xff]
      %v2085 = vld [vmem:[%s1878 + $0xc8] sm:$0xff]
      %v2086 = vld [vmem:[%s1878 + $0xd0] sm:$0xff]
      %v2087 = vld [vmem:[%s1878 + $0xe8] sm:$0xff]
      %v2088 = vld [vmem:[%s1878 + $0xf0] sm:$0xff]
      %v2089 = vld [vmem:[%s1878 + $0x108] sm:$0xff]
      %v2090 = vld [vmem:[%s1878 + $0x110] sm:$0xff]
      %v2091 = vld [vmem:[%s1878 + $0x128] sm:$0xff]
      %v2092 = vld [vmem:[%s1878 + $0x130] sm:$0xff]
      %v2093 = vld [vmem:[%s1878 + $0x148] sm:$0xff]
      %v2094 = vld [vmem:[%s1878 + $0x150] sm:$0xff]
      %v2095 = vld [vmem:[%s1878 + $0x168] sm:$0xff]
      %v2096 = vld [vmem:[%s1878 + $0x170] sm:$0xff]
      %v2097 = vld [vmem:[%s1878 + $0x188] sm:$0xff]
      %v2098 = vld [vmem:[%s1878 + $0x190] sm:$0xff]
      %v2099 = vld [vmem:[%s1878 + $0x1a8] sm:$0xff]
      %v2100 = vld [vmem:[%s1878 + $0x1b0] sm:$0xff]
      %v2101 = vld [vmem:[%s1878 + $0x1c8] sm:$0xff]
      %v2102 = vld [vmem:[%s1878 + $0x1d0] sm:$0xff]
      %v2103 = vld [vmem:[%s1878 + $0x1e8] sm:$0xff]
      %v2104 = vld [vmem:[%s1878 + $0x1f0] sm:$0xff]
      %s2105 = scalar_lea.vmem %s3, 896
      %v2106 = vld [vmem:[%s2105] sm:$0xff]
      %v2107 = vld [vmem:[%s2105 + $0x8] sm:$0xff]
      %v2108 = vld [vmem:[%s2105 + $0x10] sm:$0xff]
      %v2109 = vld [vmem:[%s2105 + $0x18] sm:$0xff]
      %v2110 = vld [vmem:[%s2105 + $0x20] sm:$0xff]
      %v2111 = vld [vmem:[%s2105 + $0x28] sm:$0xff]
      %v2112 = vld [vmem:[%s2105 + $0x30] sm:$0xff]
      %v2113 = vld [vmem:[%s2105 + $0x38] sm:$0xff]
      %v2114 = vld [vmem:[%s2105 + $0x40] sm:$0xff]
      %v2115 = vld [vmem:[%s2105 + $0x48] sm:$0xff]
      %v2116 = vld [vmem:[%s2105 + $0x50] sm:$0xff]
      %v2117 = vld [vmem:[%s2105 + $0x58] sm:$0xff]
      %v2118 = vld [vmem:[%s2105 + $0x60] sm:$0xff]
      %v2119 = vld [vmem:[%s2105 + $0x68] sm:$0xff]
      %v2120 = vld [vmem:[%s2105 + $0x70] sm:$0xff]
      %v2121 = vld [vmem:[%s2105 + $0x78] sm:$0xff]
      %2122 = vmatpush.msra.mxu0 %v2121
      %2123 = vmatpush.msra.mxu0 %v2120
      %2124 = vmatpush.msra.mxu0 %v2119
      %2125 = vmatpush.msra.mxu0 %v2118
      %2126 = vmatpush.msra.mxu0 %v2117
      %2127 = vmatpush.msra.mxu0 %v2116
      %2128 = vmatpush.msra.mxu0 %v2115
      %2129 = vmatpush.msra.mxu0 %v2114
      %2130 = vmatpush.msra.mxu0 %v2113
      %2131 = vmatpush.msra.mxu0 %v2112
      %2132 = vmatpush.msra.mxu0 %v2111
      %2133 = vmatpush.msra.mxu0 %v2110
      %2134 = vmatpush.msra.mxu0 %v2109
      %2135 = vmatpush.msra.mxu0 %v2108
      %2136 = vmatpush.msra.mxu0 %v2107
      %2137 = vmatpush.msra.mxu0 %v2106
      %2138 = vmatmul.f32.gmra.mxu0 %v2073
      %v2139 = vpop.f32.mrf.mxu0
      %v2140 = vadd.f32 0.0, %v2139
      %2141 = vmatmul.f32.gmra.mxu0 %v2074
      %v2142 = vpop.f32.mrf.mxu0
      %v2143 = vadd.f32 0.0, %v2142
      %2144 = vmatmul.f32.gmra.mxu0 %v2075
      %v2145 = vpop.f32.mrf.mxu0
      %v2146 = vadd.f32 0.0, %v2145
      %2147 = vmatmul.f32.gmra.mxu0 %v2076
      %v2148 = vpop.f32.mrf.mxu0
      %v2149 = vadd.f32 0.0, %v2148
      %2150 = vmatmul.f32.gmra.mxu0 %v2077
      %v2151 = vpop.f32.mrf.mxu0
      %v2152 = vadd.f32 0.0, %v2151
      %2153 = vmatmul.f32.gmra.mxu0 %v2078
      %v2154 = vpop.f32.mrf.mxu0
      %v2155 = vadd.f32 0.0, %v2154
      %2156 = vmatmul.f32.gmra.mxu0 %v2079
      %v2157 = vpop.f32.mrf.mxu0
      %v2158 = vadd.f32 0.0, %v2157
      %2159 = vmatmul.f32.gmra.mxu0 %v2080
      %v2160 = vpop.f32.mrf.mxu0
      %v2161 = vadd.f32 0.0, %v2160
      %2162 = vmatmul.f32.gmra.mxu0 %v2081
      %v2163 = vpop.f32.mrf.mxu0
      %v2164 = vadd.f32 0.0, %v2163
      %2165 = vmatmul.f32.gmra.mxu0 %v2082
      %v2166 = vpop.f32.mrf.mxu0
      %v2167 = vadd.f32 0.0, %v2166
      %2168 = vmatmul.f32.gmra.mxu0 %v2083
      %v2169 = vpop.f32.mrf.mxu0
      %v2170 = vadd.f32 0.0, %v2169
      %2171 = vmatmul.f32.gmra.mxu0 %v2084
      %v2172 = vpop.f32.mrf.mxu0
      %v2173 = vadd.f32 0.0, %v2172
      %2174 = vmatmul.f32.gmra.mxu0 %v2085
      %v2175 = vpop.f32.mrf.mxu0
      %v2176 = vadd.f32 0.0, %v2175
      %2177 = vmatmul.f32.gmra.mxu0 %v2086
      %v2178 = vpop.f32.mrf.mxu0
      %v2179 = vadd.f32 0.0, %v2178
      %2180 = vmatmul.f32.gmra.mxu0 %v2087
      %v2181 = vpop.f32.mrf.mxu0
      %v2182 = vadd.f32 0.0, %v2181
      %2183 = vmatmul.f32.gmra.mxu0 %v2088
      %v2184 = vpop.f32.mrf.mxu0
      %v2185 = vadd.f32 0.0, %v2184
      %2186 = vmatmul.f32.gmra.mxu0 %v2089
      %v2187 = vpop.f32.mrf.mxu0
      %v2188 = vadd.f32 0.0, %v2187
      %2189 = vmatmul.f32.gmra.mxu0 %v2090
      %v2190 = vpop.f32.mrf.mxu0
      %v2191 = vadd.f32 0.0, %v2190
      %2192 = vmatmul.f32.gmra.mxu0 %v2091
      %v2193 = vpop.f32.mrf.mxu0
      %v2194 = vadd.f32 0.0, %v2193
      %2195 = vmatmul.f32.gmra.mxu0 %v2092
      %v2196 = vpop.f32.mrf.mxu0
      %v2197 = vadd.f32 0.0, %v2196
      %2198 = vmatmul.f32.gmra.mxu0 %v2093
      %v2199 = vpop.f32.mrf.mxu0
      %v2200 = vadd.f32 0.0, %v2199
      %2201 = vmatmul.f32.gmra.mxu0 %v2094
      %v2202 = vpop.f32.mrf.mxu0
      %v2203 = vadd.f32 0.0, %v2202
      %2204 = vmatmul.f32.gmra.mxu0 %v2095
      %v2205 = vpop.f32.mrf.mxu0
      %v2206 = vadd.f32 0.0, %v2205
      %2207 = vmatmul.f32.gmra.mxu0 %v2096
      %v2208 = vpop.f32.mrf.mxu0
      %v2209 = vadd.f32 0.0, %v2208
      %2210 = vmatmul.f32.gmra.mxu0 %v2097
      %v2211 = vpop.f32.mrf.mxu0
      %v2212 = vadd.f32 0.0, %v2211
      %2213 = vmatmul.f32.gmra.mxu0 %v2098
      %v2214 = vpop.f32.mrf.mxu0
      %v2215 = vadd.f32 0.0, %v2214
      %2216 = vmatmul.f32.gmra.mxu0 %v2099
      %v2217 = vpop.f32.mrf.mxu0
      %v2218 = vadd.f32 0.0, %v2217
      %2219 = vmatmul.f32.gmra.mxu0 %v2100
      %v2220 = vpop.f32.mrf.mxu0
      %v2221 = vadd.f32 0.0, %v2220
      %2222 = vmatmul.f32.gmra.mxu0 %v2101
      %v2223 = vpop.f32.mrf.mxu0
      %v2224 = vadd.f32 0.0, %v2223
      %2225 = vmatmul.f32.gmra.mxu0 %v2102
      %v2226 = vpop.f32.mrf.mxu0
      %v2227 = vadd.f32 0.0, %v2226
      %2228 = vmatmul.f32.gmra.mxu0 %v2103
      %v2229 = vpop.f32.mrf.mxu0
      %v2230 = vadd.f32 0.0, %v2229
      %2231 = vmatmul.f32.gmra.mxu0 %v2104
      %v2232 = vpop.f32.mrf.mxu0
      %v2233 = vadd.f32 0.0, %v2232
      %2234 = vdwg.mxu0
      %v2235 = vadd.f32 %v2041, %v2140
      %v2236 = vadd.f32 %v2042, %v2143
      %v2237 = vadd.f32 %v2043, %v2146
      %v2238 = vadd.f32 %v2044, %v2149
      %v2239 = vadd.f32 %v2045, %v2152
      %v2240 = vadd.f32 %v2046, %v2155
      %v2241 = vadd.f32 %v2047, %v2158
      %v2242 = vadd.f32 %v2048, %v2161
      %v2243 = vadd.f32 %v2049, %v2164
      %v2244 = vadd.f32 %v2050, %v2167
      %v2245 = vadd.f32 %v2051, %v2170
      %v2246 = vadd.f32 %v2052, %v2173
      %v2247 = vadd.f32 %v2053, %v2176
      %v2248 = vadd.f32 %v2054, %v2179
      %v2249 = vadd.f32 %v2055, %v2182
      %v2250 = vadd.f32 %v2056, %v2185
      %v2251 = vadd.f32 %v2057, %v2188
      %v2252 = vadd.f32 %v2058, %v2191
      %v2253 = vadd.f32 %v2059, %v2194
      %v2254 = vadd.f32 %v2060, %v2197
      %v2255 = vadd.f32 %v2061, %v2200
      %v2256 = vadd.f32 %v2062, %v2203
      %v2257 = vadd.f32 %v2063, %v2206
      %v2258 = vadd.f32 %v2064, %v2209
      %v2259 = vadd.f32 %v2065, %v2212
      %v2260 = vadd.f32 %v2066, %v2215
      %v2261 = vadd.f32 %v2067, %v2218
      %v2262 = vadd.f32 %v2068, %v2221
      %v2263 = vadd.f32 %v2069, %v2224
      %v2264 = vadd.f32 %v2070, %v2227
      %v2265 = vadd.f32 %v2071, %v2230
      %v2266 = vadd.f32 %v2072, %v2233
      %v2267 = vld [vmem:[%s1878 + $0x9] sm:$0xff]
      %v2268 = vld [vmem:[%s1878 + $0x11] sm:$0xff]
      %v2269 = vld [vmem:[%s1878 + $0x29] sm:$0xff]
      %v2270 = vld [vmem:[%s1878 + $0x31] sm:$0xff]
      %v2271 = vld [vmem:[%s1878 + $0x49] sm:$0xff]
      %v2272 = vld [vmem:[%s1878 + $0x51] sm:$0xff]
      %v2273 = vld [vmem:[%s1878 + $0x69] sm:$0xff]
      %v2274 = vld [vmem:[%s1878 + $0x71] sm:$0xff]
      %v2275 = vld [vmem:[%s1878 + $0x89] sm:$0xff]
      %v2276 = vld [vmem:[%s1878 + $0x91] sm:$0xff]
      %v2277 = vld [vmem:[%s1878 + $0xa9] sm:$0xff]
      %v2278 = vld [vmem:[%s1878 + $0xb1] sm:$0xff]
      %v2279 = vld [vmem:[%s1878 + $0xc9] sm:$0xff]
      %v2280 = vld [vmem:[%s1878 + $0xd1] sm:$0xff]
      %v2281 = vld [vmem:[%s1878 + $0xe9] sm:$0xff]
      %v2282 = vld [vmem:[%s1878 + $0xf1] sm:$0xff]
      %v2283 = vld [vmem:[%s1878 + $0x109] sm:$0xff]
      %v2284 = vld [vmem:[%s1878 + $0x111] sm:$0xff]
      %v2285 = vld [vmem:[%s1878 + $0x129] sm:$0xff]
      %v2286 = vld [vmem:[%s1878 + $0x131] sm:$0xff]
      %v2287 = vld [vmem:[%s1878 + $0x149] sm:$0xff]
      %v2288 = vld [vmem:[%s1878 + $0x151] sm:$0xff]
      %v2289 = vld [vmem:[%s1878 + $0x169] sm:$0xff]
      %v2290 = vld [vmem:[%s1878 + $0x171] sm:$0xff]
      %v2291 = vld [vmem:[%s1878 + $0x189] sm:$0xff]
      %v2292 = vld [vmem:[%s1878 + $0x191] sm:$0xff]
      %v2293 = vld [vmem:[%s1878 + $0x1a9] sm:$0xff]
      %v2294 = vld [vmem:[%s1878 + $0x1b1] sm:$0xff]
      %v2295 = vld [vmem:[%s1878 + $0x1c9] sm:$0xff]
      %v2296 = vld [vmem:[%s1878 + $0x1d1] sm:$0xff]
      %v2297 = vld [vmem:[%s1878 + $0x1e9] sm:$0xff]
      %v2298 = vld [vmem:[%s1878 + $0x1f1] sm:$0xff]
      %s2299 = scalar_lea.vmem %s3, 1024
      %v2300 = vld [vmem:[%s2299] sm:$0xff]
      %v2301 = vld [vmem:[%s2299 + $0x8] sm:$0xff]
      %v2302 = vld [vmem:[%s2299 + $0x10] sm:$0xff]
      %v2303 = vld [vmem:[%s2299 + $0x18] sm:$0xff]
      %v2304 = vld [vmem:[%s2299 + $0x20] sm:$0xff]
      %v2305 = vld [vmem:[%s2299 + $0x28] sm:$0xff]
      %v2306 = vld [vmem:[%s2299 + $0x30] sm:$0xff]
      %v2307 = vld [vmem:[%s2299 + $0x38] sm:$0xff]
      %v2308 = vld [vmem:[%s2299 + $0x40] sm:$0xff]
      %v2309 = vld [vmem:[%s2299 + $0x48] sm:$0xff]
      %v2310 = vld [vmem:[%s2299 + $0x50] sm:$0xff]
      %v2311 = vld [vmem:[%s2299 + $0x58] sm:$0xff]
      %v2312 = vld [vmem:[%s2299 + $0x60] sm:$0xff]
      %v2313 = vld [vmem:[%s2299 + $0x68] sm:$0xff]
      %v2314 = vld [vmem:[%s2299 + $0x70] sm:$0xff]
      %v2315 = vld [vmem:[%s2299 + $0x78] sm:$0xff]
      %2316 = vmatpush.msra.mxu0 %v2315
      %2317 = vmatpush.msra.mxu0 %v2314
      %2318 = vmatpush.msra.mxu0 %v2313
      %2319 = vmatpush.msra.mxu0 %v2312
      %2320 = vmatpush.msra.mxu0 %v2311
      %2321 = vmatpush.msra.mxu0 %v2310
      %2322 = vmatpush.msra.mxu0 %v2309
      %2323 = vmatpush.msra.mxu0 %v2308
      %2324 = vmatpush.msra.mxu0 %v2307
      %2325 = vmatpush.msra.mxu0 %v2306
      %2326 = vmatpush.msra.mxu0 %v2305
      %2327 = vmatpush.msra.mxu0 %v2304
      %2328 = vmatpush.msra.mxu0 %v2303
      %2329 = vmatpush.msra.mxu0 %v2302
      %2330 = vmatpush.msra.mxu0 %v2301
      %2331 = vmatpush.msra.mxu0 %v2300
      %2332 = vmatmul.f32.gmra.mxu0 %v2267
      %v2333 = vpop.f32.mrf.mxu0
      %v2334 = vadd.f32 0.0, %v2333
      %2335 = vmatmul.f32.gmra.mxu0 %v2268
      %v2336 = vpop.f32.mrf.mxu0
      %v2337 = vadd.f32 0.0, %v2336
      %2338 = vmatmul.f32.gmra.mxu0 %v2269
      %v2339 = vpop.f32.mrf.mxu0
      %v2340 = vadd.f32 0.0, %v2339
      %2341 = vmatmul.f32.gmra.mxu0 %v2270
      %v2342 = vpop.f32.mrf.mxu0
      %v2343 = vadd.f32 0.0, %v2342
      %2344 = vmatmul.f32.gmra.mxu0 %v2271
      %v2345 = vpop.f32.mrf.mxu0
      %v2346 = vadd.f32 0.0, %v2345
      %2347 = vmatmul.f32.gmra.mxu0 %v2272
      %v2348 = vpop.f32.mrf.mxu0
      %v2349 = vadd.f32 0.0, %v2348
      %2350 = vmatmul.f32.gmra.mxu0 %v2273
      %v2351 = vpop.f32.mrf.mxu0
      %v2352 = vadd.f32 0.0, %v2351
      %2353 = vmatmul.f32.gmra.mxu0 %v2274
      %v2354 = vpop.f32.mrf.mxu0
      %v2355 = vadd.f32 0.0, %v2354
      %2356 = vmatmul.f32.gmra.mxu0 %v2275
      %v2357 = vpop.f32.mrf.mxu0
      %v2358 = vadd.f32 0.0, %v2357
      %2359 = vmatmul.f32.gmra.mxu0 %v2276
      %v2360 = vpop.f32.mrf.mxu0
      %v2361 = vadd.f32 0.0, %v2360
      %2362 = vmatmul.f32.gmra.mxu0 %v2277
      %v2363 = vpop.f32.mrf.mxu0
      %v2364 = vadd.f32 0.0, %v2363
      %2365 = vmatmul.f32.gmra.mxu0 %v2278
      %v2366 = vpop.f32.mrf.mxu0
      %v2367 = vadd.f32 0.0, %v2366
      %2368 = vmatmul.f32.gmra.mxu0 %v2279
      %v2369 = vpop.f32.mrf.mxu0
      %v2370 = vadd.f32 0.0, %v2369
      %2371 = vmatmul.f32.gmra.mxu0 %v2280
      %v2372 = vpop.f32.mrf.mxu0
      %v2373 = vadd.f32 0.0, %v2372
      %2374 = vmatmul.f32.gmra.mxu0 %v2281
      %v2375 = vpop.f32.mrf.mxu0
      %v2376 = vadd.f32 0.0, %v2375
      %2377 = vmatmul.f32.gmra.mxu0 %v2282
      %v2378 = vpop.f32.mrf.mxu0
      %v2379 = vadd.f32 0.0, %v2378
      %2380 = vmatmul.f32.gmra.mxu0 %v2283
      %v2381 = vpop.f32.mrf.mxu0
      %v2382 = vadd.f32 0.0, %v2381
      %2383 = vmatmul.f32.gmra.mxu0 %v2284
      %v2384 = vpop.f32.mrf.mxu0
      %v2385 = vadd.f32 0.0, %v2384
      %2386 = vmatmul.f32.gmra.mxu0 %v2285
      %v2387 = vpop.f32.mrf.mxu0
      %v2388 = vadd.f32 0.0, %v2387
      %2389 = vmatmul.f32.gmra.mxu0 %v2286
      %v2390 = vpop.f32.mrf.mxu0
      %v2391 = vadd.f32 0.0, %v2390
      %2392 = vmatmul.f32.gmra.mxu0 %v2287
      %v2393 = vpop.f32.mrf.mxu0
      %v2394 = vadd.f32 0.0, %v2393
      %2395 = vmatmul.f32.gmra.mxu0 %v2288
      %v2396 = vpop.f32.mrf.mxu0
      %v2397 = vadd.f32 0.0, %v2396
      %2398 = vmatmul.f32.gmra.mxu0 %v2289
      %v2399 = vpop.f32.mrf.mxu0
      %v2400 = vadd.f32 0.0, %v2399
      %2401 = vmatmul.f32.gmra.mxu0 %v2290
      %v2402 = vpop.f32.mrf.mxu0
      %v2403 = vadd.f32 0.0, %v2402
      %2404 = vmatmul.f32.gmra.mxu0 %v2291
      %v2405 = vpop.f32.mrf.mxu0
      %v2406 = vadd.f32 0.0, %v2405
      %2407 = vmatmul.f32.gmra.mxu0 %v2292
      %v2408 = vpop.f32.mrf.mxu0
      %v2409 = vadd.f32 0.0, %v2408
      %2410 = vmatmul.f32.gmra.mxu0 %v2293
      %v2411 = vpop.f32.mrf.mxu0
      %v2412 = vadd.f32 0.0, %v2411
      %2413 = vmatmul.f32.gmra.mxu0 %v2294
      %v2414 = vpop.f32.mrf.mxu0
      %v2415 = vadd.f32 0.0, %v2414
      %2416 = vmatmul.f32.gmra.mxu0 %v2295
      %v2417 = vpop.f32.mrf.mxu0
      %v2418 = vadd.f32 0.0, %v2417
      %2419 = vmatmul.f32.gmra.mxu0 %v2296
      %v2420 = vpop.f32.mrf.mxu0
      %v2421 = vadd.f32 0.0, %v2420
      %2422 = vmatmul.f32.gmra.mxu0 %v2297
      %v2423 = vpop.f32.mrf.mxu0
      %v2424 = vadd.f32 0.0, %v2423
      %2425 = vmatmul.f32.gmra.mxu0 %v2298
      %v2426 = vpop.f32.mrf.mxu0
      %v2427 = vadd.f32 0.0, %v2426
      %2428 = vdwg.mxu0
      %v2429 = vadd.f32 %v2235, %v2334
      %v2430 = vadd.f32 %v2236, %v2337
      %v2431 = vadd.f32 %v2237, %v2340
      %v2432 = vadd.f32 %v2238, %v2343
      %v2433 = vadd.f32 %v2239, %v2346
      %v2434 = vadd.f32 %v2240, %v2349
      %v2435 = vadd.f32 %v2241, %v2352
      %v2436 = vadd.f32 %v2242, %v2355
      %v2437 = vadd.f32 %v2243, %v2358
      %v2438 = vadd.f32 %v2244, %v2361
      %v2439 = vadd.f32 %v2245, %v2364
      %v2440 = vadd.f32 %v2246, %v2367
      %v2441 = vadd.f32 %v2247, %v2370
      %v2442 = vadd.f32 %v2248, %v2373
      %v2443 = vadd.f32 %v2249, %v2376
      %v2444 = vadd.f32 %v2250, %v2379
      %v2445 = vadd.f32 %v2251, %v2382
      %v2446 = vadd.f32 %v2252, %v2385
      %v2447 = vadd.f32 %v2253, %v2388
      %v2448 = vadd.f32 %v2254, %v2391
      %v2449 = vadd.f32 %v2255, %v2394
      %v2450 = vadd.f32 %v2256, %v2397
      %v2451 = vadd.f32 %v2257, %v2400
      %v2452 = vadd.f32 %v2258, %v2403
      %v2453 = vadd.f32 %v2259, %v2406
      %v2454 = vadd.f32 %v2260, %v2409
      %v2455 = vadd.f32 %v2261, %v2412
      %v2456 = vadd.f32 %v2262, %v2415
      %v2457 = vadd.f32 %v2263, %v2418
      %v2458 = vadd.f32 %v2264, %v2421
      %v2459 = vadd.f32 %v2265, %v2424
      %v2460 = vadd.f32 %v2266, %v2427
      %v2461 = vld [vmem:[%s4] sm:$0x1]
      %v2463 = vperm.slane %v2461, 0
      %v2465 = vadd.f32 %v2429, %v2463
      %v2466 = vadd.f32 %v2430, %v2463
      %v2467 = vadd.f32 %v2431, %v2463
      %v2468 = vadd.f32 %v2432, %v2463
      %v2469 = vadd.f32 %v2433, %v2463
      %v2470 = vadd.f32 %v2434, %v2463
      %v2471 = vadd.f32 %v2435, %v2463
      %v2472 = vadd.f32 %v2436, %v2463
      %v2473 = vadd.f32 %v2437, %v2463
      %v2474 = vadd.f32 %v2438, %v2463
      %v2475 = vadd.f32 %v2439, %v2463
      %v2476 = vadd.f32 %v2440, %v2463
      %v2477 = vadd.f32 %v2441, %v2463
      %v2478 = vadd.f32 %v2442, %v2463
      %v2479 = vadd.f32 %v2443, %v2463
      %v2480 = vadd.f32 %v2444, %v2463
      %v2481 = vadd.f32 %v2445, %v2463
      %v2482 = vadd.f32 %v2446, %v2463
      %v2483 = vadd.f32 %v2447, %v2463
      %v2484 = vadd.f32 %v2448, %v2463
      %v2485 = vadd.f32 %v2449, %v2463
      %v2486 = vadd.f32 %v2450, %v2463
      %v2487 = vadd.f32 %v2451, %v2463
      %v2488 = vadd.f32 %v2452, %v2463
      %v2489 = vadd.f32 %v2453, %v2463
      %v2490 = vadd.f32 %v2454, %v2463
      %v2491 = vadd.f32 %v2455, %v2463
      %v2492 = vadd.f32 %v2456, %v2463
      %v2493 = vadd.f32 %v2457, %v2463
      %v2494 = vadd.f32 %v2458, %v2463
      %v2495 = vadd.f32 %v2459, %v2463
      %v2496 = vadd.f32 %v2460, %v2463
      %v2497 = vmax.f32 %v2465, 0.0
      %v2498 = vmax.f32 %v2466, 0.0
      %v2499 = vmax.f32 %v2467, 0.0
      %v2500 = vmax.f32 %v2468, 0.0
      %v2501 = vmax.f32 %v2469, 0.0
      %v2502 = vmax.f32 %v2470, 0.0
      %v2503 = vmax.f32 %v2471, 0.0
      %v2504 = vmax.f32 %v2472, 0.0
      %v2505 = vmax.f32 %v2473, 0.0
      %v2506 = vmax.f32 %v2474, 0.0
      %v2507 = vmax.f32 %v2475, 0.0
      %v2508 = vmax.f32 %v2476, 0.0
      %v2509 = vmax.f32 %v2477, 0.0
      %v2510 = vmax.f32 %v2478, 0.0
      %v2511 = vmax.f32 %v2479, 0.0
      %v2512 = vmax.f32 %v2480, 0.0
      %v2513 = vmax.f32 %v2481, 0.0
      %v2514 = vmax.f32 %v2482, 0.0
      %v2515 = vmax.f32 %v2483, 0.0
      %v2516 = vmax.f32 %v2484, 0.0
      %v2517 = vmax.f32 %v2485, 0.0
      %v2518 = vmax.f32 %v2486, 0.0
      %v2519 = vmax.f32 %v2487, 0.0
      %v2520 = vmax.f32 %v2488, 0.0
      %v2521 = vmax.f32 %v2489, 0.0
      %v2522 = vmax.f32 %v2490, 0.0
      %v2523 = vmax.f32 %v2491, 0.0
      %v2524 = vmax.f32 %v2492, 0.0
      %v2525 = vmax.f32 %v2493, 0.0
      %v2526 = vmax.f32 %v2494, 0.0
      %v2527 = vmax.f32 %v2495, 0.0
      %v2528 = vmax.f32 %v2496, 0.0
      %s2529 = scalar_lea.vmem [#allocation3], 32
      %2530 = vst [vmem:[%s2529 + $0x8] sm:$0xff] %v2497
      %2531 = vst [vmem:[%s2529 + $0x10] sm:$0xff] %v2498
      %2532 = vst [vmem:[%s2529 + $0x28] sm:$0xff] %v2499
      %2533 = vst [vmem:[%s2529 + $0x30] sm:$0xff] %v2500
      %2534 = vst [vmem:[%s2529 + $0x48] sm:$0xff] %v2501
      %2535 = vst [vmem:[%s2529 + $0x50] sm:$0xff] %v2502
      %2536 = vst [vmem:[%s2529 + $0x68] sm:$0xff] %v2503
      %2537 = vst [vmem:[%s2529 + $0x70] sm:$0xff] %v2504
      %2538 = vst [vmem:[%s2529 + $0x88] sm:$0xff] %v2505
      %2539 = vst [vmem:[%s2529 + $0x90] sm:$0xff] %v2506
      %2540 = vst [vmem:[%s2529 + $0xa8] sm:$0xff] %v2507
      %2541 = vst [vmem:[%s2529 + $0xb0] sm:$0xff] %v2508
      %2542 = vst [vmem:[%s2529 + $0xc8] sm:$0xff] %v2509
      %2543 = vst [vmem:[%s2529 + $0xd0] sm:$0xff] %v2510
      %2544 = vst [vmem:[%s2529 + $0xe8] sm:$0xff] %v2511
      %2545 = vst [vmem:[%s2529 + $0xf0] sm:$0xff] %v2512
      %2546 = vst [vmem:[%s2529 + $0x108] sm:$0xff] %v2513
      %2547 = vst [vmem:[%s2529 + $0x110] sm:$0xff] %v2514
      %2548 = vst [vmem:[%s2529 + $0x128] sm:$0xff] %v2515
      %2549 = vst [vmem:[%s2529 + $0x130] sm:$0xff] %v2516
      %2550 = vst [vmem:[%s2529 + $0x148] sm:$0xff] %v2517
      %2551 = vst [vmem:[%s2529 + $0x150] sm:$0xff] %v2518
      %2552 = vst [vmem:[%s2529 + $0x168] sm:$0xff] %v2519
      %2553 = vst [vmem:[%s2529 + $0x170] sm:$0xff] %v2520
      %2554 = vst [vmem:[%s2529 + $0x188] sm:$0xff] %v2521
      %2555 = vst [vmem:[%s2529 + $0x190] sm:$0xff] %v2522
      %2556 = vst [vmem:[%s2529 + $0x1a8] sm:$0xff] %v2523
      %2557 = vst [vmem:[%s2529 + $0x1b0] sm:$0xff] %v2524
      %2558 = vst [vmem:[%s2529 + $0x1c8] sm:$0xff] %v2525
      %2559 = vst [vmem:[%s2529 + $0x1d0] sm:$0xff] %v2526
      %2560 = vst [vmem:[%s2529 + $0x1e8] sm:$0xff] %v2527
      %2561 = vst [vmem:[%s2529 + $0x1f0] sm:$0xff] %v2528
      %v2562 = vld [vmem:[#allocation3 + $0x7] sm:$0xff]
      %v2563 = vld [vmem:[#allocation3 + $0xf] sm:$0xff]
      %v2564 = vld [vmem:[#allocation3 + $0x27] sm:$0xff]
      %v2565 = vld [vmem:[#allocation3 + $0x2f] sm:$0xff]
      %v2566 = vld [vmem:[#allocation3 + $0x47] sm:$0xff]
      %v2567 = vld [vmem:[#allocation3 + $0x4f] sm:$0xff]
      %v2568 = vld [vmem:[#allocation3 + $0x67] sm:$0xff]
      %v2569 = vld [vmem:[#allocation3 + $0x6f] sm:$0xff]
      %v2570 = vld [vmem:[#allocation3 + $0x87] sm:$0xff]
      %v2571 = vld [vmem:[#allocation3 + $0x8f] sm:$0xff]
      %v2572 = vld [vmem:[#allocation3 + $0xa7] sm:$0xff]
      %v2573 = vld [vmem:[#allocation3 + $0xaf] sm:$0xff]
      %v2574 = vld [vmem:[#allocation3 + $0xc7] sm:$0xff]
      %v2575 = vld [vmem:[#allocation3 + $0xcf] sm:$0xff]
      %v2576 = vld [vmem:[#allocation3 + $0xe7] sm:$0xff]
      %v2577 = vld [vmem:[#allocation3 + $0xef] sm:$0xff]
      %v2578 = vld [vmem:[#allocation3 + $0x107] sm:$0xff]
      %v2579 = vld [vmem:[#allocation3 + $0x10f] sm:$0xff]
      %v2580 = vld [vmem:[#allocation3 + $0x127] sm:$0xff]
      %v2581 = vld [vmem:[#allocation3 + $0x12f] sm:$0xff]
      %v2582 = vld [vmem:[#allocation3 + $0x147] sm:$0xff]
      %v2583 = vld [vmem:[#allocation3 + $0x14f] sm:$0xff]
      %v2584 = vld [vmem:[#allocation3 + $0x167] sm:$0xff]
      %v2585 = vld [vmem:[#allocation3 + $0x16f] sm:$0xff]
      %v2586 = vld [vmem:[#allocation3 + $0x187] sm:$0xff]
      %v2587 = vld [vmem:[#allocation3 + $0x18f] sm:$0xff]
      %v2588 = vld [vmem:[#allocation3 + $0x1a7] sm:$0xff]
      %v2589 = vld [vmem:[#allocation3 + $0x1af] sm:$0xff]
      %v2590 = vld [vmem:[#allocation3 + $0x1c7] sm:$0xff]
      %v2591 = vld [vmem:[#allocation3 + $0x1cf] sm:$0xff]
      %v2592 = vld [vmem:[#allocation3 + $0x1e7] sm:$0xff]
      %v2593 = vld [vmem:[#allocation3 + $0x1ef] sm:$0xff]
      %v2594 = vld [vmem:[%s5] sm:$0xff]
      %v2595 = vld [vmem:[%s5 + $0x8] sm:$0xff]
      %v2596 = vld [vmem:[%s5 + $0x10] sm:$0xff]
      %v2597 = vld [vmem:[%s5 + $0x18] sm:$0xff]
      %v2598 = vld [vmem:[%s5 + $0x20] sm:$0xff]
      %v2599 = vld [vmem:[%s5 + $0x28] sm:$0xff]
      %v2600 = vld [vmem:[%s5 + $0x30] sm:$0xff]
      %v2601 = vld [vmem:[%s5 + $0x38] sm:$0xff]
      %v2602 = vld [vmem:[%s5 + $0x40] sm:$0xff]
      %v2603 = vld [vmem:[%s5 + $0x48] sm:$0xff]
      %v2604 = vld [vmem:[%s5 + $0x50] sm:$0xff]
      %v2605 = vld [vmem:[%s5 + $0x58] sm:$0xff]
      %v2606 = vld [vmem:[%s5 + $0x60] sm:$0xff]
      %v2607 = vld [vmem:[%s5 + $0x68] sm:$0xff]
      %v2608 = vld [vmem:[%s5 + $0x70] sm:$0xff]
      %v2609 = vld [vmem:[%s5 + $0x78] sm:$0xff]
      %v2610 = vld [vmem:[#allocation3 + $0x8] sm:$0xff]
      %v2611 = vld [vmem:[#allocation3 + $0x10] sm:$0xff]
      %v2612 = vld [vmem:[#allocation3 + $0x28] sm:$0xff]
      %v2613 = vld [vmem:[#allocation3 + $0x30] sm:$0xff]
      %v2614 = vld [vmem:[#allocation3 + $0x48] sm:$0xff]
      %v2615 = vld [vmem:[#allocation3 + $0x50] sm:$0xff]
      %v2616 = vld [vmem:[#allocation3 + $0x68] sm:$0xff]
      %v2617 = vld [vmem:[#allocation3 + $0x70] sm:$0xff]
      %v2618 = vld [vmem:[#allocation3 + $0x88] sm:$0xff]
      %v2619 = vld [vmem:[#allocation3 + $0x90] sm:$0xff]
      %v2620 = vld [vmem:[#allocation3 + $0xa8] sm:$0xff]
      %v2621 = vld [vmem:[#allocation3 + $0xb0] sm:$0xff]
      %v2622 = vld [vmem:[#allocation3 + $0xc8] sm:$0xff]
      %v2623 = vld [vmem:[#allocation3 + $0xd0] sm:$0xff]
      %v2624 = vld [vmem:[#allocation3 + $0xe8] sm:$0xff]
      %v2625 = vld [vmem:[#allocation3 + $0xf0] sm:$0xff]
      %v2626 = vld [vmem:[#allocation3 + $0x108] sm:$0xff]
      %v2627 = vld [vmem:[#allocation3 + $0x110] sm:$0xff]
      %v2628 = vld [vmem:[#allocation3 + $0x128] sm:$0xff]
      %v2629 = vld [vmem:[#allocation3 + $0x130] sm:$0xff]
      %v2630 = vld [vmem:[#allocation3 + $0x148] sm:$0xff]
      %v2631 = vld [vmem:[#allocation3 + $0x150] sm:$0xff]
      %v2632 = vld [vmem:[#allocation3 + $0x168] sm:$0xff]
      %v2633 = vld [vmem:[#allocation3 + $0x170] sm:$0xff]
      %v2634 = vld [vmem:[#allocation3 + $0x188] sm:$0xff]
      %v2635 = vld [vmem:[#allocation3 + $0x190] sm:$0xff]
      %v2636 = vld [vmem:[#allocation3 + $0x1a8] sm:$0xff]
      %v2637 = vld [vmem:[#allocation3 + $0x1b0] sm:$0xff]
      %v2638 = vld [vmem:[#allocation3 + $0x1c8] sm:$0xff]
      %v2639 = vld [vmem:[#allocation3 + $0x1d0] sm:$0xff]
      %v2640 = vld [vmem:[#allocation3 + $0x1e8] sm:$0xff]
      %v2641 = vld [vmem:[#allocation3 + $0x1f0] sm:$0xff]
      %s2642 = scalar_lea.vmem %s5, 128
      %v2643 = vld [vmem:[%s2642] sm:$0xff]
      %v2644 = vld [vmem:[%s2642 + $0x8] sm:$0xff]
      %v2645 = vld [vmem:[%s2642 + $0x10] sm:$0xff]
      %v2646 = vld [vmem:[%s2642 + $0x18] sm:$0xff]
      %v2647 = vld [vmem:[%s2642 + $0x20] sm:$0xff]
      %v2648 = vld [vmem:[%s2642 + $0x28] sm:$0xff]
      %v2649 = vld [vmem:[%s2642 + $0x30] sm:$0xff]
      %v2650 = vld [vmem:[%s2642 + $0x38] sm:$0xff]
      %v2651 = vld [vmem:[%s2642 + $0x40] sm:$0xff]
      %v2652 = vld [vmem:[%s2642 + $0x48] sm:$0xff]
      %v2653 = vld [vmem:[%s2642 + $0x50] sm:$0xff]
      %v2654 = vld [vmem:[%s2642 + $0x58] sm:$0xff]
      %v2655 = vld [vmem:[%s2642 + $0x60] sm:$0xff]
      %v2656 = vld [vmem:[%s2642 + $0x68] sm:$0xff]
      %v2657 = vld [vmem:[%s2642 + $0x70] sm:$0xff]
      %v2658 = vld [vmem:[%s2642 + $0x78] sm:$0xff]
      %2659 = vmatpush.msra.mxu0 %v2658
      %2660 = vmatpush.msra.mxu0 %v2657
      %2661 = vmatpush.msra.mxu0 %v2656
      %2662 = vmatpush.msra.mxu0 %v2655
      %2663 = vmatpush.msra.mxu0 %v2654
      %2664 = vmatpush.msra.mxu0 %v2653
      %2665 = vmatpush.msra.mxu0 %v2652
      %2666 = vmatpush.msra.mxu0 %v2651
      %2667 = vmatpush.msra.mxu0 %v2650
      %2668 = vmatpush.msra.mxu0 %v2649
      %2669 = vmatpush.msra.mxu0 %v2648
      %2670 = vmatpush.msra.mxu0 %v2647
      %2671 = vmatpush.msra.mxu0 %v2646
      %2672 = vmatpush.msra.mxu0 %v2645
      %2673 = vmatpush.msra.mxu0 %v2644
      %2674 = vmatpush.msra.mxu0 %v2643
      %2675 = vmatmul.f32.gmra.mxu0 %v2610
      %v2676 = vpop.f32.mrf.mxu0
      %v2677 = vadd.f32 0.0, %v2676
      %2678 = vmatmul.f32.gmra.mxu0 %v2611
      %v2679 = vpop.f32.mrf.mxu0
      %v2680 = vadd.f32 0.0, %v2679
      %2681 = vmatmul.f32.gmra.mxu0 %v2612
      %v2682 = vpop.f32.mrf.mxu0
      %v2683 = vadd.f32 0.0, %v2682
      %2684 = vmatmul.f32.gmra.mxu0 %v2613
      %v2685 = vpop.f32.mrf.mxu0
      %v2686 = vadd.f32 0.0, %v2685
      %2687 = vmatmul.f32.gmra.mxu0 %v2614
      %v2688 = vpop.f32.mrf.mxu0
      %v2689 = vadd.f32 0.0, %v2688
      %2690 = vmatmul.f32.gmra.mxu0 %v2615
      %v2691 = vpop.f32.mrf.mxu0
      %v2692 = vadd.f32 0.0, %v2691
      %2693 = vmatmul.f32.gmra.mxu0 %v2616
      %v2694 = vpop.f32.mrf.mxu0
      %v2695 = vadd.f32 0.0, %v2694
      %2696 = vmatmul.f32.gmra.mxu0 %v2617
      %v2697 = vpop.f32.mrf.mxu0
      %v2698 = vadd.f32 0.0, %v2697
      %2699 = vmatmul.f32.gmra.mxu0 %v2618
      %v2700 = vpop.f32.mrf.mxu0
      %v2701 = vadd.f32 0.0, %v2700
      %2702 = vmatmul.f32.gmra.mxu0 %v2619
      %v2703 = vpop.f32.mrf.mxu0
      %v2704 = vadd.f32 0.0, %v2703
      %2705 = vmatmul.f32.gmra.mxu0 %v2620
      %v2706 = vpop.f32.mrf.mxu0
      %v2707 = vadd.f32 0.0, %v2706
      %2708 = vmatmul.f32.gmra.mxu0 %v2621
      %v2709 = vpop.f32.mrf.mxu0
      %v2710 = vadd.f32 0.0, %v2709
      %2711 = vmatmul.f32.gmra.mxu0 %v2622
      %v2712 = vpop.f32.mrf.mxu0
      %v2713 = vadd.f32 0.0, %v2712
      %2714 = vmatmul.f32.gmra.mxu0 %v2623
      %v2715 = vpop.f32.mrf.mxu0
      %v2716 = vadd.f32 0.0, %v2715
      %2717 = vmatmul.f32.gmra.mxu0 %v2624
      %v2718 = vpop.f32.mrf.mxu0
      %v2719 = vadd.f32 0.0, %v2718
      %2720 = vmatmul.f32.gmra.mxu0 %v2625
      %v2721 = vpop.f32.mrf.mxu0
      %v2722 = vadd.f32 0.0, %v2721
      %2723 = vmatmul.f32.gmra.mxu0 %v2626
      %v2724 = vpop.f32.mrf.mxu0
      %v2725 = vadd.f32 0.0, %v2724
      %2726 = vmatmul.f32.gmra.mxu0 %v2627
      %v2727 = vpop.f32.mrf.mxu0
      %v2728 = vadd.f32 0.0, %v2727
      %2729 = vmatmul.f32.gmra.mxu0 %v2628
      %v2730 = vpop.f32.mrf.mxu0
      %v2731 = vadd.f32 0.0, %v2730
      %2732 = vmatmul.f32.gmra.mxu0 %v2629
      %v2733 = vpop.f32.mrf.mxu0
      %v2734 = vadd.f32 0.0, %v2733
      %2735 = vmatmul.f32.gmra.mxu0 %v2630
      %v2736 = vpop.f32.mrf.mxu0
      %v2737 = vadd.f32 0.0, %v2736
      %2738 = vmatmul.f32.gmra.mxu0 %v2631
      %v2739 = vpop.f32.mrf.mxu0
      %v2740 = vadd.f32 0.0, %v2739
      %2741 = vmatmul.f32.gmra.mxu0 %v2632
      %v2742 = vpop.f32.mrf.mxu0
      %v2743 = vadd.f32 0.0, %v2742
      %2744 = vmatmul.f32.gmra.mxu0 %v2633
      %v2745 = vpop.f32.mrf.mxu0
      %v2746 = vadd.f32 0.0, %v2745
      %2747 = vmatmul.f32.gmra.mxu0 %v2634
      %v2748 = vpop.f32.mrf.mxu0
      %v2749 = vadd.f32 0.0, %v2748
      %2750 = vmatmul.f32.gmra.mxu0 %v2635
      %v2751 = vpop.f32.mrf.mxu0
      %v2752 = vadd.f32 0.0, %v2751
      %2753 = vmatmul.f32.gmra.mxu0 %v2636
      %v2754 = vpop.f32.mrf.mxu0
      %v2755 = vadd.f32 0.0, %v2754
      %2756 = vmatmul.f32.gmra.mxu0 %v2637
      %v2757 = vpop.f32.mrf.mxu0
      %v2758 = vadd.f32 0.0, %v2757
      %2759 = vmatmul.f32.gmra.mxu0 %v2638
      %v2760 = vpop.f32.mrf.mxu0
      %v2761 = vadd.f32 0.0, %v2760
      %2762 = vmatmul.f32.gmra.mxu0 %v2639
      %v2763 = vpop.f32.mrf.mxu0
      %v2764 = vadd.f32 0.0, %v2763
      %2765 = vmatmul.f32.gmra.mxu0 %v2640
      %v2766 = vpop.f32.mrf.mxu0
      %v2767 = vadd.f32 0.0, %v2766
      %2768 = vmatmul.f32.gmra.mxu0 %v2641
      %v2769 = vpop.f32.mrf.mxu0
      %v2770 = vadd.f32 0.0, %v2769
      %2771 = vdwg.mxu0
      %2772 = vmatpush.msra.mxu0 %v2609
      %2773 = vmatpush.msra.mxu0 %v2608
      %2774 = vmatpush.msra.mxu0 %v2607
      %2775 = vmatpush.msra.mxu0 %v2606
      %2776 = vmatpush.msra.mxu0 %v2605
      %2777 = vmatpush.msra.mxu0 %v2604
      %2778 = vmatpush.msra.mxu0 %v2603
      %2779 = vmatpush.msra.mxu0 %v2602
      %2780 = vmatpush.msra.mxu0 %v2601
      %2781 = vmatpush.msra.mxu0 %v2600
      %2782 = vmatpush.msra.mxu0 %v2599
      %2783 = vmatpush.msra.mxu0 %v2598
      %2784 = vmatpush.msra.mxu0 %v2597
      %2785 = vmatpush.msra.mxu0 %v2596
      %2786 = vmatpush.msra.mxu0 %v2595
      %2787 = vmatpush.msra.mxu0 %v2594
      %2788 = vmatmul.f32.gmra.mxu0 %v2562
      %v2789 = vpop.f32.mrf.mxu0
      %v2790 = vadd.f32 %v2677, %v2789
      %2791 = vmatmul.f32.gmra.mxu0 %v2563
      %v2792 = vpop.f32.mrf.mxu0
      %v2793 = vadd.f32 %v2680, %v2792
      %2794 = vmatmul.f32.gmra.mxu0 %v2564
      %v2795 = vpop.f32.mrf.mxu0
      %v2796 = vadd.f32 %v2683, %v2795
      %2797 = vmatmul.f32.gmra.mxu0 %v2565
      %v2798 = vpop.f32.mrf.mxu0
      %v2799 = vadd.f32 %v2686, %v2798
      %2800 = vmatmul.f32.gmra.mxu0 %v2566
      %v2801 = vpop.f32.mrf.mxu0
      %v2802 = vadd.f32 %v2689, %v2801
      %2803 = vmatmul.f32.gmra.mxu0 %v2567
      %v2804 = vpop.f32.mrf.mxu0
      %v2805 = vadd.f32 %v2692, %v2804
      %2806 = vmatmul.f32.gmra.mxu0 %v2568
      %v2807 = vpop.f32.mrf.mxu0
      %v2808 = vadd.f32 %v2695, %v2807
      %2809 = vmatmul.f32.gmra.mxu0 %v2569
      %v2810 = vpop.f32.mrf.mxu0
      %v2811 = vadd.f32 %v2698, %v2810
      %2812 = vmatmul.f32.gmra.mxu0 %v2570
      %v2813 = vpop.f32.mrf.mxu0
      %v2814 = vadd.f32 %v2701, %v2813
      %2815 = vmatmul.f32.gmra.mxu0 %v2571
      %v2816 = vpop.f32.mrf.mxu0
      %v2817 = vadd.f32 %v2704, %v2816
      %2818 = vmatmul.f32.gmra.mxu0 %v2572
      %v2819 = vpop.f32.mrf.mxu0
      %v2820 = vadd.f32 %v2707, %v2819
      %2821 = vmatmul.f32.gmra.mxu0 %v2573
      %v2822 = vpop.f32.mrf.mxu0
      %v2823 = vadd.f32 %v2710, %v2822
      %2824 = vmatmul.f32.gmra.mxu0 %v2574
      %v2825 = vpop.f32.mrf.mxu0
      %v2826 = vadd.f32 %v2713, %v2825
      %2827 = vmatmul.f32.gmra.mxu0 %v2575
      %v2828 = vpop.f32.mrf.mxu0
      %v2829 = vadd.f32 %v2716, %v2828
      %2830 = vmatmul.f32.gmra.mxu0 %v2576
      %v2831 = vpop.f32.mrf.mxu0
      %v2832 = vadd.f32 %v2719, %v2831
      %2833 = vmatmul.f32.gmra.mxu0 %v2577
      %v2834 = vpop.f32.mrf.mxu0
      %v2835 = vadd.f32 %v2722, %v2834
      %2836 = vmatmul.f32.gmra.mxu0 %v2578
      %v2837 = vpop.f32.mrf.mxu0
      %v2838 = vadd.f32 %v2725, %v2837
      %2839 = vmatmul.f32.gmra.mxu0 %v2579
      %v2840 = vpop.f32.mrf.mxu0
      %v2841 = vadd.f32 %v2728, %v2840
      %2842 = vmatmul.f32.gmra.mxu0 %v2580
      %v2843 = vpop.f32.mrf.mxu0
      %v2844 = vadd.f32 %v2731, %v2843
      %2845 = vmatmul.f32.gmra.mxu0 %v2581
      %v2846 = vpop.f32.mrf.mxu0
      %v2847 = vadd.f32 %v2734, %v2846
      %2848 = vmatmul.f32.gmra.mxu0 %v2582
      %v2849 = vpop.f32.mrf.mxu0
      %v2850 = vadd.f32 %v2737, %v2849
      %2851 = vmatmul.f32.gmra.mxu0 %v2583
      %v2852 = vpop.f32.mrf.mxu0
      %v2853 = vadd.f32 %v2740, %v2852
      %2854 = vmatmul.f32.gmra.mxu0 %v2584
      %v2855 = vpop.f32.mrf.mxu0
      %v2856 = vadd.f32 %v2743, %v2855
      %2857 = vmatmul.f32.gmra.mxu0 %v2585
      %v2858 = vpop.f32.mrf.mxu0
      %v2859 = vadd.f32 %v2746, %v2858
      %2860 = vmatmul.f32.gmra.mxu0 %v2586
      %v2861 = vpop.f32.mrf.mxu0
      %v2862 = vadd.f32 %v2749, %v2861
      %2863 = vmatmul.f32.gmra.mxu0 %v2587
      %v2864 = vpop.f32.mrf.mxu0
      %v2865 = vadd.f32 %v2752, %v2864
      %2866 = vmatmul.f32.gmra.mxu0 %v2588
      %v2867 = vpop.f32.mrf.mxu0
      %v2868 = vadd.f32 %v2755, %v2867
      %2869 = vmatmul.f32.gmra.mxu0 %v2589
      %v2870 = vpop.f32.mrf.mxu0
      %v2871 = vadd.f32 %v2758, %v2870
      %2872 = vmatmul.f32.gmra.mxu0 %v2590
      %v2873 = vpop.f32.mrf.mxu0
      %v2874 = vadd.f32 %v2761, %v2873
      %2875 = vmatmul.f32.gmra.mxu0 %v2591
      %v2876 = vpop.f32.mrf.mxu0
      %v2877 = vadd.f32 %v2764, %v2876
      %2878 = vmatmul.f32.gmra.mxu0 %v2592
      %v2879 = vpop.f32.mrf.mxu0
      %v2880 = vadd.f32 %v2767, %v2879
      %2881 = vmatmul.f32.gmra.mxu0 %v2593
      %v2882 = vpop.f32.mrf.mxu0
      %v2883 = vadd.f32 %v2770, %v2882
      %2884 = vdwg.mxu0
      %v2885 = vld [vmem:[#allocation3 + $0x9] sm:$0xff]
      %v2886 = vld [vmem:[#allocation3 + $0x11] sm:$0xff]
      %v2887 = vld [vmem:[#allocation3 + $0x29] sm:$0xff]
      %v2888 = vld [vmem:[#allocation3 + $0x31] sm:$0xff]
      %v2889 = vld [vmem:[#allocation3 + $0x49] sm:$0xff]
      %v2890 = vld [vmem:[#allocation3 + $0x51] sm:$0xff]
      %v2891 = vld [vmem:[#allocation3 + $0x69] sm:$0xff]
      %v2892 = vld [vmem:[#allocation3 + $0x71] sm:$0xff]
      %v2893 = vld [vmem:[#allocation3 + $0x89] sm:$0xff]
      %v2894 = vld [vmem:[#allocation3 + $0x91] sm:$0xff]
      %v2895 = vld [vmem:[#allocation3 + $0xa9] sm:$0xff]
      %v2896 = vld [vmem:[#allocation3 + $0xb1] sm:$0xff]
      %v2897 = vld [vmem:[#allocation3 + $0xc9] sm:$0xff]
      %v2898 = vld [vmem:[#allocation3 + $0xd1] sm:$0xff]
      %v2899 = vld [vmem:[#allocation3 + $0xe9] sm:$0xff]
      %v2900 = vld [vmem:[#allocation3 + $0xf1] sm:$0xff]
      %v2901 = vld [vmem:[#allocation3 + $0x109] sm:$0xff]
      %v2902 = vld [vmem:[#allocation3 + $0x111] sm:$0xff]
      %v2903 = vld [vmem:[#allocation3 + $0x129] sm:$0xff]
      %v2904 = vld [vmem:[#allocation3 + $0x131] sm:$0xff]
      %v2905 = vld [vmem:[#allocation3 + $0x149] sm:$0xff]
      %v2906 = vld [vmem:[#allocation3 + $0x151] sm:$0xff]
      %v2907 = vld [vmem:[#allocation3 + $0x169] sm:$0xff]
      %v2908 = vld [vmem:[#allocation3 + $0x171] sm:$0xff]
      %v2909 = vld [vmem:[#allocation3 + $0x189] sm:$0xff]
      %v2910 = vld [vmem:[#allocation3 + $0x191] sm:$0xff]
      %v2911 = vld [vmem:[#allocation3 + $0x1a9] sm:$0xff]
      %v2912 = vld [vmem:[#allocation3 + $0x1b1] sm:$0xff]
      %v2913 = vld [vmem:[#allocation3 + $0x1c9] sm:$0xff]
      %v2914 = vld [vmem:[#allocation3 + $0x1d1] sm:$0xff]
      %v2915 = vld [vmem:[#allocation3 + $0x1e9] sm:$0xff]
      %v2916 = vld [vmem:[#allocation3 + $0x1f1] sm:$0xff]
      %s2917 = scalar_lea.vmem %s5, 256
      %v2918 = vld [vmem:[%s2917] sm:$0xff]
      %v2919 = vld [vmem:[%s2917 + $0x8] sm:$0xff]
      %v2920 = vld [vmem:[%s2917 + $0x10] sm:$0xff]
      %v2921 = vld [vmem:[%s2917 + $0x18] sm:$0xff]
      %v2922 = vld [vmem:[%s2917 + $0x20] sm:$0xff]
      %v2923 = vld [vmem:[%s2917 + $0x28] sm:$0xff]
      %v2924 = vld [vmem:[%s2917 + $0x30] sm:$0xff]
      %v2925 = vld [vmem:[%s2917 + $0x38] sm:$0xff]
      %v2926 = vld [vmem:[%s2917 + $0x40] sm:$0xff]
      %v2927 = vld [vmem:[%s2917 + $0x48] sm:$0xff]
      %v2928 = vld [vmem:[%s2917 + $0x50] sm:$0xff]
      %v2929 = vld [vmem:[%s2917 + $0x58] sm:$0xff]
      %v2930 = vld [vmem:[%s2917 + $0x60] sm:$0xff]
      %v2931 = vld [vmem:[%s2917 + $0x68] sm:$0xff]
      %v2932 = vld [vmem:[%s2917 + $0x70] sm:$0xff]
      %v2933 = vld [vmem:[%s2917 + $0x78] sm:$0xff]
      %2934 = vmatpush.msra.mxu0 %v2933
      %2935 = vmatpush.msra.mxu0 %v2932
      %2936 = vmatpush.msra.mxu0 %v2931
      %2937 = vmatpush.msra.mxu0 %v2930
      %2938 = vmatpush.msra.mxu0 %v2929
      %2939 = vmatpush.msra.mxu0 %v2928
      %2940 = vmatpush.msra.mxu0 %v2927
      %2941 = vmatpush.msra.mxu0 %v2926
      %2942 = vmatpush.msra.mxu0 %v2925
      %2943 = vmatpush.msra.mxu0 %v2924
      %2944 = vmatpush.msra.mxu0 %v2923
      %2945 = vmatpush.msra.mxu0 %v2922
      %2946 = vmatpush.msra.mxu0 %v2921
      %2947 = vmatpush.msra.mxu0 %v2920
      %2948 = vmatpush.msra.mxu0 %v2919
      %2949 = vmatpush.msra.mxu0 %v2918
      %2950 = vmatmul.f32.gmra.mxu0 %v2885
      %v2951 = vpop.f32.mrf.mxu0
      %v2952 = vadd.f32 0.0, %v2951
      %2953 = vmatmul.f32.gmra.mxu0 %v2886
      %v2954 = vpop.f32.mrf.mxu0
      %v2955 = vadd.f32 0.0, %v2954
      %2956 = vmatmul.f32.gmra.mxu0 %v2887
      %v2957 = vpop.f32.mrf.mxu0
      %v2958 = vadd.f32 0.0, %v2957
      %2959 = vmatmul.f32.gmra.mxu0 %v2888
      %v2960 = vpop.f32.mrf.mxu0
      %v2961 = vadd.f32 0.0, %v2960
      %2962 = vmatmul.f32.gmra.mxu0 %v2889
      %v2963 = vpop.f32.mrf.mxu0
      %v2964 = vadd.f32 0.0, %v2963
      %2965 = vmatmul.f32.gmra.mxu0 %v2890
      %v2966 = vpop.f32.mrf.mxu0
      %v2967 = vadd.f32 0.0, %v2966
      %2968 = vmatmul.f32.gmra.mxu0 %v2891
      %v2969 = vpop.f32.mrf.mxu0
      %v2970 = vadd.f32 0.0, %v2969
      %2971 = vmatmul.f32.gmra.mxu0 %v2892
      %v2972 = vpop.f32.mrf.mxu0
      %v2973 = vadd.f32 0.0, %v2972
      %2974 = vmatmul.f32.gmra.mxu0 %v2893
      %v2975 = vpop.f32.mrf.mxu0
      %v2976 = vadd.f32 0.0, %v2975
      %2977 = vmatmul.f32.gmra.mxu0 %v2894
      %v2978 = vpop.f32.mrf.mxu0
      %v2979 = vadd.f32 0.0, %v2978
      %2980 = vmatmul.f32.gmra.mxu0 %v2895
      %v2981 = vpop.f32.mrf.mxu0
      %v2982 = vadd.f32 0.0, %v2981
      %2983 = vmatmul.f32.gmra.mxu0 %v2896
      %v2984 = vpop.f32.mrf.mxu0
      %v2985 = vadd.f32 0.0, %v2984
      %2986 = vmatmul.f32.gmra.mxu0 %v2897
      %v2987 = vpop.f32.mrf.mxu0
      %v2988 = vadd.f32 0.0, %v2987
      %2989 = vmatmul.f32.gmra.mxu0 %v2898
      %v2990 = vpop.f32.mrf.mxu0
      %v2991 = vadd.f32 0.0, %v2990
      %2992 = vmatmul.f32.gmra.mxu0 %v2899
      %v2993 = vpop.f32.mrf.mxu0
      %v2994 = vadd.f32 0.0, %v2993
      %2995 = vmatmul.f32.gmra.mxu0 %v2900
      %v2996 = vpop.f32.mrf.mxu0
      %v2997 = vadd.f32 0.0, %v2996
      %2998 = vmatmul.f32.gmra.mxu0 %v2901
      %v2999 = vpop.f32.mrf.mxu0
      %v3000 = vadd.f32 0.0, %v2999
      %3001 = vmatmul.f32.gmra.mxu0 %v2902
      %v3002 = vpop.f32.mrf.mxu0
      %v3003 = vadd.f32 0.0, %v3002
      %3004 = vmatmul.f32.gmra.mxu0 %v2903
      %v3005 = vpop.f32.mrf.mxu0
      %v3006 = vadd.f32 0.0, %v3005
      %3007 = vmatmul.f32.gmra.mxu0 %v2904
      %v3008 = vpop.f32.mrf.mxu0
      %v3009 = vadd.f32 0.0, %v3008
      %3010 = vmatmul.f32.gmra.mxu0 %v2905
      %v3011 = vpop.f32.mrf.mxu0
      %v3012 = vadd.f32 0.0, %v3011
      %3013 = vmatmul.f32.gmra.mxu0 %v2906
      %v3014 = vpop.f32.mrf.mxu0
      %v3015 = vadd.f32 0.0, %v3014
      %3016 = vmatmul.f32.gmra.mxu0 %v2907
      %v3017 = vpop.f32.mrf.mxu0
      %v3018 = vadd.f32 0.0, %v3017
      %3019 = vmatmul.f32.gmra.mxu0 %v2908
      %v3020 = vpop.f32.mrf.mxu0
      %v3021 = vadd.f32 0.0, %v3020
      %3022 = vmatmul.f32.gmra.mxu0 %v2909
      %v3023 = vpop.f32.mrf.mxu0
      %v3024 = vadd.f32 0.0, %v3023
      %3025 = vmatmul.f32.gmra.mxu0 %v2910
      %v3026 = vpop.f32.mrf.mxu0
      %v3027 = vadd.f32 0.0, %v3026
      %3028 = vmatmul.f32.gmra.mxu0 %v2911
      %v3029 = vpop.f32.mrf.mxu0
      %v3030 = vadd.f32 0.0, %v3029
      %3031 = vmatmul.f32.gmra.mxu0 %v2912
      %v3032 = vpop.f32.mrf.mxu0
      %v3033 = vadd.f32 0.0, %v3032
      %3034 = vmatmul.f32.gmra.mxu0 %v2913
      %v3035 = vpop.f32.mrf.mxu0
      %v3036 = vadd.f32 0.0, %v3035
      %3037 = vmatmul.f32.gmra.mxu0 %v2914
      %v3038 = vpop.f32.mrf.mxu0
      %v3039 = vadd.f32 0.0, %v3038
      %3040 = vmatmul.f32.gmra.mxu0 %v2915
      %v3041 = vpop.f32.mrf.mxu0
      %v3042 = vadd.f32 0.0, %v3041
      %3043 = vmatmul.f32.gmra.mxu0 %v2916
      %v3044 = vpop.f32.mrf.mxu0
      %v3045 = vadd.f32 0.0, %v3044
      %3046 = vdwg.mxu0
      %v3047 = vadd.f32 %v2790, %v2952
      %v3048 = vadd.f32 %v2793, %v2955
      %v3049 = vadd.f32 %v2796, %v2958
      %v3050 = vadd.f32 %v2799, %v2961
      %v3051 = vadd.f32 %v2802, %v2964
      %v3052 = vadd.f32 %v2805, %v2967
      %v3053 = vadd.f32 %v2808, %v2970
      %v3054 = vadd.f32 %v2811, %v2973
      %v3055 = vadd.f32 %v2814, %v2976
      %v3056 = vadd.f32 %v2817, %v2979
      %v3057 = vadd.f32 %v2820, %v2982
      %v3058 = vadd.f32 %v2823, %v2985
      %v3059 = vadd.f32 %v2826, %v2988
      %v3060 = vadd.f32 %v2829, %v2991
      %v3061 = vadd.f32 %v2832, %v2994
      %v3062 = vadd.f32 %v2835, %v2997
      %v3063 = vadd.f32 %v2838, %v3000
      %v3064 = vadd.f32 %v2841, %v3003
      %v3065 = vadd.f32 %v2844, %v3006
      %v3066 = vadd.f32 %v2847, %v3009
      %v3067 = vadd.f32 %v2850, %v3012
      %v3068 = vadd.f32 %v2853, %v3015
      %v3069 = vadd.f32 %v2856, %v3018
      %v3070 = vadd.f32 %v2859, %v3021
      %v3071 = vadd.f32 %v2862, %v3024
      %v3072 = vadd.f32 %v2865, %v3027
      %v3073 = vadd.f32 %v2868, %v3030
      %v3074 = vadd.f32 %v2871, %v3033
      %v3075 = vadd.f32 %v2874, %v3036
      %v3076 = vadd.f32 %v2877, %v3039
      %v3077 = vadd.f32 %v2880, %v3042
      %v3078 = vadd.f32 %v2883, %v3045
      %v3079 = vld [vmem:[%s2529 + $0x7] sm:$0xff]
      %v3080 = vld [vmem:[%s2529 + $0xf] sm:$0xff]
      %v3081 = vld [vmem:[%s2529 + $0x27] sm:$0xff]
      %v3082 = vld [vmem:[%s2529 + $0x2f] sm:$0xff]
      %v3083 = vld [vmem:[%s2529 + $0x47] sm:$0xff]
      %v3084 = vld [vmem:[%s2529 + $0x4f] sm:$0xff]
      %v3085 = vld [vmem:[%s2529 + $0x67] sm:$0xff]
      %v3086 = vld [vmem:[%s2529 + $0x6f] sm:$0xff]
      %v3087 = vld [vmem:[%s2529 + $0x87] sm:$0xff]
      %v3088 = vld [vmem:[%s2529 + $0x8f] sm:$0xff]
      %v3089 = vld [vmem:[%s2529 + $0xa7] sm:$0xff]
      %v3090 = vld [vmem:[%s2529 + $0xaf] sm:$0xff]
      %v3091 = vld [vmem:[%s2529 + $0xc7] sm:$0xff]
      %v3092 = vld [vmem:[%s2529 + $0xcf] sm:$0xff]
      %v3093 = vld [vmem:[%s2529 + $0xe7] sm:$0xff]
      %v3094 = vld [vmem:[%s2529 + $0xef] sm:$0xff]
      %v3095 = vld [vmem:[%s2529 + $0x107] sm:$0xff]
      %v3096 = vld [vmem:[%s2529 + $0x10f] sm:$0xff]
      %v3097 = vld [vmem:[%s2529 + $0x127] sm:$0xff]
      %v3098 = vld [vmem:[%s2529 + $0x12f] sm:$0xff]
      %v3099 = vld [vmem:[%s2529 + $0x147] sm:$0xff]
      %v3100 = vld [vmem:[%s2529 + $0x14f] sm:$0xff]
      %v3101 = vld [vmem:[%s2529 + $0x167] sm:$0xff]
      %v3102 = vld [vmem:[%s2529 + $0x16f] sm:$0xff]
      %v3103 = vld [vmem:[%s2529 + $0x187] sm:$0xff]
      %v3104 = vld [vmem:[%s2529 + $0x18f] sm:$0xff]
      %v3105 = vld [vmem:[%s2529 + $0x1a7] sm:$0xff]
      %v3106 = vld [vmem:[%s2529 + $0x1af] sm:$0xff]
      %v3107 = vld [vmem:[%s2529 + $0x1c7] sm:$0xff]
      %v3108 = vld [vmem:[%s2529 + $0x1cf] sm:$0xff]
      %v3109 = vld [vmem:[%s2529 + $0x1e7] sm:$0xff]
      %v3110 = vld [vmem:[%s2529 + $0x1ef] sm:$0xff]
      %s3111 = scalar_lea.vmem %s5, 384
      %v3112 = vld [vmem:[%s3111] sm:$0xff]
      %v3113 = vld [vmem:[%s3111 + $0x8] sm:$0xff]
      %v3114 = vld [vmem:[%s3111 + $0x10] sm:$0xff]
      %v3115 = vld [vmem:[%s3111 + $0x18] sm:$0xff]
      %v3116 = vld [vmem:[%s3111 + $0x20] sm:$0xff]
      %v3117 = vld [vmem:[%s3111 + $0x28] sm:$0xff]
      %v3118 = vld [vmem:[%s3111 + $0x30] sm:$0xff]
      %v3119 = vld [vmem:[%s3111 + $0x38] sm:$0xff]
      %v3120 = vld [vmem:[%s3111 + $0x40] sm:$0xff]
      %v3121 = vld [vmem:[%s3111 + $0x48] sm:$0xff]
      %v3122 = vld [vmem:[%s3111 + $0x50] sm:$0xff]
      %v3123 = vld [vmem:[%s3111 + $0x58] sm:$0xff]
      %v3124 = vld [vmem:[%s3111 + $0x60] sm:$0xff]
      %v3125 = vld [vmem:[%s3111 + $0x68] sm:$0xff]
      %v3126 = vld [vmem:[%s3111 + $0x70] sm:$0xff]
      %v3127 = vld [vmem:[%s3111 + $0x78] sm:$0xff]
      %3128 = vmatpush.msra.mxu0 %v3127
      %3129 = vmatpush.msra.mxu0 %v3126
      %3130 = vmatpush.msra.mxu0 %v3125
      %3131 = vmatpush.msra.mxu0 %v3124
      %3132 = vmatpush.msra.mxu0 %v3123
      %3133 = vmatpush.msra.mxu0 %v3122
      %3134 = vmatpush.msra.mxu0 %v3121
      %3135 = vmatpush.msra.mxu0 %v3120
      %3136 = vmatpush.msra.mxu0 %v3119
      %3137 = vmatpush.msra.mxu0 %v3118
      %3138 = vmatpush.msra.mxu0 %v3117
      %3139 = vmatpush.msra.mxu0 %v3116
      %3140 = vmatpush.msra.mxu0 %v3115
      %3141 = vmatpush.msra.mxu0 %v3114
      %3142 = vmatpush.msra.mxu0 %v3113
      %3143 = vmatpush.msra.mxu0 %v3112
      %3144 = vmatmul.f32.gmra.mxu0 %v3079
      %v3145 = vpop.f32.mrf.mxu0
      %v3146 = vadd.f32 0.0, %v3145
      %3147 = vmatmul.f32.gmra.mxu0 %v3080
      %v3148 = vpop.f32.mrf.mxu0
      %v3149 = vadd.f32 0.0, %v3148
      %3150 = vmatmul.f32.gmra.mxu0 %v3081
      %v3151 = vpop.f32.mrf.mxu0
      %v3152 = vadd.f32 0.0, %v3151
      %3153 = vmatmul.f32.gmra.mxu0 %v3082
      %v3154 = vpop.f32.mrf.mxu0
      %v3155 = vadd.f32 0.0, %v3154
      %3156 = vmatmul.f32.gmra.mxu0 %v3083
      %v3157 = vpop.f32.mrf.mxu0
      %v3158 = vadd.f32 0.0, %v3157
      %3159 = vmatmul.f32.gmra.mxu0 %v3084
      %v3160 = vpop.f32.mrf.mxu0
      %v3161 = vadd.f32 0.0, %v3160
      %3162 = vmatmul.f32.gmra.mxu0 %v3085
      %v3163 = vpop.f32.mrf.mxu0
      %v3164 = vadd.f32 0.0, %v3163
      %3165 = vmatmul.f32.gmra.mxu0 %v3086
      %v3166 = vpop.f32.mrf.mxu0
      %v3167 = vadd.f32 0.0, %v3166
      %3168 = vmatmul.f32.gmra.mxu0 %v3087
      %v3169 = vpop.f32.mrf.mxu0
      %v3170 = vadd.f32 0.0, %v3169
      %3171 = vmatmul.f32.gmra.mxu0 %v3088
      %v3172 = vpop.f32.mrf.mxu0
      %v3173 = vadd.f32 0.0, %v3172
      %3174 = vmatmul.f32.gmra.mxu0 %v3089
      %v3175 = vpop.f32.mrf.mxu0
      %v3176 = vadd.f32 0.0, %v3175
      %3177 = vmatmul.f32.gmra.mxu0 %v3090
      %v3178 = vpop.f32.mrf.mxu0
      %v3179 = vadd.f32 0.0, %v3178
      %3180 = vmatmul.f32.gmra.mxu0 %v3091
      %v3181 = vpop.f32.mrf.mxu0
      %v3182 = vadd.f32 0.0, %v3181
      %3183 = vmatmul.f32.gmra.mxu0 %v3092
      %v3184 = vpop.f32.mrf.mxu0
      %v3185 = vadd.f32 0.0, %v3184
      %3186 = vmatmul.f32.gmra.mxu0 %v3093
      %v3187 = vpop.f32.mrf.mxu0
      %v3188 = vadd.f32 0.0, %v3187
      %3189 = vmatmul.f32.gmra.mxu0 %v3094
      %v3190 = vpop.f32.mrf.mxu0
      %v3191 = vadd.f32 0.0, %v3190
      %3192 = vmatmul.f32.gmra.mxu0 %v3095
      %v3193 = vpop.f32.mrf.mxu0
      %v3194 = vadd.f32 0.0, %v3193
      %3195 = vmatmul.f32.gmra.mxu0 %v3096
      %v3196 = vpop.f32.mrf.mxu0
      %v3197 = vadd.f32 0.0, %v3196
      %3198 = vmatmul.f32.gmra.mxu0 %v3097
      %v3199 = vpop.f32.mrf.mxu0
      %v3200 = vadd.f32 0.0, %v3199
      %3201 = vmatmul.f32.gmra.mxu0 %v3098
      %v3202 = vpop.f32.mrf.mxu0
      %v3203 = vadd.f32 0.0, %v3202
      %3204 = vmatmul.f32.gmra.mxu0 %v3099
      %v3205 = vpop.f32.mrf.mxu0
      %v3206 = vadd.f32 0.0, %v3205
      %3207 = vmatmul.f32.gmra.mxu0 %v3100
      %v3208 = vpop.f32.mrf.mxu0
      %v3209 = vadd.f32 0.0, %v3208
      %3210 = vmatmul.f32.gmra.mxu0 %v3101
      %v3211 = vpop.f32.mrf.mxu0
      %v3212 = vadd.f32 0.0, %v3211
      %3213 = vmatmul.f32.gmra.mxu0 %v3102
      %v3214 = vpop.f32.mrf.mxu0
      %v3215 = vadd.f32 0.0, %v3214
      %3216 = vmatmul.f32.gmra.mxu0 %v3103
      %v3217 = vpop.f32.mrf.mxu0
      %v3218 = vadd.f32 0.0, %v3217
      %3219 = vmatmul.f32.gmra.mxu0 %v3104
      %v3220 = vpop.f32.mrf.mxu0
      %v3221 = vadd.f32 0.0, %v3220
      %3222 = vmatmul.f32.gmra.mxu0 %v3105
      %v3223 = vpop.f32.mrf.mxu0
      %v3224 = vadd.f32 0.0, %v3223
      %3225 = vmatmul.f32.gmra.mxu0 %v3106
      %v3226 = vpop.f32.mrf.mxu0
      %v3227 = vadd.f32 0.0, %v3226
      %3228 = vmatmul.f32.gmra.mxu0 %v3107
      %v3229 = vpop.f32.mrf.mxu0
      %v3230 = vadd.f32 0.0, %v3229
      %3231 = vmatmul.f32.gmra.mxu0 %v3108
      %v3232 = vpop.f32.mrf.mxu0
      %v3233 = vadd.f32 0.0, %v3232
      %3234 = vmatmul.f32.gmra.mxu0 %v3109
      %v3235 = vpop.f32.mrf.mxu0
      %v3236 = vadd.f32 0.0, %v3235
      %3237 = vmatmul.f32.gmra.mxu0 %v3110
      %v3238 = vpop.f32.mrf.mxu0
      %v3239 = vadd.f32 0.0, %v3238
      %3240 = vdwg.mxu0
      %v3241 = vadd.f32 %v3047, %v3146
      %v3242 = vadd.f32 %v3048, %v3149
      %v3243 = vadd.f32 %v3049, %v3152
      %v3244 = vadd.f32 %v3050, %v3155
      %v3245 = vadd.f32 %v3051, %v3158
      %v3246 = vadd.f32 %v3052, %v3161
      %v3247 = vadd.f32 %v3053, %v3164
      %v3248 = vadd.f32 %v3054, %v3167
      %v3249 = vadd.f32 %v3055, %v3170
      %v3250 = vadd.f32 %v3056, %v3173
      %v3251 = vadd.f32 %v3057, %v3176
      %v3252 = vadd.f32 %v3058, %v3179
      %v3253 = vadd.f32 %v3059, %v3182
      %v3254 = vadd.f32 %v3060, %v3185
      %v3255 = vadd.f32 %v3061, %v3188
      %v3256 = vadd.f32 %v3062, %v3191
      %v3257 = vadd.f32 %v3063, %v3194
      %v3258 = vadd.f32 %v3064, %v3197
      %v3259 = vadd.f32 %v3065, %v3200
      %v3260 = vadd.f32 %v3066, %v3203
      %v3261 = vadd.f32 %v3067, %v3206
      %v3262 = vadd.f32 %v3068, %v3209
      %v3263 = vadd.f32 %v3069, %v3212
      %v3264 = vadd.f32 %v3070, %v3215
      %v3265 = vadd.f32 %v3071, %v3218
      %v3266 = vadd.f32 %v3072, %v3221
      %v3267 = vadd.f32 %v3073, %v3224
      %v3268 = vadd.f32 %v3074, %v3227
      %v3269 = vadd.f32 %v3075, %v3230
      %v3270 = vadd.f32 %v3076, %v3233
      %v3271 = vadd.f32 %v3077, %v3236
      %v3272 = vadd.f32 %v3078, %v3239
      %v3273 = vld [vmem:[%s2529 + $0x8] sm:$0xff]
      %v3274 = vld [vmem:[%s2529 + $0x10] sm:$0xff]
      %v3275 = vld [vmem:[%s2529 + $0x28] sm:$0xff]
      %v3276 = vld [vmem:[%s2529 + $0x30] sm:$0xff]
      %v3277 = vld [vmem:[%s2529 + $0x48] sm:$0xff]
      %v3278 = vld [vmem:[%s2529 + $0x50] sm:$0xff]
      %v3279 = vld [vmem:[%s2529 + $0x68] sm:$0xff]
      %v3280 = vld [vmem:[%s2529 + $0x70] sm:$0xff]
      %v3281 = vld [vmem:[%s2529 + $0x88] sm:$0xff]
      %v3282 = vld [vmem:[%s2529 + $0x90] sm:$0xff]
      %v3283 = vld [vmem:[%s2529 + $0xa8] sm:$0xff]
      %v3284 = vld [vmem:[%s2529 + $0xb0] sm:$0xff]
      %v3285 = vld [vmem:[%s2529 + $0xc8] sm:$0xff]
      %v3286 = vld [vmem:[%s2529 + $0xd0] sm:$0xff]
      %v3287 = vld [vmem:[%s2529 + $0xe8] sm:$0xff]
      %v3288 = vld [vmem:[%s2529 + $0xf0] sm:$0xff]
      %v3289 = vld [vmem:[%s2529 + $0x108] sm:$0xff]
      %v3290 = vld [vmem:[%s2529 + $0x110] sm:$0xff]
      %v3291 = vld [vmem:[%s2529 + $0x128] sm:$0xff]
      %v3292 = vld [vmem:[%s2529 + $0x130] sm:$0xff]
      %v3293 = vld [vmem:[%s2529 + $0x148] sm:$0xff]
      %v3294 = vld [vmem:[%s2529 + $0x150] sm:$0xff]
      %v3295 = vld [vmem:[%s2529 + $0x168] sm:$0xff]
      %v3296 = vld [vmem:[%s2529 + $0x170] sm:$0xff]
      %v3297 = vld [vmem:[%s2529 + $0x188] sm:$0xff]
      %v3298 = vld [vmem:[%s2529 + $0x190] sm:$0xff]
      %v3299 = vld [vmem:[%s2529 + $0x1a8] sm:$0xff]
      %v3300 = vld [vmem:[%s2529 + $0x1b0] sm:$0xff]
      %v3301 = vld [vmem:[%s2529 + $0x1c8] sm:$0xff]
      %v3302 = vld [vmem:[%s2529 + $0x1d0] sm:$0xff]
      %v3303 = vld [vmem:[%s2529 + $0x1e8] sm:$0xff]
      %v3304 = vld [vmem:[%s2529 + $0x1f0] sm:$0xff]
      %s3305 = scalar_lea.vmem %s5, 512
      %v3306 = vld [vmem:[%s3305] sm:$0xff]
      %v3307 = vld [vmem:[%s3305 + $0x8] sm:$0xff]
      %v3308 = vld [vmem:[%s3305 + $0x10] sm:$0xff]
      %v3309 = vld [vmem:[%s3305 + $0x18] sm:$0xff]
      %v3310 = vld [vmem:[%s3305 + $0x20] sm:$0xff]
      %v3311 = vld [vmem:[%s3305 + $0x28] sm:$0xff]
      %v3312 = vld [vmem:[%s3305 + $0x30] sm:$0xff]
      %v3313 = vld [vmem:[%s3305 + $0x38] sm:$0xff]
      %v3314 = vld [vmem:[%s3305 + $0x40] sm:$0xff]
      %v3315 = vld [vmem:[%s3305 + $0x48] sm:$0xff]
      %v3316 = vld [vmem:[%s3305 + $0x50] sm:$0xff]
      %v3317 = vld [vmem:[%s3305 + $0x58] sm:$0xff]
      %v3318 = vld [vmem:[%s3305 + $0x60] sm:$0xff]
      %v3319 = vld [vmem:[%s3305 + $0x68] sm:$0xff]
      %v3320 = vld [vmem:[%s3305 + $0x70] sm:$0xff]
      %v3321 = vld [vmem:[%s3305 + $0x78] sm:$0xff]
      %3322 = vmatpush.msra.mxu0 %v3321
      %3323 = vmatpush.msra.mxu0 %v3320
      %3324 = vmatpush.msra.mxu0 %v3319
      %3325 = vmatpush.msra.mxu0 %v3318
      %3326 = vmatpush.msra.mxu0 %v3317
      %3327 = vmatpush.msra.mxu0 %v3316
      %3328 = vmatpush.msra.mxu0 %v3315
      %3329 = vmatpush.msra.mxu0 %v3314
      %3330 = vmatpush.msra.mxu0 %v3313
      %3331 = vmatpush.msra.mxu0 %v3312
      %3332 = vmatpush.msra.mxu0 %v3311
      %3333 = vmatpush.msra.mxu0 %v3310
      %3334 = vmatpush.msra.mxu0 %v3309
      %3335 = vmatpush.msra.mxu0 %v3308
      %3336 = vmatpush.msra.mxu0 %v3307
      %3337 = vmatpush.msra.mxu0 %v3306
      %3338 = vmatmul.f32.gmra.mxu0 %v3273
      %v3339 = vpop.f32.mrf.mxu0
      %v3340 = vadd.f32 0.0, %v3339
      %3341 = vmatmul.f32.gmra.mxu0 %v3274
      %v3342 = vpop.f32.mrf.mxu0
      %v3343 = vadd.f32 0.0, %v3342
      %3344 = vmatmul.f32.gmra.mxu0 %v3275
      %v3345 = vpop.f32.mrf.mxu0
      %v3346 = vadd.f32 0.0, %v3345
      %3347 = vmatmul.f32.gmra.mxu0 %v3276
      %v3348 = vpop.f32.mrf.mxu0
      %v3349 = vadd.f32 0.0, %v3348
      %3350 = vmatmul.f32.gmra.mxu0 %v3277
      %v3351 = vpop.f32.mrf.mxu0
      %v3352 = vadd.f32 0.0, %v3351
      %3353 = vmatmul.f32.gmra.mxu0 %v3278
      %v3354 = vpop.f32.mrf.mxu0
      %v3355 = vadd.f32 0.0, %v3354
      %3356 = vmatmul.f32.gmra.mxu0 %v3279
      %v3357 = vpop.f32.mrf.mxu0
      %v3358 = vadd.f32 0.0, %v3357
      %3359 = vmatmul.f32.gmra.mxu0 %v3280
      %v3360 = vpop.f32.mrf.mxu0
      %v3361 = vadd.f32 0.0, %v3360
      %3362 = vmatmul.f32.gmra.mxu0 %v3281
      %v3363 = vpop.f32.mrf.mxu0
      %v3364 = vadd.f32 0.0, %v3363
      %3365 = vmatmul.f32.gmra.mxu0 %v3282
      %v3366 = vpop.f32.mrf.mxu0
      %v3367 = vadd.f32 0.0, %v3366
      %3368 = vmatmul.f32.gmra.mxu0 %v3283
      %v3369 = vpop.f32.mrf.mxu0
      %v3370 = vadd.f32 0.0, %v3369
      %3371 = vmatmul.f32.gmra.mxu0 %v3284
      %v3372 = vpop.f32.mrf.mxu0
      %v3373 = vadd.f32 0.0, %v3372
      %3374 = vmatmul.f32.gmra.mxu0 %v3285
      %v3375 = vpop.f32.mrf.mxu0
      %v3376 = vadd.f32 0.0, %v3375
      %3377 = vmatmul.f32.gmra.mxu0 %v3286
      %v3378 = vpop.f32.mrf.mxu0
      %v3379 = vadd.f32 0.0, %v3378
      %3380 = vmatmul.f32.gmra.mxu0 %v3287
      %v3381 = vpop.f32.mrf.mxu0
      %v3382 = vadd.f32 0.0, %v3381
      %3383 = vmatmul.f32.gmra.mxu0 %v3288
      %v3384 = vpop.f32.mrf.mxu0
      %v3385 = vadd.f32 0.0, %v3384
      %3386 = vmatmul.f32.gmra.mxu0 %v3289
      %v3387 = vpop.f32.mrf.mxu0
      %v3388 = vadd.f32 0.0, %v3387
      %3389 = vmatmul.f32.gmra.mxu0 %v3290
      %v3390 = vpop.f32.mrf.mxu0
      %v3391 = vadd.f32 0.0, %v3390
      %3392 = vmatmul.f32.gmra.mxu0 %v3291
      %v3393 = vpop.f32.mrf.mxu0
      %v3394 = vadd.f32 0.0, %v3393
      %3395 = vmatmul.f32.gmra.mxu0 %v3292
      %v3396 = vpop.f32.mrf.mxu0
      %v3397 = vadd.f32 0.0, %v3396
      %3398 = vmatmul.f32.gmra.mxu0 %v3293
      %v3399 = vpop.f32.mrf.mxu0
      %v3400 = vadd.f32 0.0, %v3399
      %3401 = vmatmul.f32.gmra.mxu0 %v3294
      %v3402 = vpop.f32.mrf.mxu0
      %v3403 = vadd.f32 0.0, %v3402
      %3404 = vmatmul.f32.gmra.mxu0 %v3295
      %v3405 = vpop.f32.mrf.mxu0
      %v3406 = vadd.f32 0.0, %v3405
      %3407 = vmatmul.f32.gmra.mxu0 %v3296
      %v3408 = vpop.f32.mrf.mxu0
      %v3409 = vadd.f32 0.0, %v3408
      %3410 = vmatmul.f32.gmra.mxu0 %v3297
      %v3411 = vpop.f32.mrf.mxu0
      %v3412 = vadd.f32 0.0, %v3411
      %3413 = vmatmul.f32.gmra.mxu0 %v3298
      %v3414 = vpop.f32.mrf.mxu0
      %v3415 = vadd.f32 0.0, %v3414
      %3416 = vmatmul.f32.gmra.mxu0 %v3299
      %v3417 = vpop.f32.mrf.mxu0
      %v3418 = vadd.f32 0.0, %v3417
      %3419 = vmatmul.f32.gmra.mxu0 %v3300
      %v3420 = vpop.f32.mrf.mxu0
      %v3421 = vadd.f32 0.0, %v3420
      %3422 = vmatmul.f32.gmra.mxu0 %v3301
      %v3423 = vpop.f32.mrf.mxu0
      %v3424 = vadd.f32 0.0, %v3423
      %3425 = vmatmul.f32.gmra.mxu0 %v3302
      %v3426 = vpop.f32.mrf.mxu0
      %v3427 = vadd.f32 0.0, %v3426
      %3428 = vmatmul.f32.gmra.mxu0 %v3303
      %v3429 = vpop.f32.mrf.mxu0
      %v3430 = vadd.f32 0.0, %v3429
      %3431 = vmatmul.f32.gmra.mxu0 %v3304
      %v3432 = vpop.f32.mrf.mxu0
      %v3433 = vadd.f32 0.0, %v3432
      %3434 = vdwg.mxu0
      %v3435 = vadd.f32 %v3241, %v3340
      %v3436 = vadd.f32 %v3242, %v3343
      %v3437 = vadd.f32 %v3243, %v3346
      %v3438 = vadd.f32 %v3244, %v3349
      %v3439 = vadd.f32 %v3245, %v3352
      %v3440 = vadd.f32 %v3246, %v3355
      %v3441 = vadd.f32 %v3247, %v3358
      %v3442 = vadd.f32 %v3248, %v3361
      %v3443 = vadd.f32 %v3249, %v3364
      %v3444 = vadd.f32 %v3250, %v3367
      %v3445 = vadd.f32 %v3251, %v3370
      %v3446 = vadd.f32 %v3252, %v3373
      %v3447 = vadd.f32 %v3253, %v3376
      %v3448 = vadd.f32 %v3254, %v3379
      %v3449 = vadd.f32 %v3255, %v3382
      %v3450 = vadd.f32 %v3256, %v3385
      %v3451 = vadd.f32 %v3257, %v3388
      %v3452 = vadd.f32 %v3258, %v3391
      %v3453 = vadd.f32 %v3259, %v3394
      %v3454 = vadd.f32 %v3260, %v3397
      %v3455 = vadd.f32 %v3261, %v3400
      %v3456 = vadd.f32 %v3262, %v3403
      %v3457 = vadd.f32 %v3263, %v3406
      %v3458 = vadd.f32 %v3264, %v3409
      %v3459 = vadd.f32 %v3265, %v3412
      %v3460 = vadd.f32 %v3266, %v3415
      %v3461 = vadd.f32 %v3267, %v3418
      %v3462 = vadd.f32 %v3268, %v3421
      %v3463 = vadd.f32 %v3269, %v3424
      %v3464 = vadd.f32 %v3270, %v3427
      %v3465 = vadd.f32 %v3271, %v3430
      %v3466 = vadd.f32 %v3272, %v3433
      %v3467 = vld [vmem:[%s2529 + $0x9] sm:$0xff]
      %v3468 = vld [vmem:[%s2529 + $0x11] sm:$0xff]
      %v3469 = vld [vmem:[%s2529 + $0x29] sm:$0xff]
      %v3470 = vld [vmem:[%s2529 + $0x31] sm:$0xff]
      %v3471 = vld [vmem:[%s2529 + $0x49] sm:$0xff]
      %v3472 = vld [vmem:[%s2529 + $0x51] sm:$0xff]
      %v3473 = vld [vmem:[%s2529 + $0x69] sm:$0xff]
      %v3474 = vld [vmem:[%s2529 + $0x71] sm:$0xff]
      %v3475 = vld [vmem:[%s2529 + $0x89] sm:$0xff]
      %v3476 = vld [vmem:[%s2529 + $0x91] sm:$0xff]
      %v3477 = vld [vmem:[%s2529 + $0xa9] sm:$0xff]
      %v3478 = vld [vmem:[%s2529 + $0xb1] sm:$0xff]
      %v3479 = vld [vmem:[%s2529 + $0xc9] sm:$0xff]
      %v3480 = vld [vmem:[%s2529 + $0xd1] sm:$0xff]
      %v3481 = vld [vmem:[%s2529 + $0xe9] sm:$0xff]
      %v3482 = vld [vmem:[%s2529 + $0xf1] sm:$0xff]
      %v3483 = vld [vmem:[%s2529 + $0x109] sm:$0xff]
      %v3484 = vld [vmem:[%s2529 + $0x111] sm:$0xff]
      %v3485 = vld [vmem:[%s2529 + $0x129] sm:$0xff]
      %v3486 = vld [vmem:[%s2529 + $0x131] sm:$0xff]
      %v3487 = vld [vmem:[%s2529 + $0x149] sm:$0xff]
      %v3488 = vld [vmem:[%s2529 + $0x151] sm:$0xff]
      %v3489 = vld [vmem:[%s2529 + $0x169] sm:$0xff]
      %v3490 = vld [vmem:[%s2529 + $0x171] sm:$0xff]
      %v3491 = vld [vmem:[%s2529 + $0x189] sm:$0xff]
      %v3492 = vld [vmem:[%s2529 + $0x191] sm:$0xff]
      %v3493 = vld [vmem:[%s2529 + $0x1a9] sm:$0xff]
      %v3494 = vld [vmem:[%s2529 + $0x1b1] sm:$0xff]
      %v3495 = vld [vmem:[%s2529 + $0x1c9] sm:$0xff]
      %v3496 = vld [vmem:[%s2529 + $0x1d1] sm:$0xff]
      %v3497 = vld [vmem:[%s2529 + $0x1e9] sm:$0xff]
      %v3498 = vld [vmem:[%s2529 + $0x1f1] sm:$0xff]
      %s3499 = scalar_lea.vmem %s5, 640
      %v3500 = vld [vmem:[%s3499] sm:$0xff]
      %v3501 = vld [vmem:[%s3499 + $0x8] sm:$0xff]
      %v3502 = vld [vmem:[%s3499 + $0x10] sm:$0xff]
      %v3503 = vld [vmem:[%s3499 + $0x18] sm:$0xff]
      %v3504 = vld [vmem:[%s3499 + $0x20] sm:$0xff]
      %v3505 = vld [vmem:[%s3499 + $0x28] sm:$0xff]
      %v3506 = vld [vmem:[%s3499 + $0x30] sm:$0xff]
      %v3507 = vld [vmem:[%s3499 + $0x38] sm:$0xff]
      %v3508 = vld [vmem:[%s3499 + $0x40] sm:$0xff]
      %v3509 = vld [vmem:[%s3499 + $0x48] sm:$0xff]
      %v3510 = vld [vmem:[%s3499 + $0x50] sm:$0xff]
      %v3511 = vld [vmem:[%s3499 + $0x58] sm:$0xff]
      %v3512 = vld [vmem:[%s3499 + $0x60] sm:$0xff]
      %v3513 = vld [vmem:[%s3499 + $0x68] sm:$0xff]
      %v3514 = vld [vmem:[%s3499 + $0x70] sm:$0xff]
      %v3515 = vld [vmem:[%s3499 + $0x78] sm:$0xff]
      %3516 = vmatpush.msra.mxu0 %v3515
      %3517 = vmatpush.msra.mxu0 %v3514
      %3518 = vmatpush.msra.mxu0 %v3513
      %3519 = vmatpush.msra.mxu0 %v3512
      %3520 = vmatpush.msra.mxu0 %v3511
      %3521 = vmatpush.msra.mxu0 %v3510
      %3522 = vmatpush.msra.mxu0 %v3509
      %3523 = vmatpush.msra.mxu0 %v3508
      %3524 = vmatpush.msra.mxu0 %v3507
      %3525 = vmatpush.msra.mxu0 %v3506
      %3526 = vmatpush.msra.mxu0 %v3505
      %3527 = vmatpush.msra.mxu0 %v3504
      %3528 = vmatpush.msra.mxu0 %v3503
      %3529 = vmatpush.msra.mxu0 %v3502
      %3530 = vmatpush.msra.mxu0 %v3501
      %3531 = vmatpush.msra.mxu0 %v3500
      %3532 = vmatmul.f32.gmra.mxu0 %v3467
      %v3533 = vpop.f32.mrf.mxu0
      %v3534 = vadd.f32 0.0, %v3533
      %3535 = vmatmul.f32.gmra.mxu0 %v3468
      %v3536 = vpop.f32.mrf.mxu0
      %v3537 = vadd.f32 0.0, %v3536
      %3538 = vmatmul.f32.gmra.mxu0 %v3469
      %v3539 = vpop.f32.mrf.mxu0
      %v3540 = vadd.f32 0.0, %v3539
      %3541 = vmatmul.f32.gmra.mxu0 %v3470
      %v3542 = vpop.f32.mrf.mxu0
      %v3543 = vadd.f32 0.0, %v3542
      %3544 = vmatmul.f32.gmra.mxu0 %v3471
      %v3545 = vpop.f32.mrf.mxu0
      %v3546 = vadd.f32 0.0, %v3545
      %3547 = vmatmul.f32.gmra.mxu0 %v3472
      %v3548 = vpop.f32.mrf.mxu0
      %v3549 = vadd.f32 0.0, %v3548
      %3550 = vmatmul.f32.gmra.mxu0 %v3473
      %v3551 = vpop.f32.mrf.mxu0
      %v3552 = vadd.f32 0.0, %v3551
      %3553 = vmatmul.f32.gmra.mxu0 %v3474
      %v3554 = vpop.f32.mrf.mxu0
      %v3555 = vadd.f32 0.0, %v3554
      %3556 = vmatmul.f32.gmra.mxu0 %v3475
      %v3557 = vpop.f32.mrf.mxu0
      %v3558 = vadd.f32 0.0, %v3557
      %3559 = vmatmul.f32.gmra.mxu0 %v3476
      %v3560 = vpop.f32.mrf.mxu0
      %v3561 = vadd.f32 0.0, %v3560
      %3562 = vmatmul.f32.gmra.mxu0 %v3477
      %v3563 = vpop.f32.mrf.mxu0
      %v3564 = vadd.f32 0.0, %v3563
      %3565 = vmatmul.f32.gmra.mxu0 %v3478
      %v3566 = vpop.f32.mrf.mxu0
      %v3567 = vadd.f32 0.0, %v3566
      %3568 = vmatmul.f32.gmra.mxu0 %v3479
      %v3569 = vpop.f32.mrf.mxu0
      %v3570 = vadd.f32 0.0, %v3569
      %3571 = vmatmul.f32.gmra.mxu0 %v3480
      %v3572 = vpop.f32.mrf.mxu0
      %v3573 = vadd.f32 0.0, %v3572
      %3574 = vmatmul.f32.gmra.mxu0 %v3481
      %v3575 = vpop.f32.mrf.mxu0
      %v3576 = vadd.f32 0.0, %v3575
      %3577 = vmatmul.f32.gmra.mxu0 %v3482
      %v3578 = vpop.f32.mrf.mxu0
      %v3579 = vadd.f32 0.0, %v3578
      %3580 = vmatmul.f32.gmra.mxu0 %v3483
      %v3581 = vpop.f32.mrf.mxu0
      %v3582 = vadd.f32 0.0, %v3581
      %3583 = vmatmul.f32.gmra.mxu0 %v3484
      %v3584 = vpop.f32.mrf.mxu0
      %v3585 = vadd.f32 0.0, %v3584
      %3586 = vmatmul.f32.gmra.mxu0 %v3485
      %v3587 = vpop.f32.mrf.mxu0
      %v3588 = vadd.f32 0.0, %v3587
      %3589 = vmatmul.f32.gmra.mxu0 %v3486
      %v3590 = vpop.f32.mrf.mxu0
      %v3591 = vadd.f32 0.0, %v3590
      %3592 = vmatmul.f32.gmra.mxu0 %v3487
      %v3593 = vpop.f32.mrf.mxu0
      %v3594 = vadd.f32 0.0, %v3593
      %3595 = vmatmul.f32.gmra.mxu0 %v3488
      %v3596 = vpop.f32.mrf.mxu0
      %v3597 = vadd.f32 0.0, %v3596
      %3598 = vmatmul.f32.gmra.mxu0 %v3489
      %v3599 = vpop.f32.mrf.mxu0
      %v3600 = vadd.f32 0.0, %v3599
      %3601 = vmatmul.f32.gmra.mxu0 %v3490
      %v3602 = vpop.f32.mrf.mxu0
      %v3603 = vadd.f32 0.0, %v3602
      %3604 = vmatmul.f32.gmra.mxu0 %v3491
      %v3605 = vpop.f32.mrf.mxu0
      %v3606 = vadd.f32 0.0, %v3605
      %3607 = vmatmul.f32.gmra.mxu0 %v3492
      %v3608 = vpop.f32.mrf.mxu0
      %v3609 = vadd.f32 0.0, %v3608
      %3610 = vmatmul.f32.gmra.mxu0 %v3493
      %v3611 = vpop.f32.mrf.mxu0
      %v3612 = vadd.f32 0.0, %v3611
      %3613 = vmatmul.f32.gmra.mxu0 %v3494
      %v3614 = vpop.f32.mrf.mxu0
      %v3615 = vadd.f32 0.0, %v3614
      %3616 = vmatmul.f32.gmra.mxu0 %v3495
      %v3617 = vpop.f32.mrf.mxu0
      %v3618 = vadd.f32 0.0, %v3617
      %3619 = vmatmul.f32.gmra.mxu0 %v3496
      %v3620 = vpop.f32.mrf.mxu0
      %v3621 = vadd.f32 0.0, %v3620
      %3622 = vmatmul.f32.gmra.mxu0 %v3497
      %v3623 = vpop.f32.mrf.mxu0
      %v3624 = vadd.f32 0.0, %v3623
      %3625 = vmatmul.f32.gmra.mxu0 %v3498
      %v3626 = vpop.f32.mrf.mxu0
      %v3627 = vadd.f32 0.0, %v3626
      %3628 = vdwg.mxu0
      %v3629 = vadd.f32 %v3435, %v3534
      %v3630 = vadd.f32 %v3436, %v3537
      %v3631 = vadd.f32 %v3437, %v3540
      %v3632 = vadd.f32 %v3438, %v3543
      %v3633 = vadd.f32 %v3439, %v3546
      %v3634 = vadd.f32 %v3440, %v3549
      %v3635 = vadd.f32 %v3441, %v3552
      %v3636 = vadd.f32 %v3442, %v3555
      %v3637 = vadd.f32 %v3443, %v3558
      %v3638 = vadd.f32 %v3444, %v3561
      %v3639 = vadd.f32 %v3445, %v3564
      %v3640 = vadd.f32 %v3446, %v3567
      %v3641 = vadd.f32 %v3447, %v3570
      %v3642 = vadd.f32 %v3448, %v3573
      %v3643 = vadd.f32 %v3449, %v3576
      %v3644 = vadd.f32 %v3450, %v3579
      %v3645 = vadd.f32 %v3451, %v3582
      %v3646 = vadd.f32 %v3452, %v3585
      %v3647 = vadd.f32 %v3453, %v3588
      %v3648 = vadd.f32 %v3454, %v3591
      %v3649 = vadd.f32 %v3455, %v3594
      %v3650 = vadd.f32 %v3456, %v3597
      %v3651 = vadd.f32 %v3457, %v3600
      %v3652 = vadd.f32 %v3458, %v3603
      %v3653 = vadd.f32 %v3459, %v3606
      %v3654 = vadd.f32 %v3460, %v3609
      %v3655 = vadd.f32 %v3461, %v3612
      %v3656 = vadd.f32 %v3462, %v3615
      %v3657 = vadd.f32 %v3463, %v3618
      %v3658 = vadd.f32 %v3464, %v3621
      %v3659 = vadd.f32 %v3465, %v3624
      %v3660 = vadd.f32 %v3466, %v3627
      %s3661 = scalar_lea.vmem [#allocation3], 64
      %v3662 = vld [vmem:[%s3661 + $0x7] sm:$0xff]
      %v3663 = vld [vmem:[%s3661 + $0xf] sm:$0xff]
      %v3664 = vld [vmem:[%s3661 + $0x27] sm:$0xff]
      %v3665 = vld [vmem:[%s3661 + $0x2f] sm:$0xff]
      %v3666 = vld [vmem:[%s3661 + $0x47] sm:$0xff]
      %v3667 = vld [vmem:[%s3661 + $0x4f] sm:$0xff]
      %v3668 = vld [vmem:[%s3661 + $0x67] sm:$0xff]
      %v3669 = vld [vmem:[%s3661 + $0x6f] sm:$0xff]
      %v3670 = vld [vmem:[%s3661 + $0x87] sm:$0xff]
      %v3671 = vld [vmem:[%s3661 + $0x8f] sm:$0xff]
      %v3672 = vld [vmem:[%s3661 + $0xa7] sm:$0xff]
      %v3673 = vld [vmem:[%s3661 + $0xaf] sm:$0xff]
      %v3674 = vld [vmem:[%s3661 + $0xc7] sm:$0xff]
      %v3675 = vld [vmem:[%s3661 + $0xcf] sm:$0xff]
      %v3676 = vld [vmem:[%s3661 + $0xe7] sm:$0xff]
      %v3677 = vld [vmem:[%s3661 + $0xef] sm:$0xff]
      %v3678 = vld [vmem:[%s3661 + $0x107] sm:$0xff]
      %v3679 = vld [vmem:[%s3661 + $0x10f] sm:$0xff]
      %v3680 = vld [vmem:[%s3661 + $0x127] sm:$0xff]
      %v3681 = vld [vmem:[%s3661 + $0x12f] sm:$0xff]
      %v3682 = vld [vmem:[%s3661 + $0x147] sm:$0xff]
      %v3683 = vld [vmem:[%s3661 + $0x14f] sm:$0xff]
      %v3684 = vld [vmem:[%s3661 + $0x167] sm:$0xff]
      %v3685 = vld [vmem:[%s3661 + $0x16f] sm:$0xff]
      %v3686 = vld [vmem:[%s3661 + $0x187] sm:$0xff]
      %v3687 = vld [vmem:[%s3661 + $0x18f] sm:$0xff]
      %v3688 = vld [vmem:[%s3661 + $0x1a7] sm:$0xff]
      %v3689 = vld [vmem:[%s3661 + $0x1af] sm:$0xff]
      %v3690 = vld [vmem:[%s3661 + $0x1c7] sm:$0xff]
      %v3691 = vld [vmem:[%s3661 + $0x1cf] sm:$0xff]
      %v3692 = vld [vmem:[%s3661 + $0x1e7] sm:$0xff]
      %v3693 = vld [vmem:[%s3661 + $0x1ef] sm:$0xff]
      %s3694 = scalar_lea.vmem %s5, 768
      %v3695 = vld [vmem:[%s3694] sm:$0xff]
      %v3696 = vld [vmem:[%s3694 + $0x8] sm:$0xff]
      %v3697 = vld [vmem:[%s3694 + $0x10] sm:$0xff]
      %v3698 = vld [vmem:[%s3694 + $0x18] sm:$0xff]
      %v3699 = vld [vmem:[%s3694 + $0x20] sm:$0xff]
      %v3700 = vld [vmem:[%s3694 + $0x28] sm:$0xff]
      %v3701 = vld [vmem:[%s3694 + $0x30] sm:$0xff]
      %v3702 = vld [vmem:[%s3694 + $0x38] sm:$0xff]
      %v3703 = vld [vmem:[%s3694 + $0x40] sm:$0xff]
      %v3704 = vld [vmem:[%s3694 + $0x48] sm:$0xff]
      %v3705 = vld [vmem:[%s3694 + $0x50] sm:$0xff]
      %v3706 = vld [vmem:[%s3694 + $0x58] sm:$0xff]
      %v3707 = vld [vmem:[%s3694 + $0x60] sm:$0xff]
      %v3708 = vld [vmem:[%s3694 + $0x68] sm:$0xff]
      %v3709 = vld [vmem:[%s3694 + $0x70] sm:$0xff]
      %v3710 = vld [vmem:[%s3694 + $0x78] sm:$0xff]
      %3711 = vmatpush.msra.mxu0 %v3710
      %3712 = vmatpush.msra.mxu0 %v3709
      %3713 = vmatpush.msra.mxu0 %v3708
      %3714 = vmatpush.msra.mxu0 %v3707
      %3715 = vmatpush.msra.mxu0 %v3706
      %3716 = vmatpush.msra.mxu0 %v3705
      %3717 = vmatpush.msra.mxu0 %v3704
      %3718 = vmatpush.msra.mxu0 %v3703
      %3719 = vmatpush.msra.mxu0 %v3702
      %3720 = vmatpush.msra.mxu0 %v3701
      %3721 = vmatpush.msra.mxu0 %v3700
      %3722 = vmatpush.msra.mxu0 %v3699
      %3723 = vmatpush.msra.mxu0 %v3698
      %3724 = vmatpush.msra.mxu0 %v3697
      %3725 = vmatpush.msra.mxu0 %v3696
      %3726 = vmatpush.msra.mxu0 %v3695
      %3727 = vmatmul.f32.gmra.mxu0 %v3662
      %v3728 = vpop.f32.mrf.mxu0
      %v3729 = vadd.f32 0.0, %v3728
      %3730 = vmatmul.f32.gmra.mxu0 %v3663
      %v3731 = vpop.f32.mrf.mxu0
      %v3732 = vadd.f32 0.0, %v3731
      %3733 = vmatmul.f32.gmra.mxu0 %v3664
      %v3734 = vpop.f32.mrf.mxu0
      %v3735 = vadd.f32 0.0, %v3734
      %3736 = vmatmul.f32.gmra.mxu0 %v3665
      %v3737 = vpop.f32.mrf.mxu0
      %v3738 = vadd.f32 0.0, %v3737
      %3739 = vmatmul.f32.gmra.mxu0 %v3666
      %v3740 = vpop.f32.mrf.mxu0
      %v3741 = vadd.f32 0.0, %v3740
      %3742 = vmatmul.f32.gmra.mxu0 %v3667
      %v3743 = vpop.f32.mrf.mxu0
      %v3744 = vadd.f32 0.0, %v3743
      %3745 = vmatmul.f32.gmra.mxu0 %v3668
      %v3746 = vpop.f32.mrf.mxu0
      %v3747 = vadd.f32 0.0, %v3746
      %3748 = vmatmul.f32.gmra.mxu0 %v3669
      %v3749 = vpop.f32.mrf.mxu0
      %v3750 = vadd.f32 0.0, %v3749
      %3751 = vmatmul.f32.gmra.mxu0 %v3670
      %v3752 = vpop.f32.mrf.mxu0
      %v3753 = vadd.f32 0.0, %v3752
      %3754 = vmatmul.f32.gmra.mxu0 %v3671
      %v3755 = vpop.f32.mrf.mxu0
      %v3756 = vadd.f32 0.0, %v3755
      %3757 = vmatmul.f32.gmra.mxu0 %v3672
      %v3758 = vpop.f32.mrf.mxu0
      %v3759 = vadd.f32 0.0, %v3758
      %3760 = vmatmul.f32.gmra.mxu0 %v3673
      %v3761 = vpop.f32.mrf.mxu0
      %v3762 = vadd.f32 0.0, %v3761
      %3763 = vmatmul.f32.gmra.mxu0 %v3674
      %v3764 = vpop.f32.mrf.mxu0
      %v3765 = vadd.f32 0.0, %v3764
      %3766 = vmatmul.f32.gmra.mxu0 %v3675
      %v3767 = vpop.f32.mrf.mxu0
      %v3768 = vadd.f32 0.0, %v3767
      %3769 = vmatmul.f32.gmra.mxu0 %v3676
      %v3770 = vpop.f32.mrf.mxu0
      %v3771 = vadd.f32 0.0, %v3770
      %3772 = vmatmul.f32.gmra.mxu0 %v3677
      %v3773 = vpop.f32.mrf.mxu0
      %v3774 = vadd.f32 0.0, %v3773
      %3775 = vmatmul.f32.gmra.mxu0 %v3678
      %v3776 = vpop.f32.mrf.mxu0
      %v3777 = vadd.f32 0.0, %v3776
      %3778 = vmatmul.f32.gmra.mxu0 %v3679
      %v3779 = vpop.f32.mrf.mxu0
      %v3780 = vadd.f32 0.0, %v3779
      %3781 = vmatmul.f32.gmra.mxu0 %v3680
      %v3782 = vpop.f32.mrf.mxu0
      %v3783 = vadd.f32 0.0, %v3782
      %3784 = vmatmul.f32.gmra.mxu0 %v3681
      %v3785 = vpop.f32.mrf.mxu0
      %v3786 = vadd.f32 0.0, %v3785
      %3787 = vmatmul.f32.gmra.mxu0 %v3682
      %v3788 = vpop.f32.mrf.mxu0
      %v3789 = vadd.f32 0.0, %v3788
      %3790 = vmatmul.f32.gmra.mxu0 %v3683
      %v3791 = vpop.f32.mrf.mxu0
      %v3792 = vadd.f32 0.0, %v3791
      %3793 = vmatmul.f32.gmra.mxu0 %v3684
      %v3794 = vpop.f32.mrf.mxu0
      %v3795 = vadd.f32 0.0, %v3794
      %3796 = vmatmul.f32.gmra.mxu0 %v3685
      %v3797 = vpop.f32.mrf.mxu0
      %v3798 = vadd.f32 0.0, %v3797
      %3799 = vmatmul.f32.gmra.mxu0 %v3686
      %v3800 = vpop.f32.mrf.mxu0
      %v3801 = vadd.f32 0.0, %v3800
      %3802 = vmatmul.f32.gmra.mxu0 %v3687
      %v3803 = vpop.f32.mrf.mxu0
      %v3804 = vadd.f32 0.0, %v3803
      %3805 = vmatmul.f32.gmra.mxu0 %v3688
      %v3806 = vpop.f32.mrf.mxu0
      %v3807 = vadd.f32 0.0, %v3806
      %3808 = vmatmul.f32.gmra.mxu0 %v3689
      %v3809 = vpop.f32.mrf.mxu0
      %v3810 = vadd.f32 0.0, %v3809
      %3811 = vmatmul.f32.gmra.mxu0 %v3690
      %v3812 = vpop.f32.mrf.mxu0
      %v3813 = vadd.f32 0.0, %v3812
      %3814 = vmatmul.f32.gmra.mxu0 %v3691
      %v3815 = vpop.f32.mrf.mxu0
      %v3816 = vadd.f32 0.0, %v3815
      %3817 = vmatmul.f32.gmra.mxu0 %v3692
      %v3818 = vpop.f32.mrf.mxu0
      %v3819 = vadd.f32 0.0, %v3818
      %3820 = vmatmul.f32.gmra.mxu0 %v3693
      %v3821 = vpop.f32.mrf.mxu0
      %v3822 = vadd.f32 0.0, %v3821
      %3823 = vdwg.mxu0
      %v3824 = vadd.f32 %v3629, %v3729
      %v3825 = vadd.f32 %v3630, %v3732
      %v3826 = vadd.f32 %v3631, %v3735
      %v3827 = vadd.f32 %v3632, %v3738
      %v3828 = vadd.f32 %v3633, %v3741
      %v3829 = vadd.f32 %v3634, %v3744
      %v3830 = vadd.f32 %v3635, %v3747
      %v3831 = vadd.f32 %v3636, %v3750
      %v3832 = vadd.f32 %v3637, %v3753
      %v3833 = vadd.f32 %v3638, %v3756
      %v3834 = vadd.f32 %v3639, %v3759
      %v3835 = vadd.f32 %v3640, %v3762
      %v3836 = vadd.f32 %v3641, %v3765
      %v3837 = vadd.f32 %v3642, %v3768
      %v3838 = vadd.f32 %v3643, %v3771
      %v3839 = vadd.f32 %v3644, %v3774
      %v3840 = vadd.f32 %v3645, %v3777
      %v3841 = vadd.f32 %v3646, %v3780
      %v3842 = vadd.f32 %v3647, %v3783
      %v3843 = vadd.f32 %v3648, %v3786
      %v3844 = vadd.f32 %v3649, %v3789
      %v3845 = vadd.f32 %v3650, %v3792
      %v3846 = vadd.f32 %v3651, %v3795
      %v3847 = vadd.f32 %v3652, %v3798
      %v3848 = vadd.f32 %v3653, %v3801
      %v3849 = vadd.f32 %v3654, %v3804
      %v3850 = vadd.f32 %v3655, %v3807
      %v3851 = vadd.f32 %v3656, %v3810
      %v3852 = vadd.f32 %v3657, %v3813
      %v3853 = vadd.f32 %v3658, %v3816
      %v3854 = vadd.f32 %v3659, %v3819
      %v3855 = vadd.f32 %v3660, %v3822
      %v3856 = vld [vmem:[%s3661 + $0x8] sm:$0xff]
      %v3857 = vld [vmem:[%s3661 + $0x10] sm:$0xff]
      %v3858 = vld [vmem:[%s3661 + $0x28] sm:$0xff]
      %v3859 = vld [vmem:[%s3661 + $0x30] sm:$0xff]
      %v3860 = vld [vmem:[%s3661 + $0x48] sm:$0xff]
      %v3861 = vld [vmem:[%s3661 + $0x50] sm:$0xff]
      %v3862 = vld [vmem:[%s3661 + $0x68] sm:$0xff]
      %v3863 = vld [vmem:[%s3661 + $0x70] sm:$0xff]
      %v3864 = vld [vmem:[%s3661 + $0x88] sm:$0xff]
      %v3865 = vld [vmem:[%s3661 + $0x90] sm:$0xff]
      %v3866 = vld [vmem:[%s3661 + $0xa8] sm:$0xff]
      %v3867 = vld [vmem:[%s3661 + $0xb0] sm:$0xff]
      %v3868 = vld [vmem:[%s3661 + $0xc8] sm:$0xff]
      %v3869 = vld [vmem:[%s3661 + $0xd0] sm:$0xff]
      %v3870 = vld [vmem:[%s3661 + $0xe8] sm:$0xff]
      %v3871 = vld [vmem:[%s3661 + $0xf0] sm:$0xff]
      %v3872 = vld [vmem:[%s3661 + $0x108] sm:$0xff]
      %v3873 = vld [vmem:[%s3661 + $0x110] sm:$0xff]
      %v3874 = vld [vmem:[%s3661 + $0x128] sm:$0xff]
      %v3875 = vld [vmem:[%s3661 + $0x130] sm:$0xff]
      %v3876 = vld [vmem:[%s3661 + $0x148] sm:$0xff]
      %v3877 = vld [vmem:[%s3661 + $0x150] sm:$0xff]
      %v3878 = vld [vmem:[%s3661 + $0x168] sm:$0xff]
      %v3879 = vld [vmem:[%s3661 + $0x170] sm:$0xff]
      %v3880 = vld [vmem:[%s3661 + $0x188] sm:$0xff]
      %v3881 = vld [vmem:[%s3661 + $0x190] sm:$0xff]
      %v3882 = vld [vmem:[%s3661 + $0x1a8] sm:$0xff]
      %v3883 = vld [vmem:[%s3661 + $0x1b0] sm:$0xff]
      %v3884 = vld [vmem:[%s3661 + $0x1c8] sm:$0xff]
      %v3885 = vld [vmem:[%s3661 + $0x1d0] sm:$0xff]
      %v3886 = vld [vmem:[%s3661 + $0x1e8] sm:$0xff]
      %v3887 = vld [vmem:[%s3661 + $0x1f0] sm:$0xff]
      %s3888 = scalar_lea.vmem %s5, 896
      %v3889 = vld [vmem:[%s3888] sm:$0xff]
      %v3890 = vld [vmem:[%s3888 + $0x8] sm:$0xff]
      %v3891 = vld [vmem:[%s3888 + $0x10] sm:$0xff]
      %v3892 = vld [vmem:[%s3888 + $0x18] sm:$0xff]
      %v3893 = vld [vmem:[%s3888 + $0x20] sm:$0xff]
      %v3894 = vld [vmem:[%s3888 + $0x28] sm:$0xff]
      %v3895 = vld [vmem:[%s3888 + $0x30] sm:$0xff]
      %v3896 = vld [vmem:[%s3888 + $0x38] sm:$0xff]
      %v3897 = vld [vmem:[%s3888 + $0x40] sm:$0xff]
      %v3898 = vld [vmem:[%s3888 + $0x48] sm:$0xff]
      %v3899 = vld [vmem:[%s3888 + $0x50] sm:$0xff]
      %v3900 = vld [vmem:[%s3888 + $0x58] sm:$0xff]
      %v3901 = vld [vmem:[%s3888 + $0x60] sm:$0xff]
      %v3902 = vld [vmem:[%s3888 + $0x68] sm:$0xff]
      %v3903 = vld [vmem:[%s3888 + $0x70] sm:$0xff]
      %v3904 = vld [vmem:[%s3888 + $0x78] sm:$0xff]
      %3905 = vmatpush.msra.mxu0 %v3904
      %3906 = vmatpush.msra.mxu0 %v3903
      %3907 = vmatpush.msra.mxu0 %v3902
      %3908 = vmatpush.msra.mxu0 %v3901
      %3909 = vmatpush.msra.mxu0 %v3900
      %3910 = vmatpush.msra.mxu0 %v3899
      %3911 = vmatpush.msra.mxu0 %v3898
      %3912 = vmatpush.msra.mxu0 %v3897
      %3913 = vmatpush.msra.mxu0 %v3896
      %3914 = vmatpush.msra.mxu0 %v3895
      %3915 = vmatpush.msra.mxu0 %v3894
      %3916 = vmatpush.msra.mxu0 %v3893
      %3917 = vmatpush.msra.mxu0 %v3892
      %3918 = vmatpush.msra.mxu0 %v3891
      %3919 = vmatpush.msra.mxu0 %v3890
      %3920 = vmatpush.msra.mxu0 %v3889
      %3921 = vmatmul.f32.gmra.mxu0 %v3856
      %v3922 = vpop.f32.mrf.mxu0
      %v3923 = vadd.f32 0.0, %v3922
      %3924 = vmatmul.f32.gmra.mxu0 %v3857
      %v3925 = vpop.f32.mrf.mxu0
      %v3926 = vadd.f32 0.0, %v3925
      %3927 = vmatmul.f32.gmra.mxu0 %v3858
      %v3928 = vpop.f32.mrf.mxu0
      %v3929 = vadd.f32 0.0, %v3928
      %3930 = vmatmul.f32.gmra.mxu0 %v3859
      %v3931 = vpop.f32.mrf.mxu0
      %v3932 = vadd.f32 0.0, %v3931
      %3933 = vmatmul.f32.gmra.mxu0 %v3860
      %v3934 = vpop.f32.mrf.mxu0
      %v3935 = vadd.f32 0.0, %v3934
      %3936 = vmatmul.f32.gmra.mxu0 %v3861
      %v3937 = vpop.f32.mrf.mxu0
      %v3938 = vadd.f32 0.0, %v3937
      %3939 = vmatmul.f32.gmra.mxu0 %v3862
      %v3940 = vpop.f32.mrf.mxu0
      %v3941 = vadd.f32 0.0, %v3940
      %3942 = vmatmul.f32.gmra.mxu0 %v3863
      %v3943 = vpop.f32.mrf.mxu0
      %v3944 = vadd.f32 0.0, %v3943
      %3945 = vmatmul.f32.gmra.mxu0 %v3864
      %v3946 = vpop.f32.mrf.mxu0
      %v3947 = vadd.f32 0.0, %v3946
      %3948 = vmatmul.f32.gmra.mxu0 %v3865
      %v3949 = vpop.f32.mrf.mxu0
      %v3950 = vadd.f32 0.0, %v3949
      %3951 = vmatmul.f32.gmra.mxu0 %v3866
      %v3952 = vpop.f32.mrf.mxu0
      %v3953 = vadd.f32 0.0, %v3952
      %3954 = vmatmul.f32.gmra.mxu0 %v3867
      %v3955 = vpop.f32.mrf.mxu0
      %v3956 = vadd.f32 0.0, %v3955
      %3957 = vmatmul.f32.gmra.mxu0 %v3868
      %v3958 = vpop.f32.mrf.mxu0
      %v3959 = vadd.f32 0.0, %v3958
      %3960 = vmatmul.f32.gmra.mxu0 %v3869
      %v3961 = vpop.f32.mrf.mxu0
      %v3962 = vadd.f32 0.0, %v3961
      %3963 = vmatmul.f32.gmra.mxu0 %v3870
      %v3964 = vpop.f32.mrf.mxu0
      %v3965 = vadd.f32 0.0, %v3964
      %3966 = vmatmul.f32.gmra.mxu0 %v3871
      %v3967 = vpop.f32.mrf.mxu0
      %v3968 = vadd.f32 0.0, %v3967
      %3969 = vmatmul.f32.gmra.mxu0 %v3872
      %v3970 = vpop.f32.mrf.mxu0
      %v3971 = vadd.f32 0.0, %v3970
      %3972 = vmatmul.f32.gmra.mxu0 %v3873
      %v3973 = vpop.f32.mrf.mxu0
      %v3974 = vadd.f32 0.0, %v3973
      %3975 = vmatmul.f32.gmra.mxu0 %v3874
      %v3976 = vpop.f32.mrf.mxu0
      %v3977 = vadd.f32 0.0, %v3976
      %3978 = vmatmul.f32.gmra.mxu0 %v3875
      %v3979 = vpop.f32.mrf.mxu0
      %v3980 = vadd.f32 0.0, %v3979
      %3981 = vmatmul.f32.gmra.mxu0 %v3876
      %v3982 = vpop.f32.mrf.mxu0
      %v3983 = vadd.f32 0.0, %v3982
      %3984 = vmatmul.f32.gmra.mxu0 %v3877
      %v3985 = vpop.f32.mrf.mxu0
      %v3986 = vadd.f32 0.0, %v3985
      %3987 = vmatmul.f32.gmra.mxu0 %v3878
      %v3988 = vpop.f32.mrf.mxu0
      %v3989 = vadd.f32 0.0, %v3988
      %3990 = vmatmul.f32.gmra.mxu0 %v3879
      %v3991 = vpop.f32.mrf.mxu0
      %v3992 = vadd.f32 0.0, %v3991
      %3993 = vmatmul.f32.gmra.mxu0 %v3880
      %v3994 = vpop.f32.mrf.mxu0
      %v3995 = vadd.f32 0.0, %v3994
      %3996 = vmatmul.f32.gmra.mxu0 %v3881
      %v3997 = vpop.f32.mrf.mxu0
      %v3998 = vadd.f32 0.0, %v3997
      %3999 = vmatmul.f32.gmra.mxu0 %v3882
      %v4000 = vpop.f32.mrf.mxu0
      %v4001 = vadd.f32 0.0, %v4000
      %4002 = vmatmul.f32.gmra.mxu0 %v3883
      %v4003 = vpop.f32.mrf.mxu0
      %v4004 = vadd.f32 0.0, %v4003
      %4005 = vmatmul.f32.gmra.mxu0 %v3884
      %v4006 = vpop.f32.mrf.mxu0
      %v4007 = vadd.f32 0.0, %v4006
      %4008 = vmatmul.f32.gmra.mxu0 %v3885
      %v4009 = vpop.f32.mrf.mxu0
      %v4010 = vadd.f32 0.0, %v4009
      %4011 = vmatmul.f32.gmra.mxu0 %v3886
      %v4012 = vpop.f32.mrf.mxu0
      %v4013 = vadd.f32 0.0, %v4012
      %4014 = vmatmul.f32.gmra.mxu0 %v3887
      %v4015 = vpop.f32.mrf.mxu0
      %v4016 = vadd.f32 0.0, %v4015
      %4017 = vdwg.mxu0
      %v4018 = vadd.f32 %v3824, %v3923
      %v4019 = vadd.f32 %v3825, %v3926
      %v4020 = vadd.f32 %v3826, %v3929
      %v4021 = vadd.f32 %v3827, %v3932
      %v4022 = vadd.f32 %v3828, %v3935
      %v4023 = vadd.f32 %v3829, %v3938
      %v4024 = vadd.f32 %v3830, %v3941
      %v4025 = vadd.f32 %v3831, %v3944
      %v4026 = vadd.f32 %v3832, %v3947
      %v4027 = vadd.f32 %v3833, %v3950
      %v4028 = vadd.f32 %v3834, %v3953
      %v4029 = vadd.f32 %v3835, %v3956
      %v4030 = vadd.f32 %v3836, %v3959
      %v4031 = vadd.f32 %v3837, %v3962
      %v4032 = vadd.f32 %v3838, %v3965
      %v4033 = vadd.f32 %v3839, %v3968
      %v4034 = vadd.f32 %v3840, %v3971
      %v4035 = vadd.f32 %v3841, %v3974
      %v4036 = vadd.f32 %v3842, %v3977
      %v4037 = vadd.f32 %v3843, %v3980
      %v4038 = vadd.f32 %v3844, %v3983
      %v4039 = vadd.f32 %v3845, %v3986
      %v4040 = vadd.f32 %v3846, %v3989
      %v4041 = vadd.f32 %v3847, %v3992
      %v4042 = vadd.f32 %v3848, %v3995
      %v4043 = vadd.f32 %v3849, %v3998
      %v4044 = vadd.f32 %v3850, %v4001
      %v4045 = vadd.f32 %v3851, %v4004
      %v4046 = vadd.f32 %v3852, %v4007
      %v4047 = vadd.f32 %v3853, %v4010
      %v4048 = vadd.f32 %v3854, %v4013
      %v4049 = vadd.f32 %v3855, %v4016
      %v4050 = vld [vmem:[%s3661 + $0x9] sm:$0xff]
      %v4051 = vld [vmem:[%s3661 + $0x11] sm:$0xff]
      %v4052 = vld [vmem:[%s3661 + $0x29] sm:$0xff]
      %v4053 = vld [vmem:[%s3661 + $0x31] sm:$0xff]
      %v4054 = vld [vmem:[%s3661 + $0x49] sm:$0xff]
      %v4055 = vld [vmem:[%s3661 + $0x51] sm:$0xff]
      %v4056 = vld [vmem:[%s3661 + $0x69] sm:$0xff]
      %v4057 = vld [vmem:[%s3661 + $0x71] sm:$0xff]
      %v4058 = vld [vmem:[%s3661 + $0x89] sm:$0xff]
      %v4059 = vld [vmem:[%s3661 + $0x91] sm:$0xff]
      %v4060 = vld [vmem:[%s3661 + $0xa9] sm:$0xff]
      %v4061 = vld [vmem:[%s3661 + $0xb1] sm:$0xff]
      %v4062 = vld [vmem:[%s3661 + $0xc9] sm:$0xff]
      %v4063 = vld [vmem:[%s3661 + $0xd1] sm:$0xff]
      %v4064 = vld [vmem:[%s3661 + $0xe9] sm:$0xff]
      %v4065 = vld [vmem:[%s3661 + $0xf1] sm:$0xff]
      %v4066 = vld [vmem:[%s3661 + $0x109] sm:$0xff]
      %v4067 = vld [vmem:[%s3661 + $0x111] sm:$0xff]
      %v4068 = vld [vmem:[%s3661 + $0x129] sm:$0xff]
      %v4069 = vld [vmem:[%s3661 + $0x131] sm:$0xff]
      %v4070 = vld [vmem:[%s3661 + $0x149] sm:$0xff]
      %v4071 = vld [vmem:[%s3661 + $0x151] sm:$0xff]
      %v4072 = vld [vmem:[%s3661 + $0x169] sm:$0xff]
      %v4073 = vld [vmem:[%s3661 + $0x171] sm:$0xff]
      %v4074 = vld [vmem:[%s3661 + $0x189] sm:$0xff]
      %v4075 = vld [vmem:[%s3661 + $0x191] sm:$0xff]
      %v4076 = vld [vmem:[%s3661 + $0x1a9] sm:$0xff]
      %v4077 = vld [vmem:[%s3661 + $0x1b1] sm:$0xff]
      %v4078 = vld [vmem:[%s3661 + $0x1c9] sm:$0xff]
      %v4079 = vld [vmem:[%s3661 + $0x1d1] sm:$0xff]
      %v4080 = vld [vmem:[%s3661 + $0x1e9] sm:$0xff]
      %v4081 = vld [vmem:[%s3661 + $0x1f1] sm:$0xff]
      %s4082 = scalar_lea.vmem %s5, 1024
      %v4083 = vld [vmem:[%s4082] sm:$0xff]
      %v4084 = vld [vmem:[%s4082 + $0x8] sm:$0xff]
      %v4085 = vld [vmem:[%s4082 + $0x10] sm:$0xff]
      %v4086 = vld [vmem:[%s4082 + $0x18] sm:$0xff]
      %v4087 = vld [vmem:[%s4082 + $0x20] sm:$0xff]
      %v4088 = vld [vmem:[%s4082 + $0x28] sm:$0xff]
      %v4089 = vld [vmem:[%s4082 + $0x30] sm:$0xff]
      %v4090 = vld [vmem:[%s4082 + $0x38] sm:$0xff]
      %v4091 = vld [vmem:[%s4082 + $0x40] sm:$0xff]
      %v4092 = vld [vmem:[%s4082 + $0x48] sm:$0xff]
      %v4093 = vld [vmem:[%s4082 + $0x50] sm:$0xff]
      %v4094 = vld [vmem:[%s4082 + $0x58] sm:$0xff]
      %v4095 = vld [vmem:[%s4082 + $0x60] sm:$0xff]
      %v4096 = vld [vmem:[%s4082 + $0x68] sm:$0xff]
      %v4097 = vld [vmem:[%s4082 + $0x70] sm:$0xff]
      %v4098 = vld [vmem:[%s4082 + $0x78] sm:$0xff]
      %4099 = vmatpush.msra.mxu0 %v4098
      %4100 = vmatpush.msra.mxu0 %v4097
      %4101 = vmatpush.msra.mxu0 %v4096
      %4102 = vmatpush.msra.mxu0 %v4095
      %4103 = vmatpush.msra.mxu0 %v4094
      %4104 = vmatpush.msra.mxu0 %v4093
      %4105 = vmatpush.msra.mxu0 %v4092
      %4106 = vmatpush.msra.mxu0 %v4091
      %4107 = vmatpush.msra.mxu0 %v4090
      %4108 = vmatpush.msra.mxu0 %v4089
      %4109 = vmatpush.msra.mxu0 %v4088
      %4110 = vmatpush.msra.mxu0 %v4087
      %4111 = vmatpush.msra.mxu0 %v4086
      %4112 = vmatpush.msra.mxu0 %v4085
      %4113 = vmatpush.msra.mxu0 %v4084
      %4114 = vmatpush.msra.mxu0 %v4083
      %4115 = vmatmul.f32.gmra.mxu0 %v4050
      %v4116 = vpop.f32.mrf.mxu0
      %v4117 = vadd.f32 0.0, %v4116
      %4118 = vmatmul.f32.gmra.mxu0 %v4051
      %v4119 = vpop.f32.mrf.mxu0
      %v4120 = vadd.f32 0.0, %v4119
      %4121 = vmatmul.f32.gmra.mxu0 %v4052
      %v4122 = vpop.f32.mrf.mxu0
      %v4123 = vadd.f32 0.0, %v4122
      %4124 = vmatmul.f32.gmra.mxu0 %v4053
      %v4125 = vpop.f32.mrf.mxu0
      %v4126 = vadd.f32 0.0, %v4125
      %4127 = vmatmul.f32.gmra.mxu0 %v4054
      %v4128 = vpop.f32.mrf.mxu0
      %v4129 = vadd.f32 0.0, %v4128
      %4130 = vmatmul.f32.gmra.mxu0 %v4055
      %v4131 = vpop.f32.mrf.mxu0
      %v4132 = vadd.f32 0.0, %v4131
      %4133 = vmatmul.f32.gmra.mxu0 %v4056
      %v4134 = vpop.f32.mrf.mxu0
      %v4135 = vadd.f32 0.0, %v4134
      %4136 = vmatmul.f32.gmra.mxu0 %v4057
      %v4137 = vpop.f32.mrf.mxu0
      %v4138 = vadd.f32 0.0, %v4137
      %4139 = vmatmul.f32.gmra.mxu0 %v4058
      %v4140 = vpop.f32.mrf.mxu0
      %v4141 = vadd.f32 0.0, %v4140
      %4142 = vmatmul.f32.gmra.mxu0 %v4059
      %v4143 = vpop.f32.mrf.mxu0
      %v4144 = vadd.f32 0.0, %v4143
      %4145 = vmatmul.f32.gmra.mxu0 %v4060
      %v4146 = vpop.f32.mrf.mxu0
      %v4147 = vadd.f32 0.0, %v4146
      %4148 = vmatmul.f32.gmra.mxu0 %v4061
      %v4149 = vpop.f32.mrf.mxu0
      %v4150 = vadd.f32 0.0, %v4149
      %4151 = vmatmul.f32.gmra.mxu0 %v4062
      %v4152 = vpop.f32.mrf.mxu0
      %v4153 = vadd.f32 0.0, %v4152
      %4154 = vmatmul.f32.gmra.mxu0 %v4063
      %v4155 = vpop.f32.mrf.mxu0
      %v4156 = vadd.f32 0.0, %v4155
      %4157 = vmatmul.f32.gmra.mxu0 %v4064
      %v4158 = vpop.f32.mrf.mxu0
      %v4159 = vadd.f32 0.0, %v4158
      %4160 = vmatmul.f32.gmra.mxu0 %v4065
      %v4161 = vpop.f32.mrf.mxu0
      %v4162 = vadd.f32 0.0, %v4161
      %4163 = vmatmul.f32.gmra.mxu0 %v4066
      %v4164 = vpop.f32.mrf.mxu0
      %v4165 = vadd.f32 0.0, %v4164
      %4166 = vmatmul.f32.gmra.mxu0 %v4067
      %v4167 = vpop.f32.mrf.mxu0
      %v4168 = vadd.f32 0.0, %v4167
      %4169 = vmatmul.f32.gmra.mxu0 %v4068
      %v4170 = vpop.f32.mrf.mxu0
      %v4171 = vadd.f32 0.0, %v4170
      %4172 = vmatmul.f32.gmra.mxu0 %v4069
      %v4173 = vpop.f32.mrf.mxu0
      %v4174 = vadd.f32 0.0, %v4173
      %4175 = vmatmul.f32.gmra.mxu0 %v4070
      %v4176 = vpop.f32.mrf.mxu0
      %v4177 = vadd.f32 0.0, %v4176
      %4178 = vmatmul.f32.gmra.mxu0 %v4071
      %v4179 = vpop.f32.mrf.mxu0
      %v4180 = vadd.f32 0.0, %v4179
      %4181 = vmatmul.f32.gmra.mxu0 %v4072
      %v4182 = vpop.f32.mrf.mxu0
      %v4183 = vadd.f32 0.0, %v4182
      %4184 = vmatmul.f32.gmra.mxu0 %v4073
      %v4185 = vpop.f32.mrf.mxu0
      %v4186 = vadd.f32 0.0, %v4185
      %4187 = vmatmul.f32.gmra.mxu0 %v4074
      %v4188 = vpop.f32.mrf.mxu0
      %v4189 = vadd.f32 0.0, %v4188
      %4190 = vmatmul.f32.gmra.mxu0 %v4075
      %v4191 = vpop.f32.mrf.mxu0
      %v4192 = vadd.f32 0.0, %v4191
      %4193 = vmatmul.f32.gmra.mxu0 %v4076
      %v4194 = vpop.f32.mrf.mxu0
      %v4195 = vadd.f32 0.0, %v4194
      %4196 = vmatmul.f32.gmra.mxu0 %v4077
      %v4197 = vpop.f32.mrf.mxu0
      %v4198 = vadd.f32 0.0, %v4197
      %4199 = vmatmul.f32.gmra.mxu0 %v4078
      %v4200 = vpop.f32.mrf.mxu0
      %v4201 = vadd.f32 0.0, %v4200
      %4202 = vmatmul.f32.gmra.mxu0 %v4079
      %v4203 = vpop.f32.mrf.mxu0
      %v4204 = vadd.f32 0.0, %v4203
      %4205 = vmatmul.f32.gmra.mxu0 %v4080
      %v4206 = vpop.f32.mrf.mxu0
      %v4207 = vadd.f32 0.0, %v4206
      %4208 = vmatmul.f32.gmra.mxu0 %v4081
      %v4209 = vpop.f32.mrf.mxu0
      %v4210 = vadd.f32 0.0, %v4209
      %4211 = vdwg.mxu0
      %v4212 = vadd.f32 %v4018, %v4117
      %v4213 = vadd.f32 %v4019, %v4120
      %v4214 = vadd.f32 %v4020, %v4123
      %v4215 = vadd.f32 %v4021, %v4126
      %v4216 = vadd.f32 %v4022, %v4129
      %v4217 = vadd.f32 %v4023, %v4132
      %v4218 = vadd.f32 %v4024, %v4135
      %v4219 = vadd.f32 %v4025, %v4138
      %v4220 = vadd.f32 %v4026, %v4141
      %v4221 = vadd.f32 %v4027, %v4144
      %v4222 = vadd.f32 %v4028, %v4147
      %v4223 = vadd.f32 %v4029, %v4150
      %v4224 = vadd.f32 %v4030, %v4153
      %v4225 = vadd.f32 %v4031, %v4156
      %v4226 = vadd.f32 %v4032, %v4159
      %v4227 = vadd.f32 %v4033, %v4162
      %v4228 = vadd.f32 %v4034, %v4165
      %v4229 = vadd.f32 %v4035, %v4168
      %v4230 = vadd.f32 %v4036, %v4171
      %v4231 = vadd.f32 %v4037, %v4174
      %v4232 = vadd.f32 %v4038, %v4177
      %v4233 = vadd.f32 %v4039, %v4180
      %v4234 = vadd.f32 %v4040, %v4183
      %v4235 = vadd.f32 %v4041, %v4186
      %v4236 = vadd.f32 %v4042, %v4189
      %v4237 = vadd.f32 %v4043, %v4192
      %v4238 = vadd.f32 %v4044, %v4195
      %v4239 = vadd.f32 %v4045, %v4198
      %v4240 = vadd.f32 %v4046, %v4201
      %v4241 = vadd.f32 %v4047, %v4204
      %v4242 = vadd.f32 %v4048, %v4207
      %v4243 = vadd.f32 %v4049, %v4210
      %v4244 = vld [vmem:[%s6] sm:$0x1]
      %v4246 = vperm.slane %v4244, 0
      %v4248 = vadd.f32 %v4212, %v4246
      %v4249 = vadd.f32 %v4213, %v4246
      %v4250 = vadd.f32 %v4214, %v4246
      %v4251 = vadd.f32 %v4215, %v4246
      %v4252 = vadd.f32 %v4216, %v4246
      %v4253 = vadd.f32 %v4217, %v4246
      %v4254 = vadd.f32 %v4218, %v4246
      %v4255 = vadd.f32 %v4219, %v4246
      %v4256 = vadd.f32 %v4220, %v4246
      %v4257 = vadd.f32 %v4221, %v4246
      %v4258 = vadd.f32 %v4222, %v4246
      %v4259 = vadd.f32 %v4223, %v4246
      %v4260 = vadd.f32 %v4224, %v4246
      %v4261 = vadd.f32 %v4225, %v4246
      %v4262 = vadd.f32 %v4226, %v4246
      %v4263 = vadd.f32 %v4227, %v4246
      %v4264 = vadd.f32 %v4228, %v4246
      %v4265 = vadd.f32 %v4229, %v4246
      %v4266 = vadd.f32 %v4230, %v4246
      %v4267 = vadd.f32 %v4231, %v4246
      %v4268 = vadd.f32 %v4232, %v4246
      %v4269 = vadd.f32 %v4233, %v4246
      %v4270 = vadd.f32 %v4234, %v4246
      %v4271 = vadd.f32 %v4235, %v4246
      %v4272 = vadd.f32 %v4236, %v4246
      %v4273 = vadd.f32 %v4237, %v4246
      %v4274 = vadd.f32 %v4238, %v4246
      %v4275 = vadd.f32 %v4239, %v4246
      %v4276 = vadd.f32 %v4240, %v4246
      %v4277 = vadd.f32 %v4241, %v4246
      %v4278 = vadd.f32 %v4242, %v4246
      %v4279 = vadd.f32 %v4243, %v4246
      %v4280 = vmax.f32 %v4248, 0.0
      %v4281 = vmax.f32 %v4249, 0.0
      %v4282 = vmax.f32 %v4250, 0.0
      %v4283 = vmax.f32 %v4251, 0.0
      %v4284 = vmax.f32 %v4252, 0.0
      %v4285 = vmax.f32 %v4253, 0.0
      %v4286 = vmax.f32 %v4254, 0.0
      %v4287 = vmax.f32 %v4255, 0.0
      %v4288 = vmax.f32 %v4256, 0.0
      %v4289 = vmax.f32 %v4257, 0.0
      %v4290 = vmax.f32 %v4258, 0.0
      %v4291 = vmax.f32 %v4259, 0.0
      %v4292 = vmax.f32 %v4260, 0.0
      %v4293 = vmax.f32 %v4261, 0.0
      %v4294 = vmax.f32 %v4262, 0.0
      %v4295 = vmax.f32 %v4263, 0.0
      %v4296 = vmax.f32 %v4264, 0.0
      %v4297 = vmax.f32 %v4265, 0.0
      %v4298 = vmax.f32 %v4266, 0.0
      %v4299 = vmax.f32 %v4267, 0.0
      %v4300 = vmax.f32 %v4268, 0.0
      %v4301 = vmax.f32 %v4269, 0.0
      %v4302 = vmax.f32 %v4270, 0.0
      %v4303 = vmax.f32 %v4271, 0.0
      %v4304 = vmax.f32 %v4272, 0.0
      %v4305 = vmax.f32 %v4273, 0.0
      %v4306 = vmax.f32 %v4274, 0.0
      %v4307 = vmax.f32 %v4275, 0.0
      %v4308 = vmax.f32 %v4276, 0.0
      %v4309 = vmax.f32 %v4277, 0.0
      %v4310 = vmax.f32 %v4278, 0.0
      %v4311 = vmax.f32 %v4279, 0.0
      %s4312 = scalar_lea.vmem [#allocation4], 32
      %4313 = vst [vmem:[%s4312 + $0x8] sm:$0xff] %v4280
      %4314 = vst [vmem:[%s4312 + $0x10] sm:$0xff] %v4281
      %4315 = vst [vmem:[%s4312 + $0x28] sm:$0xff] %v4282
      %4316 = vst [vmem:[%s4312 + $0x30] sm:$0xff] %v4283
      %4317 = vst [vmem:[%s4312 + $0x48] sm:$0xff] %v4284
      %4318 = vst [vmem:[%s4312 + $0x50] sm:$0xff] %v4285
      %4319 = vst [vmem:[%s4312 + $0x68] sm:$0xff] %v4286
      %4320 = vst [vmem:[%s4312 + $0x70] sm:$0xff] %v4287
      %4321 = vst [vmem:[%s4312 + $0x88] sm:$0xff] %v4288
      %4322 = vst [vmem:[%s4312 + $0x90] sm:$0xff] %v4289
      %4323 = vst [vmem:[%s4312 + $0xa8] sm:$0xff] %v4290
      %4324 = vst [vmem:[%s4312 + $0xb0] sm:$0xff] %v4291
      %4325 = vst [vmem:[%s4312 + $0xc8] sm:$0xff] %v4292
      %4326 = vst [vmem:[%s4312 + $0xd0] sm:$0xff] %v4293
      %4327 = vst [vmem:[%s4312 + $0xe8] sm:$0xff] %v4294
      %4328 = vst [vmem:[%s4312 + $0xf0] sm:$0xff] %v4295
      %4329 = vst [vmem:[%s4312 + $0x108] sm:$0xff] %v4296
      %4330 = vst [vmem:[%s4312 + $0x110] sm:$0xff] %v4297
      %4331 = vst [vmem:[%s4312 + $0x128] sm:$0xff] %v4298
      %4332 = vst [vmem:[%s4312 + $0x130] sm:$0xff] %v4299
      %4333 = vst [vmem:[%s4312 + $0x148] sm:$0xff] %v4300
      %4334 = vst [vmem:[%s4312 + $0x150] sm:$0xff] %v4301
      %4335 = vst [vmem:[%s4312 + $0x168] sm:$0xff] %v4302
      %4336 = vst [vmem:[%s4312 + $0x170] sm:$0xff] %v4303
      %4337 = vst [vmem:[%s4312 + $0x188] sm:$0xff] %v4304
      %4338 = vst [vmem:[%s4312 + $0x190] sm:$0xff] %v4305
      %4339 = vst [vmem:[%s4312 + $0x1a8] sm:$0xff] %v4306
      %4340 = vst [vmem:[%s4312 + $0x1b0] sm:$0xff] %v4307
      %4341 = vst [vmem:[%s4312 + $0x1c8] sm:$0xff] %v4308
      %4342 = vst [vmem:[%s4312 + $0x1d0] sm:$0xff] %v4309
      %4343 = vst [vmem:[%s4312 + $0x1e8] sm:$0xff] %v4310
      %4344 = vst [vmem:[%s4312 + $0x1f0] sm:$0xff] %v4311
      %v4345 = vld [vmem:[#allocation4 + $0x7] sm:$0xff]
      %v4346 = vld [vmem:[#allocation4 + $0xf] sm:$0xff]
      %v4347 = vld [vmem:[#allocation4 + $0x27] sm:$0xff]
      %v4348 = vld [vmem:[#allocation4 + $0x2f] sm:$0xff]
      %v4349 = vld [vmem:[#allocation4 + $0x47] sm:$0xff]
      %v4350 = vld [vmem:[#allocation4 + $0x4f] sm:$0xff]
      %v4351 = vld [vmem:[#allocation4 + $0x67] sm:$0xff]
      %v4352 = vld [vmem:[#allocation4 + $0x6f] sm:$0xff]
      %v4353 = vld [vmem:[#allocation4 + $0x87] sm:$0xff]
      %v4354 = vld [vmem:[#allocation4 + $0x8f] sm:$0xff]
      %v4355 = vld [vmem:[#allocation4 + $0xa7] sm:$0xff]
      %v4356 = vld [vmem:[#allocation4 + $0xaf] sm:$0xff]
      %v4357 = vld [vmem:[#allocation4 + $0xc7] sm:$0xff]
      %v4358 = vld [vmem:[#allocation4 + $0xcf] sm:$0xff]
      %v4359 = vld [vmem:[#allocation4 + $0xe7] sm:$0xff]
      %v4360 = vld [vmem:[#allocation4 + $0xef] sm:$0xff]
      %v4361 = vld [vmem:[#allocation4 + $0x107] sm:$0xff]
      %v4362 = vld [vmem:[#allocation4 + $0x10f] sm:$0xff]
      %v4363 = vld [vmem:[#allocation4 + $0x127] sm:$0xff]
      %v4364 = vld [vmem:[#allocation4 + $0x12f] sm:$0xff]
      %v4365 = vld [vmem:[#allocation4 + $0x147] sm:$0xff]
      %v4366 = vld [vmem:[#allocation4 + $0x14f] sm:$0xff]
      %v4367 = vld [vmem:[#allocation4 + $0x167] sm:$0xff]
      %v4368 = vld [vmem:[#allocation4 + $0x16f] sm:$0xff]
      %v4369 = vld [vmem:[#allocation4 + $0x187] sm:$0xff]
      %v4370 = vld [vmem:[#allocation4 + $0x18f] sm:$0xff]
      %v4371 = vld [vmem:[#allocation4 + $0x1a7] sm:$0xff]
      %v4372 = vld [vmem:[#allocation4 + $0x1af] sm:$0xff]
      %v4373 = vld [vmem:[#allocation4 + $0x1c7] sm:$0xff]
      %v4374 = vld [vmem:[#allocation4 + $0x1cf] sm:$0xff]
      %v4375 = vld [vmem:[#allocation4 + $0x1e7] sm:$0xff]
      %v4376 = vld [vmem:[#allocation4 + $0x1ef] sm:$0xff]
      %v4377 = vld [vmem:[%s7] sm:$0xff]
      %v4378 = vld [vmem:[%s7 + $0x8] sm:$0xff]
      %v4379 = vld [vmem:[%s7 + $0x10] sm:$0xff]
      %v4380 = vld [vmem:[%s7 + $0x18] sm:$0xff]
      %v4381 = vld [vmem:[%s7 + $0x20] sm:$0xff]
      %v4382 = vld [vmem:[%s7 + $0x28] sm:$0xff]
      %v4383 = vld [vmem:[%s7 + $0x30] sm:$0xff]
      %v4384 = vld [vmem:[%s7 + $0x38] sm:$0xff]
      %v4385 = vld [vmem:[%s7 + $0x40] sm:$0xff]
      %v4386 = vld [vmem:[%s7 + $0x48] sm:$0xff]
      %v4387 = vld [vmem:[%s7 + $0x50] sm:$0xff]
      %v4388 = vld [vmem:[%s7 + $0x58] sm:$0xff]
      %v4389 = vld [vmem:[%s7 + $0x60] sm:$0xff]
      %v4390 = vld [vmem:[%s7 + $0x68] sm:$0xff]
      %v4391 = vld [vmem:[%s7 + $0x70] sm:$0xff]
      %v4392 = vld [vmem:[%s7 + $0x78] sm:$0xff]
      %v4393 = vld [vmem:[#allocation4 + $0x8] sm:$0xff]
      %v4394 = vld [vmem:[#allocation4 + $0x10] sm:$0xff]
      %v4395 = vld [vmem:[#allocation4 + $0x28] sm:$0xff]
      %v4396 = vld [vmem:[#allocation4 + $0x30] sm:$0xff]
      %v4397 = vld [vmem:[#allocation4 + $0x48] sm:$0xff]
      %v4398 = vld [vmem:[#allocation4 + $0x50] sm:$0xff]
      %v4399 = vld [vmem:[#allocation4 + $0x68] sm:$0xff]
      %v4400 = vld [vmem:[#allocation4 + $0x70] sm:$0xff]
      %v4401 = vld [vmem:[#allocation4 + $0x88] sm:$0xff]
      %v4402 = vld [vmem:[#allocation4 + $0x90] sm:$0xff]
      %v4403 = vld [vmem:[#allocation4 + $0xa8] sm:$0xff]
      %v4404 = vld [vmem:[#allocation4 + $0xb0] sm:$0xff]
      %v4405 = vld [vmem:[#allocation4 + $0xc8] sm:$0xff]
      %v4406 = vld [vmem:[#allocation4 + $0xd0] sm:$0xff]
      %v4407 = vld [vmem:[#allocation4 + $0xe8] sm:$0xff]
      %v4408 = vld [vmem:[#allocation4 + $0xf0] sm:$0xff]
      %v4409 = vld [vmem:[#allocation4 + $0x108] sm:$0xff]
      %v4410 = vld [vmem:[#allocation4 + $0x110] sm:$0xff]
      %v4411 = vld [vmem:[#allocation4 + $0x128] sm:$0xff]
      %v4412 = vld [vmem:[#allocation4 + $0x130] sm:$0xff]
      %v4413 = vld [vmem:[#allocation4 + $0x148] sm:$0xff]
      %v4414 = vld [vmem:[#allocation4 + $0x150] sm:$0xff]
      %v4415 = vld [vmem:[#allocation4 + $0x168] sm:$0xff]
      %v4416 = vld [vmem:[#allocation4 + $0x170] sm:$0xff]
      %v4417 = vld [vmem:[#allocation4 + $0x188] sm:$0xff]
      %v4418 = vld [vmem:[#allocation4 + $0x190] sm:$0xff]
      %v4419 = vld [vmem:[#allocation4 + $0x1a8] sm:$0xff]
      %v4420 = vld [vmem:[#allocation4 + $0x1b0] sm:$0xff]
      %v4421 = vld [vmem:[#allocation4 + $0x1c8] sm:$0xff]
      %v4422 = vld [vmem:[#allocation4 + $0x1d0] sm:$0xff]
      %v4423 = vld [vmem:[#allocation4 + $0x1e8] sm:$0xff]
      %v4424 = vld [vmem:[#allocation4 + $0x1f0] sm:$0xff]
      %s4425 = scalar_lea.vmem %s7, 128
      %v4426 = vld [vmem:[%s4425] sm:$0xff]
      %v4427 = vld [vmem:[%s4425 + $0x8] sm:$0xff]
      %v4428 = vld [vmem:[%s4425 + $0x10] sm:$0xff]
      %v4429 = vld [vmem:[%s4425 + $0x18] sm:$0xff]
      %v4430 = vld [vmem:[%s4425 + $0x20] sm:$0xff]
      %v4431 = vld [vmem:[%s4425 + $0x28] sm:$0xff]
      %v4432 = vld [vmem:[%s4425 + $0x30] sm:$0xff]
      %v4433 = vld [vmem:[%s4425 + $0x38] sm:$0xff]
      %v4434 = vld [vmem:[%s4425 + $0x40] sm:$0xff]
      %v4435 = vld [vmem:[%s4425 + $0x48] sm:$0xff]
      %v4436 = vld [vmem:[%s4425 + $0x50] sm:$0xff]
      %v4437 = vld [vmem:[%s4425 + $0x58] sm:$0xff]
      %v4438 = vld [vmem:[%s4425 + $0x60] sm:$0xff]
      %v4439 = vld [vmem:[%s4425 + $0x68] sm:$0xff]
      %v4440 = vld [vmem:[%s4425 + $0x70] sm:$0xff]
      %v4441 = vld [vmem:[%s4425 + $0x78] sm:$0xff]
      %4442 = vmatpush.msra.mxu0 %v4441
      %4443 = vmatpush.msra.mxu0 %v4440
      %4444 = vmatpush.msra.mxu0 %v4439
      %4445 = vmatpush.msra.mxu0 %v4438
      %4446 = vmatpush.msra.mxu0 %v4437
      %4447 = vmatpush.msra.mxu0 %v4436
      %4448 = vmatpush.msra.mxu0 %v4435
      %4449 = vmatpush.msra.mxu0 %v4434
      %4450 = vmatpush.msra.mxu0 %v4433
      %4451 = vmatpush.msra.mxu0 %v4432
      %4452 = vmatpush.msra.mxu0 %v4431
      %4453 = vmatpush.msra.mxu0 %v4430
      %4454 = vmatpush.msra.mxu0 %v4429
      %4455 = vmatpush.msra.mxu0 %v4428
      %4456 = vmatpush.msra.mxu0 %v4427
      %4457 = vmatpush.msra.mxu0 %v4426
      %4458 = vmatmul.f32.gmra.mxu0 %v4393
      %v4459 = vpop.f32.mrf.mxu0
      %v4460 = vadd.f32 0.0, %v4459
      %4461 = vmatmul.f32.gmra.mxu0 %v4394
      %v4462 = vpop.f32.mrf.mxu0
      %v4463 = vadd.f32 0.0, %v4462
      %4464 = vmatmul.f32.gmra.mxu0 %v4395
      %v4465 = vpop.f32.mrf.mxu0
      %v4466 = vadd.f32 0.0, %v4465
      %4467 = vmatmul.f32.gmra.mxu0 %v4396
      %v4468 = vpop.f32.mrf.mxu0
      %v4469 = vadd.f32 0.0, %v4468
      %4470 = vmatmul.f32.gmra.mxu0 %v4397
      %v4471 = vpop.f32.mrf.mxu0
      %v4472 = vadd.f32 0.0, %v4471
      %4473 = vmatmul.f32.gmra.mxu0 %v4398
      %v4474 = vpop.f32.mrf.mxu0
      %v4475 = vadd.f32 0.0, %v4474
      %4476 = vmatmul.f32.gmra.mxu0 %v4399
      %v4477 = vpop.f32.mrf.mxu0
      %v4478 = vadd.f32 0.0, %v4477
      %4479 = vmatmul.f32.gmra.mxu0 %v4400
      %v4480 = vpop.f32.mrf.mxu0
      %v4481 = vadd.f32 0.0, %v4480
      %4482 = vmatmul.f32.gmra.mxu0 %v4401
      %v4483 = vpop.f32.mrf.mxu0
      %v4484 = vadd.f32 0.0, %v4483
      %4485 = vmatmul.f32.gmra.mxu0 %v4402
      %v4486 = vpop.f32.mrf.mxu0
      %v4487 = vadd.f32 0.0, %v4486
      %4488 = vmatmul.f32.gmra.mxu0 %v4403
      %v4489 = vpop.f32.mrf.mxu0
      %v4490 = vadd.f32 0.0, %v4489
      %4491 = vmatmul.f32.gmra.mxu0 %v4404
      %v4492 = vpop.f32.mrf.mxu0
      %v4493 = vadd.f32 0.0, %v4492
      %4494 = vmatmul.f32.gmra.mxu0 %v4405
      %v4495 = vpop.f32.mrf.mxu0
      %v4496 = vadd.f32 0.0, %v4495
      %4497 = vmatmul.f32.gmra.mxu0 %v4406
      %v4498 = vpop.f32.mrf.mxu0
      %v4499 = vadd.f32 0.0, %v4498
      %4500 = vmatmul.f32.gmra.mxu0 %v4407
      %v4501 = vpop.f32.mrf.mxu0
      %v4502 = vadd.f32 0.0, %v4501
      %4503 = vmatmul.f32.gmra.mxu0 %v4408
      %v4504 = vpop.f32.mrf.mxu0
      %v4505 = vadd.f32 0.0, %v4504
      %4506 = vmatmul.f32.gmra.mxu0 %v4409
      %v4507 = vpop.f32.mrf.mxu0
      %v4508 = vadd.f32 0.0, %v4507
      %4509 = vmatmul.f32.gmra.mxu0 %v4410
      %v4510 = vpop.f32.mrf.mxu0
      %v4511 = vadd.f32 0.0, %v4510
      %4512 = vmatmul.f32.gmra.mxu0 %v4411
      %v4513 = vpop.f32.mrf.mxu0
      %v4514 = vadd.f32 0.0, %v4513
      %4515 = vmatmul.f32.gmra.mxu0 %v4412
      %v4516 = vpop.f32.mrf.mxu0
      %v4517 = vadd.f32 0.0, %v4516
      %4518 = vmatmul.f32.gmra.mxu0 %v4413
      %v4519 = vpop.f32.mrf.mxu0
      %v4520 = vadd.f32 0.0, %v4519
      %4521 = vmatmul.f32.gmra.mxu0 %v4414
      %v4522 = vpop.f32.mrf.mxu0
      %v4523 = vadd.f32 0.0, %v4522
      %4524 = vmatmul.f32.gmra.mxu0 %v4415
      %v4525 = vpop.f32.mrf.mxu0
      %v4526 = vadd.f32 0.0, %v4525
      %4527 = vmatmul.f32.gmra.mxu0 %v4416
      %v4528 = vpop.f32.mrf.mxu0
      %v4529 = vadd.f32 0.0, %v4528
      %4530 = vmatmul.f32.gmra.mxu0 %v4417
      %v4531 = vpop.f32.mrf.mxu0
      %v4532 = vadd.f32 0.0, %v4531
      %4533 = vmatmul.f32.gmra.mxu0 %v4418
      %v4534 = vpop.f32.mrf.mxu0
      %v4535 = vadd.f32 0.0, %v4534
      %4536 = vmatmul.f32.gmra.mxu0 %v4419
      %v4537 = vpop.f32.mrf.mxu0
      %v4538 = vadd.f32 0.0, %v4537
      %4539 = vmatmul.f32.gmra.mxu0 %v4420
      %v4540 = vpop.f32.mrf.mxu0
      %v4541 = vadd.f32 0.0, %v4540
      %4542 = vmatmul.f32.gmra.mxu0 %v4421
      %v4543 = vpop.f32.mrf.mxu0
      %v4544 = vadd.f32 0.0, %v4543
      %4545 = vmatmul.f32.gmra.mxu0 %v4422
      %v4546 = vpop.f32.mrf.mxu0
      %v4547 = vadd.f32 0.0, %v4546
      %4548 = vmatmul.f32.gmra.mxu0 %v4423
      %v4549 = vpop.f32.mrf.mxu0
      %v4550 = vadd.f32 0.0, %v4549
      %4551 = vmatmul.f32.gmra.mxu0 %v4424
      %v4552 = vpop.f32.mrf.mxu0
      %v4553 = vadd.f32 0.0, %v4552
      %4554 = vdwg.mxu0
      %4555 = vmatpush.msra.mxu0 %v4392
      %4556 = vmatpush.msra.mxu0 %v4391
      %4557 = vmatpush.msra.mxu0 %v4390
      %4558 = vmatpush.msra.mxu0 %v4389
      %4559 = vmatpush.msra.mxu0 %v4388
      %4560 = vmatpush.msra.mxu0 %v4387
      %4561 = vmatpush.msra.mxu0 %v4386
      %4562 = vmatpush.msra.mxu0 %v4385
      %4563 = vmatpush.msra.mxu0 %v4384
      %4564 = vmatpush.msra.mxu0 %v4383
      %4565 = vmatpush.msra.mxu0 %v4382
      %4566 = vmatpush.msra.mxu0 %v4381
      %4567 = vmatpush.msra.mxu0 %v4380
      %4568 = vmatpush.msra.mxu0 %v4379
      %4569 = vmatpush.msra.mxu0 %v4378
      %4570 = vmatpush.msra.mxu0 %v4377
      %4571 = vmatmul.f32.gmra.mxu0 %v4345
      %v4572 = vpop.f32.mrf.mxu0
      %v4573 = vadd.f32 %v4460, %v4572
      %4574 = vmatmul.f32.gmra.mxu0 %v4346
      %v4575 = vpop.f32.mrf.mxu0
      %v4576 = vadd.f32 %v4463, %v4575
      %4577 = vmatmul.f32.gmra.mxu0 %v4347
      %v4578 = vpop.f32.mrf.mxu0
      %v4579 = vadd.f32 %v4466, %v4578
      %4580 = vmatmul.f32.gmra.mxu0 %v4348
      %v4581 = vpop.f32.mrf.mxu0
      %v4582 = vadd.f32 %v4469, %v4581
      %4583 = vmatmul.f32.gmra.mxu0 %v4349
      %v4584 = vpop.f32.mrf.mxu0
      %v4585 = vadd.f32 %v4472, %v4584
      %4586 = vmatmul.f32.gmra.mxu0 %v4350
      %v4587 = vpop.f32.mrf.mxu0
      %v4588 = vadd.f32 %v4475, %v4587
      %4589 = vmatmul.f32.gmra.mxu0 %v4351
      %v4590 = vpop.f32.mrf.mxu0
      %v4591 = vadd.f32 %v4478, %v4590
      %4592 = vmatmul.f32.gmra.mxu0 %v4352
      %v4593 = vpop.f32.mrf.mxu0
      %v4594 = vadd.f32 %v4481, %v4593
      %4595 = vmatmul.f32.gmra.mxu0 %v4353
      %v4596 = vpop.f32.mrf.mxu0
      %v4597 = vadd.f32 %v4484, %v4596
      %4598 = vmatmul.f32.gmra.mxu0 %v4354
      %v4599 = vpop.f32.mrf.mxu0
      %v4600 = vadd.f32 %v4487, %v4599
      %4601 = vmatmul.f32.gmra.mxu0 %v4355
      %v4602 = vpop.f32.mrf.mxu0
      %v4603 = vadd.f32 %v4490, %v4602
      %4604 = vmatmul.f32.gmra.mxu0 %v4356
      %v4605 = vpop.f32.mrf.mxu0
      %v4606 = vadd.f32 %v4493, %v4605
      %4607 = vmatmul.f32.gmra.mxu0 %v4357
      %v4608 = vpop.f32.mrf.mxu0
      %v4609 = vadd.f32 %v4496, %v4608
      %4610 = vmatmul.f32.gmra.mxu0 %v4358
      %v4611 = vpop.f32.mrf.mxu0
      %v4612 = vadd.f32 %v4499, %v4611
      %4613 = vmatmul.f32.gmra.mxu0 %v4359
      %v4614 = vpop.f32.mrf.mxu0
      %v4615 = vadd.f32 %v4502, %v4614
      %4616 = vmatmul.f32.gmra.mxu0 %v4360
      %v4617 = vpop.f32.mrf.mxu0
      %v4618 = vadd.f32 %v4505, %v4617
      %4619 = vmatmul.f32.gmra.mxu0 %v4361
      %v4620 = vpop.f32.mrf.mxu0
      %v4621 = vadd.f32 %v4508, %v4620
      %4622 = vmatmul.f32.gmra.mxu0 %v4362
      %v4623 = vpop.f32.mrf.mxu0
      %v4624 = vadd.f32 %v4511, %v4623
      %4625 = vmatmul.f32.gmra.mxu0 %v4363
      %v4626 = vpop.f32.mrf.mxu0
      %v4627 = vadd.f32 %v4514, %v4626
      %4628 = vmatmul.f32.gmra.mxu0 %v4364
      %v4629 = vpop.f32.mrf.mxu0
      %v4630 = vadd.f32 %v4517, %v4629
      %4631 = vmatmul.f32.gmra.mxu0 %v4365
      %v4632 = vpop.f32.mrf.mxu0
      %v4633 = vadd.f32 %v4520, %v4632
      %4634 = vmatmul.f32.gmra.mxu0 %v4366
      %v4635 = vpop.f32.mrf.mxu0
      %v4636 = vadd.f32 %v4523, %v4635
      %4637 = vmatmul.f32.gmra.mxu0 %v4367
      %v4638 = vpop.f32.mrf.mxu0
      %v4639 = vadd.f32 %v4526, %v4638
      %4640 = vmatmul.f32.gmra.mxu0 %v4368
      %v4641 = vpop.f32.mrf.mxu0
      %v4642 = vadd.f32 %v4529, %v4641
      %4643 = vmatmul.f32.gmra.mxu0 %v4369
      %v4644 = vpop.f32.mrf.mxu0
      %v4645 = vadd.f32 %v4532, %v4644
      %4646 = vmatmul.f32.gmra.mxu0 %v4370
      %v4647 = vpop.f32.mrf.mxu0
      %v4648 = vadd.f32 %v4535, %v4647
      %4649 = vmatmul.f32.gmra.mxu0 %v4371
      %v4650 = vpop.f32.mrf.mxu0
      %v4651 = vadd.f32 %v4538, %v4650
      %4652 = vmatmul.f32.gmra.mxu0 %v4372
      %v4653 = vpop.f32.mrf.mxu0
      %v4654 = vadd.f32 %v4541, %v4653
      %4655 = vmatmul.f32.gmra.mxu0 %v4373
      %v4656 = vpop.f32.mrf.mxu0
      %v4657 = vadd.f32 %v4544, %v4656
      %4658 = vmatmul.f32.gmra.mxu0 %v4374
      %v4659 = vpop.f32.mrf.mxu0
      %v4660 = vadd.f32 %v4547, %v4659
      %4661 = vmatmul.f32.gmra.mxu0 %v4375
      %v4662 = vpop.f32.mrf.mxu0
      %v4663 = vadd.f32 %v4550, %v4662
      %4664 = vmatmul.f32.gmra.mxu0 %v4376
      %v4665 = vpop.f32.mrf.mxu0
      %v4666 = vadd.f32 %v4553, %v4665
      %4667 = vdwg.mxu0
      %v4668 = vld [vmem:[#allocation4 + $0x9] sm:$0xff]
      %v4669 = vld [vmem:[#allocation4 + $0x11] sm:$0xff]
      %v4670 = vld [vmem:[#allocation4 + $0x29] sm:$0xff]
      %v4671 = vld [vmem:[#allocation4 + $0x31] sm:$0xff]
      %v4672 = vld [vmem:[#allocation4 + $0x49] sm:$0xff]
      %v4673 = vld [vmem:[#allocation4 + $0x51] sm:$0xff]
      %v4674 = vld [vmem:[#allocation4 + $0x69] sm:$0xff]
      %v4675 = vld [vmem:[#allocation4 + $0x71] sm:$0xff]
      %v4676 = vld [vmem:[#allocation4 + $0x89] sm:$0xff]
      %v4677 = vld [vmem:[#allocation4 + $0x91] sm:$0xff]
      %v4678 = vld [vmem:[#allocation4 + $0xa9] sm:$0xff]
      %v4679 = vld [vmem:[#allocation4 + $0xb1] sm:$0xff]
      %v4680 = vld [vmem:[#allocation4 + $0xc9] sm:$0xff]
      %v4681 = vld [vmem:[#allocation4 + $0xd1] sm:$0xff]
      %v4682 = vld [vmem:[#allocation4 + $0xe9] sm:$0xff]
      %v4683 = vld [vmem:[#allocation4 + $0xf1] sm:$0xff]
      %v4684 = vld [vmem:[#allocation4 + $0x109] sm:$0xff]
      %v4685 = vld [vmem:[#allocation4 + $0x111] sm:$0xff]
      %v4686 = vld [vmem:[#allocation4 + $0x129] sm:$0xff]
      %v4687 = vld [vmem:[#allocation4 + $0x131] sm:$0xff]
      %v4688 = vld [vmem:[#allocation4 + $0x149] sm:$0xff]
      %v4689 = vld [vmem:[#allocation4 + $0x151] sm:$0xff]
      %v4690 = vld [vmem:[#allocation4 + $0x169] sm:$0xff]
      %v4691 = vld [vmem:[#allocation4 + $0x171] sm:$0xff]
      %v4692 = vld [vmem:[#allocation4 + $0x189] sm:$0xff]
      %v4693 = vld [vmem:[#allocation4 + $0x191] sm:$0xff]
      %v4694 = vld [vmem:[#allocation4 + $0x1a9] sm:$0xff]
      %v4695 = vld [vmem:[#allocation4 + $0x1b1] sm:$0xff]
      %v4696 = vld [vmem:[#allocation4 + $0x1c9] sm:$0xff]
      %v4697 = vld [vmem:[#allocation4 + $0x1d1] sm:$0xff]
      %v4698 = vld [vmem:[#allocation4 + $0x1e9] sm:$0xff]
      %v4699 = vld [vmem:[#allocation4 + $0x1f1] sm:$0xff]
      %s4700 = scalar_lea.vmem %s7, 256
      %v4701 = vld [vmem:[%s4700] sm:$0xff]
      %v4702 = vld [vmem:[%s4700 + $0x8] sm:$0xff]
      %v4703 = vld [vmem:[%s4700 + $0x10] sm:$0xff]
      %v4704 = vld [vmem:[%s4700 + $0x18] sm:$0xff]
      %v4705 = vld [vmem:[%s4700 + $0x20] sm:$0xff]
      %v4706 = vld [vmem:[%s4700 + $0x28] sm:$0xff]
      %v4707 = vld [vmem:[%s4700 + $0x30] sm:$0xff]
      %v4708 = vld [vmem:[%s4700 + $0x38] sm:$0xff]
      %v4709 = vld [vmem:[%s4700 + $0x40] sm:$0xff]
      %v4710 = vld [vmem:[%s4700 + $0x48] sm:$0xff]
      %v4711 = vld [vmem:[%s4700 + $0x50] sm:$0xff]
      %v4712 = vld [vmem:[%s4700 + $0x58] sm:$0xff]
      %v4713 = vld [vmem:[%s4700 + $0x60] sm:$0xff]
      %v4714 = vld [vmem:[%s4700 + $0x68] sm:$0xff]
      %v4715 = vld [vmem:[%s4700 + $0x70] sm:$0xff]
      %v4716 = vld [vmem:[%s4700 + $0x78] sm:$0xff]
      %4717 = vmatpush.msra.mxu0 %v4716
      %4718 = vmatpush.msra.mxu0 %v4715
      %4719 = vmatpush.msra.mxu0 %v4714
      %4720 = vmatpush.msra.mxu0 %v4713
      %4721 = vmatpush.msra.mxu0 %v4712
      %4722 = vmatpush.msra.mxu0 %v4711
      %4723 = vmatpush.msra.mxu0 %v4710
      %4724 = vmatpush.msra.mxu0 %v4709
      %4725 = vmatpush.msra.mxu0 %v4708
      %4726 = vmatpush.msra.mxu0 %v4707
      %4727 = vmatpush.msra.mxu0 %v4706
      %4728 = vmatpush.msra.mxu0 %v4705
      %4729 = vmatpush.msra.mxu0 %v4704
      %4730 = vmatpush.msra.mxu0 %v4703
      %4731 = vmatpush.msra.mxu0 %v4702
      %4732 = vmatpush.msra.mxu0 %v4701
      %4733 = vmatmul.f32.gmra.mxu0 %v4668
      %v4734 = vpop.f32.mrf.mxu0
      %v4735 = vadd.f32 0.0, %v4734
      %4736 = vmatmul.f32.gmra.mxu0 %v4669
      %v4737 = vpop.f32.mrf.mxu0
      %v4738 = vadd.f32 0.0, %v4737
      %4739 = vmatmul.f32.gmra.mxu0 %v4670
      %v4740 = vpop.f32.mrf.mxu0
      %v4741 = vadd.f32 0.0, %v4740
      %4742 = vmatmul.f32.gmra.mxu0 %v4671
      %v4743 = vpop.f32.mrf.mxu0
      %v4744 = vadd.f32 0.0, %v4743
      %4745 = vmatmul.f32.gmra.mxu0 %v4672
      %v4746 = vpop.f32.mrf.mxu0
      %v4747 = vadd.f32 0.0, %v4746
      %4748 = vmatmul.f32.gmra.mxu0 %v4673
      %v4749 = vpop.f32.mrf.mxu0
      %v4750 = vadd.f32 0.0, %v4749
      %4751 = vmatmul.f32.gmra.mxu0 %v4674
      %v4752 = vpop.f32.mrf.mxu0
      %v4753 = vadd.f32 0.0, %v4752
      %4754 = vmatmul.f32.gmra.mxu0 %v4675
      %v4755 = vpop.f32.mrf.mxu0
      %v4756 = vadd.f32 0.0, %v4755
      %4757 = vmatmul.f32.gmra.mxu0 %v4676
      %v4758 = vpop.f32.mrf.mxu0
      %v4759 = vadd.f32 0.0, %v4758
      %4760 = vmatmul.f32.gmra.mxu0 %v4677
      %v4761 = vpop.f32.mrf.mxu0
      %v4762 = vadd.f32 0.0, %v4761
      %4763 = vmatmul.f32.gmra.mxu0 %v4678
      %v4764 = vpop.f32.mrf.mxu0
      %v4765 = vadd.f32 0.0, %v4764
      %4766 = vmatmul.f32.gmra.mxu0 %v4679
      %v4767 = vpop.f32.mrf.mxu0
      %v4768 = vadd.f32 0.0, %v4767
      %4769 = vmatmul.f32.gmra.mxu0 %v4680
      %v4770 = vpop.f32.mrf.mxu0
      %v4771 = vadd.f32 0.0, %v4770
      %4772 = vmatmul.f32.gmra.mxu0 %v4681
      %v4773 = vpop.f32.mrf.mxu0
      %v4774 = vadd.f32 0.0, %v4773
      %4775 = vmatmul.f32.gmra.mxu0 %v4682
      %v4776 = vpop.f32.mrf.mxu0
      %v4777 = vadd.f32 0.0, %v4776
      %4778 = vmatmul.f32.gmra.mxu0 %v4683
      %v4779 = vpop.f32.mrf.mxu0
      %v4780 = vadd.f32 0.0, %v4779
      %4781 = vmatmul.f32.gmra.mxu0 %v4684
      %v4782 = vpop.f32.mrf.mxu0
      %v4783 = vadd.f32 0.0, %v4782
      %4784 = vmatmul.f32.gmra.mxu0 %v4685
      %v4785 = vpop.f32.mrf.mxu0
      %v4786 = vadd.f32 0.0, %v4785
      %4787 = vmatmul.f32.gmra.mxu0 %v4686
      %v4788 = vpop.f32.mrf.mxu0
      %v4789 = vadd.f32 0.0, %v4788
      %4790 = vmatmul.f32.gmra.mxu0 %v4687
      %v4791 = vpop.f32.mrf.mxu0
      %v4792 = vadd.f32 0.0, %v4791
      %4793 = vmatmul.f32.gmra.mxu0 %v4688
      %v4794 = vpop.f32.mrf.mxu0
      %v4795 = vadd.f32 0.0, %v4794
      %4796 = vmatmul.f32.gmra.mxu0 %v4689
      %v4797 = vpop.f32.mrf.mxu0
      %v4798 = vadd.f32 0.0, %v4797
      %4799 = vmatmul.f32.gmra.mxu0 %v4690
      %v4800 = vpop.f32.mrf.mxu0
      %v4801 = vadd.f32 0.0, %v4800
      %4802 = vmatmul.f32.gmra.mxu0 %v4691
      %v4803 = vpop.f32.mrf.mxu0
      %v4804 = vadd.f32 0.0, %v4803
      %4805 = vmatmul.f32.gmra.mxu0 %v4692
      %v4806 = vpop.f32.mrf.mxu0
      %v4807 = vadd.f32 0.0, %v4806
      %4808 = vmatmul.f32.gmra.mxu0 %v4693
      %v4809 = vpop.f32.mrf.mxu0
      %v4810 = vadd.f32 0.0, %v4809
      %4811 = vmatmul.f32.gmra.mxu0 %v4694
      %v4812 = vpop.f32.mrf.mxu0
      %v4813 = vadd.f32 0.0, %v4812
      %4814 = vmatmul.f32.gmra.mxu0 %v4695
      %v4815 = vpop.f32.mrf.mxu0
      %v4816 = vadd.f32 0.0, %v4815
      %4817 = vmatmul.f32.gmra.mxu0 %v4696
      %v4818 = vpop.f32.mrf.mxu0
      %v4819 = vadd.f32 0.0, %v4818
      %4820 = vmatmul.f32.gmra.mxu0 %v4697
      %v4821 = vpop.f32.mrf.mxu0
      %v4822 = vadd.f32 0.0, %v4821
      %4823 = vmatmul.f32.gmra.mxu0 %v4698
      %v4824 = vpop.f32.mrf.mxu0
      %v4825 = vadd.f32 0.0, %v4824
      %4826 = vmatmul.f32.gmra.mxu0 %v4699
      %v4827 = vpop.f32.mrf.mxu0
      %v4828 = vadd.f32 0.0, %v4827
      %4829 = vdwg.mxu0
      %v4830 = vadd.f32 %v4573, %v4735
      %v4831 = vadd.f32 %v4576, %v4738
      %v4832 = vadd.f32 %v4579, %v4741
      %v4833 = vadd.f32 %v4582, %v4744
      %v4834 = vadd.f32 %v4585, %v4747
      %v4835 = vadd.f32 %v4588, %v4750
      %v4836 = vadd.f32 %v4591, %v4753
      %v4837 = vadd.f32 %v4594, %v4756
      %v4838 = vadd.f32 %v4597, %v4759
      %v4839 = vadd.f32 %v4600, %v4762
      %v4840 = vadd.f32 %v4603, %v4765
      %v4841 = vadd.f32 %v4606, %v4768
      %v4842 = vadd.f32 %v4609, %v4771
      %v4843 = vadd.f32 %v4612, %v4774
      %v4844 = vadd.f32 %v4615, %v4777
      %v4845 = vadd.f32 %v4618, %v4780
      %v4846 = vadd.f32 %v4621, %v4783
      %v4847 = vadd.f32 %v4624, %v4786
      %v4848 = vadd.f32 %v4627, %v4789
      %v4849 = vadd.f32 %v4630, %v4792
      %v4850 = vadd.f32 %v4633, %v4795
      %v4851 = vadd.f32 %v4636, %v4798
      %v4852 = vadd.f32 %v4639, %v4801
      %v4853 = vadd.f32 %v4642, %v4804
      %v4854 = vadd.f32 %v4645, %v4807
      %v4855 = vadd.f32 %v4648, %v4810
      %v4856 = vadd.f32 %v4651, %v4813
      %v4857 = vadd.f32 %v4654, %v4816
      %v4858 = vadd.f32 %v4657, %v4819
      %v4859 = vadd.f32 %v4660, %v4822
      %v4860 = vadd.f32 %v4663, %v4825
      %v4861 = vadd.f32 %v4666, %v4828
      %v4862 = vld [vmem:[%s4312 + $0x7] sm:$0xff]
      %v4863 = vld [vmem:[%s4312 + $0xf] sm:$0xff]
      %v4864 = vld [vmem:[%s4312 + $0x27] sm:$0xff]
      %v4865 = vld [vmem:[%s4312 + $0x2f] sm:$0xff]
      %v4866 = vld [vmem:[%s4312 + $0x47] sm:$0xff]
      %v4867 = vld [vmem:[%s4312 + $0x4f] sm:$0xff]
      %v4868 = vld [vmem:[%s4312 + $0x67] sm:$0xff]
      %v4869 = vld [vmem:[%s4312 + $0x6f] sm:$0xff]
      %v4870 = vld [vmem:[%s4312 + $0x87] sm:$0xff]
      %v4871 = vld [vmem:[%s4312 + $0x8f] sm:$0xff]
      %v4872 = vld [vmem:[%s4312 + $0xa7] sm:$0xff]
      %v4873 = vld [vmem:[%s4312 + $0xaf] sm:$0xff]
      %v4874 = vld [vmem:[%s4312 + $0xc7] sm:$0xff]
      %v4875 = vld [vmem:[%s4312 + $0xcf] sm:$0xff]
      %v4876 = vld [vmem:[%s4312 + $0xe7] sm:$0xff]
      %v4877 = vld [vmem:[%s4312 + $0xef] sm:$0xff]
      %v4878 = vld [vmem:[%s4312 + $0x107] sm:$0xff]
      %v4879 = vld [vmem:[%s4312 + $0x10f] sm:$0xff]
      %v4880 = vld [vmem:[%s4312 + $0x127] sm:$0xff]
      %v4881 = vld [vmem:[%s4312 + $0x12f] sm:$0xff]
      %v4882 = vld [vmem:[%s4312 + $0x147] sm:$0xff]
      %v4883 = vld [vmem:[%s4312 + $0x14f] sm:$0xff]
      %v4884 = vld [vmem:[%s4312 + $0x167] sm:$0xff]
      %v4885 = vld [vmem:[%s4312 + $0x16f] sm:$0xff]
      %v4886 = vld [vmem:[%s4312 + $0x187] sm:$0xff]
      %v4887 = vld [vmem:[%s4312 + $0x18f] sm:$0xff]
      %v4888 = vld [vmem:[%s4312 + $0x1a7] sm:$0xff]
      %v4889 = vld [vmem:[%s4312 + $0x1af] sm:$0xff]
      %v4890 = vld [vmem:[%s4312 + $0x1c7] sm:$0xff]
      %v4891 = vld [vmem:[%s4312 + $0x1cf] sm:$0xff]
      %v4892 = vld [vmem:[%s4312 + $0x1e7] sm:$0xff]
      %v4893 = vld [vmem:[%s4312 + $0x1ef] sm:$0xff]
      %s4894 = scalar_lea.vmem %s7, 384
      %v4895 = vld [vmem:[%s4894] sm:$0xff]
      %v4896 = vld [vmem:[%s4894 + $0x8] sm:$0xff]
      %v4897 = vld [vmem:[%s4894 + $0x10] sm:$0xff]
      %v4898 = vld [vmem:[%s4894 + $0x18] sm:$0xff]
      %v4899 = vld [vmem:[%s4894 + $0x20] sm:$0xff]
      %v4900 = vld [vmem:[%s4894 + $0x28] sm:$0xff]
      %v4901 = vld [vmem:[%s4894 + $0x30] sm:$0xff]
      %v4902 = vld [vmem:[%s4894 + $0x38] sm:$0xff]
      %v4903 = vld [vmem:[%s4894 + $0x40] sm:$0xff]
      %v4904 = vld [vmem:[%s4894 + $0x48] sm:$0xff]
      %v4905 = vld [vmem:[%s4894 + $0x50] sm:$0xff]
      %v4906 = vld [vmem:[%s4894 + $0x58] sm:$0xff]
      %v4907 = vld [vmem:[%s4894 + $0x60] sm:$0xff]
      %v4908 = vld [vmem:[%s4894 + $0x68] sm:$0xff]
      %v4909 = vld [vmem:[%s4894 + $0x70] sm:$0xff]
      %v4910 = vld [vmem:[%s4894 + $0x78] sm:$0xff]
      %4911 = vmatpush.msra.mxu0 %v4910
      %4912 = vmatpush.msra.mxu0 %v4909
      %4913 = vmatpush.msra.mxu0 %v4908
      %4914 = vmatpush.msra.mxu0 %v4907
      %4915 = vmatpush.msra.mxu0 %v4906
      %4916 = vmatpush.msra.mxu0 %v4905
      %4917 = vmatpush.msra.mxu0 %v4904
      %4918 = vmatpush.msra.mxu0 %v4903
      %4919 = vmatpush.msra.mxu0 %v4902
      %4920 = vmatpush.msra.mxu0 %v4901
      %4921 = vmatpush.msra.mxu0 %v4900
      %4922 = vmatpush.msra.mxu0 %v4899
      %4923 = vmatpush.msra.mxu0 %v4898
      %4924 = vmatpush.msra.mxu0 %v4897
      %4925 = vmatpush.msra.mxu0 %v4896
      %4926 = vmatpush.msra.mxu0 %v4895
      %4927 = vmatmul.f32.gmra.mxu0 %v4862
      %v4928 = vpop.f32.mrf.mxu0
      %v4929 = vadd.f32 0.0, %v4928
      %4930 = vmatmul.f32.gmra.mxu0 %v4863
      %v4931 = vpop.f32.mrf.mxu0
      %v4932 = vadd.f32 0.0, %v4931
      %4933 = vmatmul.f32.gmra.mxu0 %v4864
      %v4934 = vpop.f32.mrf.mxu0
      %v4935 = vadd.f32 0.0, %v4934
      %4936 = vmatmul.f32.gmra.mxu0 %v4865
      %v4937 = vpop.f32.mrf.mxu0
      %v4938 = vadd.f32 0.0, %v4937
      %4939 = vmatmul.f32.gmra.mxu0 %v4866
      %v4940 = vpop.f32.mrf.mxu0
      %v4941 = vadd.f32 0.0, %v4940
      %4942 = vmatmul.f32.gmra.mxu0 %v4867
      %v4943 = vpop.f32.mrf.mxu0
      %v4944 = vadd.f32 0.0, %v4943
      %4945 = vmatmul.f32.gmra.mxu0 %v4868
      %v4946 = vpop.f32.mrf.mxu0
      %v4947 = vadd.f32 0.0, %v4946
      %4948 = vmatmul.f32.gmra.mxu0 %v4869
      %v4949 = vpop.f32.mrf.mxu0
      %v4950 = vadd.f32 0.0, %v4949
      %4951 = vmatmul.f32.gmra.mxu0 %v4870
      %v4952 = vpop.f32.mrf.mxu0
      %v4953 = vadd.f32 0.0, %v4952
      %4954 = vmatmul.f32.gmra.mxu0 %v4871
      %v4955 = vpop.f32.mrf.mxu0
      %v4956 = vadd.f32 0.0, %v4955
      %4957 = vmatmul.f32.gmra.mxu0 %v4872
      %v4958 = vpop.f32.mrf.mxu0
      %v4959 = vadd.f32 0.0, %v4958
      %4960 = vmatmul.f32.gmra.mxu0 %v4873
      %v4961 = vpop.f32.mrf.mxu0
      %v4962 = vadd.f32 0.0, %v4961
      %4963 = vmatmul.f32.gmra.mxu0 %v4874
      %v4964 = vpop.f32.mrf.mxu0
      %v4965 = vadd.f32 0.0, %v4964
      %4966 = vmatmul.f32.gmra.mxu0 %v4875
      %v4967 = vpop.f32.mrf.mxu0
      %v4968 = vadd.f32 0.0, %v4967
      %4969 = vmatmul.f32.gmra.mxu0 %v4876
      %v4970 = vpop.f32.mrf.mxu0
      %v4971 = vadd.f32 0.0, %v4970
      %4972 = vmatmul.f32.gmra.mxu0 %v4877
      %v4973 = vpop.f32.mrf.mxu0
      %v4974 = vadd.f32 0.0, %v4973
      %4975 = vmatmul.f32.gmra.mxu0 %v4878
      %v4976 = vpop.f32.mrf.mxu0
      %v4977 = vadd.f32 0.0, %v4976
      %4978 = vmatmul.f32.gmra.mxu0 %v4879
      %v4979 = vpop.f32.mrf.mxu0
      %v4980 = vadd.f32 0.0, %v4979
      %4981 = vmatmul.f32.gmra.mxu0 %v4880
      %v4982 = vpop.f32.mrf.mxu0
      %v4983 = vadd.f32 0.0, %v4982
      %4984 = vmatmul.f32.gmra.mxu0 %v4881
      %v4985 = vpop.f32.mrf.mxu0
      %v4986 = vadd.f32 0.0, %v4985
      %4987 = vmatmul.f32.gmra.mxu0 %v4882
      %v4988 = vpop.f32.mrf.mxu0
      %v4989 = vadd.f32 0.0, %v4988
      %4990 = vmatmul.f32.gmra.mxu0 %v4883
      %v4991 = vpop.f32.mrf.mxu0
      %v4992 = vadd.f32 0.0, %v4991
      %4993 = vmatmul.f32.gmra.mxu0 %v4884
      %v4994 = vpop.f32.mrf.mxu0
      %v4995 = vadd.f32 0.0, %v4994
      %4996 = vmatmul.f32.gmra.mxu0 %v4885
      %v4997 = vpop.f32.mrf.mxu0
      %v4998 = vadd.f32 0.0, %v4997
      %4999 = vmatmul.f32.gmra.mxu0 %v4886
      %v5000 = vpop.f32.mrf.mxu0
      %v5001 = vadd.f32 0.0, %v5000
      %5002 = vmatmul.f32.gmra.mxu0 %v4887
      %v5003 = vpop.f32.mrf.mxu0
      %v5004 = vadd.f32 0.0, %v5003
      %5005 = vmatmul.f32.gmra.mxu0 %v4888
      %v5006 = vpop.f32.mrf.mxu0
      %v5007 = vadd.f32 0.0, %v5006
      %5008 = vmatmul.f32.gmra.mxu0 %v4889
      %v5009 = vpop.f32.mrf.mxu0
      %v5010 = vadd.f32 0.0, %v5009
      %5011 = vmatmul.f32.gmra.mxu0 %v4890
      %v5012 = vpop.f32.mrf.mxu0
      %v5013 = vadd.f32 0.0, %v5012
      %5014 = vmatmul.f32.gmra.mxu0 %v4891
      %v5015 = vpop.f32.mrf.mxu0
      %v5016 = vadd.f32 0.0, %v5015
      %5017 = vmatmul.f32.gmra.mxu0 %v4892
      %v5018 = vpop.f32.mrf.mxu0
      %v5019 = vadd.f32 0.0, %v5018
      %5020 = vmatmul.f32.gmra.mxu0 %v4893
      %v5021 = vpop.f32.mrf.mxu0
      %v5022 = vadd.f32 0.0, %v5021
      %5023 = vdwg.mxu0
      %v5024 = vadd.f32 %v4830, %v4929
      %v5025 = vadd.f32 %v4831, %v4932
      %v5026 = vadd.f32 %v4832, %v4935
      %v5027 = vadd.f32 %v4833, %v4938
      %v5028 = vadd.f32 %v4834, %v4941
      %v5029 = vadd.f32 %v4835, %v4944
      %v5030 = vadd.f32 %v4836, %v4947
      %v5031 = vadd.f32 %v4837, %v4950
      %v5032 = vadd.f32 %v4838, %v4953
      %v5033 = vadd.f32 %v4839, %v4956
      %v5034 = vadd.f32 %v4840, %v4959
      %v5035 = vadd.f32 %v4841, %v4962
      %v5036 = vadd.f32 %v4842, %v4965
      %v5037 = vadd.f32 %v4843, %v4968
      %v5038 = vadd.f32 %v4844, %v4971
      %v5039 = vadd.f32 %v4845, %v4974
      %v5040 = vadd.f32 %v4846, %v4977
      %v5041 = vadd.f32 %v4847, %v4980
      %v5042 = vadd.f32 %v4848, %v4983
      %v5043 = vadd.f32 %v4849, %v4986
      %v5044 = vadd.f32 %v4850, %v4989
      %v5045 = vadd.f32 %v4851, %v4992
      %v5046 = vadd.f32 %v4852, %v4995
      %v5047 = vadd.f32 %v4853, %v4998
      %v5048 = vadd.f32 %v4854, %v5001
      %v5049 = vadd.f32 %v4855, %v5004
      %v5050 = vadd.f32 %v4856, %v5007
      %v5051 = vadd.f32 %v4857, %v5010
      %v5052 = vadd.f32 %v4858, %v5013
      %v5053 = vadd.f32 %v4859, %v5016
      %v5054 = vadd.f32 %v4860, %v5019
      %v5055 = vadd.f32 %v4861, %v5022
      %v5056 = vld [vmem:[%s4312 + $0x8] sm:$0xff]
      %v5057 = vld [vmem:[%s4312 + $0x10] sm:$0xff]
      %v5058 = vld [vmem:[%s4312 + $0x28] sm:$0xff]
      %v5059 = vld [vmem:[%s4312 + $0x30] sm:$0xff]
      %v5060 = vld [vmem:[%s4312 + $0x48] sm:$0xff]
      %v5061 = vld [vmem:[%s4312 + $0x50] sm:$0xff]
      %v5062 = vld [vmem:[%s4312 + $0x68] sm:$0xff]
      %v5063 = vld [vmem:[%s4312 + $0x70] sm:$0xff]
      %v5064 = vld [vmem:[%s4312 + $0x88] sm:$0xff]
      %v5065 = vld [vmem:[%s4312 + $0x90] sm:$0xff]
      %v5066 = vld [vmem:[%s4312 + $0xa8] sm:$0xff]
      %v5067 = vld [vmem:[%s4312 + $0xb0] sm:$0xff]
      %v5068 = vld [vmem:[%s4312 + $0xc8] sm:$0xff]
      %v5069 = vld [vmem:[%s4312 + $0xd0] sm:$0xff]
      %v5070 = vld [vmem:[%s4312 + $0xe8] sm:$0xff]
      %v5071 = vld [vmem:[%s4312 + $0xf0] sm:$0xff]
      %v5072 = vld [vmem:[%s4312 + $0x108] sm:$0xff]
      %v5073 = vld [vmem:[%s4312 + $0x110] sm:$0xff]
      %v5074 = vld [vmem:[%s4312 + $0x128] sm:$0xff]
      %v5075 = vld [vmem:[%s4312 + $0x130] sm:$0xff]
      %v5076 = vld [vmem:[%s4312 + $0x148] sm:$0xff]
      %v5077 = vld [vmem:[%s4312 + $0x150] sm:$0xff]
      %v5078 = vld [vmem:[%s4312 + $0x168] sm:$0xff]
      %v5079 = vld [vmem:[%s4312 + $0x170] sm:$0xff]
      %v5080 = vld [vmem:[%s4312 + $0x188] sm:$0xff]
      %v5081 = vld [vmem:[%s4312 + $0x190] sm:$0xff]
      %v5082 = vld [vmem:[%s4312 + $0x1a8] sm:$0xff]
      %v5083 = vld [vmem:[%s4312 + $0x1b0] sm:$0xff]
      %v5084 = vld [vmem:[%s4312 + $0x1c8] sm:$0xff]
      %v5085 = vld [vmem:[%s4312 + $0x1d0] sm:$0xff]
      %v5086 = vld [vmem:[%s4312 + $0x1e8] sm:$0xff]
      %v5087 = vld [vmem:[%s4312 + $0x1f0] sm:$0xff]
      %s5088 = scalar_lea.vmem %s7, 512
      %v5089 = vld [vmem:[%s5088] sm:$0xff]
      %v5090 = vld [vmem:[%s5088 + $0x8] sm:$0xff]
      %v5091 = vld [vmem:[%s5088 + $0x10] sm:$0xff]
      %v5092 = vld [vmem:[%s5088 + $0x18] sm:$0xff]
      %v5093 = vld [vmem:[%s5088 + $0x20] sm:$0xff]
      %v5094 = vld [vmem:[%s5088 + $0x28] sm:$0xff]
      %v5095 = vld [vmem:[%s5088 + $0x30] sm:$0xff]
      %v5096 = vld [vmem:[%s5088 + $0x38] sm:$0xff]
      %v5097 = vld [vmem:[%s5088 + $0x40] sm:$0xff]
      %v5098 = vld [vmem:[%s5088 + $0x48] sm:$0xff]
      %v5099 = vld [vmem:[%s5088 + $0x50] sm:$0xff]
      %v5100 = vld [vmem:[%s5088 + $0x58] sm:$0xff]
      %v5101 = vld [vmem:[%s5088 + $0x60] sm:$0xff]
      %v5102 = vld [vmem:[%s5088 + $0x68] sm:$0xff]
      %v5103 = vld [vmem:[%s5088 + $0x70] sm:$0xff]
      %v5104 = vld [vmem:[%s5088 + $0x78] sm:$0xff]
      %5105 = vmatpush.msra.mxu0 %v5104
      %5106 = vmatpush.msra.mxu0 %v5103
      %5107 = vmatpush.msra.mxu0 %v5102
      %5108 = vmatpush.msra.mxu0 %v5101
      %5109 = vmatpush.msra.mxu0 %v5100
      %5110 = vmatpush.msra.mxu0 %v5099
      %5111 = vmatpush.msra.mxu0 %v5098
      %5112 = vmatpush.msra.mxu0 %v5097
      %5113 = vmatpush.msra.mxu0 %v5096
      %5114 = vmatpush.msra.mxu0 %v5095
      %5115 = vmatpush.msra.mxu0 %v5094
      %5116 = vmatpush.msra.mxu0 %v5093
      %5117 = vmatpush.msra.mxu0 %v5092
      %5118 = vmatpush.msra.mxu0 %v5091
      %5119 = vmatpush.msra.mxu0 %v5090
      %5120 = vmatpush.msra.mxu0 %v5089
      %5121 = vmatmul.f32.gmra.mxu0 %v5056
      %v5122 = vpop.f32.mrf.mxu0
      %v5123 = vadd.f32 0.0, %v5122
      %5124 = vmatmul.f32.gmra.mxu0 %v5057
      %v5125 = vpop.f32.mrf.mxu0
      %v5126 = vadd.f32 0.0, %v5125
      %5127 = vmatmul.f32.gmra.mxu0 %v5058
      %v5128 = vpop.f32.mrf.mxu0
      %v5129 = vadd.f32 0.0, %v5128
      %5130 = vmatmul.f32.gmra.mxu0 %v5059
      %v5131 = vpop.f32.mrf.mxu0
      %v5132 = vadd.f32 0.0, %v5131
      %5133 = vmatmul.f32.gmra.mxu0 %v5060
      %v5134 = vpop.f32.mrf.mxu0
      %v5135 = vadd.f32 0.0, %v5134
      %5136 = vmatmul.f32.gmra.mxu0 %v5061
      %v5137 = vpop.f32.mrf.mxu0
      %v5138 = vadd.f32 0.0, %v5137
      %5139 = vmatmul.f32.gmra.mxu0 %v5062
      %v5140 = vpop.f32.mrf.mxu0
      %v5141 = vadd.f32 0.0, %v5140
      %5142 = vmatmul.f32.gmra.mxu0 %v5063
      %v5143 = vpop.f32.mrf.mxu0
      %v5144 = vadd.f32 0.0, %v5143
      %5145 = vmatmul.f32.gmra.mxu0 %v5064
      %v5146 = vpop.f32.mrf.mxu0
      %v5147 = vadd.f32 0.0, %v5146
      %5148 = vmatmul.f32.gmra.mxu0 %v5065
      %v5149 = vpop.f32.mrf.mxu0
      %v5150 = vadd.f32 0.0, %v5149
      %5151 = vmatmul.f32.gmra.mxu0 %v5066
      %v5152 = vpop.f32.mrf.mxu0
      %v5153 = vadd.f32 0.0, %v5152
      %5154 = vmatmul.f32.gmra.mxu0 %v5067
      %v5155 = vpop.f32.mrf.mxu0
      %v5156 = vadd.f32 0.0, %v5155
      %5157 = vmatmul.f32.gmra.mxu0 %v5068
      %v5158 = vpop.f32.mrf.mxu0
      %v5159 = vadd.f32 0.0, %v5158
      %5160 = vmatmul.f32.gmra.mxu0 %v5069
      %v5161 = vpop.f32.mrf.mxu0
      %v5162 = vadd.f32 0.0, %v5161
      %5163 = vmatmul.f32.gmra.mxu0 %v5070
      %v5164 = vpop.f32.mrf.mxu0
      %v5165 = vadd.f32 0.0, %v5164
      %5166 = vmatmul.f32.gmra.mxu0 %v5071
      %v5167 = vpop.f32.mrf.mxu0
      %v5168 = vadd.f32 0.0, %v5167
      %5169 = vmatmul.f32.gmra.mxu0 %v5072
      %v5170 = vpop.f32.mrf.mxu0
      %v5171 = vadd.f32 0.0, %v5170
      %5172 = vmatmul.f32.gmra.mxu0 %v5073
      %v5173 = vpop.f32.mrf.mxu0
      %v5174 = vadd.f32 0.0, %v5173
      %5175 = vmatmul.f32.gmra.mxu0 %v5074
      %v5176 = vpop.f32.mrf.mxu0
      %v5177 = vadd.f32 0.0, %v5176
      %5178 = vmatmul.f32.gmra.mxu0 %v5075
      %v5179 = vpop.f32.mrf.mxu0
      %v5180 = vadd.f32 0.0, %v5179
      %5181 = vmatmul.f32.gmra.mxu0 %v5076
      %v5182 = vpop.f32.mrf.mxu0
      %v5183 = vadd.f32 0.0, %v5182
      %5184 = vmatmul.f32.gmra.mxu0 %v5077
      %v5185 = vpop.f32.mrf.mxu0
      %v5186 = vadd.f32 0.0, %v5185
      %5187 = vmatmul.f32.gmra.mxu0 %v5078
      %v5188 = vpop.f32.mrf.mxu0
      %v5189 = vadd.f32 0.0, %v5188
      %5190 = vmatmul.f32.gmra.mxu0 %v5079
      %v5191 = vpop.f32.mrf.mxu0
      %v5192 = vadd.f32 0.0, %v5191
      %5193 = vmatmul.f32.gmra.mxu0 %v5080
      %v5194 = vpop.f32.mrf.mxu0
      %v5195 = vadd.f32 0.0, %v5194
      %5196 = vmatmul.f32.gmra.mxu0 %v5081
      %v5197 = vpop.f32.mrf.mxu0
      %v5198 = vadd.f32 0.0, %v5197
      %5199 = vmatmul.f32.gmra.mxu0 %v5082
      %v5200 = vpop.f32.mrf.mxu0
      %v5201 = vadd.f32 0.0, %v5200
      %5202 = vmatmul.f32.gmra.mxu0 %v5083
      %v5203 = vpop.f32.mrf.mxu0
      %v5204 = vadd.f32 0.0, %v5203
      %5205 = vmatmul.f32.gmra.mxu0 %v5084
      %v5206 = vpop.f32.mrf.mxu0
      %v5207 = vadd.f32 0.0, %v5206
      %5208 = vmatmul.f32.gmra.mxu0 %v5085
      %v5209 = vpop.f32.mrf.mxu0
      %v5210 = vadd.f32 0.0, %v5209
      %5211 = vmatmul.f32.gmra.mxu0 %v5086
      %v5212 = vpop.f32.mrf.mxu0
      %v5213 = vadd.f32 0.0, %v5212
      %5214 = vmatmul.f32.gmra.mxu0 %v5087
      %v5215 = vpop.f32.mrf.mxu0
      %v5216 = vadd.f32 0.0, %v5215
      %5217 = vdwg.mxu0
      %v5218 = vadd.f32 %v5024, %v5123
      %v5219 = vadd.f32 %v5025, %v5126
      %v5220 = vadd.f32 %v5026, %v5129
      %v5221 = vadd.f32 %v5027, %v5132
      %v5222 = vadd.f32 %v5028, %v5135
      %v5223 = vadd.f32 %v5029, %v5138
      %v5224 = vadd.f32 %v5030, %v5141
      %v5225 = vadd.f32 %v5031, %v5144
      %v5226 = vadd.f32 %v5032, %v5147
      %v5227 = vadd.f32 %v5033, %v5150
      %v5228 = vadd.f32 %v5034, %v5153
      %v5229 = vadd.f32 %v5035, %v5156
      %v5230 = vadd.f32 %v5036, %v5159
      %v5231 = vadd.f32 %v5037, %v5162
      %v5232 = vadd.f32 %v5038, %v5165
      %v5233 = vadd.f32 %v5039, %v5168
      %v5234 = vadd.f32 %v5040, %v5171
      %v5235 = vadd.f32 %v5041, %v5174
      %v5236 = vadd.f32 %v5042, %v5177
      %v5237 = vadd.f32 %v5043, %v5180
      %v5238 = vadd.f32 %v5044, %v5183
      %v5239 = vadd.f32 %v5045, %v5186
      %v5240 = vadd.f32 %v5046, %v5189
      %v5241 = vadd.f32 %v5047, %v5192
      %v5242 = vadd.f32 %v5048, %v5195
      %v5243 = vadd.f32 %v5049, %v5198
      %v5244 = vadd.f32 %v5050, %v5201
      %v5245 = vadd.f32 %v5051, %v5204
      %v5246 = vadd.f32 %v5052, %v5207
      %v5247 = vadd.f32 %v5053, %v5210
      %v5248 = vadd.f32 %v5054, %v5213
      %v5249 = vadd.f32 %v5055, %v5216
      %v5250 = vld [vmem:[%s4312 + $0x9] sm:$0xff]
      %v5251 = vld [vmem:[%s4312 + $0x11] sm:$0xff]
      %v5252 = vld [vmem:[%s4312 + $0x29] sm:$0xff]
      %v5253 = vld [vmem:[%s4312 + $0x31] sm:$0xff]
      %v5254 = vld [vmem:[%s4312 + $0x49] sm:$0xff]
      %v5255 = vld [vmem:[%s4312 + $0x51] sm:$0xff]
      %v5256 = vld [vmem:[%s4312 + $0x69] sm:$0xff]
      %v5257 = vld [vmem:[%s4312 + $0x71] sm:$0xff]
      %v5258 = vld [vmem:[%s4312 + $0x89] sm:$0xff]
      %v5259 = vld [vmem:[%s4312 + $0x91] sm:$0xff]
      %v5260 = vld [vmem:[%s4312 + $0xa9] sm:$0xff]
      %v5261 = vld [vmem:[%s4312 + $0xb1] sm:$0xff]
      %v5262 = vld [vmem:[%s4312 + $0xc9] sm:$0xff]
      %v5263 = vld [vmem:[%s4312 + $0xd1] sm:$0xff]
      %v5264 = vld [vmem:[%s4312 + $0xe9] sm:$0xff]
      %v5265 = vld [vmem:[%s4312 + $0xf1] sm:$0xff]
      %v5266 = vld [vmem:[%s4312 + $0x109] sm:$0xff]
      %v5267 = vld [vmem:[%s4312 + $0x111] sm:$0xff]
      %v5268 = vld [vmem:[%s4312 + $0x129] sm:$0xff]
      %v5269 = vld [vmem:[%s4312 + $0x131] sm:$0xff]
      %v5270 = vld [vmem:[%s4312 + $0x149] sm:$0xff]
      %v5271 = vld [vmem:[%s4312 + $0x151] sm:$0xff]
      %v5272 = vld [vmem:[%s4312 + $0x169] sm:$0xff]
      %v5273 = vld [vmem:[%s4312 + $0x171] sm:$0xff]
      %v5274 = vld [vmem:[%s4312 + $0x189] sm:$0xff]
      %v5275 = vld [vmem:[%s4312 + $0x191] sm:$0xff]
      %v5276 = vld [vmem:[%s4312 + $0x1a9] sm:$0xff]
      %v5277 = vld [vmem:[%s4312 + $0x1b1] sm:$0xff]
      %v5278 = vld [vmem:[%s4312 + $0x1c9] sm:$0xff]
      %v5279 = vld [vmem:[%s4312 + $0x1d1] sm:$0xff]
      %v5280 = vld [vmem:[%s4312 + $0x1e9] sm:$0xff]
      %v5281 = vld [vmem:[%s4312 + $0x1f1] sm:$0xff]
      %s5282 = scalar_lea.vmem %s7, 640
      %v5283 = vld [vmem:[%s5282] sm:$0xff]
      %v5284 = vld [vmem:[%s5282 + $0x8] sm:$0xff]
      %v5285 = vld [vmem:[%s5282 + $0x10] sm:$0xff]
      %v5286 = vld [vmem:[%s5282 + $0x18] sm:$0xff]
      %v5287 = vld [vmem:[%s5282 + $0x20] sm:$0xff]
      %v5288 = vld [vmem:[%s5282 + $0x28] sm:$0xff]
      %v5289 = vld [vmem:[%s5282 + $0x30] sm:$0xff]
      %v5290 = vld [vmem:[%s5282 + $0x38] sm:$0xff]
      %v5291 = vld [vmem:[%s5282 + $0x40] sm:$0xff]
      %v5292 = vld [vmem:[%s5282 + $0x48] sm:$0xff]
      %v5293 = vld [vmem:[%s5282 + $0x50] sm:$0xff]
      %v5294 = vld [vmem:[%s5282 + $0x58] sm:$0xff]
      %v5295 = vld [vmem:[%s5282 + $0x60] sm:$0xff]
      %v5296 = vld [vmem:[%s5282 + $0x68] sm:$0xff]
      %v5297 = vld [vmem:[%s5282 + $0x70] sm:$0xff]
      %v5298 = vld [vmem:[%s5282 + $0x78] sm:$0xff]
      %5299 = vmatpush.msra.mxu0 %v5298
      %5300 = vmatpush.msra.mxu0 %v5297
      %5301 = vmatpush.msra.mxu0 %v5296
      %5302 = vmatpush.msra.mxu0 %v5295
      %5303 = vmatpush.msra.mxu0 %v5294
      %5304 = vmatpush.msra.mxu0 %v5293
      %5305 = vmatpush.msra.mxu0 %v5292
      %5306 = vmatpush.msra.mxu0 %v5291
      %5307 = vmatpush.msra.mxu0 %v5290
      %5308 = vmatpush.msra.mxu0 %v5289
      %5309 = vmatpush.msra.mxu0 %v5288
      %5310 = vmatpush.msra.mxu0 %v5287
      %5311 = vmatpush.msra.mxu0 %v5286
      %5312 = vmatpush.msra.mxu0 %v5285
      %5313 = vmatpush.msra.mxu0 %v5284
      %5314 = vmatpush.msra.mxu0 %v5283
      %5315 = vmatmul.f32.gmra.mxu0 %v5250
      %v5316 = vpop.f32.mrf.mxu0
      %v5317 = vadd.f32 0.0, %v5316
      %5318 = vmatmul.f32.gmra.mxu0 %v5251
      %v5319 = vpop.f32.mrf.mxu0
      %v5320 = vadd.f32 0.0, %v5319
      %5321 = vmatmul.f32.gmra.mxu0 %v5252
      %v5322 = vpop.f32.mrf.mxu0
      %v5323 = vadd.f32 0.0, %v5322
      %5324 = vmatmul.f32.gmra.mxu0 %v5253
      %v5325 = vpop.f32.mrf.mxu0
      %v5326 = vadd.f32 0.0, %v5325
      %5327 = vmatmul.f32.gmra.mxu0 %v5254
      %v5328 = vpop.f32.mrf.mxu0
      %v5329 = vadd.f32 0.0, %v5328
      %5330 = vmatmul.f32.gmra.mxu0 %v5255
      %v5331 = vpop.f32.mrf.mxu0
      %v5332 = vadd.f32 0.0, %v5331
      %5333 = vmatmul.f32.gmra.mxu0 %v5256
      %v5334 = vpop.f32.mrf.mxu0
      %v5335 = vadd.f32 0.0, %v5334
      %5336 = vmatmul.f32.gmra.mxu0 %v5257
      %v5337 = vpop.f32.mrf.mxu0
      %v5338 = vadd.f32 0.0, %v5337
      %5339 = vmatmul.f32.gmra.mxu0 %v5258
      %v5340 = vpop.f32.mrf.mxu0
      %v5341 = vadd.f32 0.0, %v5340
      %5342 = vmatmul.f32.gmra.mxu0 %v5259
      %v5343 = vpop.f32.mrf.mxu0
      %v5344 = vadd.f32 0.0, %v5343
      %5345 = vmatmul.f32.gmra.mxu0 %v5260
      %v5346 = vpop.f32.mrf.mxu0
      %v5347 = vadd.f32 0.0, %v5346
      %5348 = vmatmul.f32.gmra.mxu0 %v5261
      %v5349 = vpop.f32.mrf.mxu0
      %v5350 = vadd.f32 0.0, %v5349
      %5351 = vmatmul.f32.gmra.mxu0 %v5262
      %v5352 = vpop.f32.mrf.mxu0
      %v5353 = vadd.f32 0.0, %v5352
      %5354 = vmatmul.f32.gmra.mxu0 %v5263
      %v5355 = vpop.f32.mrf.mxu0
      %v5356 = vadd.f32 0.0, %v5355
      %5357 = vmatmul.f32.gmra.mxu0 %v5264
      %v5358 = vpop.f32.mrf.mxu0
      %v5359 = vadd.f32 0.0, %v5358
      %5360 = vmatmul.f32.gmra.mxu0 %v5265
      %v5361 = vpop.f32.mrf.mxu0
      %v5362 = vadd.f32 0.0, %v5361
      %5363 = vmatmul.f32.gmra.mxu0 %v5266
      %v5364 = vpop.f32.mrf.mxu0
      %v5365 = vadd.f32 0.0, %v5364
      %5366 = vmatmul.f32.gmra.mxu0 %v5267
      %v5367 = vpop.f32.mrf.mxu0
      %v5368 = vadd.f32 0.0, %v5367
      %5369 = vmatmul.f32.gmra.mxu0 %v5268
      %v5370 = vpop.f32.mrf.mxu0
      %v5371 = vadd.f32 0.0, %v5370
      %5372 = vmatmul.f32.gmra.mxu0 %v5269
      %v5373 = vpop.f32.mrf.mxu0
      %v5374 = vadd.f32 0.0, %v5373
      %5375 = vmatmul.f32.gmra.mxu0 %v5270
      %v5376 = vpop.f32.mrf.mxu0
      %v5377 = vadd.f32 0.0, %v5376
      %5378 = vmatmul.f32.gmra.mxu0 %v5271
      %v5379 = vpop.f32.mrf.mxu0
      %v5380 = vadd.f32 0.0, %v5379
      %5381 = vmatmul.f32.gmra.mxu0 %v5272
      %v5382 = vpop.f32.mrf.mxu0
      %v5383 = vadd.f32 0.0, %v5382
      %5384 = vmatmul.f32.gmra.mxu0 %v5273
      %v5385 = vpop.f32.mrf.mxu0
      %v5386 = vadd.f32 0.0, %v5385
      %5387 = vmatmul.f32.gmra.mxu0 %v5274
      %v5388 = vpop.f32.mrf.mxu0
      %v5389 = vadd.f32 0.0, %v5388
      %5390 = vmatmul.f32.gmra.mxu0 %v5275
      %v5391 = vpop.f32.mrf.mxu0
      %v5392 = vadd.f32 0.0, %v5391
      %5393 = vmatmul.f32.gmra.mxu0 %v5276
      %v5394 = vpop.f32.mrf.mxu0
      %v5395 = vadd.f32 0.0, %v5394
      %5396 = vmatmul.f32.gmra.mxu0 %v5277
      %v5397 = vpop.f32.mrf.mxu0
      %v5398 = vadd.f32 0.0, %v5397
      %5399 = vmatmul.f32.gmra.mxu0 %v5278
      %v5400 = vpop.f32.mrf.mxu0
      %v5401 = vadd.f32 0.0, %v5400
      %5402 = vmatmul.f32.gmra.mxu0 %v5279
      %v5403 = vpop.f32.mrf.mxu0
      %v5404 = vadd.f32 0.0, %v5403
      %5405 = vmatmul.f32.gmra.mxu0 %v5280
      %v5406 = vpop.f32.mrf.mxu0
      %v5407 = vadd.f32 0.0, %v5406
      %5408 = vmatmul.f32.gmra.mxu0 %v5281
      %v5409 = vpop.f32.mrf.mxu0
      %v5410 = vadd.f32 0.0, %v5409
      %5411 = vdwg.mxu0
      %v5412 = vadd.f32 %v5218, %v5317
      %v5413 = vadd.f32 %v5219, %v5320
      %v5414 = vadd.f32 %v5220, %v5323
      %v5415 = vadd.f32 %v5221, %v5326
      %v5416 = vadd.f32 %v5222, %v5329
      %v5417 = vadd.f32 %v5223, %v5332
      %v5418 = vadd.f32 %v5224, %v5335
      %v5419 = vadd.f32 %v5225, %v5338
      %v5420 = vadd.f32 %v5226, %v5341
      %v5421 = vadd.f32 %v5227, %v5344
      %v5422 = vadd.f32 %v5228, %v5347
      %v5423 = vadd.f32 %v5229, %v5350
      %v5424 = vadd.f32 %v5230, %v5353
      %v5425 = vadd.f32 %v5231, %v5356
      %v5426 = vadd.f32 %v5232, %v5359
      %v5427 = vadd.f32 %v5233, %v5362
      %v5428 = vadd.f32 %v5234, %v5365
      %v5429 = vadd.f32 %v5235, %v5368
      %v5430 = vadd.f32 %v5236, %v5371
      %v5431 = vadd.f32 %v5237, %v5374
      %v5432 = vadd.f32 %v5238, %v5377
      %v5433 = vadd.f32 %v5239, %v5380
      %v5434 = vadd.f32 %v5240, %v5383
      %v5435 = vadd.f32 %v5241, %v5386
      %v5436 = vadd.f32 %v5242, %v5389
      %v5437 = vadd.f32 %v5243, %v5392
      %v5438 = vadd.f32 %v5244, %v5395
      %v5439 = vadd.f32 %v5245, %v5398
      %v5440 = vadd.f32 %v5246, %v5401
      %v5441 = vadd.f32 %v5247, %v5404
      %v5442 = vadd.f32 %v5248, %v5407
      %v5443 = vadd.f32 %v5249, %v5410
      %s5444 = scalar_lea.vmem [#allocation4], 64
      %v5445 = vld [vmem:[%s5444 + $0x7] sm:$0xff]
      %v5446 = vld [vmem:[%s5444 + $0xf] sm:$0xff]
      %v5447 = vld [vmem:[%s5444 + $0x27] sm:$0xff]
      %v5448 = vld [vmem:[%s5444 + $0x2f] sm:$0xff]
      %v5449 = vld [vmem:[%s5444 + $0x47] sm:$0xff]
      %v5450 = vld [vmem:[%s5444 + $0x4f] sm:$0xff]
      %v5451 = vld [vmem:[%s5444 + $0x67] sm:$0xff]
      %v5452 = vld [vmem:[%s5444 + $0x6f] sm:$0xff]
      %v5453 = vld [vmem:[%s5444 + $0x87] sm:$0xff]
      %v5454 = vld [vmem:[%s5444 + $0x8f] sm:$0xff]
      %v5455 = vld [vmem:[%s5444 + $0xa7] sm:$0xff]
      %v5456 = vld [vmem:[%s5444 + $0xaf] sm:$0xff]
      %v5457 = vld [vmem:[%s5444 + $0xc7] sm:$0xff]
      %v5458 = vld [vmem:[%s5444 + $0xcf] sm:$0xff]
      %v5459 = vld [vmem:[%s5444 + $0xe7] sm:$0xff]
      %v5460 = vld [vmem:[%s5444 + $0xef] sm:$0xff]
      %v5461 = vld [vmem:[%s5444 + $0x107] sm:$0xff]
      %v5462 = vld [vmem:[%s5444 + $0x10f] sm:$0xff]
      %v5463 = vld [vmem:[%s5444 + $0x127] sm:$0xff]
      %v5464 = vld [vmem:[%s5444 + $0x12f] sm:$0xff]
      %v5465 = vld [vmem:[%s5444 + $0x147] sm:$0xff]
      %v5466 = vld [vmem:[%s5444 + $0x14f] sm:$0xff]
      %v5467 = vld [vmem:[%s5444 + $0x167] sm:$0xff]
      %v5468 = vld [vmem:[%s5444 + $0x16f] sm:$0xff]
      %v5469 = vld [vmem:[%s5444 + $0x187] sm:$0xff]
      %v5470 = vld [vmem:[%s5444 + $0x18f] sm:$0xff]
      %v5471 = vld [vmem:[%s5444 + $0x1a7] sm:$0xff]
      %v5472 = vld [vmem:[%s5444 + $0x1af] sm:$0xff]
      %v5473 = vld [vmem:[%s5444 + $0x1c7] sm:$0xff]
      %v5474 = vld [vmem:[%s5444 + $0x1cf] sm:$0xff]
      %v5475 = vld [vmem:[%s5444 + $0x1e7] sm:$0xff]
      %v5476 = vld [vmem:[%s5444 + $0x1ef] sm:$0xff]
      %s5477 = scalar_lea.vmem %s7, 768
      %v5478 = vld [vmem:[%s5477] sm:$0xff]
      %v5479 = vld [vmem:[%s5477 + $0x8] sm:$0xff]
      %v5480 = vld [vmem:[%s5477 + $0x10] sm:$0xff]
      %v5481 = vld [vmem:[%s5477 + $0x18] sm:$0xff]
      %v5482 = vld [vmem:[%s5477 + $0x20] sm:$0xff]
      %v5483 = vld [vmem:[%s5477 + $0x28] sm:$0xff]
      %v5484 = vld [vmem:[%s5477 + $0x30] sm:$0xff]
      %v5485 = vld [vmem:[%s5477 + $0x38] sm:$0xff]
      %v5486 = vld [vmem:[%s5477 + $0x40] sm:$0xff]
      %v5487 = vld [vmem:[%s5477 + $0x48] sm:$0xff]
      %v5488 = vld [vmem:[%s5477 + $0x50] sm:$0xff]
      %v5489 = vld [vmem:[%s5477 + $0x58] sm:$0xff]
      %v5490 = vld [vmem:[%s5477 + $0x60] sm:$0xff]
      %v5491 = vld [vmem:[%s5477 + $0x68] sm:$0xff]
      %v5492 = vld [vmem:[%s5477 + $0x70] sm:$0xff]
      %v5493 = vld [vmem:[%s5477 + $0x78] sm:$0xff]
      %5494 = vmatpush.msra.mxu0 %v5493
      %5495 = vmatpush.msra.mxu0 %v5492
      %5496 = vmatpush.msra.mxu0 %v5491
      %5497 = vmatpush.msra.mxu0 %v5490
      %5498 = vmatpush.msra.mxu0 %v5489
      %5499 = vmatpush.msra.mxu0 %v5488
      %5500 = vmatpush.msra.mxu0 %v5487
      %5501 = vmatpush.msra.mxu0 %v5486
      %5502 = vmatpush.msra.mxu0 %v5485
      %5503 = vmatpush.msra.mxu0 %v5484
      %5504 = vmatpush.msra.mxu0 %v5483
      %5505 = vmatpush.msra.mxu0 %v5482
      %5506 = vmatpush.msra.mxu0 %v5481
      %5507 = vmatpush.msra.mxu0 %v5480
      %5508 = vmatpush.msra.mxu0 %v5479
      %5509 = vmatpush.msra.mxu0 %v5478
      %5510 = vmatmul.f32.gmra.mxu0 %v5445
      %v5511 = vpop.f32.mrf.mxu0
      %v5512 = vadd.f32 0.0, %v5511
      %5513 = vmatmul.f32.gmra.mxu0 %v5446
      %v5514 = vpop.f32.mrf.mxu0
      %v5515 = vadd.f32 0.0, %v5514
      %5516 = vmatmul.f32.gmra.mxu0 %v5447
      %v5517 = vpop.f32.mrf.mxu0
      %v5518 = vadd.f32 0.0, %v5517
      %5519 = vmatmul.f32.gmra.mxu0 %v5448
      %v5520 = vpop.f32.mrf.mxu0
      %v5521 = vadd.f32 0.0, %v5520
      %5522 = vmatmul.f32.gmra.mxu0 %v5449
      %v5523 = vpop.f32.mrf.mxu0
      %v5524 = vadd.f32 0.0, %v5523
      %5525 = vmatmul.f32.gmra.mxu0 %v5450
      %v5526 = vpop.f32.mrf.mxu0
      %v5527 = vadd.f32 0.0, %v5526
      %5528 = vmatmul.f32.gmra.mxu0 %v5451
      %v5529 = vpop.f32.mrf.mxu0
      %v5530 = vadd.f32 0.0, %v5529
      %5531 = vmatmul.f32.gmra.mxu0 %v5452
      %v5532 = vpop.f32.mrf.mxu0
      %v5533 = vadd.f32 0.0, %v5532
      %5534 = vmatmul.f32.gmra.mxu0 %v5453
      %v5535 = vpop.f32.mrf.mxu0
      %v5536 = vadd.f32 0.0, %v5535
      %5537 = vmatmul.f32.gmra.mxu0 %v5454
      %v5538 = vpop.f32.mrf.mxu0
      %v5539 = vadd.f32 0.0, %v5538
      %5540 = vmatmul.f32.gmra.mxu0 %v5455
      %v5541 = vpop.f32.mrf.mxu0
      %v5542 = vadd.f32 0.0, %v5541
      %5543 = vmatmul.f32.gmra.mxu0 %v5456
      %v5544 = vpop.f32.mrf.mxu0
      %v5545 = vadd.f32 0.0, %v5544
      %5546 = vmatmul.f32.gmra.mxu0 %v5457
      %v5547 = vpop.f32.mrf.mxu0
      %v5548 = vadd.f32 0.0, %v5547
      %5549 = vmatmul.f32.gmra.mxu0 %v5458
      %v5550 = vpop.f32.mrf.mxu0
      %v5551 = vadd.f32 0.0, %v5550
      %5552 = vmatmul.f32.gmra.mxu0 %v5459
      %v5553 = vpop.f32.mrf.mxu0
      %v5554 = vadd.f32 0.0, %v5553
      %5555 = vmatmul.f32.gmra.mxu0 %v5460
      %v5556 = vpop.f32.mrf.mxu0
      %v5557 = vadd.f32 0.0, %v5556
      %5558 = vmatmul.f32.gmra.mxu0 %v5461
      %v5559 = vpop.f32.mrf.mxu0
      %v5560 = vadd.f32 0.0, %v5559
      %5561 = vmatmul.f32.gmra.mxu0 %v5462
      %v5562 = vpop.f32.mrf.mxu0
      %v5563 = vadd.f32 0.0, %v5562
      %5564 = vmatmul.f32.gmra.mxu0 %v5463
      %v5565 = vpop.f32.mrf.mxu0
      %v5566 = vadd.f32 0.0, %v5565
      %5567 = vmatmul.f32.gmra.mxu0 %v5464
      %v5568 = vpop.f32.mrf.mxu0
      %v5569 = vadd.f32 0.0, %v5568
      %5570 = vmatmul.f32.gmra.mxu0 %v5465
      %v5571 = vpop.f32.mrf.mxu0
      %v5572 = vadd.f32 0.0, %v5571
      %5573 = vmatmul.f32.gmra.mxu0 %v5466
      %v5574 = vpop.f32.mrf.mxu0
      %v5575 = vadd.f32 0.0, %v5574
      %5576 = vmatmul.f32.gmra.mxu0 %v5467
      %v5577 = vpop.f32.mrf.mxu0
      %v5578 = vadd.f32 0.0, %v5577
      %5579 = vmatmul.f32.gmra.mxu0 %v5468
      %v5580 = vpop.f32.mrf.mxu0
      %v5581 = vadd.f32 0.0, %v5580
      %5582 = vmatmul.f32.gmra.mxu0 %v5469
      %v5583 = vpop.f32.mrf.mxu0
      %v5584 = vadd.f32 0.0, %v5583
      %5585 = vmatmul.f32.gmra.mxu0 %v5470
      %v5586 = vpop.f32.mrf.mxu0
      %v5587 = vadd.f32 0.0, %v5586
      %5588 = vmatmul.f32.gmra.mxu0 %v5471
      %v5589 = vpop.f32.mrf.mxu0
      %v5590 = vadd.f32 0.0, %v5589
      %5591 = vmatmul.f32.gmra.mxu0 %v5472
      %v5592 = vpop.f32.mrf.mxu0
      %v5593 = vadd.f32 0.0, %v5592
      %5594 = vmatmul.f32.gmra.mxu0 %v5473
      %v5595 = vpop.f32.mrf.mxu0
      %v5596 = vadd.f32 0.0, %v5595
      %5597 = vmatmul.f32.gmra.mxu0 %v5474
      %v5598 = vpop.f32.mrf.mxu0
      %v5599 = vadd.f32 0.0, %v5598
      %5600 = vmatmul.f32.gmra.mxu0 %v5475
      %v5601 = vpop.f32.mrf.mxu0
      %v5602 = vadd.f32 0.0, %v5601
      %5603 = vmatmul.f32.gmra.mxu0 %v5476
      %v5604 = vpop.f32.mrf.mxu0
      %v5605 = vadd.f32 0.0, %v5604
      %5606 = vdwg.mxu0
      %v5607 = vadd.f32 %v5412, %v5512
      %v5608 = vadd.f32 %v5413, %v5515
      %v5609 = vadd.f32 %v5414, %v5518
      %v5610 = vadd.f32 %v5415, %v5521
      %v5611 = vadd.f32 %v5416, %v5524
      %v5612 = vadd.f32 %v5417, %v5527
      %v5613 = vadd.f32 %v5418, %v5530
      %v5614 = vadd.f32 %v5419, %v5533
      %v5615 = vadd.f32 %v5420, %v5536
      %v5616 = vadd.f32 %v5421, %v5539
      %v5617 = vadd.f32 %v5422, %v5542
      %v5618 = vadd.f32 %v5423, %v5545
      %v5619 = vadd.f32 %v5424, %v5548
      %v5620 = vadd.f32 %v5425, %v5551
      %v5621 = vadd.f32 %v5426, %v5554
      %v5622 = vadd.f32 %v5427, %v5557
      %v5623 = vadd.f32 %v5428, %v5560
      %v5624 = vadd.f32 %v5429, %v5563
      %v5625 = vadd.f32 %v5430, %v5566
      %v5626 = vadd.f32 %v5431, %v5569
      %v5627 = vadd.f32 %v5432, %v5572
      %v5628 = vadd.f32 %v5433, %v5575
      %v5629 = vadd.f32 %v5434, %v5578
      %v5630 = vadd.f32 %v5435, %v5581
      %v5631 = vadd.f32 %v5436, %v5584
      %v5632 = vadd.f32 %v5437, %v5587
      %v5633 = vadd.f32 %v5438, %v5590
      %v5634 = vadd.f32 %v5439, %v5593
      %v5635 = vadd.f32 %v5440, %v5596
      %v5636 = vadd.f32 %v5441, %v5599
      %v5637 = vadd.f32 %v5442, %v5602
      %v5638 = vadd.f32 %v5443, %v5605
      %v5639 = vld [vmem:[%s5444 + $0x8] sm:$0xff]
      %v5640 = vld [vmem:[%s5444 + $0x10] sm:$0xff]
      %v5641 = vld [vmem:[%s5444 + $0x28] sm:$0xff]
      %v5642 = vld [vmem:[%s5444 + $0x30] sm:$0xff]
      %v5643 = vld [vmem:[%s5444 + $0x48] sm:$0xff]
      %v5644 = vld [vmem:[%s5444 + $0x50] sm:$0xff]
      %v5645 = vld [vmem:[%s5444 + $0x68] sm:$0xff]
      %v5646 = vld [vmem:[%s5444 + $0x70] sm:$0xff]
      %v5647 = vld [vmem:[%s5444 + $0x88] sm:$0xff]
      %v5648 = vld [vmem:[%s5444 + $0x90] sm:$0xff]
      %v5649 = vld [vmem:[%s5444 + $0xa8] sm:$0xff]
      %v5650 = vld [vmem:[%s5444 + $0xb0] sm:$0xff]
      %v5651 = vld [vmem:[%s5444 + $0xc8] sm:$0xff]
      %v5652 = vld [vmem:[%s5444 + $0xd0] sm:$0xff]
      %v5653 = vld [vmem:[%s5444 + $0xe8] sm:$0xff]
      %v5654 = vld [vmem:[%s5444 + $0xf0] sm:$0xff]
      %v5655 = vld [vmem:[%s5444 + $0x108] sm:$0xff]
      %v5656 = vld [vmem:[%s5444 + $0x110] sm:$0xff]
      %v5657 = vld [vmem:[%s5444 + $0x128] sm:$0xff]
      %v5658 = vld [vmem:[%s5444 + $0x130] sm:$0xff]
      %v5659 = vld [vmem:[%s5444 + $0x148] sm:$0xff]
      %v5660 = vld [vmem:[%s5444 + $0x150] sm:$0xff]
      %v5661 = vld [vmem:[%s5444 + $0x168] sm:$0xff]
      %v5662 = vld [vmem:[%s5444 + $0x170] sm:$0xff]
      %v5663 = vld [vmem:[%s5444 + $0x188] sm:$0xff]
      %v5664 = vld [vmem:[%s5444 + $0x190] sm:$0xff]
      %v5665 = vld [vmem:[%s5444 + $0x1a8] sm:$0xff]
      %v5666 = vld [vmem:[%s5444 + $0x1b0] sm:$0xff]
      %v5667 = vld [vmem:[%s5444 + $0x1c8] sm:$0xff]
      %v5668 = vld [vmem:[%s5444 + $0x1d0] sm:$0xff]
      %v5669 = vld [vmem:[%s5444 + $0x1e8] sm:$0xff]
      %v5670 = vld [vmem:[%s5444 + $0x1f0] sm:$0xff]
      %s5671 = scalar_lea.vmem %s7, 896
      %v5672 = vld [vmem:[%s5671] sm:$0xff]
      %v5673 = vld [vmem:[%s5671 + $0x8] sm:$0xff]
      %v5674 = vld [vmem:[%s5671 + $0x10] sm:$0xff]
      %v5675 = vld [vmem:[%s5671 + $0x18] sm:$0xff]
      %v5676 = vld [vmem:[%s5671 + $0x20] sm:$0xff]
      %v5677 = vld [vmem:[%s5671 + $0x28] sm:$0xff]
      %v5678 = vld [vmem:[%s5671 + $0x30] sm:$0xff]
      %v5679 = vld [vmem:[%s5671 + $0x38] sm:$0xff]
      %v5680 = vld [vmem:[%s5671 + $0x40] sm:$0xff]
      %v5681 = vld [vmem:[%s5671 + $0x48] sm:$0xff]
      %v5682 = vld [vmem:[%s5671 + $0x50] sm:$0xff]
      %v5683 = vld [vmem:[%s5671 + $0x58] sm:$0xff]
      %v5684 = vld [vmem:[%s5671 + $0x60] sm:$0xff]
      %v5685 = vld [vmem:[%s5671 + $0x68] sm:$0xff]
      %v5686 = vld [vmem:[%s5671 + $0x70] sm:$0xff]
      %v5687 = vld [vmem:[%s5671 + $0x78] sm:$0xff]
      %5688 = vmatpush.msra.mxu0 %v5687
      %5689 = vmatpush.msra.mxu0 %v5686
      %5690 = vmatpush.msra.mxu0 %v5685
      %5691 = vmatpush.msra.mxu0 %v5684
      %5692 = vmatpush.msra.mxu0 %v5683
      %5693 = vmatpush.msra.mxu0 %v5682
      %5694 = vmatpush.msra.mxu0 %v5681
      %5695 = vmatpush.msra.mxu0 %v5680
      %5696 = vmatpush.msra.mxu0 %v5679
      %5697 = vmatpush.msra.mxu0 %v5678
      %5698 = vmatpush.msra.mxu0 %v5677
      %5699 = vmatpush.msra.mxu0 %v5676
      %5700 = vmatpush.msra.mxu0 %v5675
      %5701 = vmatpush.msra.mxu0 %v5674
      %5702 = vmatpush.msra.mxu0 %v5673
      %5703 = vmatpush.msra.mxu0 %v5672
      %5704 = vmatmul.f32.gmra.mxu0 %v5639
      %v5705 = vpop.f32.mrf.mxu0
      %v5706 = vadd.f32 0.0, %v5705
      %5707 = vmatmul.f32.gmra.mxu0 %v5640
      %v5708 = vpop.f32.mrf.mxu0
      %v5709 = vadd.f32 0.0, %v5708
      %5710 = vmatmul.f32.gmra.mxu0 %v5641
      %v5711 = vpop.f32.mrf.mxu0
      %v5712 = vadd.f32 0.0, %v5711
      %5713 = vmatmul.f32.gmra.mxu0 %v5642
      %v5714 = vpop.f32.mrf.mxu0
      %v5715 = vadd.f32 0.0, %v5714
      %5716 = vmatmul.f32.gmra.mxu0 %v5643
      %v5717 = vpop.f32.mrf.mxu0
      %v5718 = vadd.f32 0.0, %v5717
      %5719 = vmatmul.f32.gmra.mxu0 %v5644
      %v5720 = vpop.f32.mrf.mxu0
      %v5721 = vadd.f32 0.0, %v5720
      %5722 = vmatmul.f32.gmra.mxu0 %v5645
      %v5723 = vpop.f32.mrf.mxu0
      %v5724 = vadd.f32 0.0, %v5723
      %5725 = vmatmul.f32.gmra.mxu0 %v5646
      %v5726 = vpop.f32.mrf.mxu0
      %v5727 = vadd.f32 0.0, %v5726
      %5728 = vmatmul.f32.gmra.mxu0 %v5647
      %v5729 = vpop.f32.mrf.mxu0
      %v5730 = vadd.f32 0.0, %v5729
      %5731 = vmatmul.f32.gmra.mxu0 %v5648
      %v5732 = vpop.f32.mrf.mxu0
      %v5733 = vadd.f32 0.0, %v5732
      %5734 = vmatmul.f32.gmra.mxu0 %v5649
      %v5735 = vpop.f32.mrf.mxu0
      %v5736 = vadd.f32 0.0, %v5735
      %5737 = vmatmul.f32.gmra.mxu0 %v5650
      %v5738 = vpop.f32.mrf.mxu0
      %v5739 = vadd.f32 0.0, %v5738
      %5740 = vmatmul.f32.gmra.mxu0 %v5651
      %v5741 = vpop.f32.mrf.mxu0
      %v5742 = vadd.f32 0.0, %v5741
      %5743 = vmatmul.f32.gmra.mxu0 %v5652
      %v5744 = vpop.f32.mrf.mxu0
      %v5745 = vadd.f32 0.0, %v5744
      %5746 = vmatmul.f32.gmra.mxu0 %v5653
      %v5747 = vpop.f32.mrf.mxu0
      %v5748 = vadd.f32 0.0, %v5747
      %5749 = vmatmul.f32.gmra.mxu0 %v5654
      %v5750 = vpop.f32.mrf.mxu0
      %v5751 = vadd.f32 0.0, %v5750
      %5752 = vmatmul.f32.gmra.mxu0 %v5655
      %v5753 = vpop.f32.mrf.mxu0
      %v5754 = vadd.f32 0.0, %v5753
      %5755 = vmatmul.f32.gmra.mxu0 %v5656
      %v5756 = vpop.f32.mrf.mxu0
      %v5757 = vadd.f32 0.0, %v5756
      %5758 = vmatmul.f32.gmra.mxu0 %v5657
      %v5759 = vpop.f32.mrf.mxu0
      %v5760 = vadd.f32 0.0, %v5759
      %5761 = vmatmul.f32.gmra.mxu0 %v5658
      %v5762 = vpop.f32.mrf.mxu0
      %v5763 = vadd.f32 0.0, %v5762
      %5764 = vmatmul.f32.gmra.mxu0 %v5659
      %v5765 = vpop.f32.mrf.mxu0
      %v5766 = vadd.f32 0.0, %v5765
      %5767 = vmatmul.f32.gmra.mxu0 %v5660
      %v5768 = vpop.f32.mrf.mxu0
      %v5769 = vadd.f32 0.0, %v5768
      %5770 = vmatmul.f32.gmra.mxu0 %v5661
      %v5771 = vpop.f32.mrf.mxu0
      %v5772 = vadd.f32 0.0, %v5771
      %5773 = vmatmul.f32.gmra.mxu0 %v5662
      %v5774 = vpop.f32.mrf.mxu0
      %v5775 = vadd.f32 0.0, %v5774
      %5776 = vmatmul.f32.gmra.mxu0 %v5663
      %v5777 = vpop.f32.mrf.mxu0
      %v5778 = vadd.f32 0.0, %v5777
      %5779 = vmatmul.f32.gmra.mxu0 %v5664
      %v5780 = vpop.f32.mrf.mxu0
      %v5781 = vadd.f32 0.0, %v5780
      %5782 = vmatmul.f32.gmra.mxu0 %v5665
      %v5783 = vpop.f32.mrf.mxu0
      %v5784 = vadd.f32 0.0, %v5783
      %5785 = vmatmul.f32.gmra.mxu0 %v5666
      %v5786 = vpop.f32.mrf.mxu0
      %v5787 = vadd.f32 0.0, %v5786
      %5788 = vmatmul.f32.gmra.mxu0 %v5667
      %v5789 = vpop.f32.mrf.mxu0
      %v5790 = vadd.f32 0.0, %v5789
      %5791 = vmatmul.f32.gmra.mxu0 %v5668
      %v5792 = vpop.f32.mrf.mxu0
      %v5793 = vadd.f32 0.0, %v5792
      %5794 = vmatmul.f32.gmra.mxu0 %v5669
      %v5795 = vpop.f32.mrf.mxu0
      %v5796 = vadd.f32 0.0, %v5795
      %5797 = vmatmul.f32.gmra.mxu0 %v5670
      %v5798 = vpop.f32.mrf.mxu0
      %v5799 = vadd.f32 0.0, %v5798
      %5800 = vdwg.mxu0
      %v5801 = vadd.f32 %v5607, %v5706
      %v5802 = vadd.f32 %v5608, %v5709
      %v5803 = vadd.f32 %v5609, %v5712
      %v5804 = vadd.f32 %v5610, %v5715
      %v5805 = vadd.f32 %v5611, %v5718
      %v5806 = vadd.f32 %v5612, %v5721
      %v5807 = vadd.f32 %v5613, %v5724
      %v5808 = vadd.f32 %v5614, %v5727
      %v5809 = vadd.f32 %v5615, %v5730
      %v5810 = vadd.f32 %v5616, %v5733
      %v5811 = vadd.f32 %v5617, %v5736
      %v5812 = vadd.f32 %v5618, %v5739
      %v5813 = vadd.f32 %v5619, %v5742
      %v5814 = vadd.f32 %v5620, %v5745
      %v5815 = vadd.f32 %v5621, %v5748
      %v5816 = vadd.f32 %v5622, %v5751
      %v5817 = vadd.f32 %v5623, %v5754
      %v5818 = vadd.f32 %v5624, %v5757
      %v5819 = vadd.f32 %v5625, %v5760
      %v5820 = vadd.f32 %v5626, %v5763
      %v5821 = vadd.f32 %v5627, %v5766
      %v5822 = vadd.f32 %v5628, %v5769
      %v5823 = vadd.f32 %v5629, %v5772
      %v5824 = vadd.f32 %v5630, %v5775
      %v5825 = vadd.f32 %v5631, %v5778
      %v5826 = vadd.f32 %v5632, %v5781
      %v5827 = vadd.f32 %v5633, %v5784
      %v5828 = vadd.f32 %v5634, %v5787
      %v5829 = vadd.f32 %v5635, %v5790
      %v5830 = vadd.f32 %v5636, %v5793
      %v5831 = vadd.f32 %v5637, %v5796
      %v5832 = vadd.f32 %v5638, %v5799
      %v5833 = vld [vmem:[%s5444 + $0x9] sm:$0xff]
      %v5834 = vld [vmem:[%s5444 + $0x11] sm:$0xff]
      %v5835 = vld [vmem:[%s5444 + $0x29] sm:$0xff]
      %v5836 = vld [vmem:[%s5444 + $0x31] sm:$0xff]
      %v5837 = vld [vmem:[%s5444 + $0x49] sm:$0xff]
      %v5838 = vld [vmem:[%s5444 + $0x51] sm:$0xff]
      %v5839 = vld [vmem:[%s5444 + $0x69] sm:$0xff]
      %v5840 = vld [vmem:[%s5444 + $0x71] sm:$0xff]
      %v5841 = vld [vmem:[%s5444 + $0x89] sm:$0xff]
      %v5842 = vld [vmem:[%s5444 + $0x91] sm:$0xff]
      %v5843 = vld [vmem:[%s5444 + $0xa9] sm:$0xff]
      %v5844 = vld [vmem:[%s5444 + $0xb1] sm:$0xff]
      %v5845 = vld [vmem:[%s5444 + $0xc9] sm:$0xff]
      %v5846 = vld [vmem:[%s5444 + $0xd1] sm:$0xff]
      %v5847 = vld [vmem:[%s5444 + $0xe9] sm:$0xff]
      %v5848 = vld [vmem:[%s5444 + $0xf1] sm:$0xff]
      %v5849 = vld [vmem:[%s5444 + $0x109] sm:$0xff]
      %v5850 = vld [vmem:[%s5444 + $0x111] sm:$0xff]
      %v5851 = vld [vmem:[%s5444 + $0x129] sm:$0xff]
      %v5852 = vld [vmem:[%s5444 + $0x131] sm:$0xff]
      %v5853 = vld [vmem:[%s5444 + $0x149] sm:$0xff]
      %v5854 = vld [vmem:[%s5444 + $0x151] sm:$0xff]
      %v5855 = vld [vmem:[%s5444 + $0x169] sm:$0xff]
      %v5856 = vld [vmem:[%s5444 + $0x171] sm:$0xff]
      %v5857 = vld [vmem:[%s5444 + $0x189] sm:$0xff]
      %v5858 = vld [vmem:[%s5444 + $0x191] sm:$0xff]
      %v5859 = vld [vmem:[%s5444 + $0x1a9] sm:$0xff]
      %v5860 = vld [vmem:[%s5444 + $0x1b1] sm:$0xff]
      %v5861 = vld [vmem:[%s5444 + $0x1c9] sm:$0xff]
      %v5862 = vld [vmem:[%s5444 + $0x1d1] sm:$0xff]
      %v5863 = vld [vmem:[%s5444 + $0x1e9] sm:$0xff]
      %v5864 = vld [vmem:[%s5444 + $0x1f1] sm:$0xff]
      %s5865 = scalar_lea.vmem %s7, 1024
      %v5866 = vld [vmem:[%s5865] sm:$0xff]
      %v5867 = vld [vmem:[%s5865 + $0x8] sm:$0xff]
      %v5868 = vld [vmem:[%s5865 + $0x10] sm:$0xff]
      %v5869 = vld [vmem:[%s5865 + $0x18] sm:$0xff]
      %v5870 = vld [vmem:[%s5865 + $0x20] sm:$0xff]
      %v5871 = vld [vmem:[%s5865 + $0x28] sm:$0xff]
      %v5872 = vld [vmem:[%s5865 + $0x30] sm:$0xff]
      %v5873 = vld [vmem:[%s5865 + $0x38] sm:$0xff]
      %v5874 = vld [vmem:[%s5865 + $0x40] sm:$0xff]
      %v5875 = vld [vmem:[%s5865 + $0x48] sm:$0xff]
      %v5876 = vld [vmem:[%s5865 + $0x50] sm:$0xff]
      %v5877 = vld [vmem:[%s5865 + $0x58] sm:$0xff]
      %v5878 = vld [vmem:[%s5865 + $0x60] sm:$0xff]
      %v5879 = vld [vmem:[%s5865 + $0x68] sm:$0xff]
      %v5880 = vld [vmem:[%s5865 + $0x70] sm:$0xff]
      %v5881 = vld [vmem:[%s5865 + $0x78] sm:$0xff]
      %5882 = vmatpush.msra.mxu0 %v5881
      %5883 = vmatpush.msra.mxu0 %v5880
      %5884 = vmatpush.msra.mxu0 %v5879
      %5885 = vmatpush.msra.mxu0 %v5878
      %5886 = vmatpush.msra.mxu0 %v5877
      %5887 = vmatpush.msra.mxu0 %v5876
      %5888 = vmatpush.msra.mxu0 %v5875
      %5889 = vmatpush.msra.mxu0 %v5874
      %5890 = vmatpush.msra.mxu0 %v5873
      %5891 = vmatpush.msra.mxu0 %v5872
      %5892 = vmatpush.msra.mxu0 %v5871
      %5893 = vmatpush.msra.mxu0 %v5870
      %5894 = vmatpush.msra.mxu0 %v5869
      %5895 = vmatpush.msra.mxu0 %v5868
      %5896 = vmatpush.msra.mxu0 %v5867
      %5897 = vmatpush.msra.mxu0 %v5866
      %5898 = vmatmul.f32.gmra.mxu0 %v5833
      %v5899 = vpop.f32.mrf.mxu0
      %v5900 = vadd.f32 0.0, %v5899
      %5901 = vmatmul.f32.gmra.mxu0 %v5834
      %v5902 = vpop.f32.mrf.mxu0
      %v5903 = vadd.f32 0.0, %v5902
      %5904 = vmatmul.f32.gmra.mxu0 %v5835
      %v5905 = vpop.f32.mrf.mxu0
      %v5906 = vadd.f32 0.0, %v5905
      %5907 = vmatmul.f32.gmra.mxu0 %v5836
      %v5908 = vpop.f32.mrf.mxu0
      %v5909 = vadd.f32 0.0, %v5908
      %5910 = vmatmul.f32.gmra.mxu0 %v5837
      %v5911 = vpop.f32.mrf.mxu0
      %v5912 = vadd.f32 0.0, %v5911
      %5913 = vmatmul.f32.gmra.mxu0 %v5838
      %v5914 = vpop.f32.mrf.mxu0
      %v5915 = vadd.f32 0.0, %v5914
      %5916 = vmatmul.f32.gmra.mxu0 %v5839
      %v5917 = vpop.f32.mrf.mxu0
      %v5918 = vadd.f32 0.0, %v5917
      %5919 = vmatmul.f32.gmra.mxu0 %v5840
      %v5920 = vpop.f32.mrf.mxu0
      %v5921 = vadd.f32 0.0, %v5920
      %5922 = vmatmul.f32.gmra.mxu0 %v5841
      %v5923 = vpop.f32.mrf.mxu0
      %v5924 = vadd.f32 0.0, %v5923
      %5925 = vmatmul.f32.gmra.mxu0 %v5842
      %v5926 = vpop.f32.mrf.mxu0
      %v5927 = vadd.f32 0.0, %v5926
      %5928 = vmatmul.f32.gmra.mxu0 %v5843
      %v5929 = vpop.f32.mrf.mxu0
      %v5930 = vadd.f32 0.0, %v5929
      %5931 = vmatmul.f32.gmra.mxu0 %v5844
      %v5932 = vpop.f32.mrf.mxu0
      %v5933 = vadd.f32 0.0, %v5932
      %5934 = vmatmul.f32.gmra.mxu0 %v5845
      %v5935 = vpop.f32.mrf.mxu0
      %v5936 = vadd.f32 0.0, %v5935
      %5937 = vmatmul.f32.gmra.mxu0 %v5846
      %v5938 = vpop.f32.mrf.mxu0
      %v5939 = vadd.f32 0.0, %v5938
      %5940 = vmatmul.f32.gmra.mxu0 %v5847
      %v5941 = vpop.f32.mrf.mxu0
      %v5942 = vadd.f32 0.0, %v5941
      %5943 = vmatmul.f32.gmra.mxu0 %v5848
      %v5944 = vpop.f32.mrf.mxu0
      %v5945 = vadd.f32 0.0, %v5944
      %5946 = vmatmul.f32.gmra.mxu0 %v5849
      %v5947 = vpop.f32.mrf.mxu0
      %v5948 = vadd.f32 0.0, %v5947
      %5949 = vmatmul.f32.gmra.mxu0 %v5850
      %v5950 = vpop.f32.mrf.mxu0
      %v5951 = vadd.f32 0.0, %v5950
      %5952 = vmatmul.f32.gmra.mxu0 %v5851
      %v5953 = vpop.f32.mrf.mxu0
      %v5954 = vadd.f32 0.0, %v5953
      %5955 = vmatmul.f32.gmra.mxu0 %v5852
      %v5956 = vpop.f32.mrf.mxu0
      %v5957 = vadd.f32 0.0, %v5956
      %5958 = vmatmul.f32.gmra.mxu0 %v5853
      %v5959 = vpop.f32.mrf.mxu0
      %v5960 = vadd.f32 0.0, %v5959
      %5961 = vmatmul.f32.gmra.mxu0 %v5854
      %v5962 = vpop.f32.mrf.mxu0
      %v5963 = vadd.f32 0.0, %v5962
      %5964 = vmatmul.f32.gmra.mxu0 %v5855
      %v5965 = vpop.f32.mrf.mxu0
      %v5966 = vadd.f32 0.0, %v5965
      %5967 = vmatmul.f32.gmra.mxu0 %v5856
      %v5968 = vpop.f32.mrf.mxu0
      %v5969 = vadd.f32 0.0, %v5968
      %5970 = vmatmul.f32.gmra.mxu0 %v5857
      %v5971 = vpop.f32.mrf.mxu0
      %v5972 = vadd.f32 0.0, %v5971
      %5973 = vmatmul.f32.gmra.mxu0 %v5858
      %v5974 = vpop.f32.mrf.mxu0
      %v5975 = vadd.f32 0.0, %v5974
      %5976 = vmatmul.f32.gmra.mxu0 %v5859
      %v5977 = vpop.f32.mrf.mxu0
      %v5978 = vadd.f32 0.0, %v5977
      %5979 = vmatmul.f32.gmra.mxu0 %v5860
      %v5980 = vpop.f32.mrf.mxu0
      %v5981 = vadd.f32 0.0, %v5980
      %5982 = vmatmul.f32.gmra.mxu0 %v5861
      %v5983 = vpop.f32.mrf.mxu0
      %v5984 = vadd.f32 0.0, %v5983
      %5985 = vmatmul.f32.gmra.mxu0 %v5862
      %v5986 = vpop.f32.mrf.mxu0
      %v5987 = vadd.f32 0.0, %v5986
      %5988 = vmatmul.f32.gmra.mxu0 %v5863
      %v5989 = vpop.f32.mrf.mxu0
      %v5990 = vadd.f32 0.0, %v5989
      %5991 = vmatmul.f32.gmra.mxu0 %v5864
      %v5992 = vpop.f32.mrf.mxu0
      %v5993 = vadd.f32 0.0, %v5992
      %5994 = vdwg.mxu0
      %v5995 = vadd.f32 %v5801, %v5900
      %v5996 = vadd.f32 %v5802, %v5903
      %v5997 = vadd.f32 %v5803, %v5906
      %v5998 = vadd.f32 %v5804, %v5909
      %v5999 = vadd.f32 %v5805, %v5912
      %v6000 = vadd.f32 %v5806, %v5915
      %v6001 = vadd.f32 %v5807, %v5918
      %v6002 = vadd.f32 %v5808, %v5921
      %v6003 = vadd.f32 %v5809, %v5924
      %v6004 = vadd.f32 %v5810, %v5927
      %v6005 = vadd.f32 %v5811, %v5930
      %v6006 = vadd.f32 %v5812, %v5933
      %v6007 = vadd.f32 %v5813, %v5936
      %v6008 = vadd.f32 %v5814, %v5939
      %v6009 = vadd.f32 %v5815, %v5942
      %v6010 = vadd.f32 %v5816, %v5945
      %v6011 = vadd.f32 %v5817, %v5948
      %v6012 = vadd.f32 %v5818, %v5951
      %v6013 = vadd.f32 %v5819, %v5954
      %v6014 = vadd.f32 %v5820, %v5957
      %v6015 = vadd.f32 %v5821, %v5960
      %v6016 = vadd.f32 %v5822, %v5963
      %v6017 = vadd.f32 %v5823, %v5966
      %v6018 = vadd.f32 %v5824, %v5969
      %v6019 = vadd.f32 %v5825, %v5972
      %v6020 = vadd.f32 %v5826, %v5975
      %v6021 = vadd.f32 %v5827, %v5978
      %v6022 = vadd.f32 %v5828, %v5981
      %v6023 = vadd.f32 %v5829, %v5984
      %v6024 = vadd.f32 %v5830, %v5987
      %v6025 = vadd.f32 %v5831, %v5990
      %v6026 = vadd.f32 %v5832, %v5993
      %v6027 = vld [vmem:[%s8] sm:$0x1]
      %v6029 = vperm.slane %v6027, 0
      %v6031 = vadd.f32 %v5995, %v6029
      %v6032 = vadd.f32 %v5996, %v6029
      %v6033 = vadd.f32 %v5997, %v6029
      %v6034 = vadd.f32 %v5998, %v6029
      %v6035 = vadd.f32 %v5999, %v6029
      %v6036 = vadd.f32 %v6000, %v6029
      %v6037 = vadd.f32 %v6001, %v6029
      %v6038 = vadd.f32 %v6002, %v6029
      %v6039 = vadd.f32 %v6003, %v6029
      %v6040 = vadd.f32 %v6004, %v6029
      %v6041 = vadd.f32 %v6005, %v6029
      %v6042 = vadd.f32 %v6006, %v6029
      %v6043 = vadd.f32 %v6007, %v6029
      %v6044 = vadd.f32 %v6008, %v6029
      %v6045 = vadd.f32 %v6009, %v6029
      %v6046 = vadd.f32 %v6010, %v6029
      %v6047 = vadd.f32 %v6011, %v6029
      %v6048 = vadd.f32 %v6012, %v6029
      %v6049 = vadd.f32 %v6013, %v6029
      %v6050 = vadd.f32 %v6014, %v6029
      %v6051 = vadd.f32 %v6015, %v6029
      %v6052 = vadd.f32 %v6016, %v6029
      %v6053 = vadd.f32 %v6017, %v6029
      %v6054 = vadd.f32 %v6018, %v6029
      %v6055 = vadd.f32 %v6019, %v6029
      %v6056 = vadd.f32 %v6020, %v6029
      %v6057 = vadd.f32 %v6021, %v6029
      %v6058 = vadd.f32 %v6022, %v6029
      %v6059 = vadd.f32 %v6023, %v6029
      %v6060 = vadd.f32 %v6024, %v6029
      %v6061 = vadd.f32 %v6025, %v6029
      %v6062 = vadd.f32 %v6026, %v6029
      %6063 = vst [vmem:[%s332] sm:$0xff] %v6031
      %6064 = vst [vmem:[%s332 + $0x8] sm:$0xff] %v6032
      %6065 = vst [vmem:[%s332 + $0x10] sm:$0xff] %v6033
      %6066 = vst [vmem:[%s332 + $0x18] sm:$0xff] %v6034
      %6067 = vst [vmem:[%s332 + $0x20] sm:$0xff] %v6035
      %6068 = vst [vmem:[%s332 + $0x28] sm:$0xff] %v6036
      %6069 = vst [vmem:[%s332 + $0x30] sm:$0xff] %v6037
      %6070 = vst [vmem:[%s332 + $0x38] sm:$0xff] %v6038
      %6071 = vst [vmem:[%s332 + $0x40] sm:$0xff] %v6039
      %6072 = vst [vmem:[%s332 + $0x48] sm:$0xff] %v6040
      %6073 = vst [vmem:[%s332 + $0x50] sm:$0xff] %v6041
      %6074 = vst [vmem:[%s332 + $0x58] sm:$0xff] %v6042
      %6075 = vst [vmem:[%s332 + $0x60] sm:$0xff] %v6043
      %6076 = vst [vmem:[%s332 + $0x68] sm:$0xff] %v6044
      %6077 = vst [vmem:[%s332 + $0x70] sm:$0xff] %v6045
      %6078 = vst [vmem:[%s332 + $0x78] sm:$0xff] %v6046
      %6079 = vst [vmem:[%s332 + $0x80] sm:$0xff] %v6047
      %6080 = vst [vmem:[%s332 + $0x88] sm:$0xff] %v6048
      %6081 = vst [vmem:[%s332 + $0x90] sm:$0xff] %v6049
      %6082 = vst [vmem:[%s332 + $0x98] sm:$0xff] %v6050
      %6083 = vst [vmem:[%s332 + $0xa0] sm:$0xff] %v6051
      %6084 = vst [vmem:[%s332 + $0xa8] sm:$0xff] %v6052
      %6085 = vst [vmem:[%s332 + $0xb0] sm:$0xff] %v6053
      %6086 = vst [vmem:[%s332 + $0xb8] sm:$0xff] %v6054
      %6087 = vst [vmem:[%s332 + $0xc0] sm:$0xff] %v6055
      %6088 = vst [vmem:[%s332 + $0xc8] sm:$0xff] %v6056
      %6089 = vst [vmem:[%s332 + $0xd0] sm:$0xff] %v6057
      %6090 = vst [vmem:[%s332 + $0xd8] sm:$0xff] %v6058
      %6091 = vst [vmem:[%s332 + $0xe0] sm:$0xff] %v6059
      %6092 = vst [vmem:[%s332 + $0xe8] sm:$0xff] %v6060
      %6093 = vst [vmem:[%s332 + $0xf0] sm:$0xff] %v6061
      %6094 = vst [vmem:[%s332 + $0xf8] sm:$0xff] %v6062
      %p6095 = scmp.lt.s32.totalorder %s20, 1
      %s6096 = scalar_select %p6095, %s20, 1
      %s6097 = smul.addr %s6096, 32
      %s6098 = smul.addr %s6097, 8
      %s6099 = scalar_lea.vmem %s9, %s6098
      // Predicated region
      $region57: #{espcn_forward.1} parent=55 // pred_check
        %p6100 = pneg %p232
      $region58: #{espcn_forward.1} parent=55 // pred_check_branch
        %6102 = sbr.rel (%p6100) target = $region60
      $region59: #{espcn_forward.1} parent=55 // pred_region
        _
      $region60: #{espcn_forward.1} parent=55 // pred_fallthru
        _
    $region56: #{espcn_forward.1} parent=5 // pred_fallthru
      _
    %p6103 = scmp.le.s32.totalorder 2, %s15
    // Predicated region
    $region61: #{espcn_forward.1} parent=5 // pred_check
      %p6104 = pneg %p6103
    $region62: #{espcn_forward.1} parent=5 // pred_check_branch
      %6106 = sbr.rel (%p6104) target = $region64
    $region63: #{espcn_forward.1} parent=5 // pred_region
      %s6107 = ssub.s32 %s15, 2
      // Predicated region
      $region65: #{espcn_forward.1} parent=63 // pred_check
        %p6108 = pneg %p238
      $region66: #{espcn_forward.1} parent=63 // pred_check_branch
        %6110 = sbr.rel (%p6108) target = $region68
      $region67: #{espcn_forward.1} parent=63 // pred_region
        %p6111 = scmp.lt.s32.totalorder %s21, 1
        %s6112 = scalar_select %p6111, %s21, 1
        %s6113 = smul.addr %s6112, 32
        %s6114 = smul.addr %s6113, 8
        %s6115 = scalar_lea.vmem %s9, %s6114
      $region68: #{espcn_forward.1} parent=63 // pred_fallthru
        _
    $region64: #{espcn_forward.1} parent=5 // pred_fallthru
      _
  $region6: #{espcn_forward.1} parent=0 // loop_footer
    %s19 = sadd.s32 1, %s15
  $region7: #{espcn_forward.1} parent=0 // loop_footer_branch
    %14 = sbr.rel target = $region3
  $region8: #{espcn_forward.1} parent=0 // loop_exit
    _

</llo_original>
